<compile_context>
chip_gen: v7x
topology: tpu7x:2x2x1
jax: 0.10.0
libtpu: 0.0.40
codegen_flags: <defaults>
</compile_context>

<pallas_src>
import functools
import math

import jax
import jax.numpy as jnp
import numpy as np
from jax.experimental import pallas as pl
from jax.experimental.pallas import tpu as pltpu


def _window_attention_kernel(*refs, num_heads, has_mask, approx_recip):
    """One grid step = G windows; rows of x are (window, token) flattened."""
    if has_mask:
        (x_ref, wqkv_ref, bqkv_ref, rel_ref, mask_ref,
         wproj_ref, bproj_ref, o_ref, head_acc) = refs
    else:
        (x_ref, wqkv_ref, bqkv_ref, rel_ref,
         wproj_ref, bproj_ref, o_ref, head_acc) = refs
        mask_ref = None

    x = x_ref[0]                                   # (G*N, C), compute dtype
    GN, C = x.shape
    H = num_heads
    hd = C // H
    N = rel_ref.shape[-1]
    G = GN // N
    cdt = x.dtype

    # qkv projection: one MXU matmul over all G windows, f32 accumulation.
    # Columns of W_qkv are head-major [h][q|k|v][hd]; q columns carry the scale.
    qkv = jnp.dot(x, wqkv_ref[...], preferred_element_type=jnp.float32) + bqkv_ref[0]
    qkv = qkv.reshape(G, N, 3 * C).astype(cdt)     # leading-dim split only (cheap)

    for h in range(H):                             # small static unroll over heads
        chunk = qkv[:, :, h * 3 * hd:(h + 1) * 3 * hd]   # contiguous (G, N, 3*hd)
        q = chunk[:, :, :hd]                             # pre-scaled
        k = chunk[:, :, hd:2 * hd]
        v = chunk[:, :, 2 * hd:]

        # scores for all G windows at once (single batch dim), f32.
        s = jnp.einsum("gnd,gmd->gnm", q, k,
                       preferred_element_type=jnp.float32)      # (G, N, N)
        s = s + rel_ref[h]                                      # (N, N) broadcast over G
        if has_mask:
            s = s + mask_ref[0]                                 # (G, N, N) shift mask

        # softmax (f32); divide replaced by EUP reciprocal * multiply.
        s = s - jnp.max(s, axis=-1, keepdims=True)
        p = jnp.exp(s)
        p = p * pl.reciprocal(jnp.sum(p, axis=-1, keepdims=True),
                              approx=approx_recip)

        head_out = jnp.einsum("gnm,gmd->gnd", p.astype(cdt), v,
                              preferred_element_type=jnp.float32)  # (G, N, hd) f32
        # write this head's slice into the persistent VMEM scratch (no concat,
        # no long-lived per-head values).
        head_acc[:, h * hd:(h + 1) * hd] = head_out.reshape(GN, hd)

    # output projection: one MXU matmul over all G windows (== transpose+reshape
    # followed by proj in the PyTorch reference).
    attn_out = head_acc[...].astype(cdt)                        # (G*N, C)
    out = jnp.dot(attn_out, wproj_ref[...],
                  preferred_element_type=jnp.float32) + bproj_ref[0]
    o_ref[0] = out.astype(o_ref.dtype)


def _pick_group(num_windows, seq_len, max_rows=512):
    """Largest divisor G of num_windows with G*seq_len <= max_rows (>= 1).

    max_rows=512 amortizes the ~0.35us/step pipeline overhead and fills the MXU
    M dim (v5e/v6e guidance).  On v7x (64 MiB VMEM, 2 TensorCores) pass a smaller
    max_rows so n_groups stays >= 2 and the 'parallel' axis shards across cores.
    """
    best = 1
    for g in range(1, num_windows + 1):
        if num_windows % g == 0 and g * seq_len <= max_rows:
            best = g
    return best


def window_attention_pallas(x, params, num_heads, mask=None,
                            compute_dtype=jnp.bfloat16,
                            approx_softmax_recip=True,
                            max_rows=512):
    """x: (B_, N, C). mask: (nW, N, N) or None. Returns (B_, N, C) in x.dtype.

    Defaults are the production configuration (bf16 matmul operands, approximate
    EUP reciprocal).  For bit-tight reference checks pass compute_dtype=float32
    and approx_softmax_recip=False.
    """
    B_, N, C = x.shape
    H = num_heads
    hd = C // H
    scale = hd ** (-0.5)
    orig_dtype = x.dtype

    # ---- one-time parameter transforms (wrapper-side, static) ----
    # fold q scale into the q columns, then permute columns to head-major
    # [h][q|k|v][hd] so each head reads one contiguous lane chunk in the kernel.
    w_qkv = jnp.asarray(params["w_qkv"], jnp.float32).at[:, :C].multiply(scale)
    b_qkv = jnp.asarray(params["b_qkv"], jnp.float32).at[:C].multiply(scale)
    perm = np.concatenate([
        np.concatenate([0 * C + np.arange(h * hd, (h + 1) * hd),
                        1 * C + np.arange(h * hd, (h + 1) * hd),
                        2 * C + np.arange(h * hd, (h + 1) * hd)])
        for h in range(H)])
    w_qkv = w_qkv[:, perm].astype(compute_dtype)
    b_qkv = b_qkv[perm].reshape(1, 3 * C)                               # f32
    w_proj = jnp.asarray(params["w_proj"], jnp.float32).astype(compute_dtype)
    b_proj = jnp.asarray(params["b_proj"], jnp.float32).reshape(1, C)   # f32

    # relative-position bias gather (table lookup, plain JAX glue).
    rel_bias = params["rpb_table"][params["rel_index"].reshape(-1)]     # (N*N, H)
    rel_bias = rel_bias.reshape(N, N, H).transpose(2, 0, 1)             # (H, N, N)
    rel_bias = rel_bias.astype(jnp.float32)

    # ---- window grouping ----
    G = _pick_group(B_, N, max_rows=max_rows)
    n_groups = B_ // G
    GN = G * N

    # ---- kernel inputs / specs ----
    x_in = x.reshape(n_groups, GN, C).astype(compute_dtype)

    in_specs = [
        pl.BlockSpec((1, GN, C), lambda b: (b, 0, 0)),          # x (G windows)
        pl.BlockSpec((C, 3 * C), lambda b: (0, 0)),             # W_qkv (resident)
        pl.BlockSpec((1, 3 * C), lambda b: (0, 0)),             # b_qkv (resident)
        pl.BlockSpec((H, N, N), lambda b: (0, 0, 0)),           # rel bias (resident)
    ]
    inputs = [x_in, w_qkv, b_qkv, rel_bias]

    has_mask = mask is not None
    if has_mask:
        nW = mask.shape[0]
        assert B_ % nW == 0
        # window w uses mask[w % nW]; group g covers windows [g*G, (g+1)*G), so
        # there are P = nW / gcd(G, nW) distinct per-group patterns, selected
        # with block index (g % P).  Per-step mask traffic is G*N*N (no H factor).
        P = nW // math.gcd(G, nW)
        idx = (np.arange(P)[:, None] * G + np.arange(G)[None, :]) % nW  # (P, G)
        mask_groups = jnp.asarray(mask, jnp.float32)[idx]               # (P, G, N, N)
        in_specs.append(pl.BlockSpec((1, G, N, N), lambda b: (b % P, 0, 0, 0)))
        inputs.append(mask_groups)

    in_specs += [
        pl.BlockSpec((C, C), lambda b: (0, 0)),                 # W_proj (resident)
        pl.BlockSpec((1, C), lambda b: (0, 0)),                 # b_proj (resident)
    ]
    inputs += [w_proj, b_proj]

    kernel = functools.partial(_window_attention_kernel, num_heads=H,
                               has_mask=has_mask,
                               approx_recip=approx_softmax_recip)

    out = pl.pallas_call(
        kernel,
        out_shape=jax.ShapeDtypeStruct((n_groups, GN, C), orig_dtype),
        grid=(n_groups,),
        in_specs=in_specs,
        out_specs=pl.BlockSpec((1, GN, C), lambda b: (b, 0, 0)),
        scratch_shapes=[pltpu.VMEM((GN, C), jnp.float32)],      # per-head output acc
        compiler_params=pltpu.CompilerParams(
            dimension_semantics=("parallel",),
            vmem_limit_bytes=64 * 1024 * 1024),
    )(*inputs)

    return out.reshape(B_, N, C)


def window_attention_ref(x, params, num_heads, mask=None):
    """Pure-JAX reference mirroring the PyTorch WindowAttention.forward exactly."""
    B_, N, C = x.shape
    hd = C // num_heads
    scale = hd ** (-0.5)

    qkv = x @ params["w_qkv"] + params["b_qkv"]                        # (B_, N, 3C)
    qkv = qkv.reshape(B_, N, 3, num_heads, hd).transpose(2, 0, 3, 1, 4)
    q, k, v = qkv[0], qkv[1], qkv[2]                                   # (B_, H, N, hd)
    q = q * scale
    attn = jnp.einsum("bhnd,bhmd->bhnm", q, k)

    rel_bias = params["rpb_table"][params["rel_index"].reshape(-1)]
    rel_bias = rel_bias.reshape(N, N, num_heads).transpose(2, 0, 1)
    attn = attn + rel_bias[None]

    if mask is not None:
        nW = mask.shape[0]
        attn = attn.reshape(B_ // nW, nW, num_heads, N, N) + mask[None, :, None]
        attn = attn.reshape(B_, num_heads, N, N)

    attn = jax.nn.softmax(attn, axis=-1)
    out = jnp.einsum("bhnm,bhmd->bhnd", attn, v)
    out = out.transpose(0, 2, 1, 3).reshape(B_, N, C)
    return out @ params["w_proj"] + params["b_proj"]


def make_relative_position_index(window_size):
    Wh, Ww = window_size
    coords = np.stack(np.meshgrid(np.arange(Wh), np.arange(Ww), indexing="ij"))
    coords_flatten = coords.reshape(2, -1)
    rel = coords_flatten[:, :, None] - coords_flatten[:, None, :]
    rel = rel.transpose(1, 2, 0).copy()
    rel[:, :, 0] += Wh - 1
    rel[:, :, 1] += Ww - 1
    rel[:, :, 0] *= 2 * Wh - 1                     # matches the PyTorch module
    return jnp.asarray(rel.sum(-1), dtype=jnp.int32)                   # (Wh*Ww, Wh*Ww)


if __name__ == "__main__":
    def build_params(key, dim, window_size, num_heads):
        k_tab, k_wqkv, k_bqkv, k_wproj, k_bproj = jax.random.split(key, 5)
        return {
            "rpb_table": 0.2 * jax.random.truncated_normal(
                k_tab, -2.0, 2.0,
                ((2 * window_size[0] - 1) * (2 * window_size[1] - 1), num_heads),
                jnp.float32),
            "rel_index": make_relative_position_index(window_size),
            "w_qkv": 0.05 * jax.random.normal(k_wqkv, (dim, 3 * dim), jnp.float32),
            "b_qkv": 0.05 * jax.random.normal(k_bqkv, (3 * dim,), jnp.float32),
            "w_proj": 0.05 * jax.random.normal(k_wproj, (dim, dim), jnp.float32),
            "b_proj": 0.05 * jax.random.normal(k_bproj, (dim,), jnp.float32),
        }

    def make_test_mask(nW, N):
        # deterministic SW-MSA-style 0 / -100 masks with varying split points
        m = np.zeros((nW, N, N), np.float32)
        for w in range(nW):
            s = (w % 4) * (N // 4)
            if s > 0:
                m[w, :s, s:] = -100.0
                m[w, s:, :s] = -100.0
        return jnp.asarray(m)

    key = jax.random.PRNGKey(0)

    # (dim, window, heads, B, nW, max_rows):
    #  case 1: B_=8,  G=8  -> single 128-row group, rel-bias resident, P=1
    #  case 2: B_=24, G=24 -> single 384-row group (max_rows=512 default), P=1
    #  case 3: B_=24, G=12 -> 2 grid steps, P=2 distinct group-mask patterns
    cases = [
        (32, (4, 4), 4, 2, 4, 512),
        (32, (4, 4), 4, 3, 8, 512),
        (32, (4, 4), 4, 3, 8, 192),
    ]

    for dim, win, heads, B, nW, max_rows in cases:
        N = win[0] * win[1]
        B_ = B * nW
        kp, kx, key = jax.random.split(key, 3)
        params = build_params(kp, dim, win, heads)
        x = jax.random.normal(kx, (B_, N, dim), jnp.float32)
        mask = make_test_mask(nW, N)

        # masked (SW-MSA) path, f32 + exact reciprocal -> tight tolerance
        out = jax.block_until_ready(
            window_attention_pallas(x, params, heads, mask=mask,
                                    compute_dtype=jnp.float32,
                                    approx_softmax_recip=False,
                                    max_rows=max_rows))
        ref = window_attention_ref(x, params, heads, mask=mask)
        np.testing.assert_allclose(np.asarray(out), np.asarray(ref),
                                   atol=1e-4, rtol=1e-4)

        # no-mask (W-MSA) path, f32 + exact reciprocal -> tight tolerance
        out_nm = jax.block_until_ready(
            window_attention_pallas(x, params, heads, mask=None,
                                    compute_dtype=jnp.float32,
                                    approx_softmax_recip=False,
                                    max_rows=max_rows))
        ref_nm = window_attention_ref(x, params, heads, mask=None)
        np.testing.assert_allclose(np.asarray(out_nm), np.asarray(ref_nm),
                                   atol=1e-4, rtol=1e-4)

    # production defaults (bf16 matmuls, approx EUP reciprocal), both paths.
    out_bf16 = jax.block_until_ready(
        window_attention_pallas(x, params, heads, mask=mask))
    np.testing.assert_allclose(np.asarray(out_bf16), np.asarray(ref),
                               atol=2e-2, rtol=2e-2)
    out_bf16_nm = jax.block_until_ready(
        window_attention_pallas(x, params, heads, mask=None))
    np.testing.assert_allclose(np.asarray(out_bf16_nm), np.asarray(ref_nm),
                               atol=2e-2, rtol=2e-2)

    print("KERNEL_OK")
</pallas_src>

<mosaic_0001>
module attributes {stable_mosaic.version = 11 : i64} {
  func.func @_window_attention_kernel(%arg0: i32, %arg1: memref<1x128x32xf32, #tpu.memory_space<vmem>>, %arg2: memref<32x96xf32, #tpu.memory_space<vmem>>, %arg3: memref<1x96xf32, #tpu.memory_space<vmem>>, %arg4: memref<4x16x16xf32, #tpu.memory_space<vmem>>, %arg5: memref<1x8x16x16xf32, #tpu.memory_space<vmem>>, %arg6: memref<32x32xf32, #tpu.memory_space<vmem>>, %arg7: memref<1x32xf32, #tpu.memory_space<vmem>>, %arg8: memref<1x128x32xf32, #tpu.memory_space<vmem>>, %arg9: memref<128x32xf32, #tpu.memory_space<vmem>>) attributes {dimension_semantics = [#tpu.dimension_semantics<parallel>], iteration_bounds = array<i64: 1>, scalar_prefetch = 0 : i64, scratch_operands = 1 : i64, tpu.core_type = #tpu.core_type<tc>, window_params = [{transform_indices = @transform_0, window_bounds = array<i64: 1, 128, 32>}, {pipeline_mode = #tpu.pipeline_mode<synchronous>, transform_indices = @transform_1, window_bounds = array<i64: 32, 96>}, {pipeline_mode = #tpu.pipeline_mode<synchronous>, transform_indices = @transform_2, window_bounds = array<i64: 1, 96>}, {pipeline_mode = #tpu.pipeline_mode<synchronous>, transform_indices = @transform_3, window_bounds = array<i64: 4, 16, 16>}, {transform_indices = @transform_4, window_bounds = array<i64: 1, 8, 16, 16>}, {pipeline_mode = #tpu.pipeline_mode<synchronous>, transform_indices = @transform_5, window_bounds = array<i64: 32, 32>}, {pipeline_mode = #tpu.pipeline_mode<synchronous>, transform_indices = @transform_6, window_bounds = array<i64: 1, 32>}, {transform_indices = @transform_7, window_bounds = array<i64: 1, 128, 32>}]} {
    %c0 = arith.constant 0 : index
    %c0_0 = arith.constant 0 : index
    %c0_1 = arith.constant 0 : index
    %0 = vector.load %arg1[%c0, %c0_0, %c0_1] : memref<1x128x32xf32, #tpu.memory_space<vmem>>, vector<1x128x32xf32>
    %1 = vector.shape_cast %0 : vector<1x128x32xf32> to vector<128x32xf32>
    %c0_2 = arith.constant 0 : index
    %c0_3 = arith.constant 0 : index
    %2 = vector.load %arg2[%c0_2, %c0_3] : memref<32x96xf32, #tpu.memory_space<vmem>>, vector<32x96xf32>
    %cst = arith.constant dense<0.000000e+00> : vector<128x96xf32>
    %3 = tpu.matmul %1, %2, %cst {dimension_numbers = #tpu.dot_dimension_numbers<[1], [0], [0], [1], [0, 0, 1, 1], [], []>} : vector<128x32xf32>, vector<32x96xf32>, vector<128x96xf32> -> vector<128x96xf32>
    %c0_4 = arith.constant 0 : index
    %c0_5 = arith.constant 0 : index
    %4 = vector.load %arg3[%c0_4, %c0_5] : memref<1x96xf32, #tpu.memory_space<vmem>>, vector<1x96xf32>
    %5 = vector.shape_cast %4 : vector<1x96xf32> to vector<96xf32>
    %6 = vector.shape_cast %5 : vector<96xf32> to vector<1x96xf32>
    %7 = vector.broadcast %6 : vector<1x96xf32> to vector<128x96xf32>
    %8 = arith.addf %3, %7 : vector<128x96xf32>
    %9 = vector.shape_cast %8 : vector<128x96xf32> to vector<8x16x96xf32>
    %10 = vector.extract_strided_slice %9 {offsets = [0, 0, 0], sizes = [8, 16, 24], strides = [1, 1, 1]} : vector<8x16x96xf32> to vector<8x16x24xf32>
    %11 = vector.extract_strided_slice %10 {offsets = [0, 0, 0], sizes = [8, 16, 8], strides = [1, 1, 1]} : vector<8x16x24xf32> to vector<8x16x8xf32>
    %12 = vector.extract_strided_slice %10 {offsets = [0, 0, 8], sizes = [8, 16, 8], strides = [1, 1, 1]} : vector<8x16x24xf32> to vector<8x16x8xf32>
    %13 = vector.extract_strided_slice %10 {offsets = [0, 0, 16], sizes = [8, 16, 8], strides = [1, 1, 1]} : vector<8x16x24xf32> to vector<8x16x8xf32>
    "tpu.trace_start"() <{level = 10 : i32, message = "gnd,gmd->gnm"}> : () -> ()
    %cst_6 = arith.constant dense<0.000000e+00> : vector<8x16x16xf32>
    %14 = tpu.matmul %11, %12, %cst_6 {dimension_numbers = #tpu.dot_dimension_numbers<[2], [2], [1], [1], [0, 0, 0, 1, 1, 1], [0], [0]>} : vector<8x16x8xf32>, vector<8x16x8xf32>, vector<8x16x16xf32> -> vector<8x16x16xf32>
    "tpu.trace_stop"() : () -> ()
    %c0_7 = arith.constant 0 : index
    %c0_8 = arith.constant 0 : index
    %c0_9 = arith.constant 0 : index
    %15 = vector.load %arg4[%c0_7, %c0_8, %c0_9] : memref<4x16x16xf32, #tpu.memory_space<vmem>>, vector<1x16x16xf32>
    %16 = vector.shape_cast %15 : vector<1x16x16xf32> to vector<16x16xf32>
    %17 = vector.shape_cast %16 : vector<16x16xf32> to vector<1x16x16xf32>
    %18 = vector.broadcast %17 : vector<1x16x16xf32> to vector<8x16x16xf32>
    %19 = arith.addf %14, %18 : vector<8x16x16xf32>
    %c0_10 = arith.constant 0 : index
    %c0_11 = arith.constant 0 : index
    %c0_12 = arith.constant 0 : index
    %c0_13 = arith.constant 0 : index
    %20 = vector.load %arg5[%c0_10, %c0_11, %c0_12, %c0_13] : memref<1x8x16x16xf32, #tpu.memory_space<vmem>>, vector<1x8x16x16xf32>
    %21 = vector.shape_cast %20 : vector<1x8x16x16xf32> to vector<8x16x16xf32>
    %22 = arith.addf %19, %21 : vector<8x16x16xf32>
    %cst_14 = arith.constant dense<0xFF800000> : vector<8x16xf32>
    %23 = vector.multi_reduction <maximumf>, %22, %cst_14 [2] : vector<8x16x16xf32> to vector<8x16xf32>
    %24 = vector.shape_cast %23 : vector<8x16xf32> to vector<8x16x1xf32>
    %25 = vector.broadcast %24 : vector<8x16x1xf32> to vector<8x16x16xf32>
    %26 = arith.subf %22, %25 : vector<8x16x16xf32>
    %27 = math.exp %26 : vector<8x16x16xf32>
    %cst_15 = arith.constant dense<0.000000e+00> : vector<8x16xf32>
    %28 = vector.multi_reduction <add>, %27, %cst_15 [2] : vector<8x16x16xf32> to vector<8x16xf32>
    %29 = vector.shape_cast %28 : vector<8x16xf32> to vector<8x16x1xf32>
    %30 = tpu.reciprocal %29 : vector<8x16x1xf32> -> vector<8x16x1xf32>
    %31 = vector.broadcast %30 : vector<8x16x1xf32> to vector<8x16x16xf32>
    %32 = arith.mulf %27, %31 : vector<8x16x16xf32>
    "tpu.trace_start"() <{level = 10 : i32, message = "gnm,gmd->gnd"}> : () -> ()
    %cst_16 = arith.constant dense<0.000000e+00> : vector<8x16x8xf32>
    %33 = tpu.matmul %32, %13, %cst_16 {dimension_numbers = #tpu.dot_dimension_numbers<[2], [1], [1], [2], [0, 0, 0, 1, 1, 2], [0], [0]>} : vector<8x16x16xf32>, vector<8x16x8xf32>, vector<8x16x8xf32> -> vector<8x16x8xf32>
    "tpu.trace_stop"() : () -> ()
    %34 = vector.shape_cast %33 : vector<8x16x8xf32> to vector<128x8xf32>
    %c0_17 = arith.constant 0 : index
    %c0_18 = arith.constant 0 : index
    %35 = vector.load %arg9[%c0_17, %c0_18] : memref<128x32xf32, #tpu.memory_space<vmem>>, vector<128x8xf32>
    tpu.vector_store %arg9[%c0_17, %c0_18], %34 {strides = array<i32>} : memref<128x32xf32, #tpu.memory_space<vmem>>, vector<128x8xf32>,
    %36 = vector.extract_strided_slice %9 {offsets = [0, 0, 24], sizes = [8, 16, 24], strides = [1, 1, 1]} : vector<8x16x96xf32> to vector<8x16x24xf32>
    %37 = vector.extract_strided_slice %36 {offsets = [0, 0, 0], sizes = [8, 16, 8], strides = [1, 1, 1]} : vector<8x16x24xf32> to vector<8x16x8xf32>
    %38 = vector.extract_strided_slice %36 {offsets = [0, 0, 8], sizes = [8, 16, 8], strides = [1, 1, 1]} : vector<8x16x24xf32> to vector<8x16x8xf32>
    %39 = vector.extract_strided_slice %36 {offsets = [0, 0, 16], sizes = [8, 16, 8], strides = [1, 1, 1]} : vector<8x16x24xf32> to vector<8x16x8xf32>
    "tpu.trace_start"() <{level = 10 : i32, message = "gnd,gmd->gnm"}> : () -> ()
    %cst_19 = arith.constant dense<0.000000e+00> : vector<8x16x16xf32>
    %40 = tpu.matmul %37, %38, %cst_19 {dimension_numbers = #tpu.dot_dimension_numbers<[2], [2], [1], [1], [0, 0, 0, 1, 1, 1], [0], [0]>} : vector<8x16x8xf32>, vector<8x16x8xf32>, vector<8x16x16xf32> -> vector<8x16x16xf32>
    "tpu.trace_stop"() : () -> ()
    %c1 = arith.constant 1 : index
    %c0_20 = arith.constant 0 : index
    %c0_21 = arith.constant 0 : index
    %41 = vector.load %arg4[%c1, %c0_20, %c0_21] : memref<4x16x16xf32, #tpu.memory_space<vmem>>, vector<1x16x16xf32>
    %42 = vector.shape_cast %41 : vector<1x16x16xf32> to vector<16x16xf32>
    %43 = vector.shape_cast %42 : vector<16x16xf32> to vector<1x16x16xf32>
    %44 = vector.broadcast %43 : vector<1x16x16xf32> to vector<8x16x16xf32>
    %45 = arith.addf %40, %44 : vector<8x16x16xf32>
    %c0_22 = arith.constant 0 : index
    %c0_23 = arith.constant 0 : index
    %c0_24 = arith.constant 0 : index
    %c0_25 = arith.constant 0 : index
    %46 = vector.load %arg5[%c0_22, %c0_23, %c0_24, %c0_25] : memref<1x8x16x16xf32, #tpu.memory_space<vmem>>, vector<1x8x16x16xf32>
    %47 = vector.shape_cast %46 : vector<1x8x16x16xf32> to vector<8x16x16xf32>
    %48 = arith.addf %45, %47 : vector<8x16x16xf32>
    %cst_26 = arith.constant dense<0xFF800000> : vector<8x16xf32>
    %49 = vector.multi_reduction <maximumf>, %48, %cst_26 [2] : vector<8x16x16xf32> to vector<8x16xf32>
    %50 = vector.shape_cast %49 : vector<8x16xf32> to vector<8x16x1xf32>
    %51 = vector.broadcast %50 : vector<8x16x1xf32> to vector<8x16x16xf32>
    %52 = arith.subf %48, %51 : vector<8x16x16xf32>
    %53 = math.exp %52 : vector<8x16x16xf32>
    %cst_27 = arith.constant dense<0.000000e+00> : vector<8x16xf32>
    %54 = vector.multi_reduction <add>, %53, %cst_27 [2] : vector<8x16x16xf32> to vector<8x16xf32>
    %55 = vector.shape_cast %54 : vector<8x16xf32> to vector<8x16x1xf32>
    %56 = tpu.reciprocal %55 : vector<8x16x1xf32> -> vector<8x16x1xf32>
    %57 = vector.broadcast %56 : vector<8x16x1xf32> to vector<8x16x16xf32>
    %58 = arith.mulf %53, %57 : vector<8x16x16xf32>
    "tpu.trace_start"() <{level = 10 : i32, message = "gnm,gmd->gnd"}> : () -> ()
    %cst_28 = arith.constant dense<0.000000e+00> : vector<8x16x8xf32>
    %59 = tpu.matmul %58, %39, %cst_28 {dimension_numbers = #tpu.dot_dimension_numbers<[2], [1], [1], [2], [0, 0, 0, 1, 1, 2], [0], [0]>} : vector<8x16x16xf32>, vector<8x16x8xf32>, vector<8x16x8xf32> -> vector<8x16x8xf32>
    "tpu.trace_stop"() : () -> ()
    %60 = vector.shape_cast %59 : vector<8x16x8xf32> to vector<128x8xf32>
    %c0_29 = arith.constant 0 : index
    %c8 = arith.constant 8 : index
    %61 = vector.load %arg9[%c0_29, %c8] : memref<128x32xf32, #tpu.memory_space<vmem>>, vector<128x8xf32>
    tpu.vector_store %arg9[%c0_29, %c8], %60 {strides = array<i32>} : memref<128x32xf32, #tpu.memory_space<vmem>>, vector<128x8xf32>,
    %62 = vector.extract_strided_slice %9 {offsets = [0, 0, 48], sizes = [8, 16, 24], strides = [1, 1, 1]} : vector<8x16x96xf32> to vector<8x16x24xf32>
    %63 = vector.extract_strided_slice %62 {offsets = [0, 0, 0], sizes = [8, 16, 8], strides = [1, 1, 1]} : vector<8x16x24xf32> to vector<8x16x8xf32>
    %64 = vector.extract_strided_slice %62 {offsets = [0, 0, 8], sizes = [8, 16, 8], strides = [1, 1, 1]} : vector<8x16x24xf32> to vector<8x16x8xf32>
    %65 = vector.extract_strided_slice %62 {offsets = [0, 0, 16], sizes = [8, 16, 8], strides = [1, 1, 1]} : vector<8x16x24xf32> to vector<8x16x8xf32>
    "tpu.trace_start"() <{level = 10 : i32, message = "gnd,gmd->gnm"}> : () -> ()
    %cst_30 = arith.constant dense<0.000000e+00> : vector<8x16x16xf32>
    %66 = tpu.matmul %63, %64, %cst_30 {dimension_numbers = #tpu.dot_dimension_numbers<[2], [2], [1], [1], [0, 0, 0, 1, 1, 1], [0], [0]>} : vector<8x16x8xf32>, vector<8x16x8xf32>, vector<8x16x16xf32> -> vector<8x16x16xf32>
    "tpu.trace_stop"() : () -> ()
    %c2 = arith.constant 2 : index
    %c0_31 = arith.constant 0 : index
    %c0_32 = arith.constant 0 : index
    %67 = vector.load %arg4[%c2, %c0_31, %c0_32] : memref<4x16x16xf32, #tpu.memory_space<vmem>>, vector<1x16x16xf32>
    %68 = vector.shape_cast %67 : vector<1x16x16xf32> to vector<16x16xf32>
    %69 = vector.shape_cast %68 : vector<16x16xf32> to vector<1x16x16xf32>
    %70 = vector.broadcast %69 : vector<1x16x16xf32> to vector<8x16x16xf32>
    %71 = arith.addf %66, %70 : vector<8x16x16xf32>
    %c0_33 = arith.constant 0 : index
    %c0_34 = arith.constant 0 : index
    %c0_35 = arith.constant 0 : index
    %c0_36 = arith.constant 0 : index
    %72 = vector.load %arg5[%c0_33, %c0_34, %c0_35, %c0_36] : memref<1x8x16x16xf32, #tpu.memory_space<vmem>>, vector<1x8x16x16xf32>
    %73 = vector.shape_cast %72 : vector<1x8x16x16xf32> to vector<8x16x16xf32>
    %74 = arith.addf %71, %73 : vector<8x16x16xf32>
    %cst_37 = arith.constant dense<0xFF800000> : vector<8x16xf32>
    %75 = vector.multi_reduction <maximumf>, %74, %cst_37 [2] : vector<8x16x16xf32> to vector<8x16xf32>
    %76 = vector.shape_cast %75 : vector<8x16xf32> to vector<8x16x1xf32>
    %77 = vector.broadcast %76 : vector<8x16x1xf32> to vector<8x16x16xf32>
    %78 = arith.subf %74, %77 : vector<8x16x16xf32>
    %79 = math.exp %78 : vector<8x16x16xf32>
    %cst_38 = arith.constant dense<0.000000e+00> : vector<8x16xf32>
    %80 = vector.multi_reduction <add>, %79, %cst_38 [2] : vector<8x16x16xf32> to vector<8x16xf32>
    %81 = vector.shape_cast %80 : vector<8x16xf32> to vector<8x16x1xf32>
    %82 = tpu.reciprocal %81 : vector<8x16x1xf32> -> vector<8x16x1xf32>
    %83 = vector.broadcast %82 : vector<8x16x1xf32> to vector<8x16x16xf32>
    %84 = arith.mulf %79, %83 : vector<8x16x16xf32>
    "tpu.trace_start"() <{level = 10 : i32, message = "gnm,gmd->gnd"}> : () -> ()
    %cst_39 = arith.constant dense<0.000000e+00> : vector<8x16x8xf32>
    %85 = tpu.matmul %84, %65, %cst_39 {dimension_numbers = #tpu.dot_dimension_numbers<[2], [1], [1], [2], [0, 0, 0, 1, 1, 2], [0], [0]>} : vector<8x16x16xf32>, vector<8x16x8xf32>, vector<8x16x8xf32> -> vector<8x16x8xf32>
    "tpu.trace_stop"() : () -> ()
    %86 = vector.shape_cast %85 : vector<8x16x8xf32> to vector<128x8xf32>
    %c0_40 = arith.constant 0 : index
    %c16 = arith.constant 16 : index
    %87 = vector.load %arg9[%c0_40, %c16] : memref<128x32xf32, #tpu.memory_space<vmem>>, vector<128x8xf32>
    tpu.vector_store %arg9[%c0_40, %c16], %86 {strides = array<i32>} : memref<128x32xf32, #tpu.memory_space<vmem>>, vector<128x8xf32>,
    %88 = vector.extract_strided_slice %9 {offsets = [0, 0, 72], sizes = [8, 16, 24], strides = [1, 1, 1]} : vector<8x16x96xf32> to vector<8x16x24xf32>
    %89 = vector.extract_strided_slice %88 {offsets = [0, 0, 0], sizes = [8, 16, 8], strides = [1, 1, 1]} : vector<8x16x24xf32> to vector<8x16x8xf32>
    %90 = vector.extract_strided_slice %88 {offsets = [0, 0, 8], sizes = [8, 16, 8], strides = [1, 1, 1]} : vector<8x16x24xf32> to vector<8x16x8xf32>
    %91 = vector.extract_strided_slice %88 {offsets = [0, 0, 16], sizes = [8, 16, 8], strides = [1, 1, 1]} : vector<8x16x24xf32> to vector<8x16x8xf32>
    "tpu.trace_start"() <{level = 10 : i32, message = "gnd,gmd->gnm"}> : () -> ()
    %cst_41 = arith.constant dense<0.000000e+00> : vector<8x16x16xf32>
    %92 = tpu.matmul %89, %90, %cst_41 {dimension_numbers = #tpu.dot_dimension_numbers<[2], [2], [1], [1], [0, 0, 0, 1, 1, 1], [0], [0]>} : vector<8x16x8xf32>, vector<8x16x8xf32>, vector<8x16x16xf32> -> vector<8x16x16xf32>
    "tpu.trace_stop"() : () -> ()
    %c3 = arith.constant 3 : index
    %c0_42 = arith.constant 0 : index
    %c0_43 = arith.constant 0 : index
    %93 = vector.load %arg4[%c3, %c0_42, %c0_43] : memref<4x16x16xf32, #tpu.memory_space<vmem>>, vector<1x16x16xf32>
    %94 = vector.shape_cast %93 : vector<1x16x16xf32> to vector<16x16xf32>
    %95 = vector.shape_cast %94 : vector<16x16xf32> to vector<1x16x16xf32>
    %96 = vector.broadcast %95 : vector<1x16x16xf32> to vector<8x16x16xf32>
    %97 = arith.addf %92, %96 : vector<8x16x16xf32>
    %c0_44 = arith.constant 0 : index
    %c0_45 = arith.constant 0 : index
    %c0_46 = arith.constant 0 : index
    %c0_47 = arith.constant 0 : index
    %98 = vector.load %arg5[%c0_44, %c0_45, %c0_46, %c0_47] : memref<1x8x16x16xf32, #tpu.memory_space<vmem>>, vector<1x8x16x16xf32>
    %99 = vector.shape_cast %98 : vector<1x8x16x16xf32> to vector<8x16x16xf32>
    %100 = arith.addf %97, %99 : vector<8x16x16xf32>
    %cst_48 = arith.constant dense<0xFF800000> : vector<8x16xf32>
    %101 = vector.multi_reduction <maximumf>, %100, %cst_48 [2] : vector<8x16x16xf32> to vector<8x16xf32>
    %102 = vector.shape_cast %101 : vector<8x16xf32> to vector<8x16x1xf32>
    %103 = vector.broadcast %102 : vector<8x16x1xf32> to vector<8x16x16xf32>
    %104 = arith.subf %100, %103 : vector<8x16x16xf32>
    %105 = math.exp %104 : vector<8x16x16xf32>
    %cst_49 = arith.constant dense<0.000000e+00> : vector<8x16xf32>
    %106 = vector.multi_reduction <add>, %105, %cst_49 [2] : vector<8x16x16xf32> to vector<8x16xf32>
    %107 = vector.shape_cast %106 : vector<8x16xf32> to vector<8x16x1xf32>
    %108 = tpu.reciprocal %107 : vector<8x16x1xf32> -> vector<8x16x1xf32>
    %109 = vector.broadcast %108 : vector<8x16x1xf32> to vector<8x16x16xf32>
    %110 = arith.mulf %105, %109 : vector<8x16x16xf32>
    "tpu.trace_start"() <{level = 10 : i32, message = "gnm,gmd->gnd"}> : () -> ()
    %cst_50 = arith.constant dense<0.000000e+00> : vector<8x16x8xf32>
    %111 = tpu.matmul %110, %91, %cst_50 {dimension_numbers = #tpu.dot_dimension_numbers<[2], [1], [1], [2], [0, 0, 0, 1, 1, 2], [0], [0]>} : vector<8x16x16xf32>, vector<8x16x8xf32>, vector<8x16x8xf32> -> vector<8x16x8xf32>
    "tpu.trace_stop"() : () -> ()
    %112 = vector.shape_cast %111 : vector<8x16x8xf32> to vector<128x8xf32>
    %c0_51 = arith.constant 0 : index
    %c24 = arith.constant 24 : index
    %113 = vector.load %arg9[%c0_51, %c24] : memref<128x32xf32, #tpu.memory_space<vmem>>, vector<128x8xf32>
    tpu.vector_store %arg9[%c0_51, %c24], %112 {strides = array<i32>} : memref<128x32xf32, #tpu.memory_space<vmem>>, vector<128x8xf32>,
    %c0_52 = arith.constant 0 : index
    %c0_53 = arith.constant 0 : index
    %114 = vector.load %arg9[%c0_52, %c0_53] : memref<128x32xf32, #tpu.memory_space<vmem>>, vector<128x32xf32>
    %c0_54 = arith.constant 0 : index
    %c0_55 = arith.constant 0 : index
    %115 = vector.load %arg6[%c0_54, %c0_55] : memref<32x32xf32, #tpu.memory_space<vmem>>, vector<32x32xf32>
    %cst_56 = arith.constant dense<0.000000e+00> : vector<128x32xf32>
    %116 = tpu.matmul %114, %115, %cst_56 {dimension_numbers = #tpu.dot_dimension_numbers<[1], [0], [0], [1], [0, 0, 1, 1], [], []>} : vector<128x32xf32>, vector<32x32xf32>, vector<128x32xf32> -> vector<128x32xf32>
    %c0_57 = arith.constant 0 : index
    %c0_58 = arith.constant 0 : index
    %117 = vector.load %arg7[%c0_57, %c0_58] : memref<1x32xf32, #tpu.memory_space<vmem>>, vector<1x32xf32>
    %118 = vector.shape_cast %117 : vector<1x32xf32> to vector<32xf32>
    %119 = vector.shape_cast %118 : vector<32xf32> to vector<1x32xf32>
    %120 = vector.broadcast %119 : vector<1x32xf32> to vector<128x32xf32>
    %121 = arith.addf %116, %120 : vector<128x32xf32>
    %c0_59 = arith.constant 0 : index
    %c0_60 = arith.constant 0 : index
    %c0_61 = arith.constant 0 : index
    %122 = vector.load %arg8[%c0_59, %c0_60, %c0_61] : memref<1x128x32xf32, #tpu.memory_space<vmem>>, vector<1x128x32xf32>
    %123 = vector.shape_cast %122 : vector<1x128x32xf32> to vector<128x32xf32>
    %124 = vector.shape_cast %121 : vector<128x32xf32> to vector<1x128x32xf32>
    tpu.vector_store %arg8[%c0_59, %c0_60, %c0_61], %124 {strides = array<i32>} : memref<1x128x32xf32, #tpu.memory_space<vmem>>, vector<1x128x32xf32>,
    return
  }
  func.func @transform_0(%arg0: i32) -> (i32, i32, i32) {
    %c0_i32 = arith.constant 0 : i32
    %c0_i32_0 = arith.constant 0 : i32
    %c0_i32_1 = arith.constant 0 : i32
    return %arg0, %c0_i32, %c0_i32_0 : i32, i32, i32
  }
  func.func @transform_1(%arg0: i32) -> (i32, i32) {
    %c0_i32 = arith.constant 0 : i32
    %c0_i32_0 = arith.constant 0 : i32
    %c0_i32_1 = arith.constant 0 : i32
    return %c0_i32, %c0_i32_0 : i32, i32
  }
  func.func @transform_2(%arg0: i32) -> (i32, i32) {
    %c0_i32 = arith.constant 0 : i32
    %c0_i32_0 = arith.constant 0 : i32
    %c0_i32_1 = arith.constant 0 : i32
    return %c0_i32, %c0_i32_0 : i32, i32
  }
  func.func @transform_3(%arg0: i32) -> (i32, i32, i32) {
    %c0_i32 = arith.constant 0 : i32
    %c0_i32_0 = arith.constant 0 : i32
    %c0_i32_1 = arith.constant 0 : i32
    %c0_i32_2 = arith.constant 0 : i32
    return %c0_i32, %c0_i32_0, %c0_i32_1 : i32, i32, i32
  }
  func.func @transform_4(%arg0: i32) -> (i32, i32, i32, i32) {
    %c1_i32 = arith.constant 1 : i32
    %c0_i32 = arith.constant 0 : i32
    %0 = arith.cmpi eq, %c1_i32, %c0_i32 : i32
    %c1_i32_0 = arith.constant 1 : i32
    %1 = arith.select %0, %c1_i32_0, %c1_i32 : i32
    %2 = arith.remsi %arg0, %1 : i32
    %c0_i32_1 = arith.constant 0 : i32
    %3 = arith.cmpi ne, %2, %c0_i32_1 : i32
    %c0_i32_2 = arith.constant 0 : i32
    %4 = arith.cmpi slt, %2, %c0_i32_2 : i32
    %c0_i32_3 = arith.constant 0 : i32
    %5 = arith.cmpi slt, %1, %c0_i32_3 : i32
    %6 = arith.xori %4, %5 : i1
    %7 = arith.andi %6, %3 : i1
    %8 = arith.addi %2, %1 : i32
    %9 = arith.select %7, %8, %2 : i32
    %c0_i32_4 = arith.constant 0 : i32
    %c0_i32_5 = arith.constant 0 : i32
    %c0_i32_6 = arith.constant 0 : i32
    %c0_i32_7 = arith.constant 0 : i32
    return %9, %c0_i32_4, %c0_i32_5, %c0_i32_6 : i32, i32, i32, i32
  }
  func.func @transform_5(%arg0: i32) -> (i32, i32) {
    %c0_i32 = arith.constant 0 : i32
    %c0_i32_0 = arith.constant 0 : i32
    %c0_i32_1 = arith.constant 0 : i32
    return %c0_i32, %c0_i32_0 : i32, i32
  }
  func.func @transform_6(%arg0: i32) -> (i32, i32) {
    %c0_i32 = arith.constant 0 : i32
    %c0_i32_0 = arith.constant 0 : i32
    %c0_i32_1 = arith.constant 0 : i32
    return %c0_i32, %c0_i32_0 : i32, i32
  }
  func.func @transform_7(%arg0: i32) -> (i32, i32, i32) {
    %c0_i32 = arith.constant 0 : i32
    %c0_i32_0 = arith.constant 0 : i32
    %c0_i32_1 = arith.constant 0 : i32
    return %arg0, %c0_i32, %c0_i32_0 : i32, i32, i32
  }
}

</mosaic_0001>

<llo_original>
// kernel: tpu_custom_call.1
$region0: #{tpu_custom_call.1}
  #allocation0 [shape = 'u32[]', space=smem, size = 0x4, offset = 0x4, fixed_abs, tag = 'smem constant byte address 0x4 - core index']
  #allocation1 [shape = 'u32[144,128]{1,0:T(1,128)}', space=vmem, size = 0x12000, scoped, tag = 'internal scratch']
  #allocation2 [shape = 'f32[128,32]{1,0:T(8,128)}', space=vmem, size = 0x10000, scoped, tag = 'scratch operand']
  %s0 = inlined_call_operand.hbm [shape: f32[1,128,32], index: 0, kind: input, shape index: {}]
  %s1 = inlined_call_operand.hbm [shape: f32[32,96], index: 1, kind: input, shape index: {}]
  %s2 = inlined_call_operand.hbm [shape: f32[1,96], index: 2, kind: input, shape index: {}]
  %s3 = inlined_call_operand.hbm [shape: f32[4,16,16], index: 3, kind: input, shape index: {}]
  %s4 = inlined_call_operand.hbm [shape: f32[1,8,16,16], index: 4, kind: input, shape index: {}]
  %s5 = inlined_call_operand.hbm [shape: f32[32,32], index: 5, kind: input, shape index: {}]
  %s6 = inlined_call_operand.hbm [shape: f32[1,32], index: 6, kind: input, shape index: {}]
  %s7 = inlined_call_operand.hbm [shape: f32[1,128,32], index: 7, kind: output, shape index: {}]
  %s8 = sld [smem:[#allocation0]]
  $region66: #{tpu_custom_call.1} parent=0
    _
  %s10 = ssub.s32 1, %s8
  %s11 = scalar_select 0, %s10, %s8
  $region1: #{tpu_custom_call.1} parent=0
    #allocation3 [shape = 'u8[65536]{0}', space=vmem, size = 0x10000, scoped, tag = 'input window, operand 0, single buffered']
    #allocation4 [shape = 's32[1]{0}', space=sflag, size = 0x4, scoped, tag = 'scoped memory for tpu_custom_call.1']
    #allocation5 [shape = 's32[1]{0}', space=sflag, size = 0x4, scoped, tag = 'scoped memory for tpu_custom_call.1']
    #allocation6 [shape = 'u8[16384]{0}', space=vmem, size = 0x4000, scoped, tag = 'input window, operand 1, single buffered']
    #allocation7 [shape = 's32[1]{0}', space=sflag, size = 0x4, scoped, tag = 'scoped memory for tpu_custom_call.1']
    #allocation8 [shape = 'u8[512]{0}', space=vmem, size = 0x400, scoped, tag = 'input window, operand 2, single buffered']
    #allocation9 [shape = 'u8[32768]{0}', space=vmem, size = 0x8000, scoped, tag = 'input window, operand 3, single buffered']
    #allocation10 [shape = 's32[1]{0}', space=sflag, size = 0x4, scoped, tag = 'scoped memory for tpu_custom_call.1']
    #allocation11 [shape = 'u8[65536]{0}', space=vmem, size = 0x10000, scoped, tag = 'input window, operand 4, single buffered']
    #allocation12 [shape = 'u8[16384]{0}', space=vmem, size = 0x4000, scoped, tag = 'input window, operand 5, single buffered']
    #allocation13 [shape = 's32[1]{0}', space=sflag, size = 0x4, scoped, tag = 'scoped memory for tpu_custom_call.1']
    #allocation14 [shape = 'u8[512]{0}', space=vmem, size = 0x400, scoped, tag = 'input window, operand 6, single buffered']
    #allocation15 [shape = 'u8[65536]{0}', space=vmem, size = 0x10000, scoped, tag = 'output window, operand 0, single buffered']
    %12 = vsyncpa [#allocation4], 0
    %13 = vsyncpa [#allocation7], 0
    %14 = vsyncpa [#allocation10], 0
    %15 = vsyncpa [#allocation13], 0
    %16 = vsyncpa [#allocation5], 0
    // Predicated region
    $region2: #{tpu_custom_call.1} parent=1 // pred_check
      _
    $region3: #{tpu_custom_call.1} parent=1 // pred_check_branch
      %18 = sbr.rel (0) target = $region5
    $region4: #{tpu_custom_call.1} parent=1 // pred_region
      %s20 = ssub.s32 2048, 2048
      %21 = vsyncadd [#allocation4], %s20
      %s22 = sshll.u32 [#allocation3], 4
      %s23 = int_to_ptr.vmem [resolvable:$true] %s22
      %28 = dma.hbm_to_vmem [thread:$0]  %s0, 2048, %s23, [#allocation4], 128, 128, 8
    $region5: #{tpu_custom_call.1} parent=1 // pred_fallthru
      _
    // Predicated region
    $region6: #{tpu_custom_call.1} parent=1 // pred_check
      _
    $region7: #{tpu_custom_call.1} parent=1 // pred_check_branch
      %30 = sbr.rel (0) target = $region9
    $region8: #{tpu_custom_call.1} parent=1 // pred_region
      %s32 = ssub.s32 512, 512
      %33 = vsyncadd [#allocation7], %s32
      %s34 = sshll.u32 [#allocation6], 4
      %s35 = int_to_ptr.vmem [resolvable:$true] %s34
      %40 = dma.hbm_to_vmem [thread:$0]  %s1, 512, %s35, [#allocation7], 128, 128, 8
    $region9: #{tpu_custom_call.1} parent=1 // pred_fallthru
      _
    // Predicated region
    $region10: #{tpu_custom_call.1} parent=1 // pred_check
      _
    $region11: #{tpu_custom_call.1} parent=1 // pred_check_branch
      %42 = sbr.rel (0) target = $region13
    $region12: #{tpu_custom_call.1} parent=1 // pred_region
      %s44 = ssub.s32 16, 16
      %45 = vsyncadd [#allocation7], %s44
      %s47 = sshll.u32 [#allocation8], 4
      %s48 = int_to_ptr.vmem [resolvable:$true] %s47
      %50 = dma.hbm_to_vmem [thread:$0]  %s2, 16, %s48, [#allocation7]
    $region13: #{tpu_custom_call.1} parent=1 // pred_fallthru
      _
    // Predicated region
    $region14: #{tpu_custom_call.1} parent=1 // pred_check
      _
    $region15: #{tpu_custom_call.1} parent=1 // pred_check_branch
      %52 = sbr.rel (0) target = $region17
    $region16: #{tpu_custom_call.1} parent=1 // pred_region
      %s54 = ssub.s32 1024, 1024
      %55 = vsyncadd [#allocation10], %s54
      %s56 = sshll.u32 [#allocation9], 4
      %s57 = int_to_ptr.vmem [resolvable:$true] %s56
      %62 = dma.hbm_to_vmem [thread:$0]  %s3, 1024, %s57, [#allocation10], 128, 128, 8
    $region17: #{tpu_custom_call.1} parent=1 // pred_fallthru
      _
    // Predicated region
    $region18: #{tpu_custom_call.1} parent=1 // pred_check
      _
    $region19: #{tpu_custom_call.1} parent=1 // pred_check_branch
      %64 = sbr.rel (0) target = $region21
    $region20: #{tpu_custom_call.1} parent=1 // pred_region
      %s66 = ssub.s32 2048, 2048
      %67 = vsyncadd [#allocation10], %s66
      %s68 = sshll.u32 [#allocation11], 4
      %s69 = int_to_ptr.vmem [resolvable:$true] %s68
      %74 = dma.hbm_to_vmem [thread:$0]  %s4, 2048, %s69, [#allocation10], 128, 128, 8
    $region21: #{tpu_custom_call.1} parent=1 // pred_fallthru
      _
    // Predicated region
    $region22: #{tpu_custom_call.1} parent=1 // pred_check
      _
    $region23: #{tpu_custom_call.1} parent=1 // pred_check_branch
      %76 = sbr.rel (0) target = $region25
    $region24: #{tpu_custom_call.1} parent=1 // pred_region
      %s78 = ssub.s32 512, 512
      %79 = vsyncadd [#allocation13], %s78
      %s80 = sshll.u32 [#allocation12], 4
      %s81 = int_to_ptr.vmem [resolvable:$true] %s80
      %86 = dma.hbm_to_vmem [thread:$0]  %s5, 512, %s81, [#allocation13], 128, 128, 8
    $region25: #{tpu_custom_call.1} parent=1 // pred_fallthru
      _
    // Predicated region
    $region26: #{tpu_custom_call.1} parent=1 // pred_check
      _
    $region27: #{tpu_custom_call.1} parent=1 // pred_check_branch
      %88 = sbr.rel (0) target = $region29
    $region28: #{tpu_custom_call.1} parent=1 // pred_region
      %s90 = ssub.s32 16, 16
      %91 = vsyncadd [#allocation13], %s90
      %s93 = sshll.u32 [#allocation14], 4
      %s94 = int_to_ptr.vmem [resolvable:$true] %s93
      %96 = dma.hbm_to_vmem [thread:$0]  %s6, 16, %s94, [#allocation13]
    $region29: #{tpu_custom_call.1} parent=1 // pred_fallthru
      _
    // Predicated region
    $region30: #{tpu_custom_call.1} parent=1 // pred_check
      _
    $region31: #{tpu_custom_call.1} parent=1 // pred_check_branch
      %98 = sbr.rel (0) target = $region33
    $region32: #{tpu_custom_call.1} parent=1 // pred_region
      %99 = dma.done [#allocation4], 2048
    $region33: #{tpu_custom_call.1} parent=1 // pred_fallthru
      _
    // Predicated region
    $region34: #{tpu_custom_call.1} parent=1 // pred_check
      _
    $region35: #{tpu_custom_call.1} parent=1 // pred_check_branch
      %101 = sbr.rel (0) target = $region37
    $region36: #{tpu_custom_call.1} parent=1 // pred_region
      %102 = dma.done [#allocation7], 512
    $region37: #{tpu_custom_call.1} parent=1 // pred_fallthru
      _
    // Predicated region
    $region38: #{tpu_custom_call.1} parent=1 // pred_check
      _
    $region39: #{tpu_custom_call.1} parent=1 // pred_check_branch
      %104 = sbr.rel (0) target = $region41
    $region40: #{tpu_custom_call.1} parent=1 // pred_region
      %105 = dma.done [#allocation7], 16
    $region41: #{tpu_custom_call.1} parent=1 // pred_fallthru
      _
    // Predicated region
    $region42: #{tpu_custom_call.1} parent=1 // pred_check
      _
    $region43: #{tpu_custom_call.1} parent=1 // pred_check_branch
      %107 = sbr.rel (0) target = $region45
    $region44: #{tpu_custom_call.1} parent=1 // pred_region
      %108 = dma.done [#allocation10], 1024
    $region45: #{tpu_custom_call.1} parent=1 // pred_fallthru
      _
    // Predicated region
    $region46: #{tpu_custom_call.1} parent=1 // pred_check
      _
    $region47: #{tpu_custom_call.1} parent=1 // pred_check_branch
      %110 = sbr.rel (0) target = $region49
    $region48: #{tpu_custom_call.1} parent=1 // pred_region
      %111 = dma.done [#allocation10], 2048
    $region49: #{tpu_custom_call.1} parent=1 // pred_fallthru
      _
    // Predicated region
    $region50: #{tpu_custom_call.1} parent=1 // pred_check
      _
    $region51: #{tpu_custom_call.1} parent=1 // pred_check_branch
      %113 = sbr.rel (0) target = $region53
    $region52: #{tpu_custom_call.1} parent=1 // pred_region
      %114 = dma.done [#allocation13], 512
    $region53: #{tpu_custom_call.1} parent=1 // pred_fallthru
      _
    // Predicated region
    $region54: #{tpu_custom_call.1} parent=1 // pred_check
      _
    $region55: #{tpu_custom_call.1} parent=1 // pred_check_branch
      %116 = sbr.rel (0) target = $region57
    $region56: #{tpu_custom_call.1} parent=1 // pred_region
      %117 = dma.done [#allocation13], 16
    $region57: #{tpu_custom_call.1} parent=1 // pred_fallthru
      _
    %v118 = vld [vmem:[#allocation3] sm:$0xff]
    %v119 = vld [vmem:[#allocation3 + $0x8] sm:$0xff]
    %v120 = vld [vmem:[#allocation3 + $0x10] sm:$0xff]
    %v121 = vld [vmem:[#allocation3 + $0x18] sm:$0xff]
    %v122 = vld [vmem:[#allocation3 + $0x20] sm:$0xff]
    %v123 = vld [vmem:[#allocation3 + $0x28] sm:$0xff]
    %v124 = vld [vmem:[#allocation3 + $0x30] sm:$0xff]
    %v125 = vld [vmem:[#allocation3 + $0x38] sm:$0xff]
    %v126 = vld [vmem:[#allocation3 + $0x40] sm:$0xff]
    %v127 = vld [vmem:[#allocation3 + $0x48] sm:$0xff]
    %v128 = vld [vmem:[#allocation3 + $0x50] sm:$0xff]
    %v129 = vld [vmem:[#allocation3 + $0x58] sm:$0xff]
    %v130 = vld [vmem:[#allocation3 + $0x60] sm:$0xff]
    %v131 = vld [vmem:[#allocation3 + $0x68] sm:$0xff]
    %v132 = vld [vmem:[#allocation3 + $0x70] sm:$0xff]
    %v133 = vld [vmem:[#allocation3 + $0x78] sm:$0xff]
    %v134 = vld [vmem:[#allocation6] sm:$0xff]
    %v135 = vld [vmem:[#allocation6 + $0x8] sm:$0xff]
    %v136 = vld [vmem:[#allocation6 + $0x10] sm:$0xff]
    %v137 = vld [vmem:[#allocation6 + $0x18] sm:$0xff]
    %v138 = vld [vmem:[#allocation8] sm:$0x1]
    %v140 = vlaneseq
    %v141 = vshrl.u32 %v140, 7
    %v142 = vsub.s32 0, %v141
    %v143 = vrot.slane %v138, %v142
    %vm145 = vcmask 261120
    %v147 = vsel %vm145, %v118, 0
    %v150 = vsel %vm145, %v119, 0
    %v153 = vsel %vm145, %v120, 0
    %v156 = vsel %vm145, %v121, 0
    %v159 = vsel %vm145, %v122, 0
    %v162 = vsel %vm145, %v123, 0
    %v165 = vsel %vm145, %v124, 0
    %v168 = vsel %vm145, %v125, 0
    %v171 = vsel %vm145, %v126, 0
    %v174 = vsel %vm145, %v127, 0
    %v177 = vsel %vm145, %v128, 0
    %v180 = vsel %vm145, %v129, 0
    %v183 = vsel %vm145, %v130, 0
    %v186 = vsel %vm145, %v131, 0
    %v189 = vsel %vm145, %v132, 0
    %v192 = vsel %vm145, %v133, 0
    %194 = vmatprep.subr.mxu0 0.0
    %195 = vmatpush1.msra.mxu0 %v134
    %196 = vmatprep.subr.mxu0 0.0
    %197 = vmatpush1.msra.mxu0 %v135
    %198 = vmatprep.subr.mxu0 0.0
    %199 = vmatpush1.msra.mxu0 %v136
    %200 = vmatprep.subr.mxu0 0.0
    %201 = vmatpush1.msra.mxu0 %v137
    %202 = vmatprep.subr.mxu0 0.0
    %203 = vmatpush1.msra.mxu0 0.0
    %204 = vmatprep.subr.mxu0 0.0
    %205 = vmatpush1.msra.mxu0 0.0
    %206 = vmatprep.subr.mxu0 0.0
    %207 = vmatpush1.msra.mxu0 0.0
    %208 = vmatprep.subr.mxu0 0.0
    %209 = vmatpush1.msra.mxu0 0.0
    %210 = vmatprep.subr.mxu0 0.0
    %211 = vmatpush1.msra.mxu0 0.0
    %212 = vmatprep.subr.mxu0 0.0
    %213 = vmatpush1.msra.mxu0 0.0
    %214 = vmatprep.subr.mxu0 0.0
    %215 = vmatpush1.msra.mxu0 0.0
    %216 = vmatprep.subr.mxu0 0.0
    %217 = vmatpush1.msra.mxu0 0.0
    %218 = vmatprep.subr.mxu0 0.0
    %219 = vmatpush1.msra.mxu0 0.0
    %220 = vmatprep.subr.mxu0 0.0
    %221 = vmatpush1.msra.mxu0 0.0
    %222 = vmatprep.subr.mxu0 0.0
    %223 = vmatpush1.msra.mxu0 0.0
    %224 = vmatprep.subr.mxu0 0.0
    %225 = vmatpush1.msra.mxu0 0.0
    %226 = vmatprep.subr.mxu0 0.0
    %227 = vmatpush1.msra.mxu0 0.0
    %228 = vmatprep.subr.mxu0 0.0
    %229 = vmatpush1.msra.mxu0 0.0
    %230 = vmatprep.subr.mxu0 0.0
    %231 = vmatpush1.msra.mxu0 0.0
    %232 = vmatprep.subr.mxu0 0.0
    %233 = vmatpush1.msra.mxu0 0.0
    %234 = vmatprep.subr.mxu0 0.0
    %235 = vmatpush1.msra.mxu0 0.0
    %236 = vmatprep.subr.mxu0 0.0
    %237 = vmatpush1.msra.mxu0 0.0
    %238 = vmatprep.subr.mxu0 0.0
    %239 = vmatpush1.msra.mxu0 0.0
    %240 = vmatprep.subr.mxu0 0.0
    %241 = vmatpush1.msra.mxu0 0.0
    %242 = vmatprep.subr.mxu0 0.0
    %243 = vmatpush1.msra.mxu0 0.0
    %244 = vmatprep.subr.mxu0 0.0
    %245 = vmatpush1.msra.mxu0 0.0
    %246 = vmatprep.subr.mxu0 0.0
    %247 = vmatpush1.msra.mxu0 0.0
    %248 = vmatprep.subr.mxu0 0.0
    %249 = vmatpush1.msra.mxu0 0.0
    %250 = vmatprep.subr.mxu0 0.0
    %251 = vmatpush1.msra.mxu0 0.0
    %252 = vmatprep.subr.mxu0 0.0
    %253 = vmatpush1.msra.mxu0 0.0
    %254 = vmatprep.subr.mxu0 0.0
    %255 = vmatpush1.msra.mxu0 0.0
    %256 = vmatprep.subr.mxu0 0.0
    %257 = vmatpush1.msra.mxu0 0.0
    %258 = vmatprep.mubr.f32.mxu0 0.0
    %259 = vmatmul.mubr.f32.gmra.mrb[0].mxu0 %v147
    %v260 = vpop.f32.mrb[0].mxu0
    %v261 = vadd.f32 %v143, %v260
    %v262 = vpop.f32.mrb[0].mxu0
    %263 = vmatprep.mubr.f32.mxu0 0.0
    %264 = vmatmul.mubr.f32.gmra.mrb[0].mxu0 %v150
    %v265 = vpop.f32.mrb[0].mxu0
    %v266 = vadd.f32 %v143, %v265
    %v267 = vpop.f32.mrb[0].mxu0
    %268 = vmatprep.mubr.f32.mxu0 0.0
    %269 = vmatmul.mubr.f32.gmra.mrb[0].mxu0 %v153
    %v270 = vpop.f32.mrb[0].mxu0
    %v271 = vadd.f32 %v143, %v270
    %v272 = vpop.f32.mrb[0].mxu0
    %273 = vmatprep.mubr.f32.mxu0 0.0
    %274 = vmatmul.mubr.f32.gmra.mrb[0].mxu0 %v156
    %v275 = vpop.f32.mrb[0].mxu0
    %v276 = vadd.f32 %v143, %v275
    %v277 = vpop.f32.mrb[0].mxu0
    %278 = vmatprep.mubr.f32.mxu0 0.0
    %279 = vmatmul.mubr.f32.gmra.mrb[0].mxu0 %v159
    %v280 = vpop.f32.mrb[0].mxu0
    %v281 = vadd.f32 %v143, %v280
    %v282 = vpop.f32.mrb[0].mxu0
    %283 = vmatprep.mubr.f32.mxu0 0.0
    %284 = vmatmul.mubr.f32.gmra.mrb[0].mxu0 %v162
    %v285 = vpop.f32.mrb[0].mxu0
    %v286 = vadd.f32 %v143, %v285
    %v287 = vpop.f32.mrb[0].mxu0
    %288 = vmatprep.mubr.f32.mxu0 0.0
    %289 = vmatmul.mubr.f32.gmra.mrb[0].mxu0 %v165
    %v290 = vpop.f32.mrb[0].mxu0
    %v291 = vadd.f32 %v143, %v290
    %v292 = vpop.f32.mrb[0].mxu0
    %293 = vmatprep.mubr.f32.mxu0 0.0
    %294 = vmatmul.mubr.f32.gmra.mrb[0].mxu0 %v168
    %v295 = vpop.f32.mrb[0].mxu0
    %v296 = vadd.f32 %v143, %v295
    %v297 = vpop.f32.mrb[0].mxu0
    %298 = vmatprep.mubr.f32.mxu0 0.0
    %299 = vmatmul.mubr.f32.gmra.mrb[0].mxu0 %v171
    %v300 = vpop.f32.mrb[0].mxu0
    %v301 = vadd.f32 %v143, %v300
    %v302 = vpop.f32.mrb[0].mxu0
    %303 = vmatprep.mubr.f32.mxu0 0.0
    %304 = vmatmul.mubr.f32.gmra.mrb[0].mxu0 %v174
    %v305 = vpop.f32.mrb[0].mxu0
    %v306 = vadd.f32 %v143, %v305
    %v307 = vpop.f32.mrb[0].mxu0
    %308 = vmatprep.mubr.f32.mxu0 0.0
    %309 = vmatmul.mubr.f32.gmra.mrb[0].mxu0 %v177
    %v310 = vpop.f32.mrb[0].mxu0
    %v311 = vadd.f32 %v143, %v310
    %v312 = vpop.f32.mrb[0].mxu0
    %313 = vmatprep.mubr.f32.mxu0 0.0
    %314 = vmatmul.mubr.f32.gmra.mrb[0].mxu0 %v180
    %v315 = vpop.f32.mrb[0].mxu0
    %v316 = vadd.f32 %v143, %v315
    %v317 = vpop.f32.mrb[0].mxu0
    %318 = vmatprep.mubr.f32.mxu0 0.0
    %319 = vmatmul.mubr.f32.gmra.mrb[0].mxu0 %v183
    %v320 = vpop.f32.mrb[0].mxu0
    %v321 = vadd.f32 %v143, %v320
    %v322 = vpop.f32.mrb[0].mxu0
    %323 = vmatprep.mubr.f32.mxu0 0.0
    %324 = vmatmul.mubr.f32.gmra.mrb[0].mxu0 %v186
    %v325 = vpop.f32.mrb[0].mxu0
    %v326 = vadd.f32 %v143, %v325
    %v327 = vpop.f32.mrb[0].mxu0
    %328 = vmatprep.mubr.f32.mxu0 0.0
    %329 = vmatmul.mubr.f32.gmra.mrb[0].mxu0 %v189
    %v330 = vpop.f32.mrb[0].mxu0
    %v331 = vadd.f32 %v143, %v330
    %v332 = vpop.f32.mrb[0].mxu0
    %333 = vmatprep.mubr.f32.mxu0 0.0
    %334 = vmatmul.mubr.f32.gmra.mrb[0].mxu0 %v192
    %v335 = vpop.f32.mrb[0].mxu0
    %v336 = vadd.f32 %v143, %v335
    %v337 = vpop.f32.mrb[0].mxu0
    %338 = vdwg.mxu0
    %v339 = vld [vmem:[#allocation9] sm:$0xff]
    %v340 = vld [vmem:[#allocation9 + $0x8] sm:$0xff]
    %343 = vrot.lane.b32.xlu0 %v261, 120
    %v344 = vpop.permute.xlu0 %343
    %345 = vrot.lane.b32.xlu0 %v266, 120
    %v346 = vpop.permute.xlu0 %345
    %vm347 = vcmask 64512
    %v348 = vsel %vm347, %v261, 0
    %v350 = vsel %vm347, %v266, 0
    %v352 = vsel %vm347, %v344, 0
    %v354 = vsel %vm347, %v346, 0
    %356 = vmatprep.subr.mxu0 0.0
    %357 = vmatpush1.xpose.msra.mxu0 %v352
    %358 = vmatprep.subr.mxu0 0.0
    %359 = vmatpush1.xpose.msra.mxu0 %v354
    %360 = vmatprep.subr.mxu0 0.0
    %361 = vmatpush1.xpose.msra.mxu0 0.0
    %362 = vmatprep.subr.mxu0 0.0
    %363 = vmatpush1.xpose.msra.mxu0 0.0
    %364 = vmatprep.subr.mxu0 0.0
    %365 = vmatpush1.xpose.msra.mxu0 0.0
    %366 = vmatprep.subr.mxu0 0.0
    %367 = vmatpush1.xpose.msra.mxu0 0.0
    %368 = vmatprep.subr.mxu0 0.0
    %369 = vmatpush1.xpose.msra.mxu0 0.0
    %370 = vmatprep.subr.mxu0 0.0
    %371 = vmatpush1.xpose.msra.mxu0 0.0
    %372 = vmatprep.subr.mxu0 0.0
    %373 = vmatpush1.xpose.msra.mxu0 0.0
    %374 = vmatprep.subr.mxu0 0.0
    %375 = vmatpush1.xpose.msra.mxu0 0.0
    %376 = vmatprep.subr.mxu0 0.0
    %377 = vmatpush1.xpose.msra.mxu0 0.0
    %378 = vmatprep.subr.mxu0 0.0
    %379 = vmatpush1.xpose.msra.mxu0 0.0
    %380 = vmatprep.subr.mxu0 0.0
    %381 = vmatpush1.xpose.msra.mxu0 0.0
    %382 = vmatprep.subr.mxu0 0.0
    %383 = vmatpush1.xpose.msra.mxu0 0.0
    %384 = vmatprep.subr.mxu0 0.0
    %385 = vmatpush1.xpose.msra.mxu0 0.0
    %386 = vmatprep.subr.mxu0 0.0
    %387 = vmatpush1.xpose.msra.mxu0 0.0
    %388 = vmatprep.subr.mxu0 0.0
    %389 = vmatpush1.xpose.msra.mxu0 0.0
    %390 = vmatprep.subr.mxu0 0.0
    %391 = vmatpush1.xpose.msra.mxu0 0.0
    %392 = vmatprep.subr.mxu0 0.0
    %393 = vmatpush1.xpose.msra.mxu0 0.0
    %394 = vmatprep.subr.mxu0 0.0
    %395 = vmatpush1.xpose.msra.mxu0 0.0
    %396 = vmatprep.subr.mxu0 0.0
    %397 = vmatpush1.xpose.msra.mxu0 0.0
    %398 = vmatprep.subr.mxu0 0.0
    %399 = vmatpush1.xpose.msra.mxu0 0.0
    %400 = vmatprep.subr.mxu0 0.0
    %401 = vmatpush1.xpose.msra.mxu0 0.0
    %402 = vmatprep.subr.mxu0 0.0
    %403 = vmatpush1.xpose.msra.mxu0 0.0
    %404 = vmatprep.subr.mxu0 0.0
    %405 = vmatpush1.xpose.msra.mxu0 0.0
    %406 = vmatprep.subr.mxu0 0.0
    %407 = vmatpush1.xpose.msra.mxu0 0.0
    %408 = vmatprep.subr.mxu0 0.0
    %409 = vmatpush1.xpose.msra.mxu0 0.0
    %410 = vmatprep.subr.mxu0 0.0
    %411 = vmatpush1.xpose.msra.mxu0 0.0
    %412 = vmatprep.subr.mxu0 0.0
    %413 = vmatpush1.xpose.msra.mxu0 0.0
    %414 = vmatprep.subr.mxu0 0.0
    %415 = vmatpush1.xpose.msra.mxu0 0.0
    %416 = vmatprep.subr.mxu0 0.0
    %417 = vmatpush1.xpose.msra.mxu0 0.0
    %418 = vmatprep.subr.mxu0 0.0
    %419 = vmatpush1.xpose.msra.mxu0 0.0
    %420 = vmatprep.mubr.f32.mxu0 0.0
    %421 = vmatmul.mubr.f32.gmra.mrb[0].mxu0 %v348
    %v422 = vpop.f32.mrb[0].mxu0
    %v423 = vadd.f32 %v339, %v422
    %v424 = vpop.f32.mrb[0].mxu0
    %425 = vmatprep.mubr.f32.mxu0 0.0
    %426 = vmatmul.mubr.f32.gmra.mrb[0].mxu0 %v350
    %v427 = vpop.f32.mrb[0].mxu0
    %v428 = vadd.f32 %v340, %v427
    %v429 = vpop.f32.mrb[0].mxu0
    %430 = vdwg.mxu0
    %433 = vrot.lane.b32.xlu0 %v271, 120
    %v434 = vpop.permute.xlu0 %433
    %435 = vrot.lane.b32.xlu0 %v276, 120
    %v436 = vpop.permute.xlu0 %435
    %v437 = vsel %vm347, %v271, 0
    %v439 = vsel %vm347, %v276, 0
    %v441 = vsel %vm347, %v434, 0
    %v443 = vsel %vm347, %v436, 0
    %445 = vmatprep.subr.mxu0 0.0
    %446 = vmatpush1.xpose.msra.mxu0 %v441
    %447 = vmatprep.subr.mxu0 0.0
    %448 = vmatpush1.xpose.msra.mxu0 %v443
    %449 = vmatprep.subr.mxu0 0.0
    %450 = vmatpush1.xpose.msra.mxu0 0.0
    %451 = vmatprep.subr.mxu0 0.0
    %452 = vmatpush1.xpose.msra.mxu0 0.0
    %453 = vmatprep.subr.mxu0 0.0
    %454 = vmatpush1.xpose.msra.mxu0 0.0
    %455 = vmatprep.subr.mxu0 0.0
    %456 = vmatpush1.xpose.msra.mxu0 0.0
    %457 = vmatprep.subr.mxu0 0.0
    %458 = vmatpush1.xpose.msra.mxu0 0.0
    %459 = vmatprep.subr.mxu0 0.0
    %460 = vmatpush1.xpose.msra.mxu0 0.0
    %461 = vmatprep.subr.mxu0 0.0
    %462 = vmatpush1.xpose.msra.mxu0 0.0
    %463 = vmatprep.subr.mxu0 0.0
    %464 = vmatpush1.xpose.msra.mxu0 0.0
    %465 = vmatprep.subr.mxu0 0.0
    %466 = vmatpush1.xpose.msra.mxu0 0.0
    %467 = vmatprep.subr.mxu0 0.0
    %468 = vmatpush1.xpose.msra.mxu0 0.0
    %469 = vmatprep.subr.mxu0 0.0
    %470 = vmatpush1.xpose.msra.mxu0 0.0
    %471 = vmatprep.subr.mxu0 0.0
    %472 = vmatpush1.xpose.msra.mxu0 0.0
    %473 = vmatprep.subr.mxu0 0.0
    %474 = vmatpush1.xpose.msra.mxu0 0.0
    %475 = vmatprep.subr.mxu0 0.0
    %476 = vmatpush1.xpose.msra.mxu0 0.0
    %477 = vmatprep.subr.mxu0 0.0
    %478 = vmatpush1.xpose.msra.mxu0 0.0
    %479 = vmatprep.subr.mxu0 0.0
    %480 = vmatpush1.xpose.msra.mxu0 0.0
    %481 = vmatprep.subr.mxu0 0.0
    %482 = vmatpush1.xpose.msra.mxu0 0.0
    %483 = vmatprep.subr.mxu0 0.0
    %484 = vmatpush1.xpose.msra.mxu0 0.0
    %485 = vmatprep.subr.mxu0 0.0
    %486 = vmatpush1.xpose.msra.mxu0 0.0
    %487 = vmatprep.subr.mxu0 0.0
    %488 = vmatpush1.xpose.msra.mxu0 0.0
    %489 = vmatprep.subr.mxu0 0.0
    %490 = vmatpush1.xpose.msra.mxu0 0.0
    %491 = vmatprep.subr.mxu0 0.0
    %492 = vmatpush1.xpose.msra.mxu0 0.0
    %493 = vmatprep.subr.mxu0 0.0
    %494 = vmatpush1.xpose.msra.mxu0 0.0
    %495 = vmatprep.subr.mxu0 0.0
    %496 = vmatpush1.xpose.msra.mxu0 0.0
    %497 = vmatprep.subr.mxu0 0.0
    %498 = vmatpush1.xpose.msra.mxu0 0.0
    %499 = vmatprep.subr.mxu0 0.0
    %500 = vmatpush1.xpose.msra.mxu0 0.0
    %501 = vmatprep.subr.mxu0 0.0
    %502 = vmatpush1.xpose.msra.mxu0 0.0
    %503 = vmatprep.subr.mxu0 0.0
    %504 = vmatpush1.xpose.msra.mxu0 0.0
    %505 = vmatprep.subr.mxu0 0.0
    %506 = vmatpush1.xpose.msra.mxu0 0.0
    %507 = vmatprep.subr.mxu0 0.0
    %508 = vmatpush1.xpose.msra.mxu0 0.0
    %509 = vmatprep.mubr.f32.mxu0 0.0
    %510 = vmatmul.mubr.f32.gmra.mrb[0].mxu0 %v437
    %v511 = vpop.f32.mrb[0].mxu0
    %v512 = vadd.f32 %v339, %v511
    %v513 = vpop.f32.mrb[0].mxu0
    %514 = vmatprep.mubr.f32.mxu0 0.0
    %515 = vmatmul.mubr.f32.gmra.mrb[0].mxu0 %v439
    %v516 = vpop.f32.mrb[0].mxu0
    %v517 = vadd.f32 %v340, %v516
    %v518 = vpop.f32.mrb[0].mxu0
    %519 = vdwg.mxu0
    %522 = vrot.lane.b32.xlu0 %v281, 120
    %v523 = vpop.permute.xlu0 %522
    %524 = vrot.lane.b32.xlu0 %v286, 120
    %v525 = vpop.permute.xlu0 %524
    %v526 = vsel %vm347, %v281, 0
    %v528 = vsel %vm347, %v286, 0
    %v530 = vsel %vm347, %v523, 0
    %v532 = vsel %vm347, %v525, 0
    %534 = vmatprep.subr.mxu0 0.0
    %535 = vmatpush1.xpose.msra.mxu0 %v530
    %536 = vmatprep.subr.mxu0 0.0
    %537 = vmatpush1.xpose.msra.mxu0 %v532
    %538 = vmatprep.subr.mxu0 0.0
    %539 = vmatpush1.xpose.msra.mxu0 0.0
    %540 = vmatprep.subr.mxu0 0.0
    %541 = vmatpush1.xpose.msra.mxu0 0.0
    %542 = vmatprep.subr.mxu0 0.0
    %543 = vmatpush1.xpose.msra.mxu0 0.0
    %544 = vmatprep.subr.mxu0 0.0
    %545 = vmatpush1.xpose.msra.mxu0 0.0
    %546 = vmatprep.subr.mxu0 0.0
    %547 = vmatpush1.xpose.msra.mxu0 0.0
    %548 = vmatprep.subr.mxu0 0.0
    %549 = vmatpush1.xpose.msra.mxu0 0.0
    %550 = vmatprep.subr.mxu0 0.0
    %551 = vmatpush1.xpose.msra.mxu0 0.0
    %552 = vmatprep.subr.mxu0 0.0
    %553 = vmatpush1.xpose.msra.mxu0 0.0
    %554 = vmatprep.subr.mxu0 0.0
    %555 = vmatpush1.xpose.msra.mxu0 0.0
    %556 = vmatprep.subr.mxu0 0.0
    %557 = vmatpush1.xpose.msra.mxu0 0.0
    %558 = vmatprep.subr.mxu0 0.0
    %559 = vmatpush1.xpose.msra.mxu0 0.0
    %560 = vmatprep.subr.mxu0 0.0
    %561 = vmatpush1.xpose.msra.mxu0 0.0
    %562 = vmatprep.subr.mxu0 0.0
    %563 = vmatpush1.xpose.msra.mxu0 0.0
    %564 = vmatprep.subr.mxu0 0.0
    %565 = vmatpush1.xpose.msra.mxu0 0.0
    %566 = vmatprep.subr.mxu0 0.0
    %567 = vmatpush1.xpose.msra.mxu0 0.0
    %568 = vmatprep.subr.mxu0 0.0
    %569 = vmatpush1.xpose.msra.mxu0 0.0
    %570 = vmatprep.subr.mxu0 0.0
    %571 = vmatpush1.xpose.msra.mxu0 0.0
    %572 = vmatprep.subr.mxu0 0.0
    %573 = vmatpush1.xpose.msra.mxu0 0.0
    %574 = vmatprep.subr.mxu0 0.0
    %575 = vmatpush1.xpose.msra.mxu0 0.0
    %576 = vmatprep.subr.mxu0 0.0
    %577 = vmatpush1.xpose.msra.mxu0 0.0
    %578 = vmatprep.subr.mxu0 0.0
    %579 = vmatpush1.xpose.msra.mxu0 0.0
    %580 = vmatprep.subr.mxu0 0.0
    %581 = vmatpush1.xpose.msra.mxu0 0.0
    %582 = vmatprep.subr.mxu0 0.0
    %583 = vmatpush1.xpose.msra.mxu0 0.0
    %584 = vmatprep.subr.mxu0 0.0
    %585 = vmatpush1.xpose.msra.mxu0 0.0
    %586 = vmatprep.subr.mxu0 0.0
    %587 = vmatpush1.xpose.msra.mxu0 0.0
    %588 = vmatprep.subr.mxu0 0.0
    %589 = vmatpush1.xpose.msra.mxu0 0.0
    %590 = vmatprep.subr.mxu0 0.0
    %591 = vmatpush1.xpose.msra.mxu0 0.0
    %592 = vmatprep.subr.mxu0 0.0
    %593 = vmatpush1.xpose.msra.mxu0 0.0
    %594 = vmatprep.subr.mxu0 0.0
    %595 = vmatpush1.xpose.msra.mxu0 0.0
    %596 = vmatprep.subr.mxu0 0.0
    %597 = vmatpush1.xpose.msra.mxu0 0.0
    %598 = vmatprep.mubr.f32.mxu0 0.0
    %599 = vmatmul.mubr.f32.gmra.mrb[0].mxu0 %v526
    %v600 = vpop.f32.mrb[0].mxu0
    %v601 = vadd.f32 %v339, %v600
    %v602 = vpop.f32.mrb[0].mxu0
    %603 = vmatprep.mubr.f32.mxu0 0.0
    %604 = vmatmul.mubr.f32.gmra.mrb[0].mxu0 %v528
    %v605 = vpop.f32.mrb[0].mxu0
    %v606 = vadd.f32 %v340, %v605
    %v607 = vpop.f32.mrb[0].mxu0
    %608 = vdwg.mxu0
    %611 = vrot.lane.b32.xlu0 %v291, 120
    %v612 = vpop.permute.xlu0 %611
    %613 = vrot.lane.b32.xlu0 %v296, 120
    %v614 = vpop.permute.xlu0 %613
    %v615 = vsel %vm347, %v291, 0
    %v617 = vsel %vm347, %v296, 0
    %v619 = vsel %vm347, %v612, 0
    %v621 = vsel %vm347, %v614, 0
    %623 = vmatprep.subr.mxu0 0.0
    %624 = vmatpush1.xpose.msra.mxu0 %v619
    %625 = vmatprep.subr.mxu0 0.0
    %626 = vmatpush1.xpose.msra.mxu0 %v621
    %627 = vmatprep.subr.mxu0 0.0
    %628 = vmatpush1.xpose.msra.mxu0 0.0
    %629 = vmatprep.subr.mxu0 0.0
    %630 = vmatpush1.xpose.msra.mxu0 0.0
    %631 = vmatprep.subr.mxu0 0.0
    %632 = vmatpush1.xpose.msra.mxu0 0.0
    %633 = vmatprep.subr.mxu0 0.0
    %634 = vmatpush1.xpose.msra.mxu0 0.0
    %635 = vmatprep.subr.mxu0 0.0
    %636 = vmatpush1.xpose.msra.mxu0 0.0
    %637 = vmatprep.subr.mxu0 0.0
    %638 = vmatpush1.xpose.msra.mxu0 0.0
    %639 = vmatprep.subr.mxu0 0.0
    %640 = vmatpush1.xpose.msra.mxu0 0.0
    %641 = vmatprep.subr.mxu0 0.0
    %642 = vmatpush1.xpose.msra.mxu0 0.0
    %643 = vmatprep.subr.mxu0 0.0
    %644 = vmatpush1.xpose.msra.mxu0 0.0
    %645 = vmatprep.subr.mxu0 0.0
    %646 = vmatpush1.xpose.msra.mxu0 0.0
    %647 = vmatprep.subr.mxu0 0.0
    %648 = vmatpush1.xpose.msra.mxu0 0.0
    %649 = vmatprep.subr.mxu0 0.0
    %650 = vmatpush1.xpose.msra.mxu0 0.0
    %651 = vmatprep.subr.mxu0 0.0
    %652 = vmatpush1.xpose.msra.mxu0 0.0
    %653 = vmatprep.subr.mxu0 0.0
    %654 = vmatpush1.xpose.msra.mxu0 0.0
    %655 = vmatprep.subr.mxu0 0.0
    %656 = vmatpush1.xpose.msra.mxu0 0.0
    %657 = vmatprep.subr.mxu0 0.0
    %658 = vmatpush1.xpose.msra.mxu0 0.0
    %659 = vmatprep.subr.mxu0 0.0
    %660 = vmatpush1.xpose.msra.mxu0 0.0
    %661 = vmatprep.subr.mxu0 0.0
    %662 = vmatpush1.xpose.msra.mxu0 0.0
    %663 = vmatprep.subr.mxu0 0.0
    %664 = vmatpush1.xpose.msra.mxu0 0.0
    %665 = vmatprep.subr.mxu0 0.0
    %666 = vmatpush1.xpose.msra.mxu0 0.0
    %667 = vmatprep.subr.mxu0 0.0
    %668 = vmatpush1.xpose.msra.mxu0 0.0
    %669 = vmatprep.subr.mxu0 0.0
    %670 = vmatpush1.xpose.msra.mxu0 0.0
    %671 = vmatprep.subr.mxu0 0.0
    %672 = vmatpush1.xpose.msra.mxu0 0.0
    %673 = vmatprep.subr.mxu0 0.0
    %674 = vmatpush1.xpose.msra.mxu0 0.0
    %675 = vmatprep.subr.mxu0 0.0
    %676 = vmatpush1.xpose.msra.mxu0 0.0
    %677 = vmatprep.subr.mxu0 0.0
    %678 = vmatpush1.xpose.msra.mxu0 0.0
    %679 = vmatprep.subr.mxu0 0.0
    %680 = vmatpush1.xpose.msra.mxu0 0.0
    %681 = vmatprep.subr.mxu0 0.0
    %682 = vmatpush1.xpose.msra.mxu0 0.0
    %683 = vmatprep.subr.mxu0 0.0
    %684 = vmatpush1.xpose.msra.mxu0 0.0
    %685 = vmatprep.subr.mxu0 0.0
    %686 = vmatpush1.xpose.msra.mxu0 0.0
    %687 = vmatprep.mubr.f32.mxu0 0.0
    %688 = vmatmul.mubr.f32.gmra.mrb[0].mxu0 %v615
    %v689 = vpop.f32.mrb[0].mxu0
    %v690 = vadd.f32 %v339, %v689
    %v691 = vpop.f32.mrb[0].mxu0
    %692 = vmatprep.mubr.f32.mxu0 0.0
    %693 = vmatmul.mubr.f32.gmra.mrb[0].mxu0 %v617
    %v694 = vpop.f32.mrb[0].mxu0
    %v695 = vadd.f32 %v340, %v694
    %v696 = vpop.f32.mrb[0].mxu0
    %697 = vdwg.mxu0
    %700 = vrot.lane.b32.xlu0 %v301, 120
    %v701 = vpop.permute.xlu0 %700
    %702 = vrot.lane.b32.xlu0 %v306, 120
    %v703 = vpop.permute.xlu0 %702
    %v704 = vsel %vm347, %v301, 0
    %v706 = vsel %vm347, %v306, 0
    %v708 = vsel %vm347, %v701, 0
    %v710 = vsel %vm347, %v703, 0
    %712 = vmatprep.subr.mxu0 0.0
    %713 = vmatpush1.xpose.msra.mxu0 %v708
    %714 = vmatprep.subr.mxu0 0.0
    %715 = vmatpush1.xpose.msra.mxu0 %v710
    %716 = vmatprep.subr.mxu0 0.0
    %717 = vmatpush1.xpose.msra.mxu0 0.0
    %718 = vmatprep.subr.mxu0 0.0
    %719 = vmatpush1.xpose.msra.mxu0 0.0
    %720 = vmatprep.subr.mxu0 0.0
    %721 = vmatpush1.xpose.msra.mxu0 0.0
    %722 = vmatprep.subr.mxu0 0.0
    %723 = vmatpush1.xpose.msra.mxu0 0.0
    %724 = vmatprep.subr.mxu0 0.0
    %725 = vmatpush1.xpose.msra.mxu0 0.0
    %726 = vmatprep.subr.mxu0 0.0
    %727 = vmatpush1.xpose.msra.mxu0 0.0
    %728 = vmatprep.subr.mxu0 0.0
    %729 = vmatpush1.xpose.msra.mxu0 0.0
    %730 = vmatprep.subr.mxu0 0.0
    %731 = vmatpush1.xpose.msra.mxu0 0.0
    %732 = vmatprep.subr.mxu0 0.0
    %733 = vmatpush1.xpose.msra.mxu0 0.0
    %734 = vmatprep.subr.mxu0 0.0
    %735 = vmatpush1.xpose.msra.mxu0 0.0
    %736 = vmatprep.subr.mxu0 0.0
    %737 = vmatpush1.xpose.msra.mxu0 0.0
    %738 = vmatprep.subr.mxu0 0.0
    %739 = vmatpush1.xpose.msra.mxu0 0.0
    %740 = vmatprep.subr.mxu0 0.0
    %741 = vmatpush1.xpose.msra.mxu0 0.0
    %742 = vmatprep.subr.mxu0 0.0
    %743 = vmatpush1.xpose.msra.mxu0 0.0
    %744 = vmatprep.subr.mxu0 0.0
    %745 = vmatpush1.xpose.msra.mxu0 0.0
    %746 = vmatprep.subr.mxu0 0.0
    %747 = vmatpush1.xpose.msra.mxu0 0.0
    %748 = vmatprep.subr.mxu0 0.0
    %749 = vmatpush1.xpose.msra.mxu0 0.0
    %750 = vmatprep.subr.mxu0 0.0
    %751 = vmatpush1.xpose.msra.mxu0 0.0
    %752 = vmatprep.subr.mxu0 0.0
    %753 = vmatpush1.xpose.msra.mxu0 0.0
    %754 = vmatprep.subr.mxu0 0.0
    %755 = vmatpush1.xpose.msra.mxu0 0.0
    %756 = vmatprep.subr.mxu0 0.0
    %757 = vmatpush1.xpose.msra.mxu0 0.0
    %758 = vmatprep.subr.mxu0 0.0
    %759 = vmatpush1.xpose.msra.mxu0 0.0
    %760 = vmatprep.subr.mxu0 0.0
    %761 = vmatpush1.xpose.msra.mxu0 0.0
    %762 = vmatprep.subr.mxu0 0.0
    %763 = vmatpush1.xpose.msra.mxu0 0.0
    %764 = vmatprep.subr.mxu0 0.0
    %765 = vmatpush1.xpose.msra.mxu0 0.0
    %766 = vmatprep.subr.mxu0 0.0
    %767 = vmatpush1.xpose.msra.mxu0 0.0
    %768 = vmatprep.subr.mxu0 0.0
    %769 = vmatpush1.xpose.msra.mxu0 0.0
    %770 = vmatprep.subr.mxu0 0.0
    %771 = vmatpush1.xpose.msra.mxu0 0.0
    %772 = vmatprep.subr.mxu0 0.0
    %773 = vmatpush1.xpose.msra.mxu0 0.0
    %774 = vmatprep.subr.mxu0 0.0
    %775 = vmatpush1.xpose.msra.mxu0 0.0
    %776 = vmatprep.mubr.f32.mxu0 0.0
    %777 = vmatmul.mubr.f32.gmra.mrb[0].mxu0 %v704
    %v778 = vpop.f32.mrb[0].mxu0
    %v779 = vadd.f32 %v339, %v778
    %v780 = vpop.f32.mrb[0].mxu0
    %781 = vmatprep.mubr.f32.mxu0 0.0
    %782 = vmatmul.mubr.f32.gmra.mrb[0].mxu0 %v706
    %v783 = vpop.f32.mrb[0].mxu0
    %v784 = vadd.f32 %v340, %v783
    %v785 = vpop.f32.mrb[0].mxu0
    %786 = vdwg.mxu0
    %789 = vrot.lane.b32.xlu0 %v311, 120
    %v790 = vpop.permute.xlu0 %789
    %791 = vrot.lane.b32.xlu0 %v316, 120
    %v792 = vpop.permute.xlu0 %791
    %v793 = vsel %vm347, %v311, 0
    %v795 = vsel %vm347, %v316, 0
    %v797 = vsel %vm347, %v790, 0
    %v799 = vsel %vm347, %v792, 0
    %801 = vmatprep.subr.mxu0 0.0
    %802 = vmatpush1.xpose.msra.mxu0 %v797
    %803 = vmatprep.subr.mxu0 0.0
    %804 = vmatpush1.xpose.msra.mxu0 %v799
    %805 = vmatprep.subr.mxu0 0.0
    %806 = vmatpush1.xpose.msra.mxu0 0.0
    %807 = vmatprep.subr.mxu0 0.0
    %808 = vmatpush1.xpose.msra.mxu0 0.0
    %809 = vmatprep.subr.mxu0 0.0
    %810 = vmatpush1.xpose.msra.mxu0 0.0
    %811 = vmatprep.subr.mxu0 0.0
    %812 = vmatpush1.xpose.msra.mxu0 0.0
    %813 = vmatprep.subr.mxu0 0.0
    %814 = vmatpush1.xpose.msra.mxu0 0.0
    %815 = vmatprep.subr.mxu0 0.0
    %816 = vmatpush1.xpose.msra.mxu0 0.0
    %817 = vmatprep.subr.mxu0 0.0
    %818 = vmatpush1.xpose.msra.mxu0 0.0
    %819 = vmatprep.subr.mxu0 0.0
    %820 = vmatpush1.xpose.msra.mxu0 0.0
    %821 = vmatprep.subr.mxu0 0.0
    %822 = vmatpush1.xpose.msra.mxu0 0.0
    %823 = vmatprep.subr.mxu0 0.0
    %824 = vmatpush1.xpose.msra.mxu0 0.0
    %825 = vmatprep.subr.mxu0 0.0
    %826 = vmatpush1.xpose.msra.mxu0 0.0
    %827 = vmatprep.subr.mxu0 0.0
    %828 = vmatpush1.xpose.msra.mxu0 0.0
    %829 = vmatprep.subr.mxu0 0.0
    %830 = vmatpush1.xpose.msra.mxu0 0.0
    %831 = vmatprep.subr.mxu0 0.0
    %832 = vmatpush1.xpose.msra.mxu0 0.0
    %833 = vmatprep.subr.mxu0 0.0
    %834 = vmatpush1.xpose.msra.mxu0 0.0
    %835 = vmatprep.subr.mxu0 0.0
    %836 = vmatpush1.xpose.msra.mxu0 0.0
    %837 = vmatprep.subr.mxu0 0.0
    %838 = vmatpush1.xpose.msra.mxu0 0.0
    %839 = vmatprep.subr.mxu0 0.0
    %840 = vmatpush1.xpose.msra.mxu0 0.0
    %841 = vmatprep.subr.mxu0 0.0
    %842 = vmatpush1.xpose.msra.mxu0 0.0
    %843 = vmatprep.subr.mxu0 0.0
    %844 = vmatpush1.xpose.msra.mxu0 0.0
    %845 = vmatprep.subr.mxu0 0.0
    %846 = vmatpush1.xpose.msra.mxu0 0.0
    %847 = vmatprep.subr.mxu0 0.0
    %848 = vmatpush1.xpose.msra.mxu0 0.0
    %849 = vmatprep.subr.mxu0 0.0
    %850 = vmatpush1.xpose.msra.mxu0 0.0
    %851 = vmatprep.subr.mxu0 0.0
    %852 = vmatpush1.xpose.msra.mxu0 0.0
    %853 = vmatprep.subr.mxu0 0.0
    %854 = vmatpush1.xpose.msra.mxu0 0.0
    %855 = vmatprep.subr.mxu0 0.0
    %856 = vmatpush1.xpose.msra.mxu0 0.0
    %857 = vmatprep.subr.mxu0 0.0
    %858 = vmatpush1.xpose.msra.mxu0 0.0
    %859 = vmatprep.subr.mxu0 0.0
    %860 = vmatpush1.xpose.msra.mxu0 0.0
    %861 = vmatprep.subr.mxu0 0.0
    %862 = vmatpush1.xpose.msra.mxu0 0.0
    %863 = vmatprep.subr.mxu0 0.0
    %864 = vmatpush1.xpose.msra.mxu0 0.0
    %865 = vmatprep.mubr.f32.mxu0 0.0
    %866 = vmatmul.mubr.f32.gmra.mrb[0].mxu0 %v793
    %v867 = vpop.f32.mrb[0].mxu0
    %v868 = vadd.f32 %v339, %v867
    %v869 = vpop.f32.mrb[0].mxu0
    %870 = vmatprep.mubr.f32.mxu0 0.0
    %871 = vmatmul.mubr.f32.gmra.mrb[0].mxu0 %v795
    %v872 = vpop.f32.mrb[0].mxu0
    %v873 = vadd.f32 %v340, %v872
    %v874 = vpop.f32.mrb[0].mxu0
    %875 = vdwg.mxu0
    %878 = vrot.lane.b32.xlu0 %v321, 120
    %v879 = vpop.permute.xlu0 %878
    %880 = vrot.lane.b32.xlu0 %v326, 120
    %v881 = vpop.permute.xlu0 %880
    %v882 = vsel %vm347, %v321, 0
    %v884 = vsel %vm347, %v326, 0
    %v886 = vsel %vm347, %v879, 0
    %v888 = vsel %vm347, %v881, 0
    %890 = vmatprep.subr.mxu0 0.0
    %891 = vmatpush1.xpose.msra.mxu0 %v886
    %892 = vmatprep.subr.mxu0 0.0
    %893 = vmatpush1.xpose.msra.mxu0 %v888
    %894 = vmatprep.subr.mxu0 0.0
    %895 = vmatpush1.xpose.msra.mxu0 0.0
    %896 = vmatprep.subr.mxu0 0.0
    %897 = vmatpush1.xpose.msra.mxu0 0.0
    %898 = vmatprep.subr.mxu0 0.0
    %899 = vmatpush1.xpose.msra.mxu0 0.0
    %900 = vmatprep.subr.mxu0 0.0
    %901 = vmatpush1.xpose.msra.mxu0 0.0
    %902 = vmatprep.subr.mxu0 0.0
    %903 = vmatpush1.xpose.msra.mxu0 0.0
    %904 = vmatprep.subr.mxu0 0.0
    %905 = vmatpush1.xpose.msra.mxu0 0.0
    %906 = vmatprep.subr.mxu0 0.0
    %907 = vmatpush1.xpose.msra.mxu0 0.0
    %908 = vmatprep.subr.mxu0 0.0
    %909 = vmatpush1.xpose.msra.mxu0 0.0
    %910 = vmatprep.subr.mxu0 0.0
    %911 = vmatpush1.xpose.msra.mxu0 0.0
    %912 = vmatprep.subr.mxu0 0.0
    %913 = vmatpush1.xpose.msra.mxu0 0.0
    %914 = vmatprep.subr.mxu0 0.0
    %915 = vmatpush1.xpose.msra.mxu0 0.0
    %916 = vmatprep.subr.mxu0 0.0
    %917 = vmatpush1.xpose.msra.mxu0 0.0
    %918 = vmatprep.subr.mxu0 0.0
    %919 = vmatpush1.xpose.msra.mxu0 0.0
    %920 = vmatprep.subr.mxu0 0.0
    %921 = vmatpush1.xpose.msra.mxu0 0.0
    %922 = vmatprep.subr.mxu0 0.0
    %923 = vmatpush1.xpose.msra.mxu0 0.0
    %924 = vmatprep.subr.mxu0 0.0
    %925 = vmatpush1.xpose.msra.mxu0 0.0
    %926 = vmatprep.subr.mxu0 0.0
    %927 = vmatpush1.xpose.msra.mxu0 0.0
    %928 = vmatprep.subr.mxu0 0.0
    %929 = vmatpush1.xpose.msra.mxu0 0.0
    %930 = vmatprep.subr.mxu0 0.0
    %931 = vmatpush1.xpose.msra.mxu0 0.0
    %932 = vmatprep.subr.mxu0 0.0
    %933 = vmatpush1.xpose.msra.mxu0 0.0
    %934 = vmatprep.subr.mxu0 0.0
    %935 = vmatpush1.xpose.msra.mxu0 0.0
    %936 = vmatprep.subr.mxu0 0.0
    %937 = vmatpush1.xpose.msra.mxu0 0.0
    %938 = vmatprep.subr.mxu0 0.0
    %939 = vmatpush1.xpose.msra.mxu0 0.0
    %940 = vmatprep.subr.mxu0 0.0
    %941 = vmatpush1.xpose.msra.mxu0 0.0
    %942 = vmatprep.subr.mxu0 0.0
    %943 = vmatpush1.xpose.msra.mxu0 0.0
    %944 = vmatprep.subr.mxu0 0.0
    %945 = vmatpush1.xpose.msra.mxu0 0.0
    %946 = vmatprep.subr.mxu0 0.0
    %947 = vmatpush1.xpose.msra.mxu0 0.0
    %948 = vmatprep.subr.mxu0 0.0
    %949 = vmatpush1.xpose.msra.mxu0 0.0
    %950 = vmatprep.subr.mxu0 0.0
    %951 = vmatpush1.xpose.msra.mxu0 0.0
    %952 = vmatprep.subr.mxu0 0.0
    %953 = vmatpush1.xpose.msra.mxu0 0.0
    %954 = vmatprep.mubr.f32.mxu0 0.0
    %955 = vmatmul.mubr.f32.gmra.mrb[0].mxu0 %v882
    %v956 = vpop.f32.mrb[0].mxu0
    %v957 = vadd.f32 %v339, %v956
    %v958 = vpop.f32.mrb[0].mxu0
    %959 = vmatprep.mubr.f32.mxu0 0.0
    %960 = vmatmul.mubr.f32.gmra.mrb[0].mxu0 %v884
    %v961 = vpop.f32.mrb[0].mxu0
    %v962 = vadd.f32 %v340, %v961
    %v963 = vpop.f32.mrb[0].mxu0
    %964 = vdwg.mxu0
    %967 = vrot.lane.b32.xlu0 %v331, 120
    %v968 = vpop.permute.xlu0 %967
    %969 = vrot.lane.b32.xlu0 %v336, 120
    %v970 = vpop.permute.xlu0 %969
    %v971 = vsel %vm347, %v331, 0
    %v973 = vsel %vm347, %v336, 0
    %v975 = vsel %vm347, %v968, 0
    %v977 = vsel %vm347, %v970, 0
    %979 = vmatprep.subr.mxu0 0.0
    %980 = vmatpush1.xpose.msra.mxu0 %v975
    %981 = vmatprep.subr.mxu0 0.0
    %982 = vmatpush1.xpose.msra.mxu0 %v977
    %983 = vmatprep.subr.mxu0 0.0
    %984 = vmatpush1.xpose.msra.mxu0 0.0
    %985 = vmatprep.subr.mxu0 0.0
    %986 = vmatpush1.xpose.msra.mxu0 0.0
    %987 = vmatprep.subr.mxu0 0.0
    %988 = vmatpush1.xpose.msra.mxu0 0.0
    %989 = vmatprep.subr.mxu0 0.0
    %990 = vmatpush1.xpose.msra.mxu0 0.0
    %991 = vmatprep.subr.mxu0 0.0
    %992 = vmatpush1.xpose.msra.mxu0 0.0
    %993 = vmatprep.subr.mxu0 0.0
    %994 = vmatpush1.xpose.msra.mxu0 0.0
    %995 = vmatprep.subr.mxu0 0.0
    %996 = vmatpush1.xpose.msra.mxu0 0.0
    %997 = vmatprep.subr.mxu0 0.0
    %998 = vmatpush1.xpose.msra.mxu0 0.0
    %999 = vmatprep.subr.mxu0 0.0
    %1000 = vmatpush1.xpose.msra.mxu0 0.0
    %1001 = vmatprep.subr.mxu0 0.0
    %1002 = vmatpush1.xpose.msra.mxu0 0.0
    %1003 = vmatprep.subr.mxu0 0.0
    %1004 = vmatpush1.xpose.msra.mxu0 0.0
    %1005 = vmatprep.subr.mxu0 0.0
    %1006 = vmatpush1.xpose.msra.mxu0 0.0
    %1007 = vmatprep.subr.mxu0 0.0
    %1008 = vmatpush1.xpose.msra.mxu0 0.0
    %1009 = vmatprep.subr.mxu0 0.0
    %1010 = vmatpush1.xpose.msra.mxu0 0.0
    %1011 = vmatprep.subr.mxu0 0.0
    %1012 = vmatpush1.xpose.msra.mxu0 0.0
    %1013 = vmatprep.subr.mxu0 0.0
    %1014 = vmatpush1.xpose.msra.mxu0 0.0
    %1015 = vmatprep.subr.mxu0 0.0
    %1016 = vmatpush1.xpose.msra.mxu0 0.0
    %1017 = vmatprep.subr.mxu0 0.0
    %1018 = vmatpush1.xpose.msra.mxu0 0.0
    %1019 = vmatprep.subr.mxu0 0.0
    %1020 = vmatpush1.xpose.msra.mxu0 0.0
    %1021 = vmatprep.subr.mxu0 0.0
    %1022 = vmatpush1.xpose.msra.mxu0 0.0
    %1023 = vmatprep.subr.mxu0 0.0
    %1024 = vmatpush1.xpose.msra.mxu0 0.0
    %1025 = vmatprep.subr.mxu0 0.0
    %1026 = vmatpush1.xpose.msra.mxu0 0.0
    %1027 = vmatprep.subr.mxu0 0.0
    %1028 = vmatpush1.xpose.msra.mxu0 0.0
    %1029 = vmatprep.subr.mxu0 0.0
    %1030 = vmatpush1.xpose.msra.mxu0 0.0
    %1031 = vmatprep.subr.mxu0 0.0
    %1032 = vmatpush1.xpose.msra.mxu0 0.0
    %1033 = vmatprep.subr.mxu0 0.0
    %1034 = vmatpush1.xpose.msra.mxu0 0.0
    %1035 = vmatprep.subr.mxu0 0.0
    %1036 = vmatpush1.xpose.msra.mxu0 0.0
    %1037 = vmatprep.subr.mxu0 0.0
    %1038 = vmatpush1.xpose.msra.mxu0 0.0
    %1039 = vmatprep.subr.mxu0 0.0
    %1040 = vmatpush1.xpose.msra.mxu0 0.0
    %1041 = vmatprep.subr.mxu0 0.0
    %1042 = vmatpush1.xpose.msra.mxu0 0.0
    %1043 = vmatprep.mubr.f32.mxu0 0.0
    %1044 = vmatmul.mubr.f32.gmra.mrb[0].mxu0 %v971
    %v1045 = vpop.f32.mrb[0].mxu0
    %v1046 = vadd.f32 %v339, %v1045
    %v1047 = vpop.f32.mrb[0].mxu0
    %1048 = vmatprep.mubr.f32.mxu0 0.0
    %1049 = vmatmul.mubr.f32.gmra.mrb[0].mxu0 %v973
    %v1050 = vpop.f32.mrb[0].mxu0
    %v1051 = vadd.f32 %v340, %v1050
    %v1052 = vpop.f32.mrb[0].mxu0
    %1053 = vdwg.mxu0
    %v1054 = vld [vmem:[#allocation11] sm:$0xff]
    %v1055 = vld [vmem:[#allocation11 + $0x8] sm:$0xff]
    %v1056 = vld [vmem:[#allocation11 + $0x10] sm:$0xff]
    %v1057 = vld [vmem:[#allocation11 + $0x18] sm:$0xff]
    %v1058 = vld [vmem:[#allocation11 + $0x20] sm:$0xff]
    %v1059 = vld [vmem:[#allocation11 + $0x28] sm:$0xff]
    %v1060 = vld [vmem:[#allocation11 + $0x30] sm:$0xff]
    %v1061 = vld [vmem:[#allocation11 + $0x38] sm:$0xff]
    %v1062 = vld [vmem:[#allocation11 + $0x40] sm:$0xff]
    %v1063 = vld [vmem:[#allocation11 + $0x48] sm:$0xff]
    %v1064 = vld [vmem:[#allocation11 + $0x50] sm:$0xff]
    %v1065 = vld [vmem:[#allocation11 + $0x58] sm:$0xff]
    %v1066 = vld [vmem:[#allocation11 + $0x60] sm:$0xff]
    %v1067 = vld [vmem:[#allocation11 + $0x68] sm:$0xff]
    %v1068 = vld [vmem:[#allocation11 + $0x70] sm:$0xff]
    %v1069 = vld [vmem:[#allocation11 + $0x78] sm:$0xff]
    %v1070 = vadd.f32 %v423, %v1054
    %v1071 = vadd.f32 %v428, %v1055
    %v1072 = vadd.f32 %v512, %v1056
    %v1073 = vadd.f32 %v517, %v1057
    %v1074 = vadd.f32 %v601, %v1058
    %v1075 = vadd.f32 %v606, %v1059
    %v1076 = vadd.f32 %v690, %v1060
    %v1077 = vadd.f32 %v695, %v1061
    %v1078 = vadd.f32 %v779, %v1062
    %v1079 = vadd.f32 %v784, %v1063
    %v1080 = vadd.f32 %v868, %v1064
    %v1081 = vadd.f32 %v873, %v1065
    %v1082 = vadd.f32 %v957, %v1066
    %v1083 = vadd.f32 %v962, %v1067
    %v1084 = vadd.f32 %v1046, %v1068
    %v1085 = vadd.f32 %v1051, %v1069
    %vm1086 = vcmask 130048
    %v1087 = vsel %vm1086, %v1070, -inf
    %1088 = vmax.xlane.f32.xlu0 %v1087
    %v1089 = vpop.xlane.xlu0 %1088
    %v1090 = vsel %vm1086, %v1071, -inf
    %1091 = vmax.xlane.f32.xlu0 %v1090
    %v1092 = vpop.xlane.xlu0 %1091
    %v1093 = vsel %vm1086, %v1072, -inf
    %1094 = vmax.xlane.f32.xlu0 %v1093
    %v1095 = vpop.xlane.xlu0 %1094
    %v1096 = vsel %vm1086, %v1073, -inf
    %1097 = vmax.xlane.f32.xlu0 %v1096
    %v1098 = vpop.xlane.xlu0 %1097
    %v1099 = vsel %vm1086, %v1074, -inf
    %1100 = vmax.xlane.f32.xlu0 %v1099
    %v1101 = vpop.xlane.xlu0 %1100
    %v1102 = vsel %vm1086, %v1075, -inf
    %1103 = vmax.xlane.f32.xlu0 %v1102
    %v1104 = vpop.xlane.xlu0 %1103
    %v1105 = vsel %vm1086, %v1076, -inf
    %1106 = vmax.xlane.f32.xlu0 %v1105
    %v1107 = vpop.xlane.xlu0 %1106
    %v1108 = vsel %vm1086, %v1077, -inf
    %1109 = vmax.xlane.f32.xlu0 %v1108
    %v1110 = vpop.xlane.xlu0 %1109
    %v1111 = vsel %vm1086, %v1078, -inf
    %1112 = vmax.xlane.f32.xlu0 %v1111
    %v1113 = vpop.xlane.xlu0 %1112
    %v1114 = vsel %vm1086, %v1079, -inf
    %1115 = vmax.xlane.f32.xlu0 %v1114
    %v1116 = vpop.xlane.xlu0 %1115
    %v1117 = vsel %vm1086, %v1080, -inf
    %1118 = vmax.xlane.f32.xlu0 %v1117
    %v1119 = vpop.xlane.xlu0 %1118
    %v1120 = vsel %vm1086, %v1081, -inf
    %1121 = vmax.xlane.f32.xlu0 %v1120
    %v1122 = vpop.xlane.xlu0 %1121
    %v1123 = vsel %vm1086, %v1082, -inf
    %1124 = vmax.xlane.f32.xlu0 %v1123
    %v1125 = vpop.xlane.xlu0 %1124
    %v1126 = vsel %vm1086, %v1083, -inf
    %1127 = vmax.xlane.f32.xlu0 %v1126
    %v1128 = vpop.xlane.xlu0 %1127
    %v1129 = vsel %vm1086, %v1084, -inf
    %1130 = vmax.xlane.f32.xlu0 %v1129
    %v1131 = vpop.xlane.xlu0 %1130
    %v1132 = vsel %vm1086, %v1085, -inf
    %1133 = vmax.xlane.f32.xlu0 %v1132
    %v1134 = vpop.xlane.xlu0 %1133
    %v1135 = vsub.f32 %v1070, %v1089
    %v1136 = vsub.f32 %v1071, %v1092
    %v1137 = vsub.f32 %v1072, %v1095
    %v1138 = vsub.f32 %v1073, %v1098
    %v1139 = vsub.f32 %v1074, %v1101
    %v1140 = vsub.f32 %v1075, %v1104
    %v1141 = vsub.f32 %v1076, %v1107
    %v1142 = vsub.f32 %v1077, %v1110
    %v1143 = vsub.f32 %v1078, %v1113
    %v1144 = vsub.f32 %v1079, %v1116
    %v1145 = vsub.f32 %v1080, %v1119
    %v1146 = vsub.f32 %v1081, %v1122
    %v1147 = vsub.f32 %v1082, %v1125
    %v1148 = vsub.f32 %v1083, %v1128
    %v1149 = vsub.f32 %v1084, %v1131
    %v1150 = vsub.f32 %v1085, %v1134
    %v1151 = vmul.f32 %v1135, 1.442695
    %v1152 = vpow.pop %v1151
    %v1153 = vmul.f32 %v1136, 1.442695
    %v1154 = vpow.pop %v1153
    %v1155 = vmul.f32 %v1137, 1.442695
    %v1156 = vpow.pop %v1155
    %v1157 = vmul.f32 %v1138, 1.442695
    %v1158 = vpow.pop %v1157
    %v1159 = vmul.f32 %v1139, 1.442695
    %v1160 = vpow.pop %v1159
    %v1161 = vmul.f32 %v1140, 1.442695
    %v1162 = vpow.pop %v1161
    %v1163 = vmul.f32 %v1141, 1.442695
    %v1164 = vpow.pop %v1163
    %v1165 = vmul.f32 %v1142, 1.442695
    %v1166 = vpow.pop %v1165
    %v1167 = vmul.f32 %v1143, 1.442695
    %v1168 = vpow.pop %v1167
    %v1169 = vmul.f32 %v1144, 1.442695
    %v1170 = vpow.pop %v1169
    %v1171 = vmul.f32 %v1145, 1.442695
    %v1172 = vpow.pop %v1171
    %v1173 = vmul.f32 %v1146, 1.442695
    %v1174 = vpow.pop %v1173
    %v1175 = vmul.f32 %v1147, 1.442695
    %v1176 = vpow.pop %v1175
    %v1177 = vmul.f32 %v1148, 1.442695
    %v1178 = vpow.pop %v1177
    %v1179 = vmul.f32 %v1149, 1.442695
    %v1180 = vpow.pop %v1179
    %v1181 = vmul.f32 %v1150, 1.442695
    %v1182 = vpow.pop %v1181
    %v1183 = vsel %vm1086, %v1152, 0.0
    %1184 = vadd.xlane.f32.xlu0 %v1183
    %v1185 = vpop.xlane.xlu0 %1184
    %v1186 = vsel %vm1086, %v1154, 0.0
    %1187 = vadd.xlane.f32.xlu0 %v1186
    %v1188 = vpop.xlane.xlu0 %1187
    %v1189 = vsel %vm1086, %v1156, 0.0
    %1190 = vadd.xlane.f32.xlu0 %v1189
    %v1191 = vpop.xlane.xlu0 %1190
    %v1192 = vsel %vm1086, %v1158, 0.0
    %1193 = vadd.xlane.f32.xlu0 %v1192
    %v1194 = vpop.xlane.xlu0 %1193
    %v1195 = vsel %vm1086, %v1160, 0.0
    %1196 = vadd.xlane.f32.xlu0 %v1195
    %v1197 = vpop.xlane.xlu0 %1196
    %v1198 = vsel %vm1086, %v1162, 0.0
    %1199 = vadd.xlane.f32.xlu0 %v1198
    %v1200 = vpop.xlane.xlu0 %1199
    %v1201 = vsel %vm1086, %v1164, 0.0
    %1202 = vadd.xlane.f32.xlu0 %v1201
    %v1203 = vpop.xlane.xlu0 %1202
    %v1204 = vsel %vm1086, %v1166, 0.0
    %1205 = vadd.xlane.f32.xlu0 %v1204
    %v1206 = vpop.xlane.xlu0 %1205
    %v1207 = vsel %vm1086, %v1168, 0.0
    %1208 = vadd.xlane.f32.xlu0 %v1207
    %v1209 = vpop.xlane.xlu0 %1208
    %v1210 = vsel %vm1086, %v1170, 0.0
    %1211 = vadd.xlane.f32.xlu0 %v1210
    %v1212 = vpop.xlane.xlu0 %1211
    %v1213 = vsel %vm1086, %v1172, 0.0
    %1214 = vadd.xlane.f32.xlu0 %v1213
    %v1215 = vpop.xlane.xlu0 %1214
    %v1216 = vsel %vm1086, %v1174, 0.0
    %1217 = vadd.xlane.f32.xlu0 %v1216
    %v1218 = vpop.xlane.xlu0 %1217
    %v1219 = vsel %vm1086, %v1176, 0.0
    %1220 = vadd.xlane.f32.xlu0 %v1219
    %v1221 = vpop.xlane.xlu0 %1220
    %v1222 = vsel %vm1086, %v1178, 0.0
    %1223 = vadd.xlane.f32.xlu0 %v1222
    %v1224 = vpop.xlane.xlu0 %1223
    %v1225 = vsel %vm1086, %v1180, 0.0
    %1226 = vadd.xlane.f32.xlu0 %v1225
    %v1227 = vpop.xlane.xlu0 %1226
    %v1228 = vsel %vm1086, %v1182, 0.0
    %1229 = vadd.xlane.f32.xlu0 %v1228
    %v1230 = vpop.xlane.xlu0 %1229
    %v1231 = vrcp.pop %v1185
    %v1232 = vrcp.pop %v1188
    %v1233 = vrcp.pop %v1191
    %v1234 = vrcp.pop %v1194
    %v1235 = vrcp.pop %v1197
    %v1236 = vrcp.pop %v1200
    %v1237 = vrcp.pop %v1203
    %v1238 = vrcp.pop %v1206
    %v1239 = vrcp.pop %v1209
    %v1240 = vrcp.pop %v1212
    %v1241 = vrcp.pop %v1215
    %v1242 = vrcp.pop %v1218
    %v1243 = vrcp.pop %v1221
    %v1244 = vrcp.pop %v1224
    %v1245 = vrcp.pop %v1227
    %v1246 = vrcp.pop %v1230
    %v1247 = vmul.f32 %v1152, %v1231
    %v1248 = vmul.f32 %v1154, %v1232
    %v1249 = vmul.f32 %v1156, %v1233
    %v1250 = vmul.f32 %v1158, %v1234
    %v1251 = vmul.f32 %v1160, %v1235
    %v1252 = vmul.f32 %v1162, %v1236
    %v1253 = vmul.f32 %v1164, %v1237
    %v1254 = vmul.f32 %v1166, %v1238
    %v1255 = vmul.f32 %v1168, %v1239
    %v1256 = vmul.f32 %v1170, %v1240
    %v1257 = vmul.f32 %v1172, %v1241
    %v1258 = vmul.f32 %v1174, %v1242
    %v1259 = vmul.f32 %v1176, %v1243
    %v1260 = vmul.f32 %v1178, %v1244
    %v1261 = vmul.f32 %v1180, %v1245
    %v1262 = vmul.f32 %v1182, %v1246
    %1263 = vrot.lane.b32.xlu0 %v261, 112
    %v1264 = vpop.permute.xlu0 %1263
    %1265 = vrot.lane.b32.xlu0 %v266, 112
    %v1266 = vpop.permute.xlu0 %1265
    %v1270 = vsel %vm1086, %v1247, 0
    %v1273 = vsel %vm1086, %v1248, 0
    %1275 = vmatprep.subr.mxu0 0.0
    %1276 = vmatpush1.msra.mxu0 %v1264
    %1277 = vmatprep.subr.mxu0 0.0
    %1278 = vmatpush1.msra.mxu0 %v1266
    %1279 = vmatprep.subr.mxu0 0.0
    %1280 = vmatpush1.msra.mxu0 0.0
    %1281 = vmatprep.subr.mxu0 0.0
    %1282 = vmatpush1.msra.mxu0 0.0
    %1283 = vmatprep.subr.mxu0 0.0
    %1284 = vmatpush1.msra.mxu0 0.0
    %1285 = vmatprep.subr.mxu0 0.0
    %1286 = vmatpush1.msra.mxu0 0.0
    %1287 = vmatprep.subr.mxu0 0.0
    %1288 = vmatpush1.msra.mxu0 0.0
    %1289 = vmatprep.subr.mxu0 0.0
    %1290 = vmatpush1.msra.mxu0 0.0
    %1291 = vmatprep.subr.mxu0 0.0
    %1292 = vmatpush1.msra.mxu0 0.0
    %1293 = vmatprep.subr.mxu0 0.0
    %1294 = vmatpush1.msra.mxu0 0.0
    %1295 = vmatprep.subr.mxu0 0.0
    %1296 = vmatpush1.msra.mxu0 0.0
    %1297 = vmatprep.subr.mxu0 0.0
    %1298 = vmatpush1.msra.mxu0 0.0
    %1299 = vmatprep.subr.mxu0 0.0
    %1300 = vmatpush1.msra.mxu0 0.0
    %1301 = vmatprep.subr.mxu0 0.0
    %1302 = vmatpush1.msra.mxu0 0.0
    %1303 = vmatprep.subr.mxu0 0.0
    %1304 = vmatpush1.msra.mxu0 0.0
    %1305 = vmatprep.subr.mxu0 0.0
    %1306 = vmatpush1.msra.mxu0 0.0
    %1307 = vmatprep.subr.mxu0 0.0
    %1308 = vmatpush1.msra.mxu0 0.0
    %1309 = vmatprep.subr.mxu0 0.0
    %1310 = vmatpush1.msra.mxu0 0.0
    %1311 = vmatprep.subr.mxu0 0.0
    %1312 = vmatpush1.msra.mxu0 0.0
    %1313 = vmatprep.subr.mxu0 0.0
    %1314 = vmatpush1.msra.mxu0 0.0
    %1315 = vmatprep.subr.mxu0 0.0
    %1316 = vmatpush1.msra.mxu0 0.0
    %1317 = vmatprep.subr.mxu0 0.0
    %1318 = vmatpush1.msra.mxu0 0.0
    %1319 = vmatprep.subr.mxu0 0.0
    %1320 = vmatpush1.msra.mxu0 0.0
    %1321 = vmatprep.subr.mxu0 0.0
    %1322 = vmatpush1.msra.mxu0 0.0
    %1323 = vmatprep.subr.mxu0 0.0
    %1324 = vmatpush1.msra.mxu0 0.0
    %1325 = vmatprep.subr.mxu0 0.0
    %1326 = vmatpush1.msra.mxu0 0.0
    %1327 = vmatprep.subr.mxu0 0.0
    %1328 = vmatpush1.msra.mxu0 0.0
    %1329 = vmatprep.subr.mxu0 0.0
    %1330 = vmatpush1.msra.mxu0 0.0
    %1331 = vmatprep.subr.mxu0 0.0
    %1332 = vmatpush1.msra.mxu0 0.0
    %1333 = vmatprep.subr.mxu0 0.0
    %1334 = vmatpush1.msra.mxu0 0.0
    %1335 = vmatprep.subr.mxu0 0.0
    %1336 = vmatpush1.msra.mxu0 0.0
    %1337 = vmatprep.subr.mxu0 0.0
    %1338 = vmatpush1.msra.mxu0 0.0
    %1339 = vmatprep.mubr.f32.mxu0 0.0
    %1340 = vmatmul.mubr.f32.gmra.mrb[0].mxu0 %v1270
    %v1341 = vpop.f32.mrb[0].mxu0
    %v1342 = vadd.f32 0.0, %v1341
    %v1343 = vpop.f32.mrb[0].mxu0
    %1344 = vmatprep.mubr.f32.mxu0 0.0
    %1345 = vmatmul.mubr.f32.gmra.mrb[0].mxu0 %v1273
    %v1346 = vpop.f32.mrb[0].mxu0
    %v1347 = vadd.f32 0.0, %v1346
    %v1348 = vpop.f32.mrb[0].mxu0
    %1349 = vdwg.mxu0
    %1350 = vrot.lane.b32.xlu0 %v271, 112
    %v1351 = vpop.permute.xlu0 %1350
    %1352 = vrot.lane.b32.xlu0 %v276, 112
    %v1353 = vpop.permute.xlu0 %1352
    %v1357 = vsel %vm1086, %v1249, 0
    %v1360 = vsel %vm1086, %v1250, 0
    %1362 = vmatprep.subr.mxu0 0.0
    %1363 = vmatpush1.msra.mxu0 %v1351
    %1364 = vmatprep.subr.mxu0 0.0
    %1365 = vmatpush1.msra.mxu0 %v1353
    %1366 = vmatprep.subr.mxu0 0.0
    %1367 = vmatpush1.msra.mxu0 0.0
    %1368 = vmatprep.subr.mxu0 0.0
    %1369 = vmatpush1.msra.mxu0 0.0
    %1370 = vmatprep.subr.mxu0 0.0
    %1371 = vmatpush1.msra.mxu0 0.0
    %1372 = vmatprep.subr.mxu0 0.0
    %1373 = vmatpush1.msra.mxu0 0.0
    %1374 = vmatprep.subr.mxu0 0.0
    %1375 = vmatpush1.msra.mxu0 0.0
    %1376 = vmatprep.subr.mxu0 0.0
    %1377 = vmatpush1.msra.mxu0 0.0
    %1378 = vmatprep.subr.mxu0 0.0
    %1379 = vmatpush1.msra.mxu0 0.0
    %1380 = vmatprep.subr.mxu0 0.0
    %1381 = vmatpush1.msra.mxu0 0.0
    %1382 = vmatprep.subr.mxu0 0.0
    %1383 = vmatpush1.msra.mxu0 0.0
    %1384 = vmatprep.subr.mxu0 0.0
    %1385 = vmatpush1.msra.mxu0 0.0
    %1386 = vmatprep.subr.mxu0 0.0
    %1387 = vmatpush1.msra.mxu0 0.0
    %1388 = vmatprep.subr.mxu0 0.0
    %1389 = vmatpush1.msra.mxu0 0.0
    %1390 = vmatprep.subr.mxu0 0.0
    %1391 = vmatpush1.msra.mxu0 0.0
    %1392 = vmatprep.subr.mxu0 0.0
    %1393 = vmatpush1.msra.mxu0 0.0
    %1394 = vmatprep.subr.mxu0 0.0
    %1395 = vmatpush1.msra.mxu0 0.0
    %1396 = vmatprep.subr.mxu0 0.0
    %1397 = vmatpush1.msra.mxu0 0.0
    %1398 = vmatprep.subr.mxu0 0.0
    %1399 = vmatpush1.msra.mxu0 0.0
    %1400 = vmatprep.subr.mxu0 0.0
    %1401 = vmatpush1.msra.mxu0 0.0
    %1402 = vmatprep.subr.mxu0 0.0
    %1403 = vmatpush1.msra.mxu0 0.0
    %1404 = vmatprep.subr.mxu0 0.0
    %1405 = vmatpush1.msra.mxu0 0.0
    %1406 = vmatprep.subr.mxu0 0.0
    %1407 = vmatpush1.msra.mxu0 0.0
    %1408 = vmatprep.subr.mxu0 0.0
    %1409 = vmatpush1.msra.mxu0 0.0
    %1410 = vmatprep.subr.mxu0 0.0
    %1411 = vmatpush1.msra.mxu0 0.0
    %1412 = vmatprep.subr.mxu0 0.0
    %1413 = vmatpush1.msra.mxu0 0.0
    %1414 = vmatprep.subr.mxu0 0.0
    %1415 = vmatpush1.msra.mxu0 0.0
    %1416 = vmatprep.subr.mxu0 0.0
    %1417 = vmatpush1.msra.mxu0 0.0
    %1418 = vmatprep.subr.mxu0 0.0
    %1419 = vmatpush1.msra.mxu0 0.0
    %1420 = vmatprep.subr.mxu0 0.0
    %1421 = vmatpush1.msra.mxu0 0.0
    %1422 = vmatprep.subr.mxu0 0.0
    %1423 = vmatpush1.msra.mxu0 0.0
    %1424 = vmatprep.subr.mxu0 0.0
    %1425 = vmatpush1.msra.mxu0 0.0
    %1426 = vmatprep.mubr.f32.mxu0 0.0
    %1427 = vmatmul.mubr.f32.gmra.mrb[0].mxu0 %v1357
    %v1428 = vpop.f32.mrb[0].mxu0
    %v1429 = vadd.f32 0.0, %v1428
    %v1430 = vpop.f32.mrb[0].mxu0
    %1431 = vmatprep.mubr.f32.mxu0 0.0
    %1432 = vmatmul.mubr.f32.gmra.mrb[0].mxu0 %v1360
    %v1433 = vpop.f32.mrb[0].mxu0
    %v1434 = vadd.f32 0.0, %v1433
    %v1435 = vpop.f32.mrb[0].mxu0
    %1436 = vdwg.mxu0
    %1437 = vrot.lane.b32.xlu0 %v281, 112
    %v1438 = vpop.permute.xlu0 %1437
    %1439 = vrot.lane.b32.xlu0 %v286, 112
    %v1440 = vpop.permute.xlu0 %1439
    %v1444 = vsel %vm1086, %v1251, 0
    %v1447 = vsel %vm1086, %v1252, 0
    %1449 = vmatprep.subr.mxu0 0.0
    %1450 = vmatpush1.msra.mxu0 %v1438
    %1451 = vmatprep.subr.mxu0 0.0
    %1452 = vmatpush1.msra.mxu0 %v1440
    %1453 = vmatprep.subr.mxu0 0.0
    %1454 = vmatpush1.msra.mxu0 0.0
    %1455 = vmatprep.subr.mxu0 0.0
    %1456 = vmatpush1.msra.mxu0 0.0
    %1457 = vmatprep.subr.mxu0 0.0
    %1458 = vmatpush1.msra.mxu0 0.0
    %1459 = vmatprep.subr.mxu0 0.0
    %1460 = vmatpush1.msra.mxu0 0.0
    %1461 = vmatprep.subr.mxu0 0.0
    %1462 = vmatpush1.msra.mxu0 0.0
    %1463 = vmatprep.subr.mxu0 0.0
    %1464 = vmatpush1.msra.mxu0 0.0
    %1465 = vmatprep.subr.mxu0 0.0
    %1466 = vmatpush1.msra.mxu0 0.0
    %1467 = vmatprep.subr.mxu0 0.0
    %1468 = vmatpush1.msra.mxu0 0.0
    %1469 = vmatprep.subr.mxu0 0.0
    %1470 = vmatpush1.msra.mxu0 0.0
    %1471 = vmatprep.subr.mxu0 0.0
    %1472 = vmatpush1.msra.mxu0 0.0
    %1473 = vmatprep.subr.mxu0 0.0
    %1474 = vmatpush1.msra.mxu0 0.0
    %1475 = vmatprep.subr.mxu0 0.0
    %1476 = vmatpush1.msra.mxu0 0.0
    %1477 = vmatprep.subr.mxu0 0.0
    %1478 = vmatpush1.msra.mxu0 0.0
    %1479 = vmatprep.subr.mxu0 0.0
    %1480 = vmatpush1.msra.mxu0 0.0
    %1481 = vmatprep.subr.mxu0 0.0
    %1482 = vmatpush1.msra.mxu0 0.0
    %1483 = vmatprep.subr.mxu0 0.0
    %1484 = vmatpush1.msra.mxu0 0.0
    %1485 = vmatprep.subr.mxu0 0.0
    %1486 = vmatpush1.msra.mxu0 0.0
    %1487 = vmatprep.subr.mxu0 0.0
    %1488 = vmatpush1.msra.mxu0 0.0
    %1489 = vmatprep.subr.mxu0 0.0
    %1490 = vmatpush1.msra.mxu0 0.0
    %1491 = vmatprep.subr.mxu0 0.0
    %1492 = vmatpush1.msra.mxu0 0.0
    %1493 = vmatprep.subr.mxu0 0.0
    %1494 = vmatpush1.msra.mxu0 0.0
    %1495 = vmatprep.subr.mxu0 0.0
    %1496 = vmatpush1.msra.mxu0 0.0
    %1497 = vmatprep.subr.mxu0 0.0
    %1498 = vmatpush1.msra.mxu0 0.0
    %1499 = vmatprep.subr.mxu0 0.0
    %1500 = vmatpush1.msra.mxu0 0.0
    %1501 = vmatprep.subr.mxu0 0.0
    %1502 = vmatpush1.msra.mxu0 0.0
    %1503 = vmatprep.subr.mxu0 0.0
    %1504 = vmatpush1.msra.mxu0 0.0
    %1505 = vmatprep.subr.mxu0 0.0
    %1506 = vmatpush1.msra.mxu0 0.0
    %1507 = vmatprep.subr.mxu0 0.0
    %1508 = vmatpush1.msra.mxu0 0.0
    %1509 = vmatprep.subr.mxu0 0.0
    %1510 = vmatpush1.msra.mxu0 0.0
    %1511 = vmatprep.subr.mxu0 0.0
    %1512 = vmatpush1.msra.mxu0 0.0
    %1513 = vmatprep.mubr.f32.mxu0 0.0
    %1514 = vmatmul.mubr.f32.gmra.mrb[0].mxu0 %v1444
    %v1515 = vpop.f32.mrb[0].mxu0
    %v1516 = vadd.f32 0.0, %v1515
    %v1517 = vpop.f32.mrb[0].mxu0
    %1518 = vmatprep.mubr.f32.mxu0 0.0
    %1519 = vmatmul.mubr.f32.gmra.mrb[0].mxu0 %v1447
    %v1520 = vpop.f32.mrb[0].mxu0
    %v1521 = vadd.f32 0.0, %v1520
    %v1522 = vpop.f32.mrb[0].mxu0
    %1523 = vdwg.mxu0
    %1524 = vrot.lane.b32.xlu0 %v291, 112
    %v1525 = vpop.permute.xlu0 %1524
    %1526 = vrot.lane.b32.xlu0 %v296, 112
    %v1527 = vpop.permute.xlu0 %1526
    %v1531 = vsel %vm1086, %v1253, 0
    %v1534 = vsel %vm1086, %v1254, 0
    %1536 = vmatprep.subr.mxu0 0.0
    %1537 = vmatpush1.msra.mxu0 %v1525
    %1538 = vmatprep.subr.mxu0 0.0
    %1539 = vmatpush1.msra.mxu0 %v1527
    %1540 = vmatprep.subr.mxu0 0.0
    %1541 = vmatpush1.msra.mxu0 0.0
    %1542 = vmatprep.subr.mxu0 0.0
    %1543 = vmatpush1.msra.mxu0 0.0
    %1544 = vmatprep.subr.mxu0 0.0
    %1545 = vmatpush1.msra.mxu0 0.0
    %1546 = vmatprep.subr.mxu0 0.0
    %1547 = vmatpush1.msra.mxu0 0.0
    %1548 = vmatprep.subr.mxu0 0.0
    %1549 = vmatpush1.msra.mxu0 0.0
    %1550 = vmatprep.subr.mxu0 0.0
    %1551 = vmatpush1.msra.mxu0 0.0
    %1552 = vmatprep.subr.mxu0 0.0
    %1553 = vmatpush1.msra.mxu0 0.0
    %1554 = vmatprep.subr.mxu0 0.0
    %1555 = vmatpush1.msra.mxu0 0.0
    %1556 = vmatprep.subr.mxu0 0.0
    %1557 = vmatpush1.msra.mxu0 0.0
    %1558 = vmatprep.subr.mxu0 0.0
    %1559 = vmatpush1.msra.mxu0 0.0
    %1560 = vmatprep.subr.mxu0 0.0
    %1561 = vmatpush1.msra.mxu0 0.0
    %1562 = vmatprep.subr.mxu0 0.0
    %1563 = vmatpush1.msra.mxu0 0.0
    %1564 = vmatprep.subr.mxu0 0.0
    %1565 = vmatpush1.msra.mxu0 0.0
    %1566 = vmatprep.subr.mxu0 0.0
    %1567 = vmatpush1.msra.mxu0 0.0
    %1568 = vmatprep.subr.mxu0 0.0
    %1569 = vmatpush1.msra.mxu0 0.0
    %1570 = vmatprep.subr.mxu0 0.0
    %1571 = vmatpush1.msra.mxu0 0.0
    %1572 = vmatprep.subr.mxu0 0.0
    %1573 = vmatpush1.msra.mxu0 0.0
    %1574 = vmatprep.subr.mxu0 0.0
    %1575 = vmatpush1.msra.mxu0 0.0
    %1576 = vmatprep.subr.mxu0 0.0
    %1577 = vmatpush1.msra.mxu0 0.0
    %1578 = vmatprep.subr.mxu0 0.0
    %1579 = vmatpush1.msra.mxu0 0.0
    %1580 = vmatprep.subr.mxu0 0.0
    %1581 = vmatpush1.msra.mxu0 0.0
    %1582 = vmatprep.subr.mxu0 0.0
    %1583 = vmatpush1.msra.mxu0 0.0
    %1584 = vmatprep.subr.mxu0 0.0
    %1585 = vmatpush1.msra.mxu0 0.0
    %1586 = vmatprep.subr.mxu0 0.0
    %1587 = vmatpush1.msra.mxu0 0.0
    %1588 = vmatprep.subr.mxu0 0.0
    %1589 = vmatpush1.msra.mxu0 0.0
    %1590 = vmatprep.subr.mxu0 0.0
    %1591 = vmatpush1.msra.mxu0 0.0
    %1592 = vmatprep.subr.mxu0 0.0
    %1593 = vmatpush1.msra.mxu0 0.0
    %1594 = vmatprep.subr.mxu0 0.0
    %1595 = vmatpush1.msra.mxu0 0.0
    %1596 = vmatprep.subr.mxu0 0.0
    %1597 = vmatpush1.msra.mxu0 0.0
    %1598 = vmatprep.subr.mxu0 0.0
    %1599 = vmatpush1.msra.mxu0 0.0
    %1600 = vmatprep.mubr.f32.mxu0 0.0
    %1601 = vmatmul.mubr.f32.gmra.mrb[0].mxu0 %v1531
    %v1602 = vpop.f32.mrb[0].mxu0
    %v1603 = vadd.f32 0.0, %v1602
    %v1604 = vpop.f32.mrb[0].mxu0
    %1605 = vmatprep.mubr.f32.mxu0 0.0
    %1606 = vmatmul.mubr.f32.gmra.mrb[0].mxu0 %v1534
    %v1607 = vpop.f32.mrb[0].mxu0
    %v1608 = vadd.f32 0.0, %v1607
    %v1609 = vpop.f32.mrb[0].mxu0
    %1610 = vdwg.mxu0
    %1611 = vrot.lane.b32.xlu0 %v301, 112
    %v1612 = vpop.permute.xlu0 %1611
    %1613 = vrot.lane.b32.xlu0 %v306, 112
    %v1614 = vpop.permute.xlu0 %1613
    %v1618 = vsel %vm1086, %v1255, 0
    %v1621 = vsel %vm1086, %v1256, 0
    %1623 = vmatprep.subr.mxu0 0.0
    %1624 = vmatpush1.msra.mxu0 %v1612
    %1625 = vmatprep.subr.mxu0 0.0
    %1626 = vmatpush1.msra.mxu0 %v1614
    %1627 = vmatprep.subr.mxu0 0.0
    %1628 = vmatpush1.msra.mxu0 0.0
    %1629 = vmatprep.subr.mxu0 0.0
    %1630 = vmatpush1.msra.mxu0 0.0
    %1631 = vmatprep.subr.mxu0 0.0
    %1632 = vmatpush1.msra.mxu0 0.0
    %1633 = vmatprep.subr.mxu0 0.0
    %1634 = vmatpush1.msra.mxu0 0.0
    %1635 = vmatprep.subr.mxu0 0.0
    %1636 = vmatpush1.msra.mxu0 0.0
    %1637 = vmatprep.subr.mxu0 0.0
    %1638 = vmatpush1.msra.mxu0 0.0
    %1639 = vmatprep.subr.mxu0 0.0
    %1640 = vmatpush1.msra.mxu0 0.0
    %1641 = vmatprep.subr.mxu0 0.0
    %1642 = vmatpush1.msra.mxu0 0.0
    %1643 = vmatprep.subr.mxu0 0.0
    %1644 = vmatpush1.msra.mxu0 0.0
    %1645 = vmatprep.subr.mxu0 0.0
    %1646 = vmatpush1.msra.mxu0 0.0
    %1647 = vmatprep.subr.mxu0 0.0
    %1648 = vmatpush1.msra.mxu0 0.0
    %1649 = vmatprep.subr.mxu0 0.0
    %1650 = vmatpush1.msra.mxu0 0.0
    %1651 = vmatprep.subr.mxu0 0.0
    %1652 = vmatpush1.msra.mxu0 0.0
    %1653 = vmatprep.subr.mxu0 0.0
    %1654 = vmatpush1.msra.mxu0 0.0
    %1655 = vmatprep.subr.mxu0 0.0
    %1656 = vmatpush1.msra.mxu0 0.0
    %1657 = vmatprep.subr.mxu0 0.0
    %1658 = vmatpush1.msra.mxu0 0.0
    %1659 = vmatprep.subr.mxu0 0.0
    %1660 = vmatpush1.msra.mxu0 0.0
    %1661 = vmatprep.subr.mxu0 0.0
    %1662 = vmatpush1.msra.mxu0 0.0
    %1663 = vmatprep.subr.mxu0 0.0
    %1664 = vmatpush1.msra.mxu0 0.0
    %1665 = vmatprep.subr.mxu0 0.0
    %1666 = vmatpush1.msra.mxu0 0.0
    %1667 = vmatprep.subr.mxu0 0.0
    %1668 = vmatpush1.msra.mxu0 0.0
    %1669 = vmatprep.subr.mxu0 0.0
    %1670 = vmatpush1.msra.mxu0 0.0
    %1671 = vmatprep.subr.mxu0 0.0
    %1672 = vmatpush1.msra.mxu0 0.0
    %1673 = vmatprep.subr.mxu0 0.0
    %1674 = vmatpush1.msra.mxu0 0.0
    %1675 = vmatprep.subr.mxu0 0.0
    %1676 = vmatpush1.msra.mxu0 0.0
    %1677 = vmatprep.subr.mxu0 0.0
    %1678 = vmatpush1.msra.mxu0 0.0
    %1679 = vmatprep.subr.mxu0 0.0
    %1680 = vmatpush1.msra.mxu0 0.0
    %1681 = vmatprep.subr.mxu0 0.0
    %1682 = vmatpush1.msra.mxu0 0.0
    %1683 = vmatprep.subr.mxu0 0.0
    %1684 = vmatpush1.msra.mxu0 0.0
    %1685 = vmatprep.subr.mxu0 0.0
    %1686 = vmatpush1.msra.mxu0 0.0
    %1687 = vmatprep.mubr.f32.mxu0 0.0
    %1688 = vmatmul.mubr.f32.gmra.mrb[0].mxu0 %v1618
    %v1689 = vpop.f32.mrb[0].mxu0
    %v1690 = vadd.f32 0.0, %v1689
    %v1691 = vpop.f32.mrb[0].mxu0
    %1692 = vmatprep.mubr.f32.mxu0 0.0
    %1693 = vmatmul.mubr.f32.gmra.mrb[0].mxu0 %v1621
    %v1694 = vpop.f32.mrb[0].mxu0
    %v1695 = vadd.f32 0.0, %v1694
    %v1696 = vpop.f32.mrb[0].mxu0
    %1697 = vdwg.mxu0
    %1698 = vrot.lane.b32.xlu0 %v311, 112
    %v1699 = vpop.permute.xlu0 %1698
    %1700 = vrot.lane.b32.xlu0 %v316, 112
    %v1701 = vpop.permute.xlu0 %1700
    %v1705 = vsel %vm1086, %v1257, 0
    %v1708 = vsel %vm1086, %v1258, 0
    %1710 = vmatprep.subr.mxu0 0.0
    %1711 = vmatpush1.msra.mxu0 %v1699
    %1712 = vmatprep.subr.mxu0 0.0
    %1713 = vmatpush1.msra.mxu0 %v1701
    %1714 = vmatprep.subr.mxu0 0.0
    %1715 = vmatpush1.msra.mxu0 0.0
    %1716 = vmatprep.subr.mxu0 0.0
    %1717 = vmatpush1.msra.mxu0 0.0
    %1718 = vmatprep.subr.mxu0 0.0
    %1719 = vmatpush1.msra.mxu0 0.0
    %1720 = vmatprep.subr.mxu0 0.0
    %1721 = vmatpush1.msra.mxu0 0.0
    %1722 = vmatprep.subr.mxu0 0.0
    %1723 = vmatpush1.msra.mxu0 0.0
    %1724 = vmatprep.subr.mxu0 0.0
    %1725 = vmatpush1.msra.mxu0 0.0
    %1726 = vmatprep.subr.mxu0 0.0
    %1727 = vmatpush1.msra.mxu0 0.0
    %1728 = vmatprep.subr.mxu0 0.0
    %1729 = vmatpush1.msra.mxu0 0.0
    %1730 = vmatprep.subr.mxu0 0.0
    %1731 = vmatpush1.msra.mxu0 0.0
    %1732 = vmatprep.subr.mxu0 0.0
    %1733 = vmatpush1.msra.mxu0 0.0
    %1734 = vmatprep.subr.mxu0 0.0
    %1735 = vmatpush1.msra.mxu0 0.0
    %1736 = vmatprep.subr.mxu0 0.0
    %1737 = vmatpush1.msra.mxu0 0.0
    %1738 = vmatprep.subr.mxu0 0.0
    %1739 = vmatpush1.msra.mxu0 0.0
    %1740 = vmatprep.subr.mxu0 0.0
    %1741 = vmatpush1.msra.mxu0 0.0
    %1742 = vmatprep.subr.mxu0 0.0
    %1743 = vmatpush1.msra.mxu0 0.0
    %1744 = vmatprep.subr.mxu0 0.0
    %1745 = vmatpush1.msra.mxu0 0.0
    %1746 = vmatprep.subr.mxu0 0.0
    %1747 = vmatpush1.msra.mxu0 0.0
    %1748 = vmatprep.subr.mxu0 0.0
    %1749 = vmatpush1.msra.mxu0 0.0
    %1750 = vmatprep.subr.mxu0 0.0
    %1751 = vmatpush1.msra.mxu0 0.0
    %1752 = vmatprep.subr.mxu0 0.0
    %1753 = vmatpush1.msra.mxu0 0.0
    %1754 = vmatprep.subr.mxu0 0.0
    %1755 = vmatpush1.msra.mxu0 0.0
    %1756 = vmatprep.subr.mxu0 0.0
    %1757 = vmatpush1.msra.mxu0 0.0
    %1758 = vmatprep.subr.mxu0 0.0
    %1759 = vmatpush1.msra.mxu0 0.0
    %1760 = vmatprep.subr.mxu0 0.0
    %1761 = vmatpush1.msra.mxu0 0.0
    %1762 = vmatprep.subr.mxu0 0.0
    %1763 = vmatpush1.msra.mxu0 0.0
    %1764 = vmatprep.subr.mxu0 0.0
    %1765 = vmatpush1.msra.mxu0 0.0
    %1766 = vmatprep.subr.mxu0 0.0
    %1767 = vmatpush1.msra.mxu0 0.0
    %1768 = vmatprep.subr.mxu0 0.0
    %1769 = vmatpush1.msra.mxu0 0.0
    %1770 = vmatprep.subr.mxu0 0.0
    %1771 = vmatpush1.msra.mxu0 0.0
    %1772 = vmatprep.subr.mxu0 0.0
    %1773 = vmatpush1.msra.mxu0 0.0
    %1774 = vmatprep.mubr.f32.mxu0 0.0
    %1775 = vmatmul.mubr.f32.gmra.mrb[0].mxu0 %v1705
    %v1776 = vpop.f32.mrb[0].mxu0
    %v1777 = vadd.f32 0.0, %v1776
    %v1778 = vpop.f32.mrb[0].mxu0
    %1779 = vmatprep.mubr.f32.mxu0 0.0
    %1780 = vmatmul.mubr.f32.gmra.mrb[0].mxu0 %v1708
    %v1781 = vpop.f32.mrb[0].mxu0
    %v1782 = vadd.f32 0.0, %v1781
    %v1783 = vpop.f32.mrb[0].mxu0
    %1784 = vdwg.mxu0
    %1785 = vrot.lane.b32.xlu0 %v321, 112
    %v1786 = vpop.permute.xlu0 %1785
    %1787 = vrot.lane.b32.xlu0 %v326, 112
    %v1788 = vpop.permute.xlu0 %1787
    %v1792 = vsel %vm1086, %v1259, 0
    %v1795 = vsel %vm1086, %v1260, 0
    %1797 = vmatprep.subr.mxu0 0.0
    %1798 = vmatpush1.msra.mxu0 %v1786
    %1799 = vmatprep.subr.mxu0 0.0
    %1800 = vmatpush1.msra.mxu0 %v1788
    %1801 = vmatprep.subr.mxu0 0.0
    %1802 = vmatpush1.msra.mxu0 0.0
    %1803 = vmatprep.subr.mxu0 0.0
    %1804 = vmatpush1.msra.mxu0 0.0
    %1805 = vmatprep.subr.mxu0 0.0
    %1806 = vmatpush1.msra.mxu0 0.0
    %1807 = vmatprep.subr.mxu0 0.0
    %1808 = vmatpush1.msra.mxu0 0.0
    %1809 = vmatprep.subr.mxu0 0.0
    %1810 = vmatpush1.msra.mxu0 0.0
    %1811 = vmatprep.subr.mxu0 0.0
    %1812 = vmatpush1.msra.mxu0 0.0
    %1813 = vmatprep.subr.mxu0 0.0
    %1814 = vmatpush1.msra.mxu0 0.0
    %1815 = vmatprep.subr.mxu0 0.0
    %1816 = vmatpush1.msra.mxu0 0.0
    %1817 = vmatprep.subr.mxu0 0.0
    %1818 = vmatpush1.msra.mxu0 0.0
    %1819 = vmatprep.subr.mxu0 0.0
    %1820 = vmatpush1.msra.mxu0 0.0
    %1821 = vmatprep.subr.mxu0 0.0
    %1822 = vmatpush1.msra.mxu0 0.0
    %1823 = vmatprep.subr.mxu0 0.0
    %1824 = vmatpush1.msra.mxu0 0.0
    %1825 = vmatprep.subr.mxu0 0.0
    %1826 = vmatpush1.msra.mxu0 0.0
    %1827 = vmatprep.subr.mxu0 0.0
    %1828 = vmatpush1.msra.mxu0 0.0
    %1829 = vmatprep.subr.mxu0 0.0
    %1830 = vmatpush1.msra.mxu0 0.0
    %1831 = vmatprep.subr.mxu0 0.0
    %1832 = vmatpush1.msra.mxu0 0.0
    %1833 = vmatprep.subr.mxu0 0.0
    %1834 = vmatpush1.msra.mxu0 0.0
    %1835 = vmatprep.subr.mxu0 0.0
    %1836 = vmatpush1.msra.mxu0 0.0
    %1837 = vmatprep.subr.mxu0 0.0
    %1838 = vmatpush1.msra.mxu0 0.0
    %1839 = vmatprep.subr.mxu0 0.0
    %1840 = vmatpush1.msra.mxu0 0.0
    %1841 = vmatprep.subr.mxu0 0.0
    %1842 = vmatpush1.msra.mxu0 0.0
    %1843 = vmatprep.subr.mxu0 0.0
    %1844 = vmatpush1.msra.mxu0 0.0
    %1845 = vmatprep.subr.mxu0 0.0
    %1846 = vmatpush1.msra.mxu0 0.0
    %1847 = vmatprep.subr.mxu0 0.0
    %1848 = vmatpush1.msra.mxu0 0.0
    %1849 = vmatprep.subr.mxu0 0.0
    %1850 = vmatpush1.msra.mxu0 0.0
    %1851 = vmatprep.subr.mxu0 0.0
    %1852 = vmatpush1.msra.mxu0 0.0
    %1853 = vmatprep.subr.mxu0 0.0
    %1854 = vmatpush1.msra.mxu0 0.0
    %1855 = vmatprep.subr.mxu0 0.0
    %1856 = vmatpush1.msra.mxu0 0.0
    %1857 = vmatprep.subr.mxu0 0.0
    %1858 = vmatpush1.msra.mxu0 0.0
    %1859 = vmatprep.subr.mxu0 0.0
    %1860 = vmatpush1.msra.mxu0 0.0
    %1861 = vmatprep.mubr.f32.mxu0 0.0
    %1862 = vmatmul.mubr.f32.gmra.mrb[0].mxu0 %v1792
    %v1863 = vpop.f32.mrb[0].mxu0
    %v1864 = vadd.f32 0.0, %v1863
    %v1865 = vpop.f32.mrb[0].mxu0
    %1866 = vmatprep.mubr.f32.mxu0 0.0
    %1867 = vmatmul.mubr.f32.gmra.mrb[0].mxu0 %v1795
    %v1868 = vpop.f32.mrb[0].mxu0
    %v1869 = vadd.f32 0.0, %v1868
    %v1870 = vpop.f32.mrb[0].mxu0
    %1871 = vdwg.mxu0
    %1872 = vrot.lane.b32.xlu0 %v331, 112
    %v1873 = vpop.permute.xlu0 %1872
    %1874 = vrot.lane.b32.xlu0 %v336, 112
    %v1875 = vpop.permute.xlu0 %1874
    %v1879 = vsel %vm1086, %v1261, 0
    %v1882 = vsel %vm1086, %v1262, 0
    %1884 = vmatprep.subr.mxu0 0.0
    %1885 = vmatpush1.msra.mxu0 %v1873
    %1886 = vmatprep.subr.mxu0 0.0
    %1887 = vmatpush1.msra.mxu0 %v1875
    %1888 = vmatprep.subr.mxu0 0.0
    %1889 = vmatpush1.msra.mxu0 0.0
    %1890 = vmatprep.subr.mxu0 0.0
    %1891 = vmatpush1.msra.mxu0 0.0
    %1892 = vmatprep.subr.mxu0 0.0
    %1893 = vmatpush1.msra.mxu0 0.0
    %1894 = vmatprep.subr.mxu0 0.0
    %1895 = vmatpush1.msra.mxu0 0.0
    %1896 = vmatprep.subr.mxu0 0.0
    %1897 = vmatpush1.msra.mxu0 0.0
    %1898 = vmatprep.subr.mxu0 0.0
    %1899 = vmatpush1.msra.mxu0 0.0
    %1900 = vmatprep.subr.mxu0 0.0
    %1901 = vmatpush1.msra.mxu0 0.0
    %1902 = vmatprep.subr.mxu0 0.0
    %1903 = vmatpush1.msra.mxu0 0.0
    %1904 = vmatprep.subr.mxu0 0.0
    %1905 = vmatpush1.msra.mxu0 0.0
    %1906 = vmatprep.subr.mxu0 0.0
    %1907 = vmatpush1.msra.mxu0 0.0
    %1908 = vmatprep.subr.mxu0 0.0
    %1909 = vmatpush1.msra.mxu0 0.0
    %1910 = vmatprep.subr.mxu0 0.0
    %1911 = vmatpush1.msra.mxu0 0.0
    %1912 = vmatprep.subr.mxu0 0.0
    %1913 = vmatpush1.msra.mxu0 0.0
    %1914 = vmatprep.subr.mxu0 0.0
    %1915 = vmatpush1.msra.mxu0 0.0
    %1916 = vmatprep.subr.mxu0 0.0
    %1917 = vmatpush1.msra.mxu0 0.0
    %1918 = vmatprep.subr.mxu0 0.0
    %1919 = vmatpush1.msra.mxu0 0.0
    %1920 = vmatprep.subr.mxu0 0.0
    %1921 = vmatpush1.msra.mxu0 0.0
    %1922 = vmatprep.subr.mxu0 0.0
    %1923 = vmatpush1.msra.mxu0 0.0
    %1924 = vmatprep.subr.mxu0 0.0
    %1925 = vmatpush1.msra.mxu0 0.0
    %1926 = vmatprep.subr.mxu0 0.0
    %1927 = vmatpush1.msra.mxu0 0.0
    %1928 = vmatprep.subr.mxu0 0.0
    %1929 = vmatpush1.msra.mxu0 0.0
    %1930 = vmatprep.subr.mxu0 0.0
    %1931 = vmatpush1.msra.mxu0 0.0
    %1932 = vmatprep.subr.mxu0 0.0
    %1933 = vmatpush1.msra.mxu0 0.0
    %1934 = vmatprep.subr.mxu0 0.0
    %1935 = vmatpush1.msra.mxu0 0.0
    %1936 = vmatprep.subr.mxu0 0.0
    %1937 = vmatpush1.msra.mxu0 0.0
    %1938 = vmatprep.subr.mxu0 0.0
    %1939 = vmatpush1.msra.mxu0 0.0
    %1940 = vmatprep.subr.mxu0 0.0
    %1941 = vmatpush1.msra.mxu0 0.0
    %1942 = vmatprep.subr.mxu0 0.0
    %1943 = vmatpush1.msra.mxu0 0.0
    %1944 = vmatprep.subr.mxu0 0.0
    %1945 = vmatpush1.msra.mxu0 0.0
    %1946 = vmatprep.subr.mxu0 0.0
    %1947 = vmatpush1.msra.mxu0 0.0
    %1948 = vmatprep.mubr.f32.mxu0 0.0
    %1949 = vmatmul.mubr.f32.gmra.mrb[0].mxu0 %v1879
    %v1950 = vpop.f32.mrb[0].mxu0
    %v1951 = vadd.f32 0.0, %v1950
    %v1952 = vpop.f32.mrb[0].mxu0
    %1953 = vmatprep.mubr.f32.mxu0 0.0
    %1954 = vmatmul.mubr.f32.gmra.mrb[0].mxu0 %v1882
    %v1955 = vpop.f32.mrb[0].mxu0
    %v1956 = vadd.f32 0.0, %v1955
    %v1957 = vpop.f32.mrb[0].mxu0
    %1958 = vdwg.mxu0
    %1959 = vst.msk [vmem:[#allocation2] sm:$0xff] %vm347, %v1342
    %1960 = vst.msk [vmem:[#allocation2 + $0x8] sm:$0xff] %vm347, %v1347
    %1961 = vst.msk [vmem:[#allocation2 + $0x10] sm:$0xff] %vm347, %v1429
    %1962 = vst.msk [vmem:[#allocation2 + $0x18] sm:$0xff] %vm347, %v1434
    %1963 = vst.msk [vmem:[#allocation2 + $0x20] sm:$0xff] %vm347, %v1516
    %1964 = vst.msk [vmem:[#allocation2 + $0x28] sm:$0xff] %vm347, %v1521
    %1965 = vst.msk [vmem:[#allocation2 + $0x30] sm:$0xff] %vm347, %v1603
    %1966 = vst.msk [vmem:[#allocation2 + $0x38] sm:$0xff] %vm347, %v1608
    %1967 = vst.msk [vmem:[#allocation2 + $0x40] sm:$0xff] %vm347, %v1690
    %1968 = vst.msk [vmem:[#allocation2 + $0x48] sm:$0xff] %vm347, %v1695
    %1969 = vst.msk [vmem:[#allocation2 + $0x50] sm:$0xff] %vm347, %v1777
    %1970 = vst.msk [vmem:[#allocation2 + $0x58] sm:$0xff] %vm347, %v1782
    %1971 = vst.msk [vmem:[#allocation2 + $0x60] sm:$0xff] %vm347, %v1864
    %1972 = vst.msk [vmem:[#allocation2 + $0x68] sm:$0xff] %vm347, %v1869
    %1973 = vst.msk [vmem:[#allocation2 + $0x70] sm:$0xff] %vm347, %v1951
    %1974 = vst.msk [vmem:[#allocation2 + $0x78] sm:$0xff] %vm347, %v1956
    %s1975 = scalar_lea.vmem [#allocation9], 16
    %v1976 = vld [vmem:[%s1975] sm:$0xff]
    %v1977 = vld [vmem:[%s1975 + $0x8] sm:$0xff]
    %1978 = vrot.lane.b32.xlu0 %v261, 104
    %v1979 = vpop.permute.xlu0 %1978
    %1980 = vrot.lane.b32.xlu0 %v266, 104
    %v1981 = vpop.permute.xlu0 %1980
    %1982 = vrot.lane.b32.xlu0 %v261, 96
    %v1983 = vpop.permute.xlu0 %1982
    %1984 = vrot.lane.b32.xlu0 %v266, 96
    %v1985 = vpop.permute.xlu0 %1984
    %v1986 = vsel %vm347, %v1979, 0
    %v1988 = vsel %vm347, %v1981, 0
    %v1990 = vsel %vm347, %v1983, 0
    %v1992 = vsel %vm347, %v1985, 0
    %1994 = vmatprep.subr.mxu0 0.0
    %1995 = vmatpush1.xpose.msra.mxu0 %v1990
    %1996 = vmatprep.subr.mxu0 0.0
    %1997 = vmatpush1.xpose.msra.mxu0 %v1992
    %1998 = vmatprep.subr.mxu0 0.0
    %1999 = vmatpush1.xpose.msra.mxu0 0.0
    %2000 = vmatprep.subr.mxu0 0.0
    %2001 = vmatpush1.xpose.msra.mxu0 0.0
    %2002 = vmatprep.subr.mxu0 0.0
    %2003 = vmatpush1.xpose.msra.mxu0 0.0
    %2004 = vmatprep.subr.mxu0 0.0
    %2005 = vmatpush1.xpose.msra.mxu0 0.0
    %2006 = vmatprep.subr.mxu0 0.0
    %2007 = vmatpush1.xpose.msra.mxu0 0.0
    %2008 = vmatprep.subr.mxu0 0.0
    %2009 = vmatpush1.xpose.msra.mxu0 0.0
    %2010 = vmatprep.subr.mxu0 0.0
    %2011 = vmatpush1.xpose.msra.mxu0 0.0
    %2012 = vmatprep.subr.mxu0 0.0
    %2013 = vmatpush1.xpose.msra.mxu0 0.0
    %2014 = vmatprep.subr.mxu0 0.0
    %2015 = vmatpush1.xpose.msra.mxu0 0.0
    %2016 = vmatprep.subr.mxu0 0.0
    %2017 = vmatpush1.xpose.msra.mxu0 0.0
    %2018 = vmatprep.subr.mxu0 0.0
    %2019 = vmatpush1.xpose.msra.mxu0 0.0
    %2020 = vmatprep.subr.mxu0 0.0
    %2021 = vmatpush1.xpose.msra.mxu0 0.0
    %2022 = vmatprep.subr.mxu0 0.0
    %2023 = vmatpush1.xpose.msra.mxu0 0.0
    %2024 = vmatprep.subr.mxu0 0.0
    %2025 = vmatpush1.xpose.msra.mxu0 0.0
    %2026 = vmatprep.subr.mxu0 0.0
    %2027 = vmatpush1.xpose.msra.mxu0 0.0
    %2028 = vmatprep.subr.mxu0 0.0
    %2029 = vmatpush1.xpose.msra.mxu0 0.0
    %2030 = vmatprep.subr.mxu0 0.0
    %2031 = vmatpush1.xpose.msra.mxu0 0.0
    %2032 = vmatprep.subr.mxu0 0.0
    %2033 = vmatpush1.xpose.msra.mxu0 0.0
    %2034 = vmatprep.subr.mxu0 0.0
    %2035 = vmatpush1.xpose.msra.mxu0 0.0
    %2036 = vmatprep.subr.mxu0 0.0
    %2037 = vmatpush1.xpose.msra.mxu0 0.0
    %2038 = vmatprep.subr.mxu0 0.0
    %2039 = vmatpush1.xpose.msra.mxu0 0.0
    %2040 = vmatprep.subr.mxu0 0.0
    %2041 = vmatpush1.xpose.msra.mxu0 0.0
    %2042 = vmatprep.subr.mxu0 0.0
    %2043 = vmatpush1.xpose.msra.mxu0 0.0
    %2044 = vmatprep.subr.mxu0 0.0
    %2045 = vmatpush1.xpose.msra.mxu0 0.0
    %2046 = vmatprep.subr.mxu0 0.0
    %2047 = vmatpush1.xpose.msra.mxu0 0.0
    %2048 = vmatprep.subr.mxu0 0.0
    %2049 = vmatpush1.xpose.msra.mxu0 0.0
    %2050 = vmatprep.subr.mxu0 0.0
    %2051 = vmatpush1.xpose.msra.mxu0 0.0
    %2052 = vmatprep.subr.mxu0 0.0
    %2053 = vmatpush1.xpose.msra.mxu0 0.0
    %2054 = vmatprep.subr.mxu0 0.0
    %2055 = vmatpush1.xpose.msra.mxu0 0.0
    %2056 = vmatprep.subr.mxu0 0.0
    %2057 = vmatpush1.xpose.msra.mxu0 0.0
    %2058 = vmatprep.mubr.f32.mxu0 0.0
    %2059 = vmatmul.mubr.f32.gmra.mrb[0].mxu0 %v1986
    %v2060 = vpop.f32.mrb[0].mxu0
    %v2061 = vadd.f32 %v1976, %v2060
    %v2062 = vpop.f32.mrb[0].mxu0
    %2063 = vmatprep.mubr.f32.mxu0 0.0
    %2064 = vmatmul.mubr.f32.gmra.mrb[0].mxu0 %v1988
    %v2065 = vpop.f32.mrb[0].mxu0
    %v2066 = vadd.f32 %v1977, %v2065
    %v2067 = vpop.f32.mrb[0].mxu0
    %2068 = vdwg.mxu0
    %2069 = vrot.lane.b32.xlu0 %v271, 104
    %v2070 = vpop.permute.xlu0 %2069
    %2071 = vrot.lane.b32.xlu0 %v276, 104
    %v2072 = vpop.permute.xlu0 %2071
    %2073 = vrot.lane.b32.xlu0 %v271, 96
    %v2074 = vpop.permute.xlu0 %2073
    %2075 = vrot.lane.b32.xlu0 %v276, 96
    %v2076 = vpop.permute.xlu0 %2075
    %v2077 = vsel %vm347, %v2070, 0
    %v2079 = vsel %vm347, %v2072, 0
    %v2081 = vsel %vm347, %v2074, 0
    %v2083 = vsel %vm347, %v2076, 0
    %2085 = vmatprep.subr.mxu0 0.0
    %2086 = vmatpush1.xpose.msra.mxu0 %v2081
    %2087 = vmatprep.subr.mxu0 0.0
    %2088 = vmatpush1.xpose.msra.mxu0 %v2083
    %2089 = vmatprep.subr.mxu0 0.0
    %2090 = vmatpush1.xpose.msra.mxu0 0.0
    %2091 = vmatprep.subr.mxu0 0.0
    %2092 = vmatpush1.xpose.msra.mxu0 0.0
    %2093 = vmatprep.subr.mxu0 0.0
    %2094 = vmatpush1.xpose.msra.mxu0 0.0
    %2095 = vmatprep.subr.mxu0 0.0
    %2096 = vmatpush1.xpose.msra.mxu0 0.0
    %2097 = vmatprep.subr.mxu0 0.0
    %2098 = vmatpush1.xpose.msra.mxu0 0.0
    %2099 = vmatprep.subr.mxu0 0.0
    %2100 = vmatpush1.xpose.msra.mxu0 0.0
    %2101 = vmatprep.subr.mxu0 0.0
    %2102 = vmatpush1.xpose.msra.mxu0 0.0
    %2103 = vmatprep.subr.mxu0 0.0
    %2104 = vmatpush1.xpose.msra.mxu0 0.0
    %2105 = vmatprep.subr.mxu0 0.0
    %2106 = vmatpush1.xpose.msra.mxu0 0.0
    %2107 = vmatprep.subr.mxu0 0.0
    %2108 = vmatpush1.xpose.msra.mxu0 0.0
    %2109 = vmatprep.subr.mxu0 0.0
    %2110 = vmatpush1.xpose.msra.mxu0 0.0
    %2111 = vmatprep.subr.mxu0 0.0
    %2112 = vmatpush1.xpose.msra.mxu0 0.0
    %2113 = vmatprep.subr.mxu0 0.0
    %2114 = vmatpush1.xpose.msra.mxu0 0.0
    %2115 = vmatprep.subr.mxu0 0.0
    %2116 = vmatpush1.xpose.msra.mxu0 0.0
    %2117 = vmatprep.subr.mxu0 0.0
    %2118 = vmatpush1.xpose.msra.mxu0 0.0
    %2119 = vmatprep.subr.mxu0 0.0
    %2120 = vmatpush1.xpose.msra.mxu0 0.0
    %2121 = vmatprep.subr.mxu0 0.0
    %2122 = vmatpush1.xpose.msra.mxu0 0.0
    %2123 = vmatprep.subr.mxu0 0.0
    %2124 = vmatpush1.xpose.msra.mxu0 0.0
    %2125 = vmatprep.subr.mxu0 0.0
    %2126 = vmatpush1.xpose.msra.mxu0 0.0
    %2127 = vmatprep.subr.mxu0 0.0
    %2128 = vmatpush1.xpose.msra.mxu0 0.0
    %2129 = vmatprep.subr.mxu0 0.0
    %2130 = vmatpush1.xpose.msra.mxu0 0.0
    %2131 = vmatprep.subr.mxu0 0.0
    %2132 = vmatpush1.xpose.msra.mxu0 0.0
    %2133 = vmatprep.subr.mxu0 0.0
    %2134 = vmatpush1.xpose.msra.mxu0 0.0
    %2135 = vmatprep.subr.mxu0 0.0
    %2136 = vmatpush1.xpose.msra.mxu0 0.0
    %2137 = vmatprep.subr.mxu0 0.0
    %2138 = vmatpush1.xpose.msra.mxu0 0.0
    %2139 = vmatprep.subr.mxu0 0.0
    %2140 = vmatpush1.xpose.msra.mxu0 0.0
    %2141 = vmatprep.subr.mxu0 0.0
    %2142 = vmatpush1.xpose.msra.mxu0 0.0
    %2143 = vmatprep.subr.mxu0 0.0
    %2144 = vmatpush1.xpose.msra.mxu0 0.0
    %2145 = vmatprep.subr.mxu0 0.0
    %2146 = vmatpush1.xpose.msra.mxu0 0.0
    %2147 = vmatprep.subr.mxu0 0.0
    %2148 = vmatpush1.xpose.msra.mxu0 0.0
    %2149 = vmatprep.mubr.f32.mxu0 0.0
    %2150 = vmatmul.mubr.f32.gmra.mrb[0].mxu0 %v2077
    %v2151 = vpop.f32.mrb[0].mxu0
    %v2152 = vadd.f32 %v1976, %v2151
    %v2153 = vpop.f32.mrb[0].mxu0
    %2154 = vmatprep.mubr.f32.mxu0 0.0
    %2155 = vmatmul.mubr.f32.gmra.mrb[0].mxu0 %v2079
    %v2156 = vpop.f32.mrb[0].mxu0
    %v2157 = vadd.f32 %v1977, %v2156
    %v2158 = vpop.f32.mrb[0].mxu0
    %2159 = vdwg.mxu0
    %2160 = vrot.lane.b32.xlu0 %v281, 104
    %v2161 = vpop.permute.xlu0 %2160
    %2162 = vrot.lane.b32.xlu0 %v286, 104
    %v2163 = vpop.permute.xlu0 %2162
    %2164 = vrot.lane.b32.xlu0 %v281, 96
    %v2165 = vpop.permute.xlu0 %2164
    %2166 = vrot.lane.b32.xlu0 %v286, 96
    %v2167 = vpop.permute.xlu0 %2166
    %v2168 = vsel %vm347, %v2161, 0
    %v2170 = vsel %vm347, %v2163, 0
    %v2172 = vsel %vm347, %v2165, 0
    %v2174 = vsel %vm347, %v2167, 0
    %2176 = vmatprep.subr.mxu0 0.0
    %2177 = vmatpush1.xpose.msra.mxu0 %v2172
    %2178 = vmatprep.subr.mxu0 0.0
    %2179 = vmatpush1.xpose.msra.mxu0 %v2174
    %2180 = vmatprep.subr.mxu0 0.0
    %2181 = vmatpush1.xpose.msra.mxu0 0.0
    %2182 = vmatprep.subr.mxu0 0.0
    %2183 = vmatpush1.xpose.msra.mxu0 0.0
    %2184 = vmatprep.subr.mxu0 0.0
    %2185 = vmatpush1.xpose.msra.mxu0 0.0
    %2186 = vmatprep.subr.mxu0 0.0
    %2187 = vmatpush1.xpose.msra.mxu0 0.0
    %2188 = vmatprep.subr.mxu0 0.0
    %2189 = vmatpush1.xpose.msra.mxu0 0.0
    %2190 = vmatprep.subr.mxu0 0.0
    %2191 = vmatpush1.xpose.msra.mxu0 0.0
    %2192 = vmatprep.subr.mxu0 0.0
    %2193 = vmatpush1.xpose.msra.mxu0 0.0
    %2194 = vmatprep.subr.mxu0 0.0
    %2195 = vmatpush1.xpose.msra.mxu0 0.0
    %2196 = vmatprep.subr.mxu0 0.0
    %2197 = vmatpush1.xpose.msra.mxu0 0.0
    %2198 = vmatprep.subr.mxu0 0.0
    %2199 = vmatpush1.xpose.msra.mxu0 0.0
    %2200 = vmatprep.subr.mxu0 0.0
    %2201 = vmatpush1.xpose.msra.mxu0 0.0
    %2202 = vmatprep.subr.mxu0 0.0
    %2203 = vmatpush1.xpose.msra.mxu0 0.0
    %2204 = vmatprep.subr.mxu0 0.0
    %2205 = vmatpush1.xpose.msra.mxu0 0.0
    %2206 = vmatprep.subr.mxu0 0.0
    %2207 = vmatpush1.xpose.msra.mxu0 0.0
    %2208 = vmatprep.subr.mxu0 0.0
    %2209 = vmatpush1.xpose.msra.mxu0 0.0
    %2210 = vmatprep.subr.mxu0 0.0
    %2211 = vmatpush1.xpose.msra.mxu0 0.0
    %2212 = vmatprep.subr.mxu0 0.0
    %2213 = vmatpush1.xpose.msra.mxu0 0.0
    %2214 = vmatprep.subr.mxu0 0.0
    %2215 = vmatpush1.xpose.msra.mxu0 0.0
    %2216 = vmatprep.subr.mxu0 0.0
    %2217 = vmatpush1.xpose.msra.mxu0 0.0
    %2218 = vmatprep.subr.mxu0 0.0
    %2219 = vmatpush1.xpose.msra.mxu0 0.0
    %2220 = vmatprep.subr.mxu0 0.0
    %2221 = vmatpush1.xpose.msra.mxu0 0.0
    %2222 = vmatprep.subr.mxu0 0.0
    %2223 = vmatpush1.xpose.msra.mxu0 0.0
    %2224 = vmatprep.subr.mxu0 0.0
    %2225 = vmatpush1.xpose.msra.mxu0 0.0
    %2226 = vmatprep.subr.mxu0 0.0
    %2227 = vmatpush1.xpose.msra.mxu0 0.0
    %2228 = vmatprep.subr.mxu0 0.0
    %2229 = vmatpush1.xpose.msra.mxu0 0.0
    %2230 = vmatprep.subr.mxu0 0.0
    %2231 = vmatpush1.xpose.msra.mxu0 0.0
    %2232 = vmatprep.subr.mxu0 0.0
    %2233 = vmatpush1.xpose.msra.mxu0 0.0
    %2234 = vmatprep.subr.mxu0 0.0
    %2235 = vmatpush1.xpose.msra.mxu0 0.0
    %2236 = vmatprep.subr.mxu0 0.0
    %2237 = vmatpush1.xpose.msra.mxu0 0.0
    %2238 = vmatprep.subr.mxu0 0.0
    %2239 = vmatpush1.xpose.msra.mxu0 0.0
    %2240 = vmatprep.mubr.f32.mxu0 0.0
    %2241 = vmatmul.mubr.f32.gmra.mrb[0].mxu0 %v2168
    %v2242 = vpop.f32.mrb[0].mxu0
    %v2243 = vadd.f32 %v1976, %v2242
    %v2244 = vpop.f32.mrb[0].mxu0
    %2245 = vmatprep.mubr.f32.mxu0 0.0
    %2246 = vmatmul.mubr.f32.gmra.mrb[0].mxu0 %v2170
    %v2247 = vpop.f32.mrb[0].mxu0
    %v2248 = vadd.f32 %v1977, %v2247
    %v2249 = vpop.f32.mrb[0].mxu0
    %2250 = vdwg.mxu0
    %2251 = vrot.lane.b32.xlu0 %v291, 104
    %v2252 = vpop.permute.xlu0 %2251
    %2253 = vrot.lane.b32.xlu0 %v296, 104
    %v2254 = vpop.permute.xlu0 %2253
    %2255 = vrot.lane.b32.xlu0 %v291, 96
    %v2256 = vpop.permute.xlu0 %2255
    %2257 = vrot.lane.b32.xlu0 %v296, 96
    %v2258 = vpop.permute.xlu0 %2257
    %v2259 = vsel %vm347, %v2252, 0
    %v2261 = vsel %vm347, %v2254, 0
    %v2263 = vsel %vm347, %v2256, 0
    %v2265 = vsel %vm347, %v2258, 0
    %2267 = vmatprep.subr.mxu0 0.0
    %2268 = vmatpush1.xpose.msra.mxu0 %v2263
    %2269 = vmatprep.subr.mxu0 0.0
    %2270 = vmatpush1.xpose.msra.mxu0 %v2265
    %2271 = vmatprep.subr.mxu0 0.0
    %2272 = vmatpush1.xpose.msra.mxu0 0.0
    %2273 = vmatprep.subr.mxu0 0.0
    %2274 = vmatpush1.xpose.msra.mxu0 0.0
    %2275 = vmatprep.subr.mxu0 0.0
    %2276 = vmatpush1.xpose.msra.mxu0 0.0
    %2277 = vmatprep.subr.mxu0 0.0
    %2278 = vmatpush1.xpose.msra.mxu0 0.0
    %2279 = vmatprep.subr.mxu0 0.0
    %2280 = vmatpush1.xpose.msra.mxu0 0.0
    %2281 = vmatprep.subr.mxu0 0.0
    %2282 = vmatpush1.xpose.msra.mxu0 0.0
    %2283 = vmatprep.subr.mxu0 0.0
    %2284 = vmatpush1.xpose.msra.mxu0 0.0
    %2285 = vmatprep.subr.mxu0 0.0
    %2286 = vmatpush1.xpose.msra.mxu0 0.0
    %2287 = vmatprep.subr.mxu0 0.0
    %2288 = vmatpush1.xpose.msra.mxu0 0.0
    %2289 = vmatprep.subr.mxu0 0.0
    %2290 = vmatpush1.xpose.msra.mxu0 0.0
    %2291 = vmatprep.subr.mxu0 0.0
    %2292 = vmatpush1.xpose.msra.mxu0 0.0
    %2293 = vmatprep.subr.mxu0 0.0
    %2294 = vmatpush1.xpose.msra.mxu0 0.0
    %2295 = vmatprep.subr.mxu0 0.0
    %2296 = vmatpush1.xpose.msra.mxu0 0.0
    %2297 = vmatprep.subr.mxu0 0.0
    %2298 = vmatpush1.xpose.msra.mxu0 0.0
    %2299 = vmatprep.subr.mxu0 0.0
    %2300 = vmatpush1.xpose.msra.mxu0 0.0
    %2301 = vmatprep.subr.mxu0 0.0
    %2302 = vmatpush1.xpose.msra.mxu0 0.0
    %2303 = vmatprep.subr.mxu0 0.0
    %2304 = vmatpush1.xpose.msra.mxu0 0.0
    %2305 = vmatprep.subr.mxu0 0.0
    %2306 = vmatpush1.xpose.msra.mxu0 0.0
    %2307 = vmatprep.subr.mxu0 0.0
    %2308 = vmatpush1.xpose.msra.mxu0 0.0
    %2309 = vmatprep.subr.mxu0 0.0
    %2310 = vmatpush1.xpose.msra.mxu0 0.0
    %2311 = vmatprep.subr.mxu0 0.0
    %2312 = vmatpush1.xpose.msra.mxu0 0.0
    %2313 = vmatprep.subr.mxu0 0.0
    %2314 = vmatpush1.xpose.msra.mxu0 0.0
    %2315 = vmatprep.subr.mxu0 0.0
    %2316 = vmatpush1.xpose.msra.mxu0 0.0
    %2317 = vmatprep.subr.mxu0 0.0
    %2318 = vmatpush1.xpose.msra.mxu0 0.0
    %2319 = vmatprep.subr.mxu0 0.0
    %2320 = vmatpush1.xpose.msra.mxu0 0.0
    %2321 = vmatprep.subr.mxu0 0.0
    %2322 = vmatpush1.xpose.msra.mxu0 0.0
    %2323 = vmatprep.subr.mxu0 0.0
    %2324 = vmatpush1.xpose.msra.mxu0 0.0
    %2325 = vmatprep.subr.mxu0 0.0
    %2326 = vmatpush1.xpose.msra.mxu0 0.0
    %2327 = vmatprep.subr.mxu0 0.0
    %2328 = vmatpush1.xpose.msra.mxu0 0.0
    %2329 = vmatprep.subr.mxu0 0.0
    %2330 = vmatpush1.xpose.msra.mxu0 0.0
    %2331 = vmatprep.mubr.f32.mxu0 0.0
    %2332 = vmatmul.mubr.f32.gmra.mrb[0].mxu0 %v2259
    %v2333 = vpop.f32.mrb[0].mxu0
    %v2334 = vadd.f32 %v1976, %v2333
    %v2335 = vpop.f32.mrb[0].mxu0
    %2336 = vmatprep.mubr.f32.mxu0 0.0
    %2337 = vmatmul.mubr.f32.gmra.mrb[0].mxu0 %v2261
    %v2338 = vpop.f32.mrb[0].mxu0
    %v2339 = vadd.f32 %v1977, %v2338
    %v2340 = vpop.f32.mrb[0].mxu0
    %2341 = vdwg.mxu0
    %2342 = vrot.lane.b32.xlu0 %v301, 104
    %v2343 = vpop.permute.xlu0 %2342
    %2344 = vrot.lane.b32.xlu0 %v306, 104
    %v2345 = vpop.permute.xlu0 %2344
    %2346 = vrot.lane.b32.xlu0 %v301, 96
    %v2347 = vpop.permute.xlu0 %2346
    %2348 = vrot.lane.b32.xlu0 %v306, 96
    %v2349 = vpop.permute.xlu0 %2348
    %v2350 = vsel %vm347, %v2343, 0
    %v2352 = vsel %vm347, %v2345, 0
    %v2354 = vsel %vm347, %v2347, 0
    %v2356 = vsel %vm347, %v2349, 0
    %2358 = vmatprep.subr.mxu0 0.0
    %2359 = vmatpush1.xpose.msra.mxu0 %v2354
    %2360 = vmatprep.subr.mxu0 0.0
    %2361 = vmatpush1.xpose.msra.mxu0 %v2356
    %2362 = vmatprep.subr.mxu0 0.0
    %2363 = vmatpush1.xpose.msra.mxu0 0.0
    %2364 = vmatprep.subr.mxu0 0.0
    %2365 = vmatpush1.xpose.msra.mxu0 0.0
    %2366 = vmatprep.subr.mxu0 0.0
    %2367 = vmatpush1.xpose.msra.mxu0 0.0
    %2368 = vmatprep.subr.mxu0 0.0
    %2369 = vmatpush1.xpose.msra.mxu0 0.0
    %2370 = vmatprep.subr.mxu0 0.0
    %2371 = vmatpush1.xpose.msra.mxu0 0.0
    %2372 = vmatprep.subr.mxu0 0.0
    %2373 = vmatpush1.xpose.msra.mxu0 0.0
    %2374 = vmatprep.subr.mxu0 0.0
    %2375 = vmatpush1.xpose.msra.mxu0 0.0
    %2376 = vmatprep.subr.mxu0 0.0
    %2377 = vmatpush1.xpose.msra.mxu0 0.0
    %2378 = vmatprep.subr.mxu0 0.0
    %2379 = vmatpush1.xpose.msra.mxu0 0.0
    %2380 = vmatprep.subr.mxu0 0.0
    %2381 = vmatpush1.xpose.msra.mxu0 0.0
    %2382 = vmatprep.subr.mxu0 0.0
    %2383 = vmatpush1.xpose.msra.mxu0 0.0
    %2384 = vmatprep.subr.mxu0 0.0
    %2385 = vmatpush1.xpose.msra.mxu0 0.0
    %2386 = vmatprep.subr.mxu0 0.0
    %2387 = vmatpush1.xpose.msra.mxu0 0.0
    %2388 = vmatprep.subr.mxu0 0.0
    %2389 = vmatpush1.xpose.msra.mxu0 0.0
    %2390 = vmatprep.subr.mxu0 0.0
    %2391 = vmatpush1.xpose.msra.mxu0 0.0
    %2392 = vmatprep.subr.mxu0 0.0
    %2393 = vmatpush1.xpose.msra.mxu0 0.0
    %2394 = vmatprep.subr.mxu0 0.0
    %2395 = vmatpush1.xpose.msra.mxu0 0.0
    %2396 = vmatprep.subr.mxu0 0.0
    %2397 = vmatpush1.xpose.msra.mxu0 0.0
    %2398 = vmatprep.subr.mxu0 0.0
    %2399 = vmatpush1.xpose.msra.mxu0 0.0
    %2400 = vmatprep.subr.mxu0 0.0
    %2401 = vmatpush1.xpose.msra.mxu0 0.0
    %2402 = vmatprep.subr.mxu0 0.0
    %2403 = vmatpush1.xpose.msra.mxu0 0.0
    %2404 = vmatprep.subr.mxu0 0.0
    %2405 = vmatpush1.xpose.msra.mxu0 0.0
    %2406 = vmatprep.subr.mxu0 0.0
    %2407 = vmatpush1.xpose.msra.mxu0 0.0
    %2408 = vmatprep.subr.mxu0 0.0
    %2409 = vmatpush1.xpose.msra.mxu0 0.0
    %2410 = vmatprep.subr.mxu0 0.0
    %2411 = vmatpush1.xpose.msra.mxu0 0.0
    %2412 = vmatprep.subr.mxu0 0.0
    %2413 = vmatpush1.xpose.msra.mxu0 0.0
    %2414 = vmatprep.subr.mxu0 0.0
    %2415 = vmatpush1.xpose.msra.mxu0 0.0
    %2416 = vmatprep.subr.mxu0 0.0
    %2417 = vmatpush1.xpose.msra.mxu0 0.0
    %2418 = vmatprep.subr.mxu0 0.0
    %2419 = vmatpush1.xpose.msra.mxu0 0.0
    %2420 = vmatprep.subr.mxu0 0.0
    %2421 = vmatpush1.xpose.msra.mxu0 0.0
    %2422 = vmatprep.mubr.f32.mxu0 0.0
    %2423 = vmatmul.mubr.f32.gmra.mrb[0].mxu0 %v2350
    %v2424 = vpop.f32.mrb[0].mxu0
    %v2425 = vadd.f32 %v1976, %v2424
    %v2426 = vpop.f32.mrb[0].mxu0
    %2427 = vmatprep.mubr.f32.mxu0 0.0
    %2428 = vmatmul.mubr.f32.gmra.mrb[0].mxu0 %v2352
    %v2429 = vpop.f32.mrb[0].mxu0
    %v2430 = vadd.f32 %v1977, %v2429
    %v2431 = vpop.f32.mrb[0].mxu0
    %2432 = vdwg.mxu0
    %2433 = vrot.lane.b32.xlu0 %v311, 104
    %v2434 = vpop.permute.xlu0 %2433
    %2435 = vrot.lane.b32.xlu0 %v316, 104
    %v2436 = vpop.permute.xlu0 %2435
    %2437 = vrot.lane.b32.xlu0 %v311, 96
    %v2438 = vpop.permute.xlu0 %2437
    %2439 = vrot.lane.b32.xlu0 %v316, 96
    %v2440 = vpop.permute.xlu0 %2439
    %v2441 = vsel %vm347, %v2434, 0
    %v2443 = vsel %vm347, %v2436, 0
    %v2445 = vsel %vm347, %v2438, 0
    %v2447 = vsel %vm347, %v2440, 0
    %2449 = vmatprep.subr.mxu0 0.0
    %2450 = vmatpush1.xpose.msra.mxu0 %v2445
    %2451 = vmatprep.subr.mxu0 0.0
    %2452 = vmatpush1.xpose.msra.mxu0 %v2447
    %2453 = vmatprep.subr.mxu0 0.0
    %2454 = vmatpush1.xpose.msra.mxu0 0.0
    %2455 = vmatprep.subr.mxu0 0.0
    %2456 = vmatpush1.xpose.msra.mxu0 0.0
    %2457 = vmatprep.subr.mxu0 0.0
    %2458 = vmatpush1.xpose.msra.mxu0 0.0
    %2459 = vmatprep.subr.mxu0 0.0
    %2460 = vmatpush1.xpose.msra.mxu0 0.0
    %2461 = vmatprep.subr.mxu0 0.0
    %2462 = vmatpush1.xpose.msra.mxu0 0.0
    %2463 = vmatprep.subr.mxu0 0.0
    %2464 = vmatpush1.xpose.msra.mxu0 0.0
    %2465 = vmatprep.subr.mxu0 0.0
    %2466 = vmatpush1.xpose.msra.mxu0 0.0
    %2467 = vmatprep.subr.mxu0 0.0
    %2468 = vmatpush1.xpose.msra.mxu0 0.0
    %2469 = vmatprep.subr.mxu0 0.0
    %2470 = vmatpush1.xpose.msra.mxu0 0.0
    %2471 = vmatprep.subr.mxu0 0.0
    %2472 = vmatpush1.xpose.msra.mxu0 0.0
    %2473 = vmatprep.subr.mxu0 0.0
    %2474 = vmatpush1.xpose.msra.mxu0 0.0
    %2475 = vmatprep.subr.mxu0 0.0
    %2476 = vmatpush1.xpose.msra.mxu0 0.0
    %2477 = vmatprep.subr.mxu0 0.0
    %2478 = vmatpush1.xpose.msra.mxu0 0.0
    %2479 = vmatprep.subr.mxu0 0.0
    %2480 = vmatpush1.xpose.msra.mxu0 0.0
    %2481 = vmatprep.subr.mxu0 0.0
    %2482 = vmatpush1.xpose.msra.mxu0 0.0
    %2483 = vmatprep.subr.mxu0 0.0
    %2484 = vmatpush1.xpose.msra.mxu0 0.0
    %2485 = vmatprep.subr.mxu0 0.0
    %2486 = vmatpush1.xpose.msra.mxu0 0.0
    %2487 = vmatprep.subr.mxu0 0.0
    %2488 = vmatpush1.xpose.msra.mxu0 0.0
    %2489 = vmatprep.subr.mxu0 0.0
    %2490 = vmatpush1.xpose.msra.mxu0 0.0
    %2491 = vmatprep.subr.mxu0 0.0
    %2492 = vmatpush1.xpose.msra.mxu0 0.0
    %2493 = vmatprep.subr.mxu0 0.0
    %2494 = vmatpush1.xpose.msra.mxu0 0.0
    %2495 = vmatprep.subr.mxu0 0.0
    %2496 = vmatpush1.xpose.msra.mxu0 0.0
    %2497 = vmatprep.subr.mxu0 0.0
    %2498 = vmatpush1.xpose.msra.mxu0 0.0
    %2499 = vmatprep.subr.mxu0 0.0
    %2500 = vmatpush1.xpose.msra.mxu0 0.0
    %2501 = vmatprep.subr.mxu0 0.0
    %2502 = vmatpush1.xpose.msra.mxu0 0.0
    %2503 = vmatprep.subr.mxu0 0.0
    %2504 = vmatpush1.xpose.msra.mxu0 0.0
    %2505 = vmatprep.subr.mxu0 0.0
    %2506 = vmatpush1.xpose.msra.mxu0 0.0
    %2507 = vmatprep.subr.mxu0 0.0
    %2508 = vmatpush1.xpose.msra.mxu0 0.0
    %2509 = vmatprep.subr.mxu0 0.0
    %2510 = vmatpush1.xpose.msra.mxu0 0.0
    %2511 = vmatprep.subr.mxu0 0.0
    %2512 = vmatpush1.xpose.msra.mxu0 0.0
    %2513 = vmatprep.mubr.f32.mxu0 0.0
    %2514 = vmatmul.mubr.f32.gmra.mrb[0].mxu0 %v2441
    %v2515 = vpop.f32.mrb[0].mxu0
    %v2516 = vadd.f32 %v1976, %v2515
    %v2517 = vpop.f32.mrb[0].mxu0
    %2518 = vmatprep.mubr.f32.mxu0 0.0
    %2519 = vmatmul.mubr.f32.gmra.mrb[0].mxu0 %v2443
    %v2520 = vpop.f32.mrb[0].mxu0
    %v2521 = vadd.f32 %v1977, %v2520
    %v2522 = vpop.f32.mrb[0].mxu0
    %2523 = vdwg.mxu0
    %2524 = vrot.lane.b32.xlu0 %v321, 104
    %v2525 = vpop.permute.xlu0 %2524
    %2526 = vrot.lane.b32.xlu0 %v326, 104
    %v2527 = vpop.permute.xlu0 %2526
    %2528 = vrot.lane.b32.xlu0 %v321, 96
    %v2529 = vpop.permute.xlu0 %2528
    %2530 = vrot.lane.b32.xlu0 %v326, 96
    %v2531 = vpop.permute.xlu0 %2530
    %v2532 = vsel %vm347, %v2525, 0
    %v2534 = vsel %vm347, %v2527, 0
    %v2536 = vsel %vm347, %v2529, 0
    %v2538 = vsel %vm347, %v2531, 0
    %2540 = vmatprep.subr.mxu0 0.0
    %2541 = vmatpush1.xpose.msra.mxu0 %v2536
    %2542 = vmatprep.subr.mxu0 0.0
    %2543 = vmatpush1.xpose.msra.mxu0 %v2538
    %2544 = vmatprep.subr.mxu0 0.0
    %2545 = vmatpush1.xpose.msra.mxu0 0.0
    %2546 = vmatprep.subr.mxu0 0.0
    %2547 = vmatpush1.xpose.msra.mxu0 0.0
    %2548 = vmatprep.subr.mxu0 0.0
    %2549 = vmatpush1.xpose.msra.mxu0 0.0
    %2550 = vmatprep.subr.mxu0 0.0
    %2551 = vmatpush1.xpose.msra.mxu0 0.0
    %2552 = vmatprep.subr.mxu0 0.0
    %2553 = vmatpush1.xpose.msra.mxu0 0.0
    %2554 = vmatprep.subr.mxu0 0.0
    %2555 = vmatpush1.xpose.msra.mxu0 0.0
    %2556 = vmatprep.subr.mxu0 0.0
    %2557 = vmatpush1.xpose.msra.mxu0 0.0
    %2558 = vmatprep.subr.mxu0 0.0
    %2559 = vmatpush1.xpose.msra.mxu0 0.0
    %2560 = vmatprep.subr.mxu0 0.0
    %2561 = vmatpush1.xpose.msra.mxu0 0.0
    %2562 = vmatprep.subr.mxu0 0.0
    %2563 = vmatpush1.xpose.msra.mxu0 0.0
    %2564 = vmatprep.subr.mxu0 0.0
    %2565 = vmatpush1.xpose.msra.mxu0 0.0
    %2566 = vmatprep.subr.mxu0 0.0
    %2567 = vmatpush1.xpose.msra.mxu0 0.0
    %2568 = vmatprep.subr.mxu0 0.0
    %2569 = vmatpush1.xpose.msra.mxu0 0.0
    %2570 = vmatprep.subr.mxu0 0.0
    %2571 = vmatpush1.xpose.msra.mxu0 0.0
    %2572 = vmatprep.subr.mxu0 0.0
    %2573 = vmatpush1.xpose.msra.mxu0 0.0
    %2574 = vmatprep.subr.mxu0 0.0
    %2575 = vmatpush1.xpose.msra.mxu0 0.0
    %2576 = vmatprep.subr.mxu0 0.0
    %2577 = vmatpush1.xpose.msra.mxu0 0.0
    %2578 = vmatprep.subr.mxu0 0.0
    %2579 = vmatpush1.xpose.msra.mxu0 0.0
    %2580 = vmatprep.subr.mxu0 0.0
    %2581 = vmatpush1.xpose.msra.mxu0 0.0
    %2582 = vmatprep.subr.mxu0 0.0
    %2583 = vmatpush1.xpose.msra.mxu0 0.0
    %2584 = vmatprep.subr.mxu0 0.0
    %2585 = vmatpush1.xpose.msra.mxu0 0.0
    %2586 = vmatprep.subr.mxu0 0.0
    %2587 = vmatpush1.xpose.msra.mxu0 0.0
    %2588 = vmatprep.subr.mxu0 0.0
    %2589 = vmatpush1.xpose.msra.mxu0 0.0
    %2590 = vmatprep.subr.mxu0 0.0
    %2591 = vmatpush1.xpose.msra.mxu0 0.0
    %2592 = vmatprep.subr.mxu0 0.0
    %2593 = vmatpush1.xpose.msra.mxu0 0.0
    %2594 = vmatprep.subr.mxu0 0.0
    %2595 = vmatpush1.xpose.msra.mxu0 0.0
    %2596 = vmatprep.subr.mxu0 0.0
    %2597 = vmatpush1.xpose.msra.mxu0 0.0
    %2598 = vmatprep.subr.mxu0 0.0
    %2599 = vmatpush1.xpose.msra.mxu0 0.0
    %2600 = vmatprep.subr.mxu0 0.0
    %2601 = vmatpush1.xpose.msra.mxu0 0.0
    %2602 = vmatprep.subr.mxu0 0.0
    %2603 = vmatpush1.xpose.msra.mxu0 0.0
    %2604 = vmatprep.mubr.f32.mxu0 0.0
    %2605 = vmatmul.mubr.f32.gmra.mrb[0].mxu0 %v2532
    %v2606 = vpop.f32.mrb[0].mxu0
    %v2607 = vadd.f32 %v1976, %v2606
    %v2608 = vpop.f32.mrb[0].mxu0
    %2609 = vmatprep.mubr.f32.mxu0 0.0
    %2610 = vmatmul.mubr.f32.gmra.mrb[0].mxu0 %v2534
    %v2611 = vpop.f32.mrb[0].mxu0
    %v2612 = vadd.f32 %v1977, %v2611
    %v2613 = vpop.f32.mrb[0].mxu0
    %2614 = vdwg.mxu0
    %2615 = vrot.lane.b32.xlu0 %v331, 104
    %v2616 = vpop.permute.xlu0 %2615
    %2617 = vrot.lane.b32.xlu0 %v336, 104
    %v2618 = vpop.permute.xlu0 %2617
    %2619 = vrot.lane.b32.xlu0 %v331, 96
    %v2620 = vpop.permute.xlu0 %2619
    %2621 = vrot.lane.b32.xlu0 %v336, 96
    %v2622 = vpop.permute.xlu0 %2621
    %v2623 = vsel %vm347, %v2616, 0
    %v2625 = vsel %vm347, %v2618, 0
    %v2627 = vsel %vm347, %v2620, 0
    %v2629 = vsel %vm347, %v2622, 0
    %2631 = vmatprep.subr.mxu0 0.0
    %2632 = vmatpush1.xpose.msra.mxu0 %v2627
    %2633 = vmatprep.subr.mxu0 0.0
    %2634 = vmatpush1.xpose.msra.mxu0 %v2629
    %2635 = vmatprep.subr.mxu0 0.0
    %2636 = vmatpush1.xpose.msra.mxu0 0.0
    %2637 = vmatprep.subr.mxu0 0.0
    %2638 = vmatpush1.xpose.msra.mxu0 0.0
    %2639 = vmatprep.subr.mxu0 0.0
    %2640 = vmatpush1.xpose.msra.mxu0 0.0
    %2641 = vmatprep.subr.mxu0 0.0
    %2642 = vmatpush1.xpose.msra.mxu0 0.0
    %2643 = vmatprep.subr.mxu0 0.0
    %2644 = vmatpush1.xpose.msra.mxu0 0.0
    %2645 = vmatprep.subr.mxu0 0.0
    %2646 = vmatpush1.xpose.msra.mxu0 0.0
    %2647 = vmatprep.subr.mxu0 0.0
    %2648 = vmatpush1.xpose.msra.mxu0 0.0
    %2649 = vmatprep.subr.mxu0 0.0
    %2650 = vmatpush1.xpose.msra.mxu0 0.0
    %2651 = vmatprep.subr.mxu0 0.0
    %2652 = vmatpush1.xpose.msra.mxu0 0.0
    %2653 = vmatprep.subr.mxu0 0.0
    %2654 = vmatpush1.xpose.msra.mxu0 0.0
    %2655 = vmatprep.subr.mxu0 0.0
    %2656 = vmatpush1.xpose.msra.mxu0 0.0
    %2657 = vmatprep.subr.mxu0 0.0
    %2658 = vmatpush1.xpose.msra.mxu0 0.0
    %2659 = vmatprep.subr.mxu0 0.0
    %2660 = vmatpush1.xpose.msra.mxu0 0.0
    %2661 = vmatprep.subr.mxu0 0.0
    %2662 = vmatpush1.xpose.msra.mxu0 0.0
    %2663 = vmatprep.subr.mxu0 0.0
    %2664 = vmatpush1.xpose.msra.mxu0 0.0
    %2665 = vmatprep.subr.mxu0 0.0
    %2666 = vmatpush1.xpose.msra.mxu0 0.0
    %2667 = vmatprep.subr.mxu0 0.0
    %2668 = vmatpush1.xpose.msra.mxu0 0.0
    %2669 = vmatprep.subr.mxu0 0.0
    %2670 = vmatpush1.xpose.msra.mxu0 0.0
    %2671 = vmatprep.subr.mxu0 0.0
    %2672 = vmatpush1.xpose.msra.mxu0 0.0
    %2673 = vmatprep.subr.mxu0 0.0
    %2674 = vmatpush1.xpose.msra.mxu0 0.0
    %2675 = vmatprep.subr.mxu0 0.0
    %2676 = vmatpush1.xpose.msra.mxu0 0.0
    %2677 = vmatprep.subr.mxu0 0.0
    %2678 = vmatpush1.xpose.msra.mxu0 0.0
    %2679 = vmatprep.subr.mxu0 0.0
    %2680 = vmatpush1.xpose.msra.mxu0 0.0
    %2681 = vmatprep.subr.mxu0 0.0
    %2682 = vmatpush1.xpose.msra.mxu0 0.0
    %2683 = vmatprep.subr.mxu0 0.0
    %2684 = vmatpush1.xpose.msra.mxu0 0.0
    %2685 = vmatprep.subr.mxu0 0.0
    %2686 = vmatpush1.xpose.msra.mxu0 0.0
    %2687 = vmatprep.subr.mxu0 0.0
    %2688 = vmatpush1.xpose.msra.mxu0 0.0
    %2689 = vmatprep.subr.mxu0 0.0
    %2690 = vmatpush1.xpose.msra.mxu0 0.0
    %2691 = vmatprep.subr.mxu0 0.0
    %2692 = vmatpush1.xpose.msra.mxu0 0.0
    %2693 = vmatprep.subr.mxu0 0.0
    %2694 = vmatpush1.xpose.msra.mxu0 0.0
    %2695 = vmatprep.mubr.f32.mxu0 0.0
    %2696 = vmatmul.mubr.f32.gmra.mrb[0].mxu0 %v2623
    %v2697 = vpop.f32.mrb[0].mxu0
    %v2698 = vadd.f32 %v1976, %v2697
    %v2699 = vpop.f32.mrb[0].mxu0
    %2700 = vmatprep.mubr.f32.mxu0 0.0
    %2701 = vmatmul.mubr.f32.gmra.mrb[0].mxu0 %v2625
    %v2702 = vpop.f32.mrb[0].mxu0
    %v2703 = vadd.f32 %v1977, %v2702
    %v2704 = vpop.f32.mrb[0].mxu0
    %2705 = vdwg.mxu0
    %v2706 = vld [vmem:[#allocation11] sm:$0xff]
    %v2707 = vld [vmem:[#allocation11 + $0x8] sm:$0xff]
    %v2708 = vld [vmem:[#allocation11 + $0x10] sm:$0xff]
    %v2709 = vld [vmem:[#allocation11 + $0x18] sm:$0xff]
    %v2710 = vld [vmem:[#allocation11 + $0x20] sm:$0xff]
    %v2711 = vld [vmem:[#allocation11 + $0x28] sm:$0xff]
    %v2712 = vld [vmem:[#allocation11 + $0x30] sm:$0xff]
    %v2713 = vld [vmem:[#allocation11 + $0x38] sm:$0xff]
    %v2714 = vld [vmem:[#allocation11 + $0x40] sm:$0xff]
    %v2715 = vld [vmem:[#allocation11 + $0x48] sm:$0xff]
    %v2716 = vld [vmem:[#allocation11 + $0x50] sm:$0xff]
    %v2717 = vld [vmem:[#allocation11 + $0x58] sm:$0xff]
    %v2718 = vld [vmem:[#allocation11 + $0x60] sm:$0xff]
    %v2719 = vld [vmem:[#allocation11 + $0x68] sm:$0xff]
    %v2720 = vld [vmem:[#allocation11 + $0x70] sm:$0xff]
    %v2721 = vld [vmem:[#allocation11 + $0x78] sm:$0xff]
    %v2722 = vadd.f32 %v2061, %v2706
    %v2723 = vadd.f32 %v2066, %v2707
    %v2724 = vadd.f32 %v2152, %v2708
    %v2725 = vadd.f32 %v2157, %v2709
    %v2726 = vadd.f32 %v2243, %v2710
    %v2727 = vadd.f32 %v2248, %v2711
    %v2728 = vadd.f32 %v2334, %v2712
    %v2729 = vadd.f32 %v2339, %v2713
    %v2730 = vadd.f32 %v2425, %v2714
    %v2731 = vadd.f32 %v2430, %v2715
    %v2732 = vadd.f32 %v2516, %v2716
    %v2733 = vadd.f32 %v2521, %v2717
    %v2734 = vadd.f32 %v2607, %v2718
    %v2735 = vadd.f32 %v2612, %v2719
    %v2736 = vadd.f32 %v2698, %v2720
    %v2737 = vadd.f32 %v2703, %v2721
    %v2738 = vsel %vm1086, %v2722, -inf
    %2739 = vmax.xlane.f32.xlu0 %v2738
    %v2740 = vpop.xlane.xlu0 %2739
    %v2741 = vsel %vm1086, %v2723, -inf
    %2742 = vmax.xlane.f32.xlu0 %v2741
    %v2743 = vpop.xlane.xlu0 %2742
    %v2744 = vsel %vm1086, %v2724, -inf
    %2745 = vmax.xlane.f32.xlu0 %v2744
    %v2746 = vpop.xlane.xlu0 %2745
    %v2747 = vsel %vm1086, %v2725, -inf
    %2748 = vmax.xlane.f32.xlu0 %v2747
    %v2749 = vpop.xlane.xlu0 %2748
    %v2750 = vsel %vm1086, %v2726, -inf
    %2751 = vmax.xlane.f32.xlu0 %v2750
    %v2752 = vpop.xlane.xlu0 %2751
    %v2753 = vsel %vm1086, %v2727, -inf
    %2754 = vmax.xlane.f32.xlu0 %v2753
    %v2755 = vpop.xlane.xlu0 %2754
    %v2756 = vsel %vm1086, %v2728, -inf
    %2757 = vmax.xlane.f32.xlu0 %v2756
    %v2758 = vpop.xlane.xlu0 %2757
    %v2759 = vsel %vm1086, %v2729, -inf
    %2760 = vmax.xlane.f32.xlu0 %v2759
    %v2761 = vpop.xlane.xlu0 %2760
    %v2762 = vsel %vm1086, %v2730, -inf
    %2763 = vmax.xlane.f32.xlu0 %v2762
    %v2764 = vpop.xlane.xlu0 %2763
    %v2765 = vsel %vm1086, %v2731, -inf
    %2766 = vmax.xlane.f32.xlu0 %v2765
    %v2767 = vpop.xlane.xlu0 %2766
    %v2768 = vsel %vm1086, %v2732, -inf
    %2769 = vmax.xlane.f32.xlu0 %v2768
    %v2770 = vpop.xlane.xlu0 %2769
    %v2771 = vsel %vm1086, %v2733, -inf
    %2772 = vmax.xlane.f32.xlu0 %v2771
    %v2773 = vpop.xlane.xlu0 %2772
    %v2774 = vsel %vm1086, %v2734, -inf
    %2775 = vmax.xlane.f32.xlu0 %v2774
    %v2776 = vpop.xlane.xlu0 %2775
    %v2777 = vsel %vm1086, %v2735, -inf
    %2778 = vmax.xlane.f32.xlu0 %v2777
    %v2779 = vpop.xlane.xlu0 %2778
    %v2780 = vsel %vm1086, %v2736, -inf
    %2781 = vmax.xlane.f32.xlu0 %v2780
    %v2782 = vpop.xlane.xlu0 %2781
    %v2783 = vsel %vm1086, %v2737, -inf
    %2784 = vmax.xlane.f32.xlu0 %v2783
    %v2785 = vpop.xlane.xlu0 %2784
    %v2786 = vsub.f32 %v2722, %v2740
    %v2787 = vsub.f32 %v2723, %v2743
    %v2788 = vsub.f32 %v2724, %v2746
    %v2789 = vsub.f32 %v2725, %v2749
    %v2790 = vsub.f32 %v2726, %v2752
    %v2791 = vsub.f32 %v2727, %v2755
    %v2792 = vsub.f32 %v2728, %v2758
    %v2793 = vsub.f32 %v2729, %v2761
    %v2794 = vsub.f32 %v2730, %v2764
    %v2795 = vsub.f32 %v2731, %v2767
    %v2796 = vsub.f32 %v2732, %v2770
    %v2797 = vsub.f32 %v2733, %v2773
    %v2798 = vsub.f32 %v2734, %v2776
    %v2799 = vsub.f32 %v2735, %v2779
    %v2800 = vsub.f32 %v2736, %v2782
    %v2801 = vsub.f32 %v2737, %v2785
    %v2802 = vmul.f32 %v2786, 1.442695
    %v2803 = vpow.pop %v2802
    %v2804 = vmul.f32 %v2787, 1.442695
    %v2805 = vpow.pop %v2804
    %v2806 = vmul.f32 %v2788, 1.442695
    %v2807 = vpow.pop %v2806
    %v2808 = vmul.f32 %v2789, 1.442695
    %v2809 = vpow.pop %v2808
    %v2810 = vmul.f32 %v2790, 1.442695
    %v2811 = vpow.pop %v2810
    %v2812 = vmul.f32 %v2791, 1.442695
    %v2813 = vpow.pop %v2812
    %v2814 = vmul.f32 %v2792, 1.442695
    %v2815 = vpow.pop %v2814
    %v2816 = vmul.f32 %v2793, 1.442695
    %v2817 = vpow.pop %v2816
    %v2818 = vmul.f32 %v2794, 1.442695
    %v2819 = vpow.pop %v2818
    %v2820 = vmul.f32 %v2795, 1.442695
    %v2821 = vpow.pop %v2820
    %v2822 = vmul.f32 %v2796, 1.442695
    %v2823 = vpow.pop %v2822
    %v2824 = vmul.f32 %v2797, 1.442695
    %v2825 = vpow.pop %v2824
    %v2826 = vmul.f32 %v2798, 1.442695
    %v2827 = vpow.pop %v2826
    %v2828 = vmul.f32 %v2799, 1.442695
    %v2829 = vpow.pop %v2828
    %v2830 = vmul.f32 %v2800, 1.442695
    %v2831 = vpow.pop %v2830
    %v2832 = vmul.f32 %v2801, 1.442695
    %v2833 = vpow.pop %v2832
    %v2834 = vsel %vm1086, %v2803, 0.0
    %2835 = vadd.xlane.f32.xlu0 %v2834
    %v2836 = vpop.xlane.xlu0 %2835
    %v2837 = vsel %vm1086, %v2805, 0.0
    %2838 = vadd.xlane.f32.xlu0 %v2837
    %v2839 = vpop.xlane.xlu0 %2838
    %v2840 = vsel %vm1086, %v2807, 0.0
    %2841 = vadd.xlane.f32.xlu0 %v2840
    %v2842 = vpop.xlane.xlu0 %2841
    %v2843 = vsel %vm1086, %v2809, 0.0
    %2844 = vadd.xlane.f32.xlu0 %v2843
    %v2845 = vpop.xlane.xlu0 %2844
    %v2846 = vsel %vm1086, %v2811, 0.0
    %2847 = vadd.xlane.f32.xlu0 %v2846
    %v2848 = vpop.xlane.xlu0 %2847
    %v2849 = vsel %vm1086, %v2813, 0.0
    %2850 = vadd.xlane.f32.xlu0 %v2849
    %v2851 = vpop.xlane.xlu0 %2850
    %v2852 = vsel %vm1086, %v2815, 0.0
    %2853 = vadd.xlane.f32.xlu0 %v2852
    %v2854 = vpop.xlane.xlu0 %2853
    %v2855 = vsel %vm1086, %v2817, 0.0
    %2856 = vadd.xlane.f32.xlu0 %v2855
    %v2857 = vpop.xlane.xlu0 %2856
    %v2858 = vsel %vm1086, %v2819, 0.0
    %2859 = vadd.xlane.f32.xlu0 %v2858
    %v2860 = vpop.xlane.xlu0 %2859
    %v2861 = vsel %vm1086, %v2821, 0.0
    %2862 = vadd.xlane.f32.xlu0 %v2861
    %v2863 = vpop.xlane.xlu0 %2862
    %v2864 = vsel %vm1086, %v2823, 0.0
    %2865 = vadd.xlane.f32.xlu0 %v2864
    %v2866 = vpop.xlane.xlu0 %2865
    %v2867 = vsel %vm1086, %v2825, 0.0
    %2868 = vadd.xlane.f32.xlu0 %v2867
    %v2869 = vpop.xlane.xlu0 %2868
    %v2870 = vsel %vm1086, %v2827, 0.0
    %2871 = vadd.xlane.f32.xlu0 %v2870
    %v2872 = vpop.xlane.xlu0 %2871
    %v2873 = vsel %vm1086, %v2829, 0.0
    %2874 = vadd.xlane.f32.xlu0 %v2873
    %v2875 = vpop.xlane.xlu0 %2874
    %v2876 = vsel %vm1086, %v2831, 0.0
    %2877 = vadd.xlane.f32.xlu0 %v2876
    %v2878 = vpop.xlane.xlu0 %2877
    %v2879 = vsel %vm1086, %v2833, 0.0
    %2880 = vadd.xlane.f32.xlu0 %v2879
    %v2881 = vpop.xlane.xlu0 %2880
    %v2882 = vrcp.pop %v2836
    %v2883 = vrcp.pop %v2839
    %v2884 = vrcp.pop %v2842
    %v2885 = vrcp.pop %v2845
    %v2886 = vrcp.pop %v2848
    %v2887 = vrcp.pop %v2851
    %v2888 = vrcp.pop %v2854
    %v2889 = vrcp.pop %v2857
    %v2890 = vrcp.pop %v2860
    %v2891 = vrcp.pop %v2863
    %v2892 = vrcp.pop %v2866
    %v2893 = vrcp.pop %v2869
    %v2894 = vrcp.pop %v2872
    %v2895 = vrcp.pop %v2875
    %v2896 = vrcp.pop %v2878
    %v2897 = vrcp.pop %v2881
    %v2898 = vmul.f32 %v2803, %v2882
    %v2899 = vmul.f32 %v2805, %v2883
    %v2900 = vmul.f32 %v2807, %v2884
    %v2901 = vmul.f32 %v2809, %v2885
    %v2902 = vmul.f32 %v2811, %v2886
    %v2903 = vmul.f32 %v2813, %v2887
    %v2904 = vmul.f32 %v2815, %v2888
    %v2905 = vmul.f32 %v2817, %v2889
    %v2906 = vmul.f32 %v2819, %v2890
    %v2907 = vmul.f32 %v2821, %v2891
    %v2908 = vmul.f32 %v2823, %v2892
    %v2909 = vmul.f32 %v2825, %v2893
    %v2910 = vmul.f32 %v2827, %v2894
    %v2911 = vmul.f32 %v2829, %v2895
    %v2912 = vmul.f32 %v2831, %v2896
    %v2913 = vmul.f32 %v2833, %v2897
    %2914 = vrot.lane.b32.xlu0 %v261, 88
    %v2915 = vpop.permute.xlu0 %2914
    %2916 = vrot.lane.b32.xlu0 %v266, 88
    %v2917 = vpop.permute.xlu0 %2916
    %v2921 = vsel %vm1086, %v2898, 0
    %v2924 = vsel %vm1086, %v2899, 0
    %2926 = vmatprep.subr.mxu0 0.0
    %2927 = vmatpush1.msra.mxu0 %v2915
    %2928 = vmatprep.subr.mxu0 0.0
    %2929 = vmatpush1.msra.mxu0 %v2917
    %2930 = vmatprep.subr.mxu0 0.0
    %2931 = vmatpush1.msra.mxu0 0.0
    %2932 = vmatprep.subr.mxu0 0.0
    %2933 = vmatpush1.msra.mxu0 0.0
    %2934 = vmatprep.subr.mxu0 0.0
    %2935 = vmatpush1.msra.mxu0 0.0
    %2936 = vmatprep.subr.mxu0 0.0
    %2937 = vmatpush1.msra.mxu0 0.0
    %2938 = vmatprep.subr.mxu0 0.0
    %2939 = vmatpush1.msra.mxu0 0.0
    %2940 = vmatprep.subr.mxu0 0.0
    %2941 = vmatpush1.msra.mxu0 0.0
    %2942 = vmatprep.subr.mxu0 0.0
    %2943 = vmatpush1.msra.mxu0 0.0
    %2944 = vmatprep.subr.mxu0 0.0
    %2945 = vmatpush1.msra.mxu0 0.0
    %2946 = vmatprep.subr.mxu0 0.0
    %2947 = vmatpush1.msra.mxu0 0.0
    %2948 = vmatprep.subr.mxu0 0.0
    %2949 = vmatpush1.msra.mxu0 0.0
    %2950 = vmatprep.subr.mxu0 0.0
    %2951 = vmatpush1.msra.mxu0 0.0
    %2952 = vmatprep.subr.mxu0 0.0
    %2953 = vmatpush1.msra.mxu0 0.0
    %2954 = vmatprep.subr.mxu0 0.0
    %2955 = vmatpush1.msra.mxu0 0.0
    %2956 = vmatprep.subr.mxu0 0.0
    %2957 = vmatpush1.msra.mxu0 0.0
    %2958 = vmatprep.subr.mxu0 0.0
    %2959 = vmatpush1.msra.mxu0 0.0
    %2960 = vmatprep.subr.mxu0 0.0
    %2961 = vmatpush1.msra.mxu0 0.0
    %2962 = vmatprep.subr.mxu0 0.0
    %2963 = vmatpush1.msra.mxu0 0.0
    %2964 = vmatprep.subr.mxu0 0.0
    %2965 = vmatpush1.msra.mxu0 0.0
    %2966 = vmatprep.subr.mxu0 0.0
    %2967 = vmatpush1.msra.mxu0 0.0
    %2968 = vmatprep.subr.mxu0 0.0
    %2969 = vmatpush1.msra.mxu0 0.0
    %2970 = vmatprep.subr.mxu0 0.0
    %2971 = vmatpush1.msra.mxu0 0.0
    %2972 = vmatprep.subr.mxu0 0.0
    %2973 = vmatpush1.msra.mxu0 0.0
    %2974 = vmatprep.subr.mxu0 0.0
    %2975 = vmatpush1.msra.mxu0 0.0
    %2976 = vmatprep.subr.mxu0 0.0
    %2977 = vmatpush1.msra.mxu0 0.0
    %2978 = vmatprep.subr.mxu0 0.0
    %2979 = vmatpush1.msra.mxu0 0.0
    %2980 = vmatprep.subr.mxu0 0.0
    %2981 = vmatpush1.msra.mxu0 0.0
    %2982 = vmatprep.subr.mxu0 0.0
    %2983 = vmatpush1.msra.mxu0 0.0
    %2984 = vmatprep.subr.mxu0 0.0
    %2985 = vmatpush1.msra.mxu0 0.0
    %2986 = vmatprep.subr.mxu0 0.0
    %2987 = vmatpush1.msra.mxu0 0.0
    %2988 = vmatprep.subr.mxu0 0.0
    %2989 = vmatpush1.msra.mxu0 0.0
    %2990 = vmatprep.mubr.f32.mxu0 0.0
    %2991 = vmatmul.mubr.f32.gmra.mrb[0].mxu0 %v2921
    %v2992 = vpop.f32.mrb[0].mxu0
    %v2993 = vadd.f32 0.0, %v2992
    %v2994 = vpop.f32.mrb[0].mxu0
    %2995 = vmatprep.mubr.f32.mxu0 0.0
    %2996 = vmatmul.mubr.f32.gmra.mrb[0].mxu0 %v2924
    %v2997 = vpop.f32.mrb[0].mxu0
    %v2998 = vadd.f32 0.0, %v2997
    %v2999 = vpop.f32.mrb[0].mxu0
    %3000 = vdwg.mxu0
    %3001 = vrot.lane.b32.xlu0 %v271, 88
    %v3002 = vpop.permute.xlu0 %3001
    %3003 = vrot.lane.b32.xlu0 %v276, 88
    %v3004 = vpop.permute.xlu0 %3003
    %v3008 = vsel %vm1086, %v2900, 0
    %v3011 = vsel %vm1086, %v2901, 0
    %3013 = vmatprep.subr.mxu0 0.0
    %3014 = vmatpush1.msra.mxu0 %v3002
    %3015 = vmatprep.subr.mxu0 0.0
    %3016 = vmatpush1.msra.mxu0 %v3004
    %3017 = vmatprep.subr.mxu0 0.0
    %3018 = vmatpush1.msra.mxu0 0.0
    %3019 = vmatprep.subr.mxu0 0.0
    %3020 = vmatpush1.msra.mxu0 0.0
    %3021 = vmatprep.subr.mxu0 0.0
    %3022 = vmatpush1.msra.mxu0 0.0
    %3023 = vmatprep.subr.mxu0 0.0
    %3024 = vmatpush1.msra.mxu0 0.0
    %3025 = vmatprep.subr.mxu0 0.0
    %3026 = vmatpush1.msra.mxu0 0.0
    %3027 = vmatprep.subr.mxu0 0.0
    %3028 = vmatpush1.msra.mxu0 0.0
    %3029 = vmatprep.subr.mxu0 0.0
    %3030 = vmatpush1.msra.mxu0 0.0
    %3031 = vmatprep.subr.mxu0 0.0
    %3032 = vmatpush1.msra.mxu0 0.0
    %3033 = vmatprep.subr.mxu0 0.0
    %3034 = vmatpush1.msra.mxu0 0.0
    %3035 = vmatprep.subr.mxu0 0.0
    %3036 = vmatpush1.msra.mxu0 0.0
    %3037 = vmatprep.subr.mxu0 0.0
    %3038 = vmatpush1.msra.mxu0 0.0
    %3039 = vmatprep.subr.mxu0 0.0
    %3040 = vmatpush1.msra.mxu0 0.0
    %3041 = vmatprep.subr.mxu0 0.0
    %3042 = vmatpush1.msra.mxu0 0.0
    %3043 = vmatprep.subr.mxu0 0.0
    %3044 = vmatpush1.msra.mxu0 0.0
    %3045 = vmatprep.subr.mxu0 0.0
    %3046 = vmatpush1.msra.mxu0 0.0
    %3047 = vmatprep.subr.mxu0 0.0
    %3048 = vmatpush1.msra.mxu0 0.0
    %3049 = vmatprep.subr.mxu0 0.0
    %3050 = vmatpush1.msra.mxu0 0.0
    %3051 = vmatprep.subr.mxu0 0.0
    %3052 = vmatpush1.msra.mxu0 0.0
    %3053 = vmatprep.subr.mxu0 0.0
    %3054 = vmatpush1.msra.mxu0 0.0
    %3055 = vmatprep.subr.mxu0 0.0
    %3056 = vmatpush1.msra.mxu0 0.0
    %3057 = vmatprep.subr.mxu0 0.0
    %3058 = vmatpush1.msra.mxu0 0.0
    %3059 = vmatprep.subr.mxu0 0.0
    %3060 = vmatpush1.msra.mxu0 0.0
    %3061 = vmatprep.subr.mxu0 0.0
    %3062 = vmatpush1.msra.mxu0 0.0
    %3063 = vmatprep.subr.mxu0 0.0
    %3064 = vmatpush1.msra.mxu0 0.0
    %3065 = vmatprep.subr.mxu0 0.0
    %3066 = vmatpush1.msra.mxu0 0.0
    %3067 = vmatprep.subr.mxu0 0.0
    %3068 = vmatpush1.msra.mxu0 0.0
    %3069 = vmatprep.subr.mxu0 0.0
    %3070 = vmatpush1.msra.mxu0 0.0
    %3071 = vmatprep.subr.mxu0 0.0
    %3072 = vmatpush1.msra.mxu0 0.0
    %3073 = vmatprep.subr.mxu0 0.0
    %3074 = vmatpush1.msra.mxu0 0.0
    %3075 = vmatprep.subr.mxu0 0.0
    %3076 = vmatpush1.msra.mxu0 0.0
    %3077 = vmatprep.mubr.f32.mxu0 0.0
    %3078 = vmatmul.mubr.f32.gmra.mrb[0].mxu0 %v3008
    %v3079 = vpop.f32.mrb[0].mxu0
    %v3080 = vadd.f32 0.0, %v3079
    %v3081 = vpop.f32.mrb[0].mxu0
    %3082 = vmatprep.mubr.f32.mxu0 0.0
    %3083 = vmatmul.mubr.f32.gmra.mrb[0].mxu0 %v3011
    %v3084 = vpop.f32.mrb[0].mxu0
    %v3085 = vadd.f32 0.0, %v3084
    %v3086 = vpop.f32.mrb[0].mxu0
    %3087 = vdwg.mxu0
    %3088 = vrot.lane.b32.xlu0 %v281, 88
    %v3089 = vpop.permute.xlu0 %3088
    %3090 = vrot.lane.b32.xlu0 %v286, 88
    %v3091 = vpop.permute.xlu0 %3090
    %v3095 = vsel %vm1086, %v2902, 0
    %v3098 = vsel %vm1086, %v2903, 0
    %3100 = vmatprep.subr.mxu0 0.0
    %3101 = vmatpush1.msra.mxu0 %v3089
    %3102 = vmatprep.subr.mxu0 0.0
    %3103 = vmatpush1.msra.mxu0 %v3091
    %3104 = vmatprep.subr.mxu0 0.0
    %3105 = vmatpush1.msra.mxu0 0.0
    %3106 = vmatprep.subr.mxu0 0.0
    %3107 = vmatpush1.msra.mxu0 0.0
    %3108 = vmatprep.subr.mxu0 0.0
    %3109 = vmatpush1.msra.mxu0 0.0
    %3110 = vmatprep.subr.mxu0 0.0
    %3111 = vmatpush1.msra.mxu0 0.0
    %3112 = vmatprep.subr.mxu0 0.0
    %3113 = vmatpush1.msra.mxu0 0.0
    %3114 = vmatprep.subr.mxu0 0.0
    %3115 = vmatpush1.msra.mxu0 0.0
    %3116 = vmatprep.subr.mxu0 0.0
    %3117 = vmatpush1.msra.mxu0 0.0
    %3118 = vmatprep.subr.mxu0 0.0
    %3119 = vmatpush1.msra.mxu0 0.0
    %3120 = vmatprep.subr.mxu0 0.0
    %3121 = vmatpush1.msra.mxu0 0.0
    %3122 = vmatprep.subr.mxu0 0.0
    %3123 = vmatpush1.msra.mxu0 0.0
    %3124 = vmatprep.subr.mxu0 0.0
    %3125 = vmatpush1.msra.mxu0 0.0
    %3126 = vmatprep.subr.mxu0 0.0
    %3127 = vmatpush1.msra.mxu0 0.0
    %3128 = vmatprep.subr.mxu0 0.0
    %3129 = vmatpush1.msra.mxu0 0.0
    %3130 = vmatprep.subr.mxu0 0.0
    %3131 = vmatpush1.msra.mxu0 0.0
    %3132 = vmatprep.subr.mxu0 0.0
    %3133 = vmatpush1.msra.mxu0 0.0
    %3134 = vmatprep.subr.mxu0 0.0
    %3135 = vmatpush1.msra.mxu0 0.0
    %3136 = vmatprep.subr.mxu0 0.0
    %3137 = vmatpush1.msra.mxu0 0.0
    %3138 = vmatprep.subr.mxu0 0.0
    %3139 = vmatpush1.msra.mxu0 0.0
    %3140 = vmatprep.subr.mxu0 0.0
    %3141 = vmatpush1.msra.mxu0 0.0
    %3142 = vmatprep.subr.mxu0 0.0
    %3143 = vmatpush1.msra.mxu0 0.0
    %3144 = vmatprep.subr.mxu0 0.0
    %3145 = vmatpush1.msra.mxu0 0.0
    %3146 = vmatprep.subr.mxu0 0.0
    %3147 = vmatpush1.msra.mxu0 0.0
    %3148 = vmatprep.subr.mxu0 0.0
    %3149 = vmatpush1.msra.mxu0 0.0
    %3150 = vmatprep.subr.mxu0 0.0
    %3151 = vmatpush1.msra.mxu0 0.0
    %3152 = vmatprep.subr.mxu0 0.0
    %3153 = vmatpush1.msra.mxu0 0.0
    %3154 = vmatprep.subr.mxu0 0.0
    %3155 = vmatpush1.msra.mxu0 0.0
    %3156 = vmatprep.subr.mxu0 0.0
    %3157 = vmatpush1.msra.mxu0 0.0
    %3158 = vmatprep.subr.mxu0 0.0
    %3159 = vmatpush1.msra.mxu0 0.0
    %3160 = vmatprep.subr.mxu0 0.0
    %3161 = vmatpush1.msra.mxu0 0.0
    %3162 = vmatprep.subr.mxu0 0.0
    %3163 = vmatpush1.msra.mxu0 0.0
    %3164 = vmatprep.mubr.f32.mxu0 0.0
    %3165 = vmatmul.mubr.f32.gmra.mrb[0].mxu0 %v3095
    %v3166 = vpop.f32.mrb[0].mxu0
    %v3167 = vadd.f32 0.0, %v3166
    %v3168 = vpop.f32.mrb[0].mxu0
    %3169 = vmatprep.mubr.f32.mxu0 0.0
    %3170 = vmatmul.mubr.f32.gmra.mrb[0].mxu0 %v3098
    %v3171 = vpop.f32.mrb[0].mxu0
    %v3172 = vadd.f32 0.0, %v3171
    %v3173 = vpop.f32.mrb[0].mxu0
    %3174 = vdwg.mxu0
    %3175 = vrot.lane.b32.xlu0 %v291, 88
    %v3176 = vpop.permute.xlu0 %3175
    %3177 = vrot.lane.b32.xlu0 %v296, 88
    %v3178 = vpop.permute.xlu0 %3177
    %v3182 = vsel %vm1086, %v2904, 0
    %v3185 = vsel %vm1086, %v2905, 0
    %3187 = vmatprep.subr.mxu0 0.0
    %3188 = vmatpush1.msra.mxu0 %v3176
    %3189 = vmatprep.subr.mxu0 0.0
    %3190 = vmatpush1.msra.mxu0 %v3178
    %3191 = vmatprep.subr.mxu0 0.0
    %3192 = vmatpush1.msra.mxu0 0.0
    %3193 = vmatprep.subr.mxu0 0.0
    %3194 = vmatpush1.msra.mxu0 0.0
    %3195 = vmatprep.subr.mxu0 0.0
    %3196 = vmatpush1.msra.mxu0 0.0
    %3197 = vmatprep.subr.mxu0 0.0
    %3198 = vmatpush1.msra.mxu0 0.0
    %3199 = vmatprep.subr.mxu0 0.0
    %3200 = vmatpush1.msra.mxu0 0.0
    %3201 = vmatprep.subr.mxu0 0.0
    %3202 = vmatpush1.msra.mxu0 0.0
    %3203 = vmatprep.subr.mxu0 0.0
    %3204 = vmatpush1.msra.mxu0 0.0
    %3205 = vmatprep.subr.mxu0 0.0
    %3206 = vmatpush1.msra.mxu0 0.0
    %3207 = vmatprep.subr.mxu0 0.0
    %3208 = vmatpush1.msra.mxu0 0.0
    %3209 = vmatprep.subr.mxu0 0.0
    %3210 = vmatpush1.msra.mxu0 0.0
    %3211 = vmatprep.subr.mxu0 0.0
    %3212 = vmatpush1.msra.mxu0 0.0
    %3213 = vmatprep.subr.mxu0 0.0
    %3214 = vmatpush1.msra.mxu0 0.0
    %3215 = vmatprep.subr.mxu0 0.0
    %3216 = vmatpush1.msra.mxu0 0.0
    %3217 = vmatprep.subr.mxu0 0.0
    %3218 = vmatpush1.msra.mxu0 0.0
    %3219 = vmatprep.subr.mxu0 0.0
    %3220 = vmatpush1.msra.mxu0 0.0
    %3221 = vmatprep.subr.mxu0 0.0
    %3222 = vmatpush1.msra.mxu0 0.0
    %3223 = vmatprep.subr.mxu0 0.0
    %3224 = vmatpush1.msra.mxu0 0.0
    %3225 = vmatprep.subr.mxu0 0.0
    %3226 = vmatpush1.msra.mxu0 0.0
    %3227 = vmatprep.subr.mxu0 0.0
    %3228 = vmatpush1.msra.mxu0 0.0
    %3229 = vmatprep.subr.mxu0 0.0
    %3230 = vmatpush1.msra.mxu0 0.0
    %3231 = vmatprep.subr.mxu0 0.0
    %3232 = vmatpush1.msra.mxu0 0.0
    %3233 = vmatprep.subr.mxu0 0.0
    %3234 = vmatpush1.msra.mxu0 0.0
    %3235 = vmatprep.subr.mxu0 0.0
    %3236 = vmatpush1.msra.mxu0 0.0
    %3237 = vmatprep.subr.mxu0 0.0
    %3238 = vmatpush1.msra.mxu0 0.0
    %3239 = vmatprep.subr.mxu0 0.0
    %3240 = vmatpush1.msra.mxu0 0.0
    %3241 = vmatprep.subr.mxu0 0.0
    %3242 = vmatpush1.msra.mxu0 0.0
    %3243 = vmatprep.subr.mxu0 0.0
    %3244 = vmatpush1.msra.mxu0 0.0
    %3245 = vmatprep.subr.mxu0 0.0
    %3246 = vmatpush1.msra.mxu0 0.0
    %3247 = vmatprep.subr.mxu0 0.0
    %3248 = vmatpush1.msra.mxu0 0.0
    %3249 = vmatprep.subr.mxu0 0.0
    %3250 = vmatpush1.msra.mxu0 0.0
    %3251 = vmatprep.mubr.f32.mxu0 0.0
    %3252 = vmatmul.mubr.f32.gmra.mrb[0].mxu0 %v3182
    %v3253 = vpop.f32.mrb[0].mxu0
    %v3254 = vadd.f32 0.0, %v3253
    %v3255 = vpop.f32.mrb[0].mxu0
    %3256 = vmatprep.mubr.f32.mxu0 0.0
    %3257 = vmatmul.mubr.f32.gmra.mrb[0].mxu0 %v3185
    %v3258 = vpop.f32.mrb[0].mxu0
    %v3259 = vadd.f32 0.0, %v3258
    %v3260 = vpop.f32.mrb[0].mxu0
    %3261 = vdwg.mxu0
    %3262 = vrot.lane.b32.xlu0 %v301, 88
    %v3263 = vpop.permute.xlu0 %3262
    %3264 = vrot.lane.b32.xlu0 %v306, 88
    %v3265 = vpop.permute.xlu0 %3264
    %v3269 = vsel %vm1086, %v2906, 0
    %v3272 = vsel %vm1086, %v2907, 0
    %3274 = vmatprep.subr.mxu0 0.0
    %3275 = vmatpush1.msra.mxu0 %v3263
    %3276 = vmatprep.subr.mxu0 0.0
    %3277 = vmatpush1.msra.mxu0 %v3265
    %3278 = vmatprep.subr.mxu0 0.0
    %3279 = vmatpush1.msra.mxu0 0.0
    %3280 = vmatprep.subr.mxu0 0.0
    %3281 = vmatpush1.msra.mxu0 0.0
    %3282 = vmatprep.subr.mxu0 0.0
    %3283 = vmatpush1.msra.mxu0 0.0
    %3284 = vmatprep.subr.mxu0 0.0
    %3285 = vmatpush1.msra.mxu0 0.0
    %3286 = vmatprep.subr.mxu0 0.0
    %3287 = vmatpush1.msra.mxu0 0.0
    %3288 = vmatprep.subr.mxu0 0.0
    %3289 = vmatpush1.msra.mxu0 0.0
    %3290 = vmatprep.subr.mxu0 0.0
    %3291 = vmatpush1.msra.mxu0 0.0
    %3292 = vmatprep.subr.mxu0 0.0
    %3293 = vmatpush1.msra.mxu0 0.0
    %3294 = vmatprep.subr.mxu0 0.0
    %3295 = vmatpush1.msra.mxu0 0.0
    %3296 = vmatprep.subr.mxu0 0.0
    %3297 = vmatpush1.msra.mxu0 0.0
    %3298 = vmatprep.subr.mxu0 0.0
    %3299 = vmatpush1.msra.mxu0 0.0
    %3300 = vmatprep.subr.mxu0 0.0
    %3301 = vmatpush1.msra.mxu0 0.0
    %3302 = vmatprep.subr.mxu0 0.0
    %3303 = vmatpush1.msra.mxu0 0.0
    %3304 = vmatprep.subr.mxu0 0.0
    %3305 = vmatpush1.msra.mxu0 0.0
    %3306 = vmatprep.subr.mxu0 0.0
    %3307 = vmatpush1.msra.mxu0 0.0
    %3308 = vmatprep.subr.mxu0 0.0
    %3309 = vmatpush1.msra.mxu0 0.0
    %3310 = vmatprep.subr.mxu0 0.0
    %3311 = vmatpush1.msra.mxu0 0.0
    %3312 = vmatprep.subr.mxu0 0.0
    %3313 = vmatpush1.msra.mxu0 0.0
    %3314 = vmatprep.subr.mxu0 0.0
    %3315 = vmatpush1.msra.mxu0 0.0
    %3316 = vmatprep.subr.mxu0 0.0
    %3317 = vmatpush1.msra.mxu0 0.0
    %3318 = vmatprep.subr.mxu0 0.0
    %3319 = vmatpush1.msra.mxu0 0.0
    %3320 = vmatprep.subr.mxu0 0.0
    %3321 = vmatpush1.msra.mxu0 0.0
    %3322 = vmatprep.subr.mxu0 0.0
    %3323 = vmatpush1.msra.mxu0 0.0
    %3324 = vmatprep.subr.mxu0 0.0
    %3325 = vmatpush1.msra.mxu0 0.0
    %3326 = vmatprep.subr.mxu0 0.0
    %3327 = vmatpush1.msra.mxu0 0.0
    %3328 = vmatprep.subr.mxu0 0.0
    %3329 = vmatpush1.msra.mxu0 0.0
    %3330 = vmatprep.subr.mxu0 0.0
    %3331 = vmatpush1.msra.mxu0 0.0
    %3332 = vmatprep.subr.mxu0 0.0
    %3333 = vmatpush1.msra.mxu0 0.0
    %3334 = vmatprep.subr.mxu0 0.0
    %3335 = vmatpush1.msra.mxu0 0.0
    %3336 = vmatprep.subr.mxu0 0.0
    %3337 = vmatpush1.msra.mxu0 0.0
    %3338 = vmatprep.mubr.f32.mxu0 0.0
    %3339 = vmatmul.mubr.f32.gmra.mrb[0].mxu0 %v3269
    %v3340 = vpop.f32.mrb[0].mxu0
    %v3341 = vadd.f32 0.0, %v3340
    %v3342 = vpop.f32.mrb[0].mxu0
    %3343 = vmatprep.mubr.f32.mxu0 0.0
    %3344 = vmatmul.mubr.f32.gmra.mrb[0].mxu0 %v3272
    %v3345 = vpop.f32.mrb[0].mxu0
    %v3346 = vadd.f32 0.0, %v3345
    %v3347 = vpop.f32.mrb[0].mxu0
    %3348 = vdwg.mxu0
    %3349 = vrot.lane.b32.xlu0 %v311, 88
    %v3350 = vpop.permute.xlu0 %3349
    %3351 = vrot.lane.b32.xlu0 %v316, 88
    %v3352 = vpop.permute.xlu0 %3351
    %v3356 = vsel %vm1086, %v2908, 0
    %v3359 = vsel %vm1086, %v2909, 0
    %3361 = vmatprep.subr.mxu0 0.0
    %3362 = vmatpush1.msra.mxu0 %v3350
    %3363 = vmatprep.subr.mxu0 0.0
    %3364 = vmatpush1.msra.mxu0 %v3352
    %3365 = vmatprep.subr.mxu0 0.0
    %3366 = vmatpush1.msra.mxu0 0.0
    %3367 = vmatprep.subr.mxu0 0.0
    %3368 = vmatpush1.msra.mxu0 0.0
    %3369 = vmatprep.subr.mxu0 0.0
    %3370 = vmatpush1.msra.mxu0 0.0
    %3371 = vmatprep.subr.mxu0 0.0
    %3372 = vmatpush1.msra.mxu0 0.0
    %3373 = vmatprep.subr.mxu0 0.0
    %3374 = vmatpush1.msra.mxu0 0.0
    %3375 = vmatprep.subr.mxu0 0.0
    %3376 = vmatpush1.msra.mxu0 0.0
    %3377 = vmatprep.subr.mxu0 0.0
    %3378 = vmatpush1.msra.mxu0 0.0
    %3379 = vmatprep.subr.mxu0 0.0
    %3380 = vmatpush1.msra.mxu0 0.0
    %3381 = vmatprep.subr.mxu0 0.0
    %3382 = vmatpush1.msra.mxu0 0.0
    %3383 = vmatprep.subr.mxu0 0.0
    %3384 = vmatpush1.msra.mxu0 0.0
    %3385 = vmatprep.subr.mxu0 0.0
    %3386 = vmatpush1.msra.mxu0 0.0
    %3387 = vmatprep.subr.mxu0 0.0
    %3388 = vmatpush1.msra.mxu0 0.0
    %3389 = vmatprep.subr.mxu0 0.0
    %3390 = vmatpush1.msra.mxu0 0.0
    %3391 = vmatprep.subr.mxu0 0.0
    %3392 = vmatpush1.msra.mxu0 0.0
    %3393 = vmatprep.subr.mxu0 0.0
    %3394 = vmatpush1.msra.mxu0 0.0
    %3395 = vmatprep.subr.mxu0 0.0
    %3396 = vmatpush1.msra.mxu0 0.0
    %3397 = vmatprep.subr.mxu0 0.0
    %3398 = vmatpush1.msra.mxu0 0.0
    %3399 = vmatprep.subr.mxu0 0.0
    %3400 = vmatpush1.msra.mxu0 0.0
    %3401 = vmatprep.subr.mxu0 0.0
    %3402 = vmatpush1.msra.mxu0 0.0
    %3403 = vmatprep.subr.mxu0 0.0
    %3404 = vmatpush1.msra.mxu0 0.0
    %3405 = vmatprep.subr.mxu0 0.0
    %3406 = vmatpush1.msra.mxu0 0.0
    %3407 = vmatprep.subr.mxu0 0.0
    %3408 = vmatpush1.msra.mxu0 0.0
    %3409 = vmatprep.subr.mxu0 0.0
    %3410 = vmatpush1.msra.mxu0 0.0
    %3411 = vmatprep.subr.mxu0 0.0
    %3412 = vmatpush1.msra.mxu0 0.0
    %3413 = vmatprep.subr.mxu0 0.0
    %3414 = vmatpush1.msra.mxu0 0.0
    %3415 = vmatprep.subr.mxu0 0.0
    %3416 = vmatpush1.msra.mxu0 0.0
    %3417 = vmatprep.subr.mxu0 0.0
    %3418 = vmatpush1.msra.mxu0 0.0
    %3419 = vmatprep.subr.mxu0 0.0
    %3420 = vmatpush1.msra.mxu0 0.0
    %3421 = vmatprep.subr.mxu0 0.0
    %3422 = vmatpush1.msra.mxu0 0.0
    %3423 = vmatprep.subr.mxu0 0.0
    %3424 = vmatpush1.msra.mxu0 0.0
    %3425 = vmatprep.mubr.f32.mxu0 0.0
    %3426 = vmatmul.mubr.f32.gmra.mrb[0].mxu0 %v3356
    %v3427 = vpop.f32.mrb[0].mxu0
    %v3428 = vadd.f32 0.0, %v3427
    %v3429 = vpop.f32.mrb[0].mxu0
    %3430 = vmatprep.mubr.f32.mxu0 0.0
    %3431 = vmatmul.mubr.f32.gmra.mrb[0].mxu0 %v3359
    %v3432 = vpop.f32.mrb[0].mxu0
    %v3433 = vadd.f32 0.0, %v3432
    %v3434 = vpop.f32.mrb[0].mxu0
    %3435 = vdwg.mxu0
    %3436 = vrot.lane.b32.xlu0 %v321, 88
    %v3437 = vpop.permute.xlu0 %3436
    %3438 = vrot.lane.b32.xlu0 %v326, 88
    %v3439 = vpop.permute.xlu0 %3438
    %v3443 = vsel %vm1086, %v2910, 0
    %v3446 = vsel %vm1086, %v2911, 0
    %3448 = vmatprep.subr.mxu0 0.0
    %3449 = vmatpush1.msra.mxu0 %v3437
    %3450 = vmatprep.subr.mxu0 0.0
    %3451 = vmatpush1.msra.mxu0 %v3439
    %3452 = vmatprep.subr.mxu0 0.0
    %3453 = vmatpush1.msra.mxu0 0.0
    %3454 = vmatprep.subr.mxu0 0.0
    %3455 = vmatpush1.msra.mxu0 0.0
    %3456 = vmatprep.subr.mxu0 0.0
    %3457 = vmatpush1.msra.mxu0 0.0
    %3458 = vmatprep.subr.mxu0 0.0
    %3459 = vmatpush1.msra.mxu0 0.0
    %3460 = vmatprep.subr.mxu0 0.0
    %3461 = vmatpush1.msra.mxu0 0.0
    %3462 = vmatprep.subr.mxu0 0.0
    %3463 = vmatpush1.msra.mxu0 0.0
    %3464 = vmatprep.subr.mxu0 0.0
    %3465 = vmatpush1.msra.mxu0 0.0
    %3466 = vmatprep.subr.mxu0 0.0
    %3467 = vmatpush1.msra.mxu0 0.0
    %3468 = vmatprep.subr.mxu0 0.0
    %3469 = vmatpush1.msra.mxu0 0.0
    %3470 = vmatprep.subr.mxu0 0.0
    %3471 = vmatpush1.msra.mxu0 0.0
    %3472 = vmatprep.subr.mxu0 0.0
    %3473 = vmatpush1.msra.mxu0 0.0
    %3474 = vmatprep.subr.mxu0 0.0
    %3475 = vmatpush1.msra.mxu0 0.0
    %3476 = vmatprep.subr.mxu0 0.0
    %3477 = vmatpush1.msra.mxu0 0.0
    %3478 = vmatprep.subr.mxu0 0.0
    %3479 = vmatpush1.msra.mxu0 0.0
    %3480 = vmatprep.subr.mxu0 0.0
    %3481 = vmatpush1.msra.mxu0 0.0
    %3482 = vmatprep.subr.mxu0 0.0
    %3483 = vmatpush1.msra.mxu0 0.0
    %3484 = vmatprep.subr.mxu0 0.0
    %3485 = vmatpush1.msra.mxu0 0.0
    %3486 = vmatprep.subr.mxu0 0.0
    %3487 = vmatpush1.msra.mxu0 0.0
    %3488 = vmatprep.subr.mxu0 0.0
    %3489 = vmatpush1.msra.mxu0 0.0
    %3490 = vmatprep.subr.mxu0 0.0
    %3491 = vmatpush1.msra.mxu0 0.0
    %3492 = vmatprep.subr.mxu0 0.0
    %3493 = vmatpush1.msra.mxu0 0.0
    %3494 = vmatprep.subr.mxu0 0.0
    %3495 = vmatpush1.msra.mxu0 0.0
    %3496 = vmatprep.subr.mxu0 0.0
    %3497 = vmatpush1.msra.mxu0 0.0
    %3498 = vmatprep.subr.mxu0 0.0
    %3499 = vmatpush1.msra.mxu0 0.0
    %3500 = vmatprep.subr.mxu0 0.0
    %3501 = vmatpush1.msra.mxu0 0.0
    %3502 = vmatprep.subr.mxu0 0.0
    %3503 = vmatpush1.msra.mxu0 0.0
    %3504 = vmatprep.subr.mxu0 0.0
    %3505 = vmatpush1.msra.mxu0 0.0
    %3506 = vmatprep.subr.mxu0 0.0
    %3507 = vmatpush1.msra.mxu0 0.0
    %3508 = vmatprep.subr.mxu0 0.0
    %3509 = vmatpush1.msra.mxu0 0.0
    %3510 = vmatprep.subr.mxu0 0.0
    %3511 = vmatpush1.msra.mxu0 0.0
    %3512 = vmatprep.mubr.f32.mxu0 0.0
    %3513 = vmatmul.mubr.f32.gmra.mrb[0].mxu0 %v3443
    %v3514 = vpop.f32.mrb[0].mxu0
    %v3515 = vadd.f32 0.0, %v3514
    %v3516 = vpop.f32.mrb[0].mxu0
    %3517 = vmatprep.mubr.f32.mxu0 0.0
    %3518 = vmatmul.mubr.f32.gmra.mrb[0].mxu0 %v3446
    %v3519 = vpop.f32.mrb[0].mxu0
    %v3520 = vadd.f32 0.0, %v3519
    %v3521 = vpop.f32.mrb[0].mxu0
    %3522 = vdwg.mxu0
    %3523 = vrot.lane.b32.xlu0 %v331, 88
    %v3524 = vpop.permute.xlu0 %3523
    %3525 = vrot.lane.b32.xlu0 %v336, 88
    %v3526 = vpop.permute.xlu0 %3525
    %v3530 = vsel %vm1086, %v2912, 0
    %v3533 = vsel %vm1086, %v2913, 0
    %3535 = vmatprep.subr.mxu0 0.0
    %3536 = vmatpush1.msra.mxu0 %v3524
    %3537 = vmatprep.subr.mxu0 0.0
    %3538 = vmatpush1.msra.mxu0 %v3526
    %3539 = vmatprep.subr.mxu0 0.0
    %3540 = vmatpush1.msra.mxu0 0.0
    %3541 = vmatprep.subr.mxu0 0.0
    %3542 = vmatpush1.msra.mxu0 0.0
    %3543 = vmatprep.subr.mxu0 0.0
    %3544 = vmatpush1.msra.mxu0 0.0
    %3545 = vmatprep.subr.mxu0 0.0
    %3546 = vmatpush1.msra.mxu0 0.0
    %3547 = vmatprep.subr.mxu0 0.0
    %3548 = vmatpush1.msra.mxu0 0.0
    %3549 = vmatprep.subr.mxu0 0.0
    %3550 = vmatpush1.msra.mxu0 0.0
    %3551 = vmatprep.subr.mxu0 0.0
    %3552 = vmatpush1.msra.mxu0 0.0
    %3553 = vmatprep.subr.mxu0 0.0
    %3554 = vmatpush1.msra.mxu0 0.0
    %3555 = vmatprep.subr.mxu0 0.0
    %3556 = vmatpush1.msra.mxu0 0.0
    %3557 = vmatprep.subr.mxu0 0.0
    %3558 = vmatpush1.msra.mxu0 0.0
    %3559 = vmatprep.subr.mxu0 0.0
    %3560 = vmatpush1.msra.mxu0 0.0
    %3561 = vmatprep.subr.mxu0 0.0
    %3562 = vmatpush1.msra.mxu0 0.0
    %3563 = vmatprep.subr.mxu0 0.0
    %3564 = vmatpush1.msra.mxu0 0.0
    %3565 = vmatprep.subr.mxu0 0.0
    %3566 = vmatpush1.msra.mxu0 0.0
    %3567 = vmatprep.subr.mxu0 0.0
    %3568 = vmatpush1.msra.mxu0 0.0
    %3569 = vmatprep.subr.mxu0 0.0
    %3570 = vmatpush1.msra.mxu0 0.0
    %3571 = vmatprep.subr.mxu0 0.0
    %3572 = vmatpush1.msra.mxu0 0.0
    %3573 = vmatprep.subr.mxu0 0.0
    %3574 = vmatpush1.msra.mxu0 0.0
    %3575 = vmatprep.subr.mxu0 0.0
    %3576 = vmatpush1.msra.mxu0 0.0
    %3577 = vmatprep.subr.mxu0 0.0
    %3578 = vmatpush1.msra.mxu0 0.0
    %3579 = vmatprep.subr.mxu0 0.0
    %3580 = vmatpush1.msra.mxu0 0.0
    %3581 = vmatprep.subr.mxu0 0.0
    %3582 = vmatpush1.msra.mxu0 0.0
    %3583 = vmatprep.subr.mxu0 0.0
    %3584 = vmatpush1.msra.mxu0 0.0
    %3585 = vmatprep.subr.mxu0 0.0
    %3586 = vmatpush1.msra.mxu0 0.0
    %3587 = vmatprep.subr.mxu0 0.0
    %3588 = vmatpush1.msra.mxu0 0.0
    %3589 = vmatprep.subr.mxu0 0.0
    %3590 = vmatpush1.msra.mxu0 0.0
    %3591 = vmatprep.subr.mxu0 0.0
    %3592 = vmatpush1.msra.mxu0 0.0
    %3593 = vmatprep.subr.mxu0 0.0
    %3594 = vmatpush1.msra.mxu0 0.0
    %3595 = vmatprep.subr.mxu0 0.0
    %3596 = vmatpush1.msra.mxu0 0.0
    %3597 = vmatprep.subr.mxu0 0.0
    %3598 = vmatpush1.msra.mxu0 0.0
    %3599 = vmatprep.mubr.f32.mxu0 0.0
    %3600 = vmatmul.mubr.f32.gmra.mrb[0].mxu0 %v3530
    %v3601 = vpop.f32.mrb[0].mxu0
    %v3602 = vadd.f32 0.0, %v3601
    %v3603 = vpop.f32.mrb[0].mxu0
    %3604 = vmatprep.mubr.f32.mxu0 0.0
    %3605 = vmatmul.mubr.f32.gmra.mrb[0].mxu0 %v3533
    %v3606 = vpop.f32.mrb[0].mxu0
    %v3607 = vadd.f32 0.0, %v3606
    %v3608 = vpop.f32.mrb[0].mxu0
    %3609 = vdwg.mxu0
    %3626 = vrot.lane.b32.xlu0 %v2993, 8
    %v3627 = vpop.permute.xlu0 %3626
    %3628 = vrot.lane.b32.xlu0 %v2998, 8
    %v3629 = vpop.permute.xlu0 %3628
    %3630 = vrot.lane.b32.xlu0 %v3080, 8
    %v3631 = vpop.permute.xlu0 %3630
    %3632 = vrot.lane.b32.xlu0 %v3085, 8
    %v3633 = vpop.permute.xlu0 %3632
    %3634 = vrot.lane.b32.xlu0 %v3167, 8
    %v3635 = vpop.permute.xlu0 %3634
    %3636 = vrot.lane.b32.xlu0 %v3172, 8
    %v3637 = vpop.permute.xlu0 %3636
    %3638 = vrot.lane.b32.xlu0 %v3254, 8
    %v3639 = vpop.permute.xlu0 %3638
    %3640 = vrot.lane.b32.xlu0 %v3259, 8
    %v3641 = vpop.permute.xlu0 %3640
    %3642 = vrot.lane.b32.xlu0 %v3341, 8
    %v3643 = vpop.permute.xlu0 %3642
    %3644 = vrot.lane.b32.xlu0 %v3346, 8
    %v3645 = vpop.permute.xlu0 %3644
    %3646 = vrot.lane.b32.xlu0 %v3428, 8
    %v3647 = vpop.permute.xlu0 %3646
    %3648 = vrot.lane.b32.xlu0 %v3433, 8
    %v3649 = vpop.permute.xlu0 %3648
    %3650 = vrot.lane.b32.xlu0 %v3515, 8
    %v3651 = vpop.permute.xlu0 %3650
    %3652 = vrot.lane.b32.xlu0 %v3520, 8
    %v3653 = vpop.permute.xlu0 %3652
    %3654 = vrot.lane.b32.xlu0 %v3602, 8
    %v3655 = vpop.permute.xlu0 %3654
    %3656 = vrot.lane.b32.xlu0 %v3607, 8
    %v3657 = vpop.permute.xlu0 %3656
    %vm3674 = vcmask 130112
    %3675 = vst.msk [vmem:[#allocation2] sm:$0xff] %vm3674, %v3627
    %3676 = vst.msk [vmem:[#allocation2 + $0x8] sm:$0xff] %vm3674, %v3629
    %3677 = vst.msk [vmem:[#allocation2 + $0x10] sm:$0xff] %vm3674, %v3631
    %3678 = vst.msk [vmem:[#allocation2 + $0x18] sm:$0xff] %vm3674, %v3633
    %3679 = vst.msk [vmem:[#allocation2 + $0x20] sm:$0xff] %vm3674, %v3635
    %3680 = vst.msk [vmem:[#allocation2 + $0x28] sm:$0xff] %vm3674, %v3637
    %3681 = vst.msk [vmem:[#allocation2 + $0x30] sm:$0xff] %vm3674, %v3639
    %3682 = vst.msk [vmem:[#allocation2 + $0x38] sm:$0xff] %vm3674, %v3641
    %3683 = vst.msk [vmem:[#allocation2 + $0x40] sm:$0xff] %vm3674, %v3643
    %3684 = vst.msk [vmem:[#allocation2 + $0x48] sm:$0xff] %vm3674, %v3645
    %3685 = vst.msk [vmem:[#allocation2 + $0x50] sm:$0xff] %vm3674, %v3647
    %3686 = vst.msk [vmem:[#allocation2 + $0x58] sm:$0xff] %vm3674, %v3649
    %3687 = vst.msk [vmem:[#allocation2 + $0x60] sm:$0xff] %vm3674, %v3651
    %3688 = vst.msk [vmem:[#allocation2 + $0x68] sm:$0xff] %vm3674, %v3653
    %3689 = vst.msk [vmem:[#allocation2 + $0x70] sm:$0xff] %vm3674, %v3655
    %3690 = vst.msk [vmem:[#allocation2 + $0x78] sm:$0xff] %vm3674, %v3657
    %s3691 = scalar_lea.vmem [#allocation9], 32
    %v3692 = vld [vmem:[%s3691] sm:$0xff]
    %v3693 = vld [vmem:[%s3691 + $0x8] sm:$0xff]
    %3694 = vrot.lane.b32.xlu0 %v261, 80
    %v3695 = vpop.permute.xlu0 %3694
    %3696 = vrot.lane.b32.xlu0 %v266, 80
    %v3697 = vpop.permute.xlu0 %3696
    %3698 = vrot.lane.b32.xlu0 %v261, 72
    %v3699 = vpop.permute.xlu0 %3698
    %3700 = vrot.lane.b32.xlu0 %v266, 72
    %v3701 = vpop.permute.xlu0 %3700
    %v3702 = vsel %vm347, %v3695, 0
    %v3704 = vsel %vm347, %v3697, 0
    %v3706 = vsel %vm347, %v3699, 0
    %v3708 = vsel %vm347, %v3701, 0
    %3710 = vmatprep.subr.mxu0 0.0
    %3711 = vmatpush1.xpose.msra.mxu0 %v3706
    %3712 = vmatprep.subr.mxu0 0.0
    %3713 = vmatpush1.xpose.msra.mxu0 %v3708
    %3714 = vmatprep.subr.mxu0 0.0
    %3715 = vmatpush1.xpose.msra.mxu0 0.0
    %3716 = vmatprep.subr.mxu0 0.0
    %3717 = vmatpush1.xpose.msra.mxu0 0.0
    %3718 = vmatprep.subr.mxu0 0.0
    %3719 = vmatpush1.xpose.msra.mxu0 0.0
    %3720 = vmatprep.subr.mxu0 0.0
    %3721 = vmatpush1.xpose.msra.mxu0 0.0
    %3722 = vmatprep.subr.mxu0 0.0
    %3723 = vmatpush1.xpose.msra.mxu0 0.0
    %3724 = vmatprep.subr.mxu0 0.0
    %3725 = vmatpush1.xpose.msra.mxu0 0.0
    %3726 = vmatprep.subr.mxu0 0.0
    %3727 = vmatpush1.xpose.msra.mxu0 0.0
    %3728 = vmatprep.subr.mxu0 0.0
    %3729 = vmatpush1.xpose.msra.mxu0 0.0
    %3730 = vmatprep.subr.mxu0 0.0
    %3731 = vmatpush1.xpose.msra.mxu0 0.0
    %3732 = vmatprep.subr.mxu0 0.0
    %3733 = vmatpush1.xpose.msra.mxu0 0.0
    %3734 = vmatprep.subr.mxu0 0.0
    %3735 = vmatpush1.xpose.msra.mxu0 0.0
    %3736 = vmatprep.subr.mxu0 0.0
    %3737 = vmatpush1.xpose.msra.mxu0 0.0
    %3738 = vmatprep.subr.mxu0 0.0
    %3739 = vmatpush1.xpose.msra.mxu0 0.0
    %3740 = vmatprep.subr.mxu0 0.0
    %3741 = vmatpush1.xpose.msra.mxu0 0.0
    %3742 = vmatprep.subr.mxu0 0.0
    %3743 = vmatpush1.xpose.msra.mxu0 0.0
    %3744 = vmatprep.subr.mxu0 0.0
    %3745 = vmatpush1.xpose.msra.mxu0 0.0
    %3746 = vmatprep.subr.mxu0 0.0
    %3747 = vmatpush1.xpose.msra.mxu0 0.0
    %3748 = vmatprep.subr.mxu0 0.0
    %3749 = vmatpush1.xpose.msra.mxu0 0.0
    %3750 = vmatprep.subr.mxu0 0.0
    %3751 = vmatpush1.xpose.msra.mxu0 0.0
    %3752 = vmatprep.subr.mxu0 0.0
    %3753 = vmatpush1.xpose.msra.mxu0 0.0
    %3754 = vmatprep.subr.mxu0 0.0
    %3755 = vmatpush1.xpose.msra.mxu0 0.0
    %3756 = vmatprep.subr.mxu0 0.0
    %3757 = vmatpush1.xpose.msra.mxu0 0.0
    %3758 = vmatprep.subr.mxu0 0.0
    %3759 = vmatpush1.xpose.msra.mxu0 0.0
    %3760 = vmatprep.subr.mxu0 0.0
    %3761 = vmatpush1.xpose.msra.mxu0 0.0
    %3762 = vmatprep.subr.mxu0 0.0
    %3763 = vmatpush1.xpose.msra.mxu0 0.0
    %3764 = vmatprep.subr.mxu0 0.0
    %3765 = vmatpush1.xpose.msra.mxu0 0.0
    %3766 = vmatprep.subr.mxu0 0.0
    %3767 = vmatpush1.xpose.msra.mxu0 0.0
    %3768 = vmatprep.subr.mxu0 0.0
    %3769 = vmatpush1.xpose.msra.mxu0 0.0
    %3770 = vmatprep.subr.mxu0 0.0
    %3771 = vmatpush1.xpose.msra.mxu0 0.0
    %3772 = vmatprep.subr.mxu0 0.0
    %3773 = vmatpush1.xpose.msra.mxu0 0.0
    %3774 = vmatprep.mubr.f32.mxu0 0.0
    %3775 = vmatmul.mubr.f32.gmra.mrb[0].mxu0 %v3702
    %v3776 = vpop.f32.mrb[0].mxu0
    %v3777 = vadd.f32 %v3692, %v3776
    %v3778 = vpop.f32.mrb[0].mxu0
    %3779 = vmatprep.mubr.f32.mxu0 0.0
    %3780 = vmatmul.mubr.f32.gmra.mrb[0].mxu0 %v3704
    %v3781 = vpop.f32.mrb[0].mxu0
    %v3782 = vadd.f32 %v3693, %v3781
    %v3783 = vpop.f32.mrb[0].mxu0
    %3784 = vdwg.mxu0
    %3785 = vrot.lane.b32.xlu0 %v271, 80
    %v3786 = vpop.permute.xlu0 %3785
    %3787 = vrot.lane.b32.xlu0 %v276, 80
    %v3788 = vpop.permute.xlu0 %3787
    %3789 = vrot.lane.b32.xlu0 %v271, 72
    %v3790 = vpop.permute.xlu0 %3789
    %3791 = vrot.lane.b32.xlu0 %v276, 72
    %v3792 = vpop.permute.xlu0 %3791
    %v3793 = vsel %vm347, %v3786, 0
    %v3795 = vsel %vm347, %v3788, 0
    %v3797 = vsel %vm347, %v3790, 0
    %v3799 = vsel %vm347, %v3792, 0
    %3801 = vmatprep.subr.mxu0 0.0
    %3802 = vmatpush1.xpose.msra.mxu0 %v3797
    %3803 = vmatprep.subr.mxu0 0.0
    %3804 = vmatpush1.xpose.msra.mxu0 %v3799
    %3805 = vmatprep.subr.mxu0 0.0
    %3806 = vmatpush1.xpose.msra.mxu0 0.0
    %3807 = vmatprep.subr.mxu0 0.0
    %3808 = vmatpush1.xpose.msra.mxu0 0.0
    %3809 = vmatprep.subr.mxu0 0.0
    %3810 = vmatpush1.xpose.msra.mxu0 0.0
    %3811 = vmatprep.subr.mxu0 0.0
    %3812 = vmatpush1.xpose.msra.mxu0 0.0
    %3813 = vmatprep.subr.mxu0 0.0
    %3814 = vmatpush1.xpose.msra.mxu0 0.0
    %3815 = vmatprep.subr.mxu0 0.0
    %3816 = vmatpush1.xpose.msra.mxu0 0.0
    %3817 = vmatprep.subr.mxu0 0.0
    %3818 = vmatpush1.xpose.msra.mxu0 0.0
    %3819 = vmatprep.subr.mxu0 0.0
    %3820 = vmatpush1.xpose.msra.mxu0 0.0
    %3821 = vmatprep.subr.mxu0 0.0
    %3822 = vmatpush1.xpose.msra.mxu0 0.0
    %3823 = vmatprep.subr.mxu0 0.0
    %3824 = vmatpush1.xpose.msra.mxu0 0.0
    %3825 = vmatprep.subr.mxu0 0.0
    %3826 = vmatpush1.xpose.msra.mxu0 0.0
    %3827 = vmatprep.subr.mxu0 0.0
    %3828 = vmatpush1.xpose.msra.mxu0 0.0
    %3829 = vmatprep.subr.mxu0 0.0
    %3830 = vmatpush1.xpose.msra.mxu0 0.0
    %3831 = vmatprep.subr.mxu0 0.0
    %3832 = vmatpush1.xpose.msra.mxu0 0.0
    %3833 = vmatprep.subr.mxu0 0.0
    %3834 = vmatpush1.xpose.msra.mxu0 0.0
    %3835 = vmatprep.subr.mxu0 0.0
    %3836 = vmatpush1.xpose.msra.mxu0 0.0
    %3837 = vmatprep.subr.mxu0 0.0
    %3838 = vmatpush1.xpose.msra.mxu0 0.0
    %3839 = vmatprep.subr.mxu0 0.0
    %3840 = vmatpush1.xpose.msra.mxu0 0.0
    %3841 = vmatprep.subr.mxu0 0.0
    %3842 = vmatpush1.xpose.msra.mxu0 0.0
    %3843 = vmatprep.subr.mxu0 0.0
    %3844 = vmatpush1.xpose.msra.mxu0 0.0
    %3845 = vmatprep.subr.mxu0 0.0
    %3846 = vmatpush1.xpose.msra.mxu0 0.0
    %3847 = vmatprep.subr.mxu0 0.0
    %3848 = vmatpush1.xpose.msra.mxu0 0.0
    %3849 = vmatprep.subr.mxu0 0.0
    %3850 = vmatpush1.xpose.msra.mxu0 0.0
    %3851 = vmatprep.subr.mxu0 0.0
    %3852 = vmatpush1.xpose.msra.mxu0 0.0
    %3853 = vmatprep.subr.mxu0 0.0
    %3854 = vmatpush1.xpose.msra.mxu0 0.0
    %3855 = vmatprep.subr.mxu0 0.0
    %3856 = vmatpush1.xpose.msra.mxu0 0.0
    %3857 = vmatprep.subr.mxu0 0.0
    %3858 = vmatpush1.xpose.msra.mxu0 0.0
    %3859 = vmatprep.subr.mxu0 0.0
    %3860 = vmatpush1.xpose.msra.mxu0 0.0
    %3861 = vmatprep.subr.mxu0 0.0
    %3862 = vmatpush1.xpose.msra.mxu0 0.0
    %3863 = vmatprep.subr.mxu0 0.0
    %3864 = vmatpush1.xpose.msra.mxu0 0.0
    %3865 = vmatprep.mubr.f32.mxu0 0.0
    %3866 = vmatmul.mubr.f32.gmra.mrb[0].mxu0 %v3793
    %v3867 = vpop.f32.mrb[0].mxu0
    %v3868 = vadd.f32 %v3692, %v3867
    %v3869 = vpop.f32.mrb[0].mxu0
    %3870 = vmatprep.mubr.f32.mxu0 0.0
    %3871 = vmatmul.mubr.f32.gmra.mrb[0].mxu0 %v3795
    %v3872 = vpop.f32.mrb[0].mxu0
    %v3873 = vadd.f32 %v3693, %v3872
    %v3874 = vpop.f32.mrb[0].mxu0
    %3875 = vdwg.mxu0
    %3876 = vrot.lane.b32.xlu0 %v281, 80
    %v3877 = vpop.permute.xlu0 %3876
    %3878 = vrot.lane.b32.xlu0 %v286, 80
    %v3879 = vpop.permute.xlu0 %3878
    %3880 = vrot.lane.b32.xlu0 %v281, 72
    %v3881 = vpop.permute.xlu0 %3880
    %3882 = vrot.lane.b32.xlu0 %v286, 72
    %v3883 = vpop.permute.xlu0 %3882
    %v3884 = vsel %vm347, %v3877, 0
    %v3886 = vsel %vm347, %v3879, 0
    %v3888 = vsel %vm347, %v3881, 0
    %v3890 = vsel %vm347, %v3883, 0
    %3892 = vmatprep.subr.mxu0 0.0
    %3893 = vmatpush1.xpose.msra.mxu0 %v3888
    %3894 = vmatprep.subr.mxu0 0.0
    %3895 = vmatpush1.xpose.msra.mxu0 %v3890
    %3896 = vmatprep.subr.mxu0 0.0
    %3897 = vmatpush1.xpose.msra.mxu0 0.0
    %3898 = vmatprep.subr.mxu0 0.0
    %3899 = vmatpush1.xpose.msra.mxu0 0.0
    %3900 = vmatprep.subr.mxu0 0.0
    %3901 = vmatpush1.xpose.msra.mxu0 0.0
    %3902 = vmatprep.subr.mxu0 0.0
    %3903 = vmatpush1.xpose.msra.mxu0 0.0
    %3904 = vmatprep.subr.mxu0 0.0
    %3905 = vmatpush1.xpose.msra.mxu0 0.0
    %3906 = vmatprep.subr.mxu0 0.0
    %3907 = vmatpush1.xpose.msra.mxu0 0.0
    %3908 = vmatprep.subr.mxu0 0.0
    %3909 = vmatpush1.xpose.msra.mxu0 0.0
    %3910 = vmatprep.subr.mxu0 0.0
    %3911 = vmatpush1.xpose.msra.mxu0 0.0
    %3912 = vmatprep.subr.mxu0 0.0
    %3913 = vmatpush1.xpose.msra.mxu0 0.0
    %3914 = vmatprep.subr.mxu0 0.0
    %3915 = vmatpush1.xpose.msra.mxu0 0.0
    %3916 = vmatprep.subr.mxu0 0.0
    %3917 = vmatpush1.xpose.msra.mxu0 0.0
    %3918 = vmatprep.subr.mxu0 0.0
    %3919 = vmatpush1.xpose.msra.mxu0 0.0
    %3920 = vmatprep.subr.mxu0 0.0
    %3921 = vmatpush1.xpose.msra.mxu0 0.0
    %3922 = vmatprep.subr.mxu0 0.0
    %3923 = vmatpush1.xpose.msra.mxu0 0.0
    %3924 = vmatprep.subr.mxu0 0.0
    %3925 = vmatpush1.xpose.msra.mxu0 0.0
    %3926 = vmatprep.subr.mxu0 0.0
    %3927 = vmatpush1.xpose.msra.mxu0 0.0
    %3928 = vmatprep.subr.mxu0 0.0
    %3929 = vmatpush1.xpose.msra.mxu0 0.0
    %3930 = vmatprep.subr.mxu0 0.0
    %3931 = vmatpush1.xpose.msra.mxu0 0.0
    %3932 = vmatprep.subr.mxu0 0.0
    %3933 = vmatpush1.xpose.msra.mxu0 0.0
    %3934 = vmatprep.subr.mxu0 0.0
    %3935 = vmatpush1.xpose.msra.mxu0 0.0
    %3936 = vmatprep.subr.mxu0 0.0
    %3937 = vmatpush1.xpose.msra.mxu0 0.0
    %3938 = vmatprep.subr.mxu0 0.0
    %3939 = vmatpush1.xpose.msra.mxu0 0.0
    %3940 = vmatprep.subr.mxu0 0.0
    %3941 = vmatpush1.xpose.msra.mxu0 0.0
    %3942 = vmatprep.subr.mxu0 0.0
    %3943 = vmatpush1.xpose.msra.mxu0 0.0
    %3944 = vmatprep.subr.mxu0 0.0
    %3945 = vmatpush1.xpose.msra.mxu0 0.0
    %3946 = vmatprep.subr.mxu0 0.0
    %3947 = vmatpush1.xpose.msra.mxu0 0.0
    %3948 = vmatprep.subr.mxu0 0.0
    %3949 = vmatpush1.xpose.msra.mxu0 0.0
    %3950 = vmatprep.subr.mxu0 0.0
    %3951 = vmatpush1.xpose.msra.mxu0 0.0
    %3952 = vmatprep.subr.mxu0 0.0
    %3953 = vmatpush1.xpose.msra.mxu0 0.0
    %3954 = vmatprep.subr.mxu0 0.0
    %3955 = vmatpush1.xpose.msra.mxu0 0.0
    %3956 = vmatprep.mubr.f32.mxu0 0.0
    %3957 = vmatmul.mubr.f32.gmra.mrb[0].mxu0 %v3884
    %v3958 = vpop.f32.mrb[0].mxu0
    %v3959 = vadd.f32 %v3692, %v3958
    %v3960 = vpop.f32.mrb[0].mxu0
    %3961 = vmatprep.mubr.f32.mxu0 0.0
    %3962 = vmatmul.mubr.f32.gmra.mrb[0].mxu0 %v3886
    %v3963 = vpop.f32.mrb[0].mxu0
    %v3964 = vadd.f32 %v3693, %v3963
    %v3965 = vpop.f32.mrb[0].mxu0
    %3966 = vdwg.mxu0
    %3967 = vrot.lane.b32.xlu0 %v291, 80
    %v3968 = vpop.permute.xlu0 %3967
    %3969 = vrot.lane.b32.xlu0 %v296, 80
    %v3970 = vpop.permute.xlu0 %3969
    %3971 = vrot.lane.b32.xlu0 %v291, 72
    %v3972 = vpop.permute.xlu0 %3971
    %3973 = vrot.lane.b32.xlu0 %v296, 72
    %v3974 = vpop.permute.xlu0 %3973
    %v3975 = vsel %vm347, %v3968, 0
    %v3977 = vsel %vm347, %v3970, 0
    %v3979 = vsel %vm347, %v3972, 0
    %v3981 = vsel %vm347, %v3974, 0
    %3983 = vmatprep.subr.mxu0 0.0
    %3984 = vmatpush1.xpose.msra.mxu0 %v3979
    %3985 = vmatprep.subr.mxu0 0.0
    %3986 = vmatpush1.xpose.msra.mxu0 %v3981
    %3987 = vmatprep.subr.mxu0 0.0
    %3988 = vmatpush1.xpose.msra.mxu0 0.0
    %3989 = vmatprep.subr.mxu0 0.0
    %3990 = vmatpush1.xpose.msra.mxu0 0.0
    %3991 = vmatprep.subr.mxu0 0.0
    %3992 = vmatpush1.xpose.msra.mxu0 0.0
    %3993 = vmatprep.subr.mxu0 0.0
    %3994 = vmatpush1.xpose.msra.mxu0 0.0
    %3995 = vmatprep.subr.mxu0 0.0
    %3996 = vmatpush1.xpose.msra.mxu0 0.0
    %3997 = vmatprep.subr.mxu0 0.0
    %3998 = vmatpush1.xpose.msra.mxu0 0.0
    %3999 = vmatprep.subr.mxu0 0.0
    %4000 = vmatpush1.xpose.msra.mxu0 0.0
    %4001 = vmatprep.subr.mxu0 0.0
    %4002 = vmatpush1.xpose.msra.mxu0 0.0
    %4003 = vmatprep.subr.mxu0 0.0
    %4004 = vmatpush1.xpose.msra.mxu0 0.0
    %4005 = vmatprep.subr.mxu0 0.0
    %4006 = vmatpush1.xpose.msra.mxu0 0.0
    %4007 = vmatprep.subr.mxu0 0.0
    %4008 = vmatpush1.xpose.msra.mxu0 0.0
    %4009 = vmatprep.subr.mxu0 0.0
    %4010 = vmatpush1.xpose.msra.mxu0 0.0
    %4011 = vmatprep.subr.mxu0 0.0
    %4012 = vmatpush1.xpose.msra.mxu0 0.0
    %4013 = vmatprep.subr.mxu0 0.0
    %4014 = vmatpush1.xpose.msra.mxu0 0.0
    %4015 = vmatprep.subr.mxu0 0.0
    %4016 = vmatpush1.xpose.msra.mxu0 0.0
    %4017 = vmatprep.subr.mxu0 0.0
    %4018 = vmatpush1.xpose.msra.mxu0 0.0
    %4019 = vmatprep.subr.mxu0 0.0
    %4020 = vmatpush1.xpose.msra.mxu0 0.0
    %4021 = vmatprep.subr.mxu0 0.0
    %4022 = vmatpush1.xpose.msra.mxu0 0.0
    %4023 = vmatprep.subr.mxu0 0.0
    %4024 = vmatpush1.xpose.msra.mxu0 0.0
    %4025 = vmatprep.subr.mxu0 0.0
    %4026 = vmatpush1.xpose.msra.mxu0 0.0
    %4027 = vmatprep.subr.mxu0 0.0
    %4028 = vmatpush1.xpose.msra.mxu0 0.0
    %4029 = vmatprep.subr.mxu0 0.0
    %4030 = vmatpush1.xpose.msra.mxu0 0.0
    %4031 = vmatprep.subr.mxu0 0.0
    %4032 = vmatpush1.xpose.msra.mxu0 0.0
    %4033 = vmatprep.subr.mxu0 0.0
    %4034 = vmatpush1.xpose.msra.mxu0 0.0
    %4035 = vmatprep.subr.mxu0 0.0
    %4036 = vmatpush1.xpose.msra.mxu0 0.0
    %4037 = vmatprep.subr.mxu0 0.0
    %4038 = vmatpush1.xpose.msra.mxu0 0.0
    %4039 = vmatprep.subr.mxu0 0.0
    %4040 = vmatpush1.xpose.msra.mxu0 0.0
    %4041 = vmatprep.subr.mxu0 0.0
    %4042 = vmatpush1.xpose.msra.mxu0 0.0
    %4043 = vmatprep.subr.mxu0 0.0
    %4044 = vmatpush1.xpose.msra.mxu0 0.0
    %4045 = vmatprep.subr.mxu0 0.0
    %4046 = vmatpush1.xpose.msra.mxu0 0.0
    %4047 = vmatprep.mubr.f32.mxu0 0.0
    %4048 = vmatmul.mubr.f32.gmra.mrb[0].mxu0 %v3975
    %v4049 = vpop.f32.mrb[0].mxu0
    %v4050 = vadd.f32 %v3692, %v4049
    %v4051 = vpop.f32.mrb[0].mxu0
    %4052 = vmatprep.mubr.f32.mxu0 0.0
    %4053 = vmatmul.mubr.f32.gmra.mrb[0].mxu0 %v3977
    %v4054 = vpop.f32.mrb[0].mxu0
    %v4055 = vadd.f32 %v3693, %v4054
    %v4056 = vpop.f32.mrb[0].mxu0
    %4057 = vdwg.mxu0
    %4058 = vrot.lane.b32.xlu0 %v301, 80
    %v4059 = vpop.permute.xlu0 %4058
    %4060 = vrot.lane.b32.xlu0 %v306, 80
    %v4061 = vpop.permute.xlu0 %4060
    %4062 = vrot.lane.b32.xlu0 %v301, 72
    %v4063 = vpop.permute.xlu0 %4062
    %4064 = vrot.lane.b32.xlu0 %v306, 72
    %v4065 = vpop.permute.xlu0 %4064
    %v4066 = vsel %vm347, %v4059, 0
    %v4068 = vsel %vm347, %v4061, 0
    %v4070 = vsel %vm347, %v4063, 0
    %v4072 = vsel %vm347, %v4065, 0
    %4074 = vmatprep.subr.mxu0 0.0
    %4075 = vmatpush1.xpose.msra.mxu0 %v4070
    %4076 = vmatprep.subr.mxu0 0.0
    %4077 = vmatpush1.xpose.msra.mxu0 %v4072
    %4078 = vmatprep.subr.mxu0 0.0
    %4079 = vmatpush1.xpose.msra.mxu0 0.0
    %4080 = vmatprep.subr.mxu0 0.0
    %4081 = vmatpush1.xpose.msra.mxu0 0.0
    %4082 = vmatprep.subr.mxu0 0.0
    %4083 = vmatpush1.xpose.msra.mxu0 0.0
    %4084 = vmatprep.subr.mxu0 0.0
    %4085 = vmatpush1.xpose.msra.mxu0 0.0
    %4086 = vmatprep.subr.mxu0 0.0
    %4087 = vmatpush1.xpose.msra.mxu0 0.0
    %4088 = vmatprep.subr.mxu0 0.0
    %4089 = vmatpush1.xpose.msra.mxu0 0.0
    %4090 = vmatprep.subr.mxu0 0.0
    %4091 = vmatpush1.xpose.msra.mxu0 0.0
    %4092 = vmatprep.subr.mxu0 0.0
    %4093 = vmatpush1.xpose.msra.mxu0 0.0
    %4094 = vmatprep.subr.mxu0 0.0
    %4095 = vmatpush1.xpose.msra.mxu0 0.0
    %4096 = vmatprep.subr.mxu0 0.0
    %4097 = vmatpush1.xpose.msra.mxu0 0.0
    %4098 = vmatprep.subr.mxu0 0.0
    %4099 = vmatpush1.xpose.msra.mxu0 0.0
    %4100 = vmatprep.subr.mxu0 0.0
    %4101 = vmatpush1.xpose.msra.mxu0 0.0
    %4102 = vmatprep.subr.mxu0 0.0
    %4103 = vmatpush1.xpose.msra.mxu0 0.0
    %4104 = vmatprep.subr.mxu0 0.0
    %4105 = vmatpush1.xpose.msra.mxu0 0.0
    %4106 = vmatprep.subr.mxu0 0.0
    %4107 = vmatpush1.xpose.msra.mxu0 0.0
    %4108 = vmatprep.subr.mxu0 0.0
    %4109 = vmatpush1.xpose.msra.mxu0 0.0
    %4110 = vmatprep.subr.mxu0 0.0
    %4111 = vmatpush1.xpose.msra.mxu0 0.0
    %4112 = vmatprep.subr.mxu0 0.0
    %4113 = vmatpush1.xpose.msra.mxu0 0.0
    %4114 = vmatprep.subr.mxu0 0.0
    %4115 = vmatpush1.xpose.msra.mxu0 0.0
    %4116 = vmatprep.subr.mxu0 0.0
    %4117 = vmatpush1.xpose.msra.mxu0 0.0
    %4118 = vmatprep.subr.mxu0 0.0
    %4119 = vmatpush1.xpose.msra.mxu0 0.0
    %4120 = vmatprep.subr.mxu0 0.0
    %4121 = vmatpush1.xpose.msra.mxu0 0.0
    %4122 = vmatprep.subr.mxu0 0.0
    %4123 = vmatpush1.xpose.msra.mxu0 0.0
    %4124 = vmatprep.subr.mxu0 0.0
    %4125 = vmatpush1.xpose.msra.mxu0 0.0
    %4126 = vmatprep.subr.mxu0 0.0
    %4127 = vmatpush1.xpose.msra.mxu0 0.0
    %4128 = vmatprep.subr.mxu0 0.0
    %4129 = vmatpush1.xpose.msra.mxu0 0.0
    %4130 = vmatprep.subr.mxu0 0.0
    %4131 = vmatpush1.xpose.msra.mxu0 0.0
    %4132 = vmatprep.subr.mxu0 0.0
    %4133 = vmatpush1.xpose.msra.mxu0 0.0
    %4134 = vmatprep.subr.mxu0 0.0
    %4135 = vmatpush1.xpose.msra.mxu0 0.0
    %4136 = vmatprep.subr.mxu0 0.0
    %4137 = vmatpush1.xpose.msra.mxu0 0.0
    %4138 = vmatprep.mubr.f32.mxu0 0.0
    %4139 = vmatmul.mubr.f32.gmra.mrb[0].mxu0 %v4066
    %v4140 = vpop.f32.mrb[0].mxu0
    %v4141 = vadd.f32 %v3692, %v4140
    %v4142 = vpop.f32.mrb[0].mxu0
    %4143 = vmatprep.mubr.f32.mxu0 0.0
    %4144 = vmatmul.mubr.f32.gmra.mrb[0].mxu0 %v4068
    %v4145 = vpop.f32.mrb[0].mxu0
    %v4146 = vadd.f32 %v3693, %v4145
    %v4147 = vpop.f32.mrb[0].mxu0
    %4148 = vdwg.mxu0
    %4149 = vrot.lane.b32.xlu0 %v311, 80
    %v4150 = vpop.permute.xlu0 %4149
    %4151 = vrot.lane.b32.xlu0 %v316, 80
    %v4152 = vpop.permute.xlu0 %4151
    %4153 = vrot.lane.b32.xlu0 %v311, 72
    %v4154 = vpop.permute.xlu0 %4153
    %4155 = vrot.lane.b32.xlu0 %v316, 72
    %v4156 = vpop.permute.xlu0 %4155
    %v4157 = vsel %vm347, %v4150, 0
    %v4159 = vsel %vm347, %v4152, 0
    %v4161 = vsel %vm347, %v4154, 0
    %v4163 = vsel %vm347, %v4156, 0
    %4165 = vmatprep.subr.mxu0 0.0
    %4166 = vmatpush1.xpose.msra.mxu0 %v4161
    %4167 = vmatprep.subr.mxu0 0.0
    %4168 = vmatpush1.xpose.msra.mxu0 %v4163
    %4169 = vmatprep.subr.mxu0 0.0
    %4170 = vmatpush1.xpose.msra.mxu0 0.0
    %4171 = vmatprep.subr.mxu0 0.0
    %4172 = vmatpush1.xpose.msra.mxu0 0.0
    %4173 = vmatprep.subr.mxu0 0.0
    %4174 = vmatpush1.xpose.msra.mxu0 0.0
    %4175 = vmatprep.subr.mxu0 0.0
    %4176 = vmatpush1.xpose.msra.mxu0 0.0
    %4177 = vmatprep.subr.mxu0 0.0
    %4178 = vmatpush1.xpose.msra.mxu0 0.0
    %4179 = vmatprep.subr.mxu0 0.0
    %4180 = vmatpush1.xpose.msra.mxu0 0.0
    %4181 = vmatprep.subr.mxu0 0.0
    %4182 = vmatpush1.xpose.msra.mxu0 0.0
    %4183 = vmatprep.subr.mxu0 0.0
    %4184 = vmatpush1.xpose.msra.mxu0 0.0
    %4185 = vmatprep.subr.mxu0 0.0
    %4186 = vmatpush1.xpose.msra.mxu0 0.0
    %4187 = vmatprep.subr.mxu0 0.0
    %4188 = vmatpush1.xpose.msra.mxu0 0.0
    %4189 = vmatprep.subr.mxu0 0.0
    %4190 = vmatpush1.xpose.msra.mxu0 0.0
    %4191 = vmatprep.subr.mxu0 0.0
    %4192 = vmatpush1.xpose.msra.mxu0 0.0
    %4193 = vmatprep.subr.mxu0 0.0
    %4194 = vmatpush1.xpose.msra.mxu0 0.0
    %4195 = vmatprep.subr.mxu0 0.0
    %4196 = vmatpush1.xpose.msra.mxu0 0.0
    %4197 = vmatprep.subr.mxu0 0.0
    %4198 = vmatpush1.xpose.msra.mxu0 0.0
    %4199 = vmatprep.subr.mxu0 0.0
    %4200 = vmatpush1.xpose.msra.mxu0 0.0
    %4201 = vmatprep.subr.mxu0 0.0
    %4202 = vmatpush1.xpose.msra.mxu0 0.0
    %4203 = vmatprep.subr.mxu0 0.0
    %4204 = vmatpush1.xpose.msra.mxu0 0.0
    %4205 = vmatprep.subr.mxu0 0.0
    %4206 = vmatpush1.xpose.msra.mxu0 0.0
    %4207 = vmatprep.subr.mxu0 0.0
    %4208 = vmatpush1.xpose.msra.mxu0 0.0
    %4209 = vmatprep.subr.mxu0 0.0
    %4210 = vmatpush1.xpose.msra.mxu0 0.0
    %4211 = vmatprep.subr.mxu0 0.0
    %4212 = vmatpush1.xpose.msra.mxu0 0.0
    %4213 = vmatprep.subr.mxu0 0.0
    %4214 = vmatpush1.xpose.msra.mxu0 0.0
    %4215 = vmatprep.subr.mxu0 0.0
    %4216 = vmatpush1.xpose.msra.mxu0 0.0
    %4217 = vmatprep.subr.mxu0 0.0
    %4218 = vmatpush1.xpose.msra.mxu0 0.0
    %4219 = vmatprep.subr.mxu0 0.0
    %4220 = vmatpush1.xpose.msra.mxu0 0.0
    %4221 = vmatprep.subr.mxu0 0.0
    %4222 = vmatpush1.xpose.msra.mxu0 0.0
    %4223 = vmatprep.subr.mxu0 0.0
    %4224 = vmatpush1.xpose.msra.mxu0 0.0
    %4225 = vmatprep.subr.mxu0 0.0
    %4226 = vmatpush1.xpose.msra.mxu0 0.0
    %4227 = vmatprep.subr.mxu0 0.0
    %4228 = vmatpush1.xpose.msra.mxu0 0.0
    %4229 = vmatprep.mubr.f32.mxu0 0.0
    %4230 = vmatmul.mubr.f32.gmra.mrb[0].mxu0 %v4157
    %v4231 = vpop.f32.mrb[0].mxu0
    %v4232 = vadd.f32 %v3692, %v4231
    %v4233 = vpop.f32.mrb[0].mxu0
    %4234 = vmatprep.mubr.f32.mxu0 0.0
    %4235 = vmatmul.mubr.f32.gmra.mrb[0].mxu0 %v4159
    %v4236 = vpop.f32.mrb[0].mxu0
    %v4237 = vadd.f32 %v3693, %v4236
    %v4238 = vpop.f32.mrb[0].mxu0
    %4239 = vdwg.mxu0
    %4240 = vrot.lane.b32.xlu0 %v321, 80
    %v4241 = vpop.permute.xlu0 %4240
    %4242 = vrot.lane.b32.xlu0 %v326, 80
    %v4243 = vpop.permute.xlu0 %4242
    %4244 = vrot.lane.b32.xlu0 %v321, 72
    %v4245 = vpop.permute.xlu0 %4244
    %4246 = vrot.lane.b32.xlu0 %v326, 72
    %v4247 = vpop.permute.xlu0 %4246
    %v4248 = vsel %vm347, %v4241, 0
    %v4250 = vsel %vm347, %v4243, 0
    %v4252 = vsel %vm347, %v4245, 0
    %v4254 = vsel %vm347, %v4247, 0
    %4256 = vmatprep.subr.mxu0 0.0
    %4257 = vmatpush1.xpose.msra.mxu0 %v4252
    %4258 = vmatprep.subr.mxu0 0.0
    %4259 = vmatpush1.xpose.msra.mxu0 %v4254
    %4260 = vmatprep.subr.mxu0 0.0
    %4261 = vmatpush1.xpose.msra.mxu0 0.0
    %4262 = vmatprep.subr.mxu0 0.0
    %4263 = vmatpush1.xpose.msra.mxu0 0.0
    %4264 = vmatprep.subr.mxu0 0.0
    %4265 = vmatpush1.xpose.msra.mxu0 0.0
    %4266 = vmatprep.subr.mxu0 0.0
    %4267 = vmatpush1.xpose.msra.mxu0 0.0
    %4268 = vmatprep.subr.mxu0 0.0
    %4269 = vmatpush1.xpose.msra.mxu0 0.0
    %4270 = vmatprep.subr.mxu0 0.0
    %4271 = vmatpush1.xpose.msra.mxu0 0.0
    %4272 = vmatprep.subr.mxu0 0.0
    %4273 = vmatpush1.xpose.msra.mxu0 0.0
    %4274 = vmatprep.subr.mxu0 0.0
    %4275 = vmatpush1.xpose.msra.mxu0 0.0
    %4276 = vmatprep.subr.mxu0 0.0
    %4277 = vmatpush1.xpose.msra.mxu0 0.0
    %4278 = vmatprep.subr.mxu0 0.0
    %4279 = vmatpush1.xpose.msra.mxu0 0.0
    %4280 = vmatprep.subr.mxu0 0.0
    %4281 = vmatpush1.xpose.msra.mxu0 0.0
    %4282 = vmatprep.subr.mxu0 0.0
    %4283 = vmatpush1.xpose.msra.mxu0 0.0
    %4284 = vmatprep.subr.mxu0 0.0
    %4285 = vmatpush1.xpose.msra.mxu0 0.0
    %4286 = vmatprep.subr.mxu0 0.0
    %4287 = vmatpush1.xpose.msra.mxu0 0.0
    %4288 = vmatprep.subr.mxu0 0.0
    %4289 = vmatpush1.xpose.msra.mxu0 0.0
    %4290 = vmatprep.subr.mxu0 0.0
    %4291 = vmatpush1.xpose.msra.mxu0 0.0
    %4292 = vmatprep.subr.mxu0 0.0
    %4293 = vmatpush1.xpose.msra.mxu0 0.0
    %4294 = vmatprep.subr.mxu0 0.0
    %4295 = vmatpush1.xpose.msra.mxu0 0.0
    %4296 = vmatprep.subr.mxu0 0.0
    %4297 = vmatpush1.xpose.msra.mxu0 0.0
    %4298 = vmatprep.subr.mxu0 0.0
    %4299 = vmatpush1.xpose.msra.mxu0 0.0
    %4300 = vmatprep.subr.mxu0 0.0
    %4301 = vmatpush1.xpose.msra.mxu0 0.0
    %4302 = vmatprep.subr.mxu0 0.0
    %4303 = vmatpush1.xpose.msra.mxu0 0.0
    %4304 = vmatprep.subr.mxu0 0.0
    %4305 = vmatpush1.xpose.msra.mxu0 0.0
    %4306 = vmatprep.subr.mxu0 0.0
    %4307 = vmatpush1.xpose.msra.mxu0 0.0
    %4308 = vmatprep.subr.mxu0 0.0
    %4309 = vmatpush1.xpose.msra.mxu0 0.0
    %4310 = vmatprep.subr.mxu0 0.0
    %4311 = vmatpush1.xpose.msra.mxu0 0.0
    %4312 = vmatprep.subr.mxu0 0.0
    %4313 = vmatpush1.xpose.msra.mxu0 0.0
    %4314 = vmatprep.subr.mxu0 0.0
    %4315 = vmatpush1.xpose.msra.mxu0 0.0
    %4316 = vmatprep.subr.mxu0 0.0
    %4317 = vmatpush1.xpose.msra.mxu0 0.0
    %4318 = vmatprep.subr.mxu0 0.0
    %4319 = vmatpush1.xpose.msra.mxu0 0.0
    %4320 = vmatprep.mubr.f32.mxu0 0.0
    %4321 = vmatmul.mubr.f32.gmra.mrb[0].mxu0 %v4248
    %v4322 = vpop.f32.mrb[0].mxu0
    %v4323 = vadd.f32 %v3692, %v4322
    %v4324 = vpop.f32.mrb[0].mxu0
    %4325 = vmatprep.mubr.f32.mxu0 0.0
    %4326 = vmatmul.mubr.f32.gmra.mrb[0].mxu0 %v4250
    %v4327 = vpop.f32.mrb[0].mxu0
    %v4328 = vadd.f32 %v3693, %v4327
    %v4329 = vpop.f32.mrb[0].mxu0
    %4330 = vdwg.mxu0
    %4331 = vrot.lane.b32.xlu0 %v331, 80
    %v4332 = vpop.permute.xlu0 %4331
    %4333 = vrot.lane.b32.xlu0 %v336, 80
    %v4334 = vpop.permute.xlu0 %4333
    %4335 = vrot.lane.b32.xlu0 %v331, 72
    %v4336 = vpop.permute.xlu0 %4335
    %4337 = vrot.lane.b32.xlu0 %v336, 72
    %v4338 = vpop.permute.xlu0 %4337
    %v4339 = vsel %vm347, %v4332, 0
    %v4341 = vsel %vm347, %v4334, 0
    %v4343 = vsel %vm347, %v4336, 0
    %v4345 = vsel %vm347, %v4338, 0
    %4347 = vmatprep.subr.mxu0 0.0
    %4348 = vmatpush1.xpose.msra.mxu0 %v4343
    %4349 = vmatprep.subr.mxu0 0.0
    %4350 = vmatpush1.xpose.msra.mxu0 %v4345
    %4351 = vmatprep.subr.mxu0 0.0
    %4352 = vmatpush1.xpose.msra.mxu0 0.0
    %4353 = vmatprep.subr.mxu0 0.0
    %4354 = vmatpush1.xpose.msra.mxu0 0.0
    %4355 = vmatprep.subr.mxu0 0.0
    %4356 = vmatpush1.xpose.msra.mxu0 0.0
    %4357 = vmatprep.subr.mxu0 0.0
    %4358 = vmatpush1.xpose.msra.mxu0 0.0
    %4359 = vmatprep.subr.mxu0 0.0
    %4360 = vmatpush1.xpose.msra.mxu0 0.0
    %4361 = vmatprep.subr.mxu0 0.0
    %4362 = vmatpush1.xpose.msra.mxu0 0.0
    %4363 = vmatprep.subr.mxu0 0.0
    %4364 = vmatpush1.xpose.msra.mxu0 0.0
    %4365 = vmatprep.subr.mxu0 0.0
    %4366 = vmatpush1.xpose.msra.mxu0 0.0
    %4367 = vmatprep.subr.mxu0 0.0
    %4368 = vmatpush1.xpose.msra.mxu0 0.0
    %4369 = vmatprep.subr.mxu0 0.0
    %4370 = vmatpush1.xpose.msra.mxu0 0.0
    %4371 = vmatprep.subr.mxu0 0.0
    %4372 = vmatpush1.xpose.msra.mxu0 0.0
    %4373 = vmatprep.subr.mxu0 0.0
    %4374 = vmatpush1.xpose.msra.mxu0 0.0
    %4375 = vmatprep.subr.mxu0 0.0
    %4376 = vmatpush1.xpose.msra.mxu0 0.0
    %4377 = vmatprep.subr.mxu0 0.0
    %4378 = vmatpush1.xpose.msra.mxu0 0.0
    %4379 = vmatprep.subr.mxu0 0.0
    %4380 = vmatpush1.xpose.msra.mxu0 0.0
    %4381 = vmatprep.subr.mxu0 0.0
    %4382 = vmatpush1.xpose.msra.mxu0 0.0
    %4383 = vmatprep.subr.mxu0 0.0
    %4384 = vmatpush1.xpose.msra.mxu0 0.0
    %4385 = vmatprep.subr.mxu0 0.0
    %4386 = vmatpush1.xpose.msra.mxu0 0.0
    %4387 = vmatprep.subr.mxu0 0.0
    %4388 = vmatpush1.xpose.msra.mxu0 0.0
    %4389 = vmatprep.subr.mxu0 0.0
    %4390 = vmatpush1.xpose.msra.mxu0 0.0
    %4391 = vmatprep.subr.mxu0 0.0
    %4392 = vmatpush1.xpose.msra.mxu0 0.0
    %4393 = vmatprep.subr.mxu0 0.0
    %4394 = vmatpush1.xpose.msra.mxu0 0.0
    %4395 = vmatprep.subr.mxu0 0.0
    %4396 = vmatpush1.xpose.msra.mxu0 0.0
    %4397 = vmatprep.subr.mxu0 0.0
    %4398 = vmatpush1.xpose.msra.mxu0 0.0
    %4399 = vmatprep.subr.mxu0 0.0
    %4400 = vmatpush1.xpose.msra.mxu0 0.0
    %4401 = vmatprep.subr.mxu0 0.0
    %4402 = vmatpush1.xpose.msra.mxu0 0.0
    %4403 = vmatprep.subr.mxu0 0.0
    %4404 = vmatpush1.xpose.msra.mxu0 0.0
    %4405 = vmatprep.subr.mxu0 0.0
    %4406 = vmatpush1.xpose.msra.mxu0 0.0
    %4407 = vmatprep.subr.mxu0 0.0
    %4408 = vmatpush1.xpose.msra.mxu0 0.0
    %4409 = vmatprep.subr.mxu0 0.0
    %4410 = vmatpush1.xpose.msra.mxu0 0.0
    %4411 = vmatprep.mubr.f32.mxu0 0.0
    %4412 = vmatmul.mubr.f32.gmra.mrb[0].mxu0 %v4339
    %v4413 = vpop.f32.mrb[0].mxu0
    %v4414 = vadd.f32 %v3692, %v4413
    %v4415 = vpop.f32.mrb[0].mxu0
    %4416 = vmatprep.mubr.f32.mxu0 0.0
    %4417 = vmatmul.mubr.f32.gmra.mrb[0].mxu0 %v4341
    %v4418 = vpop.f32.mrb[0].mxu0
    %v4419 = vadd.f32 %v3693, %v4418
    %v4420 = vpop.f32.mrb[0].mxu0
    %4421 = vdwg.mxu0
    %v4422 = vld [vmem:[#allocation11] sm:$0xff]
    %v4423 = vld [vmem:[#allocation11 + $0x8] sm:$0xff]
    %v4424 = vld [vmem:[#allocation11 + $0x10] sm:$0xff]
    %v4425 = vld [vmem:[#allocation11 + $0x18] sm:$0xff]
    %v4426 = vld [vmem:[#allocation11 + $0x20] sm:$0xff]
    %v4427 = vld [vmem:[#allocation11 + $0x28] sm:$0xff]
    %v4428 = vld [vmem:[#allocation11 + $0x30] sm:$0xff]
    %v4429 = vld [vmem:[#allocation11 + $0x38] sm:$0xff]
    %v4430 = vld [vmem:[#allocation11 + $0x40] sm:$0xff]
    %v4431 = vld [vmem:[#allocation11 + $0x48] sm:$0xff]
    %v4432 = vld [vmem:[#allocation11 + $0x50] sm:$0xff]
    %v4433 = vld [vmem:[#allocation11 + $0x58] sm:$0xff]
    %v4434 = vld [vmem:[#allocation11 + $0x60] sm:$0xff]
    %v4435 = vld [vmem:[#allocation11 + $0x68] sm:$0xff]
    %v4436 = vld [vmem:[#allocation11 + $0x70] sm:$0xff]
    %v4437 = vld [vmem:[#allocation11 + $0x78] sm:$0xff]
    %v4438 = vadd.f32 %v3777, %v4422
    %v4439 = vadd.f32 %v3782, %v4423
    %v4440 = vadd.f32 %v3868, %v4424
    %v4441 = vadd.f32 %v3873, %v4425
    %v4442 = vadd.f32 %v3959, %v4426
    %v4443 = vadd.f32 %v3964, %v4427
    %v4444 = vadd.f32 %v4050, %v4428
    %v4445 = vadd.f32 %v4055, %v4429
    %v4446 = vadd.f32 %v4141, %v4430
    %v4447 = vadd.f32 %v4146, %v4431
    %v4448 = vadd.f32 %v4232, %v4432
    %v4449 = vadd.f32 %v4237, %v4433
    %v4450 = vadd.f32 %v4323, %v4434
    %v4451 = vadd.f32 %v4328, %v4435
    %v4452 = vadd.f32 %v4414, %v4436
    %v4453 = vadd.f32 %v4419, %v4437
    %v4454 = vsel %vm1086, %v4438, -inf
    %4455 = vmax.xlane.f32.xlu0 %v4454
    %v4456 = vpop.xlane.xlu0 %4455
    %v4457 = vsel %vm1086, %v4439, -inf
    %4458 = vmax.xlane.f32.xlu0 %v4457
    %v4459 = vpop.xlane.xlu0 %4458
    %v4460 = vsel %vm1086, %v4440, -inf
    %4461 = vmax.xlane.f32.xlu0 %v4460
    %v4462 = vpop.xlane.xlu0 %4461
    %v4463 = vsel %vm1086, %v4441, -inf
    %4464 = vmax.xlane.f32.xlu0 %v4463
    %v4465 = vpop.xlane.xlu0 %4464
    %v4466 = vsel %vm1086, %v4442, -inf
    %4467 = vmax.xlane.f32.xlu0 %v4466
    %v4468 = vpop.xlane.xlu0 %4467
    %v4469 = vsel %vm1086, %v4443, -inf
    %4470 = vmax.xlane.f32.xlu0 %v4469
    %v4471 = vpop.xlane.xlu0 %4470
    %v4472 = vsel %vm1086, %v4444, -inf
    %4473 = vmax.xlane.f32.xlu0 %v4472
    %v4474 = vpop.xlane.xlu0 %4473
    %v4475 = vsel %vm1086, %v4445, -inf
    %4476 = vmax.xlane.f32.xlu0 %v4475
    %v4477 = vpop.xlane.xlu0 %4476
    %v4478 = vsel %vm1086, %v4446, -inf
    %4479 = vmax.xlane.f32.xlu0 %v4478
    %v4480 = vpop.xlane.xlu0 %4479
    %v4481 = vsel %vm1086, %v4447, -inf
    %4482 = vmax.xlane.f32.xlu0 %v4481
    %v4483 = vpop.xlane.xlu0 %4482
    %v4484 = vsel %vm1086, %v4448, -inf
    %4485 = vmax.xlane.f32.xlu0 %v4484
    %v4486 = vpop.xlane.xlu0 %4485
    %v4487 = vsel %vm1086, %v4449, -inf
    %4488 = vmax.xlane.f32.xlu0 %v4487
    %v4489 = vpop.xlane.xlu0 %4488
    %v4490 = vsel %vm1086, %v4450, -inf
    %4491 = vmax.xlane.f32.xlu0 %v4490
    %v4492 = vpop.xlane.xlu0 %4491
    %v4493 = vsel %vm1086, %v4451, -inf
    %4494 = vmax.xlane.f32.xlu0 %v4493
    %v4495 = vpop.xlane.xlu0 %4494
    %v4496 = vsel %vm1086, %v4452, -inf
    %4497 = vmax.xlane.f32.xlu0 %v4496
    %v4498 = vpop.xlane.xlu0 %4497
    %v4499 = vsel %vm1086, %v4453, -inf
    %4500 = vmax.xlane.f32.xlu0 %v4499
    %v4501 = vpop.xlane.xlu0 %4500
    %v4502 = vsub.f32 %v4438, %v4456
    %v4503 = vsub.f32 %v4439, %v4459
    %v4504 = vsub.f32 %v4440, %v4462
    %v4505 = vsub.f32 %v4441, %v4465
    %v4506 = vsub.f32 %v4442, %v4468
    %v4507 = vsub.f32 %v4443, %v4471
    %v4508 = vsub.f32 %v4444, %v4474
    %v4509 = vsub.f32 %v4445, %v4477
    %v4510 = vsub.f32 %v4446, %v4480
    %v4511 = vsub.f32 %v4447, %v4483
    %v4512 = vsub.f32 %v4448, %v4486
    %v4513 = vsub.f32 %v4449, %v4489
    %v4514 = vsub.f32 %v4450, %v4492
    %v4515 = vsub.f32 %v4451, %v4495
    %v4516 = vsub.f32 %v4452, %v4498
    %v4517 = vsub.f32 %v4453, %v4501
    %v4518 = vmul.f32 %v4502, 1.442695
    %v4519 = vpow.pop %v4518
    %v4520 = vmul.f32 %v4503, 1.442695
    %v4521 = vpow.pop %v4520
    %v4522 = vmul.f32 %v4504, 1.442695
    %v4523 = vpow.pop %v4522
    %v4524 = vmul.f32 %v4505, 1.442695
    %v4525 = vpow.pop %v4524
    %v4526 = vmul.f32 %v4506, 1.442695
    %v4527 = vpow.pop %v4526
    %v4528 = vmul.f32 %v4507, 1.442695
    %v4529 = vpow.pop %v4528
    %v4530 = vmul.f32 %v4508, 1.442695
    %v4531 = vpow.pop %v4530
    %v4532 = vmul.f32 %v4509, 1.442695
    %v4533 = vpow.pop %v4532
    %v4534 = vmul.f32 %v4510, 1.442695
    %v4535 = vpow.pop %v4534
    %v4536 = vmul.f32 %v4511, 1.442695
    %v4537 = vpow.pop %v4536
    %v4538 = vmul.f32 %v4512, 1.442695
    %v4539 = vpow.pop %v4538
    %v4540 = vmul.f32 %v4513, 1.442695
    %v4541 = vpow.pop %v4540
    %v4542 = vmul.f32 %v4514, 1.442695
    %v4543 = vpow.pop %v4542
    %v4544 = vmul.f32 %v4515, 1.442695
    %v4545 = vpow.pop %v4544
    %v4546 = vmul.f32 %v4516, 1.442695
    %v4547 = vpow.pop %v4546
    %v4548 = vmul.f32 %v4517, 1.442695
    %v4549 = vpow.pop %v4548
    %v4550 = vsel %vm1086, %v4519, 0.0
    %4551 = vadd.xlane.f32.xlu0 %v4550
    %v4552 = vpop.xlane.xlu0 %4551
    %v4553 = vsel %vm1086, %v4521, 0.0
    %4554 = vadd.xlane.f32.xlu0 %v4553
    %v4555 = vpop.xlane.xlu0 %4554
    %v4556 = vsel %vm1086, %v4523, 0.0
    %4557 = vadd.xlane.f32.xlu0 %v4556
    %v4558 = vpop.xlane.xlu0 %4557
    %v4559 = vsel %vm1086, %v4525, 0.0
    %4560 = vadd.xlane.f32.xlu0 %v4559
    %v4561 = vpop.xlane.xlu0 %4560
    %v4562 = vsel %vm1086, %v4527, 0.0
    %4563 = vadd.xlane.f32.xlu0 %v4562
    %v4564 = vpop.xlane.xlu0 %4563
    %v4565 = vsel %vm1086, %v4529, 0.0
    %4566 = vadd.xlane.f32.xlu0 %v4565
    %v4567 = vpop.xlane.xlu0 %4566
    %v4568 = vsel %vm1086, %v4531, 0.0
    %4569 = vadd.xlane.f32.xlu0 %v4568
    %v4570 = vpop.xlane.xlu0 %4569
    %v4571 = vsel %vm1086, %v4533, 0.0
    %4572 = vadd.xlane.f32.xlu0 %v4571
    %v4573 = vpop.xlane.xlu0 %4572
    %v4574 = vsel %vm1086, %v4535, 0.0
    %4575 = vadd.xlane.f32.xlu0 %v4574
    %v4576 = vpop.xlane.xlu0 %4575
    %v4577 = vsel %vm1086, %v4537, 0.0
    %4578 = vadd.xlane.f32.xlu0 %v4577
    %v4579 = vpop.xlane.xlu0 %4578
    %v4580 = vsel %vm1086, %v4539, 0.0
    %4581 = vadd.xlane.f32.xlu0 %v4580
    %v4582 = vpop.xlane.xlu0 %4581
    %v4583 = vsel %vm1086, %v4541, 0.0
    %4584 = vadd.xlane.f32.xlu0 %v4583
    %v4585 = vpop.xlane.xlu0 %4584
    %v4586 = vsel %vm1086, %v4543, 0.0
    %4587 = vadd.xlane.f32.xlu0 %v4586
    %v4588 = vpop.xlane.xlu0 %4587
    %v4589 = vsel %vm1086, %v4545, 0.0
    %4590 = vadd.xlane.f32.xlu0 %v4589
    %v4591 = vpop.xlane.xlu0 %4590
    %v4592 = vsel %vm1086, %v4547, 0.0
    %4593 = vadd.xlane.f32.xlu0 %v4592
    %v4594 = vpop.xlane.xlu0 %4593
    %v4595 = vsel %vm1086, %v4549, 0.0
    %4596 = vadd.xlane.f32.xlu0 %v4595
    %v4597 = vpop.xlane.xlu0 %4596
    %v4598 = vrcp.pop %v4552
    %v4599 = vrcp.pop %v4555
    %v4600 = vrcp.pop %v4558
    %v4601 = vrcp.pop %v4561
    %v4602 = vrcp.pop %v4564
    %v4603 = vrcp.pop %v4567
    %v4604 = vrcp.pop %v4570
    %v4605 = vrcp.pop %v4573
    %v4606 = vrcp.pop %v4576
    %v4607 = vrcp.pop %v4579
    %v4608 = vrcp.pop %v4582
    %v4609 = vrcp.pop %v4585
    %v4610 = vrcp.pop %v4588
    %v4611 = vrcp.pop %v4591
    %v4612 = vrcp.pop %v4594
    %v4613 = vrcp.pop %v4597
    %v4614 = vmul.f32 %v4519, %v4598
    %v4615 = vmul.f32 %v4521, %v4599
    %v4616 = vmul.f32 %v4523, %v4600
    %v4617 = vmul.f32 %v4525, %v4601
    %v4618 = vmul.f32 %v4527, %v4602
    %v4619 = vmul.f32 %v4529, %v4603
    %v4620 = vmul.f32 %v4531, %v4604
    %v4621 = vmul.f32 %v4533, %v4605
    %v4622 = vmul.f32 %v4535, %v4606
    %v4623 = vmul.f32 %v4537, %v4607
    %v4624 = vmul.f32 %v4539, %v4608
    %v4625 = vmul.f32 %v4541, %v4609
    %v4626 = vmul.f32 %v4543, %v4610
    %v4627 = vmul.f32 %v4545, %v4611
    %v4628 = vmul.f32 %v4547, %v4612
    %v4629 = vmul.f32 %v4549, %v4613
    %4630 = vrot.lane.b32.xlu0 %v261, 64
    %v4631 = vpop.permute.xlu0 %4630
    %4632 = vrot.lane.b32.xlu0 %v266, 64
    %v4633 = vpop.permute.xlu0 %4632
    %v4637 = vsel %vm1086, %v4614, 0
    %v4640 = vsel %vm1086, %v4615, 0
    %4642 = vmatprep.subr.mxu0 0.0
    %4643 = vmatpush1.msra.mxu0 %v4631
    %4644 = vmatprep.subr.mxu0 0.0
    %4645 = vmatpush1.msra.mxu0 %v4633
    %4646 = vmatprep.subr.mxu0 0.0
    %4647 = vmatpush1.msra.mxu0 0.0
    %4648 = vmatprep.subr.mxu0 0.0
    %4649 = vmatpush1.msra.mxu0 0.0
    %4650 = vmatprep.subr.mxu0 0.0
    %4651 = vmatpush1.msra.mxu0 0.0
    %4652 = vmatprep.subr.mxu0 0.0
    %4653 = vmatpush1.msra.mxu0 0.0
    %4654 = vmatprep.subr.mxu0 0.0
    %4655 = vmatpush1.msra.mxu0 0.0
    %4656 = vmatprep.subr.mxu0 0.0
    %4657 = vmatpush1.msra.mxu0 0.0
    %4658 = vmatprep.subr.mxu0 0.0
    %4659 = vmatpush1.msra.mxu0 0.0
    %4660 = vmatprep.subr.mxu0 0.0
    %4661 = vmatpush1.msra.mxu0 0.0
    %4662 = vmatprep.subr.mxu0 0.0
    %4663 = vmatpush1.msra.mxu0 0.0
    %4664 = vmatprep.subr.mxu0 0.0
    %4665 = vmatpush1.msra.mxu0 0.0
    %4666 = vmatprep.subr.mxu0 0.0
    %4667 = vmatpush1.msra.mxu0 0.0
    %4668 = vmatprep.subr.mxu0 0.0
    %4669 = vmatpush1.msra.mxu0 0.0
    %4670 = vmatprep.subr.mxu0 0.0
    %4671 = vmatpush1.msra.mxu0 0.0
    %4672 = vmatprep.subr.mxu0 0.0
    %4673 = vmatpush1.msra.mxu0 0.0
    %4674 = vmatprep.subr.mxu0 0.0
    %4675 = vmatpush1.msra.mxu0 0.0
    %4676 = vmatprep.subr.mxu0 0.0
    %4677 = vmatpush1.msra.mxu0 0.0
    %4678 = vmatprep.subr.mxu0 0.0
    %4679 = vmatpush1.msra.mxu0 0.0
    %4680 = vmatprep.subr.mxu0 0.0
    %4681 = vmatpush1.msra.mxu0 0.0
    %4682 = vmatprep.subr.mxu0 0.0
    %4683 = vmatpush1.msra.mxu0 0.0
    %4684 = vmatprep.subr.mxu0 0.0
    %4685 = vmatpush1.msra.mxu0 0.0
    %4686 = vmatprep.subr.mxu0 0.0
    %4687 = vmatpush1.msra.mxu0 0.0
    %4688 = vmatprep.subr.mxu0 0.0
    %4689 = vmatpush1.msra.mxu0 0.0
    %4690 = vmatprep.subr.mxu0 0.0
    %4691 = vmatpush1.msra.mxu0 0.0
    %4692 = vmatprep.subr.mxu0 0.0
    %4693 = vmatpush1.msra.mxu0 0.0
    %4694 = vmatprep.subr.mxu0 0.0
    %4695 = vmatpush1.msra.mxu0 0.0
    %4696 = vmatprep.subr.mxu0 0.0
    %4697 = vmatpush1.msra.mxu0 0.0
    %4698 = vmatprep.subr.mxu0 0.0
    %4699 = vmatpush1.msra.mxu0 0.0
    %4700 = vmatprep.subr.mxu0 0.0
    %4701 = vmatpush1.msra.mxu0 0.0
    %4702 = vmatprep.subr.mxu0 0.0
    %4703 = vmatpush1.msra.mxu0 0.0
    %4704 = vmatprep.subr.mxu0 0.0
    %4705 = vmatpush1.msra.mxu0 0.0
    %4706 = vmatprep.mubr.f32.mxu0 0.0
    %4707 = vmatmul.mubr.f32.gmra.mrb[0].mxu0 %v4637
    %v4708 = vpop.f32.mrb[0].mxu0
    %v4709 = vadd.f32 0.0, %v4708
    %v4710 = vpop.f32.mrb[0].mxu0
    %4711 = vmatprep.mubr.f32.mxu0 0.0
    %4712 = vmatmul.mubr.f32.gmra.mrb[0].mxu0 %v4640
    %v4713 = vpop.f32.mrb[0].mxu0
    %v4714 = vadd.f32 0.0, %v4713
    %v4715 = vpop.f32.mrb[0].mxu0
    %4716 = vdwg.mxu0
    %4717 = vrot.lane.b32.xlu0 %v271, 64
    %v4718 = vpop.permute.xlu0 %4717
    %4719 = vrot.lane.b32.xlu0 %v276, 64
    %v4720 = vpop.permute.xlu0 %4719
    %v4724 = vsel %vm1086, %v4616, 0
    %v4727 = vsel %vm1086, %v4617, 0
    %4729 = vmatprep.subr.mxu0 0.0
    %4730 = vmatpush1.msra.mxu0 %v4718
    %4731 = vmatprep.subr.mxu0 0.0
    %4732 = vmatpush1.msra.mxu0 %v4720
    %4733 = vmatprep.subr.mxu0 0.0
    %4734 = vmatpush1.msra.mxu0 0.0
    %4735 = vmatprep.subr.mxu0 0.0
    %4736 = vmatpush1.msra.mxu0 0.0
    %4737 = vmatprep.subr.mxu0 0.0
    %4738 = vmatpush1.msra.mxu0 0.0
    %4739 = vmatprep.subr.mxu0 0.0
    %4740 = vmatpush1.msra.mxu0 0.0
    %4741 = vmatprep.subr.mxu0 0.0
    %4742 = vmatpush1.msra.mxu0 0.0
    %4743 = vmatprep.subr.mxu0 0.0
    %4744 = vmatpush1.msra.mxu0 0.0
    %4745 = vmatprep.subr.mxu0 0.0
    %4746 = vmatpush1.msra.mxu0 0.0
    %4747 = vmatprep.subr.mxu0 0.0
    %4748 = vmatpush1.msra.mxu0 0.0
    %4749 = vmatprep.subr.mxu0 0.0
    %4750 = vmatpush1.msra.mxu0 0.0
    %4751 = vmatprep.subr.mxu0 0.0
    %4752 = vmatpush1.msra.mxu0 0.0
    %4753 = vmatprep.subr.mxu0 0.0
    %4754 = vmatpush1.msra.mxu0 0.0
    %4755 = vmatprep.subr.mxu0 0.0
    %4756 = vmatpush1.msra.mxu0 0.0
    %4757 = vmatprep.subr.mxu0 0.0
    %4758 = vmatpush1.msra.mxu0 0.0
    %4759 = vmatprep.subr.mxu0 0.0
    %4760 = vmatpush1.msra.mxu0 0.0
    %4761 = vmatprep.subr.mxu0 0.0
    %4762 = vmatpush1.msra.mxu0 0.0
    %4763 = vmatprep.subr.mxu0 0.0
    %4764 = vmatpush1.msra.mxu0 0.0
    %4765 = vmatprep.subr.mxu0 0.0
    %4766 = vmatpush1.msra.mxu0 0.0
    %4767 = vmatprep.subr.mxu0 0.0
    %4768 = vmatpush1.msra.mxu0 0.0
    %4769 = vmatprep.subr.mxu0 0.0
    %4770 = vmatpush1.msra.mxu0 0.0
    %4771 = vmatprep.subr.mxu0 0.0
    %4772 = vmatpush1.msra.mxu0 0.0
    %4773 = vmatprep.subr.mxu0 0.0
    %4774 = vmatpush1.msra.mxu0 0.0
    %4775 = vmatprep.subr.mxu0 0.0
    %4776 = vmatpush1.msra.mxu0 0.0
    %4777 = vmatprep.subr.mxu0 0.0
    %4778 = vmatpush1.msra.mxu0 0.0
    %4779 = vmatprep.subr.mxu0 0.0
    %4780 = vmatpush1.msra.mxu0 0.0
    %4781 = vmatprep.subr.mxu0 0.0
    %4782 = vmatpush1.msra.mxu0 0.0
    %4783 = vmatprep.subr.mxu0 0.0
    %4784 = vmatpush1.msra.mxu0 0.0
    %4785 = vmatprep.subr.mxu0 0.0
    %4786 = vmatpush1.msra.mxu0 0.0
    %4787 = vmatprep.subr.mxu0 0.0
    %4788 = vmatpush1.msra.mxu0 0.0
    %4789 = vmatprep.subr.mxu0 0.0
    %4790 = vmatpush1.msra.mxu0 0.0
    %4791 = vmatprep.subr.mxu0 0.0
    %4792 = vmatpush1.msra.mxu0 0.0
    %4793 = vmatprep.mubr.f32.mxu0 0.0
    %4794 = vmatmul.mubr.f32.gmra.mrb[0].mxu0 %v4724
    %v4795 = vpop.f32.mrb[0].mxu0
    %v4796 = vadd.f32 0.0, %v4795
    %v4797 = vpop.f32.mrb[0].mxu0
    %4798 = vmatprep.mubr.f32.mxu0 0.0
    %4799 = vmatmul.mubr.f32.gmra.mrb[0].mxu0 %v4727
    %v4800 = vpop.f32.mrb[0].mxu0
    %v4801 = vadd.f32 0.0, %v4800
    %v4802 = vpop.f32.mrb[0].mxu0
    %4803 = vdwg.mxu0
    %4804 = vrot.lane.b32.xlu0 %v281, 64
    %v4805 = vpop.permute.xlu0 %4804
    %4806 = vrot.lane.b32.xlu0 %v286, 64
    %v4807 = vpop.permute.xlu0 %4806
    %v4811 = vsel %vm1086, %v4618, 0
    %v4814 = vsel %vm1086, %v4619, 0
    %4816 = vmatprep.subr.mxu0 0.0
    %4817 = vmatpush1.msra.mxu0 %v4805
    %4818 = vmatprep.subr.mxu0 0.0
    %4819 = vmatpush1.msra.mxu0 %v4807
    %4820 = vmatprep.subr.mxu0 0.0
    %4821 = vmatpush1.msra.mxu0 0.0
    %4822 = vmatprep.subr.mxu0 0.0
    %4823 = vmatpush1.msra.mxu0 0.0
    %4824 = vmatprep.subr.mxu0 0.0
    %4825 = vmatpush1.msra.mxu0 0.0
    %4826 = vmatprep.subr.mxu0 0.0
    %4827 = vmatpush1.msra.mxu0 0.0
    %4828 = vmatprep.subr.mxu0 0.0
    %4829 = vmatpush1.msra.mxu0 0.0
    %4830 = vmatprep.subr.mxu0 0.0
    %4831 = vmatpush1.msra.mxu0 0.0
    %4832 = vmatprep.subr.mxu0 0.0
    %4833 = vmatpush1.msra.mxu0 0.0
    %4834 = vmatprep.subr.mxu0 0.0
    %4835 = vmatpush1.msra.mxu0 0.0
    %4836 = vmatprep.subr.mxu0 0.0
    %4837 = vmatpush1.msra.mxu0 0.0
    %4838 = vmatprep.subr.mxu0 0.0
    %4839 = vmatpush1.msra.mxu0 0.0
    %4840 = vmatprep.subr.mxu0 0.0
    %4841 = vmatpush1.msra.mxu0 0.0
    %4842 = vmatprep.subr.mxu0 0.0
    %4843 = vmatpush1.msra.mxu0 0.0
    %4844 = vmatprep.subr.mxu0 0.0
    %4845 = vmatpush1.msra.mxu0 0.0
    %4846 = vmatprep.subr.mxu0 0.0
    %4847 = vmatpush1.msra.mxu0 0.0
    %4848 = vmatprep.subr.mxu0 0.0
    %4849 = vmatpush1.msra.mxu0 0.0
    %4850 = vmatprep.subr.mxu0 0.0
    %4851 = vmatpush1.msra.mxu0 0.0
    %4852 = vmatprep.subr.mxu0 0.0
    %4853 = vmatpush1.msra.mxu0 0.0
    %4854 = vmatprep.subr.mxu0 0.0
    %4855 = vmatpush1.msra.mxu0 0.0
    %4856 = vmatprep.subr.mxu0 0.0
    %4857 = vmatpush1.msra.mxu0 0.0
    %4858 = vmatprep.subr.mxu0 0.0
    %4859 = vmatpush1.msra.mxu0 0.0
    %4860 = vmatprep.subr.mxu0 0.0
    %4861 = vmatpush1.msra.mxu0 0.0
    %4862 = vmatprep.subr.mxu0 0.0
    %4863 = vmatpush1.msra.mxu0 0.0
    %4864 = vmatprep.subr.mxu0 0.0
    %4865 = vmatpush1.msra.mxu0 0.0
    %4866 = vmatprep.subr.mxu0 0.0
    %4867 = vmatpush1.msra.mxu0 0.0
    %4868 = vmatprep.subr.mxu0 0.0
    %4869 = vmatpush1.msra.mxu0 0.0
    %4870 = vmatprep.subr.mxu0 0.0
    %4871 = vmatpush1.msra.mxu0 0.0
    %4872 = vmatprep.subr.mxu0 0.0
    %4873 = vmatpush1.msra.mxu0 0.0
    %4874 = vmatprep.subr.mxu0 0.0
    %4875 = vmatpush1.msra.mxu0 0.0
    %4876 = vmatprep.subr.mxu0 0.0
    %4877 = vmatpush1.msra.mxu0 0.0
    %4878 = vmatprep.subr.mxu0 0.0
    %4879 = vmatpush1.msra.mxu0 0.0
    %4880 = vmatprep.mubr.f32.mxu0 0.0
    %4881 = vmatmul.mubr.f32.gmra.mrb[0].mxu0 %v4811
    %v4882 = vpop.f32.mrb[0].mxu0
    %v4883 = vadd.f32 0.0, %v4882
    %v4884 = vpop.f32.mrb[0].mxu0
    %4885 = vmatprep.mubr.f32.mxu0 0.0
    %4886 = vmatmul.mubr.f32.gmra.mrb[0].mxu0 %v4814
    %v4887 = vpop.f32.mrb[0].mxu0
    %v4888 = vadd.f32 0.0, %v4887
    %v4889 = vpop.f32.mrb[0].mxu0
    %4890 = vdwg.mxu0
    %4891 = vrot.lane.b32.xlu0 %v291, 64
    %v4892 = vpop.permute.xlu0 %4891
    %4893 = vrot.lane.b32.xlu0 %v296, 64
    %v4894 = vpop.permute.xlu0 %4893
    %v4898 = vsel %vm1086, %v4620, 0
    %v4901 = vsel %vm1086, %v4621, 0
    %4903 = vmatprep.subr.mxu0 0.0
    %4904 = vmatpush1.msra.mxu0 %v4892
    %4905 = vmatprep.subr.mxu0 0.0
    %4906 = vmatpush1.msra.mxu0 %v4894
    %4907 = vmatprep.subr.mxu0 0.0
    %4908 = vmatpush1.msra.mxu0 0.0
    %4909 = vmatprep.subr.mxu0 0.0
    %4910 = vmatpush1.msra.mxu0 0.0
    %4911 = vmatprep.subr.mxu0 0.0
    %4912 = vmatpush1.msra.mxu0 0.0
    %4913 = vmatprep.subr.mxu0 0.0
    %4914 = vmatpush1.msra.mxu0 0.0
    %4915 = vmatprep.subr.mxu0 0.0
    %4916 = vmatpush1.msra.mxu0 0.0
    %4917 = vmatprep.subr.mxu0 0.0
    %4918 = vmatpush1.msra.mxu0 0.0
    %4919 = vmatprep.subr.mxu0 0.0
    %4920 = vmatpush1.msra.mxu0 0.0
    %4921 = vmatprep.subr.mxu0 0.0
    %4922 = vmatpush1.msra.mxu0 0.0
    %4923 = vmatprep.subr.mxu0 0.0
    %4924 = vmatpush1.msra.mxu0 0.0
    %4925 = vmatprep.subr.mxu0 0.0
    %4926 = vmatpush1.msra.mxu0 0.0
    %4927 = vmatprep.subr.mxu0 0.0
    %4928 = vmatpush1.msra.mxu0 0.0
    %4929 = vmatprep.subr.mxu0 0.0
    %4930 = vmatpush1.msra.mxu0 0.0
    %4931 = vmatprep.subr.mxu0 0.0
    %4932 = vmatpush1.msra.mxu0 0.0
    %4933 = vmatprep.subr.mxu0 0.0
    %4934 = vmatpush1.msra.mxu0 0.0
    %4935 = vmatprep.subr.mxu0 0.0
    %4936 = vmatpush1.msra.mxu0 0.0
    %4937 = vmatprep.subr.mxu0 0.0
    %4938 = vmatpush1.msra.mxu0 0.0
    %4939 = vmatprep.subr.mxu0 0.0
    %4940 = vmatpush1.msra.mxu0 0.0
    %4941 = vmatprep.subr.mxu0 0.0
    %4942 = vmatpush1.msra.mxu0 0.0
    %4943 = vmatprep.subr.mxu0 0.0
    %4944 = vmatpush1.msra.mxu0 0.0
    %4945 = vmatprep.subr.mxu0 0.0
    %4946 = vmatpush1.msra.mxu0 0.0
    %4947 = vmatprep.subr.mxu0 0.0
    %4948 = vmatpush1.msra.mxu0 0.0
    %4949 = vmatprep.subr.mxu0 0.0
    %4950 = vmatpush1.msra.mxu0 0.0
    %4951 = vmatprep.subr.mxu0 0.0
    %4952 = vmatpush1.msra.mxu0 0.0
    %4953 = vmatprep.subr.mxu0 0.0
    %4954 = vmatpush1.msra.mxu0 0.0
    %4955 = vmatprep.subr.mxu0 0.0
    %4956 = vmatpush1.msra.mxu0 0.0
    %4957 = vmatprep.subr.mxu0 0.0
    %4958 = vmatpush1.msra.mxu0 0.0
    %4959 = vmatprep.subr.mxu0 0.0
    %4960 = vmatpush1.msra.mxu0 0.0
    %4961 = vmatprep.subr.mxu0 0.0
    %4962 = vmatpush1.msra.mxu0 0.0
    %4963 = vmatprep.subr.mxu0 0.0
    %4964 = vmatpush1.msra.mxu0 0.0
    %4965 = vmatprep.subr.mxu0 0.0
    %4966 = vmatpush1.msra.mxu0 0.0
    %4967 = vmatprep.mubr.f32.mxu0 0.0
    %4968 = vmatmul.mubr.f32.gmra.mrb[0].mxu0 %v4898
    %v4969 = vpop.f32.mrb[0].mxu0
    %v4970 = vadd.f32 0.0, %v4969
    %v4971 = vpop.f32.mrb[0].mxu0
    %4972 = vmatprep.mubr.f32.mxu0 0.0
    %4973 = vmatmul.mubr.f32.gmra.mrb[0].mxu0 %v4901
    %v4974 = vpop.f32.mrb[0].mxu0
    %v4975 = vadd.f32 0.0, %v4974
    %v4976 = vpop.f32.mrb[0].mxu0
    %4977 = vdwg.mxu0
    %4978 = vrot.lane.b32.xlu0 %v301, 64
    %v4979 = vpop.permute.xlu0 %4978
    %4980 = vrot.lane.b32.xlu0 %v306, 64
    %v4981 = vpop.permute.xlu0 %4980
    %v4985 = vsel %vm1086, %v4622, 0
    %v4988 = vsel %vm1086, %v4623, 0
    %4990 = vmatprep.subr.mxu0 0.0
    %4991 = vmatpush1.msra.mxu0 %v4979
    %4992 = vmatprep.subr.mxu0 0.0
    %4993 = vmatpush1.msra.mxu0 %v4981
    %4994 = vmatprep.subr.mxu0 0.0
    %4995 = vmatpush1.msra.mxu0 0.0
    %4996 = vmatprep.subr.mxu0 0.0
    %4997 = vmatpush1.msra.mxu0 0.0
    %4998 = vmatprep.subr.mxu0 0.0
    %4999 = vmatpush1.msra.mxu0 0.0
    %5000 = vmatprep.subr.mxu0 0.0
    %5001 = vmatpush1.msra.mxu0 0.0
    %5002 = vmatprep.subr.mxu0 0.0
    %5003 = vmatpush1.msra.mxu0 0.0
    %5004 = vmatprep.subr.mxu0 0.0
    %5005 = vmatpush1.msra.mxu0 0.0
    %5006 = vmatprep.subr.mxu0 0.0
    %5007 = vmatpush1.msra.mxu0 0.0
    %5008 = vmatprep.subr.mxu0 0.0
    %5009 = vmatpush1.msra.mxu0 0.0
    %5010 = vmatprep.subr.mxu0 0.0
    %5011 = vmatpush1.msra.mxu0 0.0
    %5012 = vmatprep.subr.mxu0 0.0
    %5013 = vmatpush1.msra.mxu0 0.0
    %5014 = vmatprep.subr.mxu0 0.0
    %5015 = vmatpush1.msra.mxu0 0.0
    %5016 = vmatprep.subr.mxu0 0.0
    %5017 = vmatpush1.msra.mxu0 0.0
    %5018 = vmatprep.subr.mxu0 0.0
    %5019 = vmatpush1.msra.mxu0 0.0
    %5020 = vmatprep.subr.mxu0 0.0
    %5021 = vmatpush1.msra.mxu0 0.0
    %5022 = vmatprep.subr.mxu0 0.0
    %5023 = vmatpush1.msra.mxu0 0.0
    %5024 = vmatprep.subr.mxu0 0.0
    %5025 = vmatpush1.msra.mxu0 0.0
    %5026 = vmatprep.subr.mxu0 0.0
    %5027 = vmatpush1.msra.mxu0 0.0
    %5028 = vmatprep.subr.mxu0 0.0
    %5029 = vmatpush1.msra.mxu0 0.0
    %5030 = vmatprep.subr.mxu0 0.0
    %5031 = vmatpush1.msra.mxu0 0.0
    %5032 = vmatprep.subr.mxu0 0.0
    %5033 = vmatpush1.msra.mxu0 0.0
    %5034 = vmatprep.subr.mxu0 0.0
    %5035 = vmatpush1.msra.mxu0 0.0
    %5036 = vmatprep.subr.mxu0 0.0
    %5037 = vmatpush1.msra.mxu0 0.0
    %5038 = vmatprep.subr.mxu0 0.0
    %5039 = vmatpush1.msra.mxu0 0.0
    %5040 = vmatprep.subr.mxu0 0.0
    %5041 = vmatpush1.msra.mxu0 0.0
    %5042 = vmatprep.subr.mxu0 0.0
    %5043 = vmatpush1.msra.mxu0 0.0
    %5044 = vmatprep.subr.mxu0 0.0
    %5045 = vmatpush1.msra.mxu0 0.0
    %5046 = vmatprep.subr.mxu0 0.0
    %5047 = vmatpush1.msra.mxu0 0.0
    %5048 = vmatprep.subr.mxu0 0.0
    %5049 = vmatpush1.msra.mxu0 0.0
    %5050 = vmatprep.subr.mxu0 0.0
    %5051 = vmatpush1.msra.mxu0 0.0
    %5052 = vmatprep.subr.mxu0 0.0
    %5053 = vmatpush1.msra.mxu0 0.0
    %5054 = vmatprep.mubr.f32.mxu0 0.0
    %5055 = vmatmul.mubr.f32.gmra.mrb[0].mxu0 %v4985
    %v5056 = vpop.f32.mrb[0].mxu0
    %v5057 = vadd.f32 0.0, %v5056
    %v5058 = vpop.f32.mrb[0].mxu0
    %5059 = vmatprep.mubr.f32.mxu0 0.0
    %5060 = vmatmul.mubr.f32.gmra.mrb[0].mxu0 %v4988
    %v5061 = vpop.f32.mrb[0].mxu0
    %v5062 = vadd.f32 0.0, %v5061
    %v5063 = vpop.f32.mrb[0].mxu0
    %5064 = vdwg.mxu0
    %5065 = vrot.lane.b32.xlu0 %v311, 64
    %v5066 = vpop.permute.xlu0 %5065
    %5067 = vrot.lane.b32.xlu0 %v316, 64
    %v5068 = vpop.permute.xlu0 %5067
    %v5072 = vsel %vm1086, %v4624, 0
    %v5075 = vsel %vm1086, %v4625, 0
    %5077 = vmatprep.subr.mxu0 0.0
    %5078 = vmatpush1.msra.mxu0 %v5066
    %5079 = vmatprep.subr.mxu0 0.0
    %5080 = vmatpush1.msra.mxu0 %v5068
    %5081 = vmatprep.subr.mxu0 0.0
    %5082 = vmatpush1.msra.mxu0 0.0
    %5083 = vmatprep.subr.mxu0 0.0
    %5084 = vmatpush1.msra.mxu0 0.0
    %5085 = vmatprep.subr.mxu0 0.0
    %5086 = vmatpush1.msra.mxu0 0.0
    %5087 = vmatprep.subr.mxu0 0.0
    %5088 = vmatpush1.msra.mxu0 0.0
    %5089 = vmatprep.subr.mxu0 0.0
    %5090 = vmatpush1.msra.mxu0 0.0
    %5091 = vmatprep.subr.mxu0 0.0
    %5092 = vmatpush1.msra.mxu0 0.0
    %5093 = vmatprep.subr.mxu0 0.0
    %5094 = vmatpush1.msra.mxu0 0.0
    %5095 = vmatprep.subr.mxu0 0.0
    %5096 = vmatpush1.msra.mxu0 0.0
    %5097 = vmatprep.subr.mxu0 0.0
    %5098 = vmatpush1.msra.mxu0 0.0
    %5099 = vmatprep.subr.mxu0 0.0
    %5100 = vmatpush1.msra.mxu0 0.0
    %5101 = vmatprep.subr.mxu0 0.0
    %5102 = vmatpush1.msra.mxu0 0.0
    %5103 = vmatprep.subr.mxu0 0.0
    %5104 = vmatpush1.msra.mxu0 0.0
    %5105 = vmatprep.subr.mxu0 0.0
    %5106 = vmatpush1.msra.mxu0 0.0
    %5107 = vmatprep.subr.mxu0 0.0
    %5108 = vmatpush1.msra.mxu0 0.0
    %5109 = vmatprep.subr.mxu0 0.0
    %5110 = vmatpush1.msra.mxu0 0.0
    %5111 = vmatprep.subr.mxu0 0.0
    %5112 = vmatpush1.msra.mxu0 0.0
    %5113 = vmatprep.subr.mxu0 0.0
    %5114 = vmatpush1.msra.mxu0 0.0
    %5115 = vmatprep.subr.mxu0 0.0
    %5116 = vmatpush1.msra.mxu0 0.0
    %5117 = vmatprep.subr.mxu0 0.0
    %5118 = vmatpush1.msra.mxu0 0.0
    %5119 = vmatprep.subr.mxu0 0.0
    %5120 = vmatpush1.msra.mxu0 0.0
    %5121 = vmatprep.subr.mxu0 0.0
    %5122 = vmatpush1.msra.mxu0 0.0
    %5123 = vmatprep.subr.mxu0 0.0
    %5124 = vmatpush1.msra.mxu0 0.0
    %5125 = vmatprep.subr.mxu0 0.0
    %5126 = vmatpush1.msra.mxu0 0.0
    %5127 = vmatprep.subr.mxu0 0.0
    %5128 = vmatpush1.msra.mxu0 0.0
    %5129 = vmatprep.subr.mxu0 0.0
    %5130 = vmatpush1.msra.mxu0 0.0
    %5131 = vmatprep.subr.mxu0 0.0
    %5132 = vmatpush1.msra.mxu0 0.0
    %5133 = vmatprep.subr.mxu0 0.0
    %5134 = vmatpush1.msra.mxu0 0.0
    %5135 = vmatprep.subr.mxu0 0.0
    %5136 = vmatpush1.msra.mxu0 0.0
    %5137 = vmatprep.subr.mxu0 0.0
    %5138 = vmatpush1.msra.mxu0 0.0
    %5139 = vmatprep.subr.mxu0 0.0
    %5140 = vmatpush1.msra.mxu0 0.0
    %5141 = vmatprep.mubr.f32.mxu0 0.0
    %5142 = vmatmul.mubr.f32.gmra.mrb[0].mxu0 %v5072
    %v5143 = vpop.f32.mrb[0].mxu0
    %v5144 = vadd.f32 0.0, %v5143
    %v5145 = vpop.f32.mrb[0].mxu0
    %5146 = vmatprep.mubr.f32.mxu0 0.0
    %5147 = vmatmul.mubr.f32.gmra.mrb[0].mxu0 %v5075
    %v5148 = vpop.f32.mrb[0].mxu0
    %v5149 = vadd.f32 0.0, %v5148
    %v5150 = vpop.f32.mrb[0].mxu0
    %5151 = vdwg.mxu0
    %5152 = vrot.lane.b32.xlu0 %v321, 64
    %v5153 = vpop.permute.xlu0 %5152
    %5154 = vrot.lane.b32.xlu0 %v326, 64
    %v5155 = vpop.permute.xlu0 %5154
    %v5159 = vsel %vm1086, %v4626, 0
    %v5162 = vsel %vm1086, %v4627, 0
    %5164 = vmatprep.subr.mxu0 0.0
    %5165 = vmatpush1.msra.mxu0 %v5153
    %5166 = vmatprep.subr.mxu0 0.0
    %5167 = vmatpush1.msra.mxu0 %v5155
    %5168 = vmatprep.subr.mxu0 0.0
    %5169 = vmatpush1.msra.mxu0 0.0
    %5170 = vmatprep.subr.mxu0 0.0
    %5171 = vmatpush1.msra.mxu0 0.0
    %5172 = vmatprep.subr.mxu0 0.0
    %5173 = vmatpush1.msra.mxu0 0.0
    %5174 = vmatprep.subr.mxu0 0.0
    %5175 = vmatpush1.msra.mxu0 0.0
    %5176 = vmatprep.subr.mxu0 0.0
    %5177 = vmatpush1.msra.mxu0 0.0
    %5178 = vmatprep.subr.mxu0 0.0
    %5179 = vmatpush1.msra.mxu0 0.0
    %5180 = vmatprep.subr.mxu0 0.0
    %5181 = vmatpush1.msra.mxu0 0.0
    %5182 = vmatprep.subr.mxu0 0.0
    %5183 = vmatpush1.msra.mxu0 0.0
    %5184 = vmatprep.subr.mxu0 0.0
    %5185 = vmatpush1.msra.mxu0 0.0
    %5186 = vmatprep.subr.mxu0 0.0
    %5187 = vmatpush1.msra.mxu0 0.0
    %5188 = vmatprep.subr.mxu0 0.0
    %5189 = vmatpush1.msra.mxu0 0.0
    %5190 = vmatprep.subr.mxu0 0.0
    %5191 = vmatpush1.msra.mxu0 0.0
    %5192 = vmatprep.subr.mxu0 0.0
    %5193 = vmatpush1.msra.mxu0 0.0
    %5194 = vmatprep.subr.mxu0 0.0
    %5195 = vmatpush1.msra.mxu0 0.0
    %5196 = vmatprep.subr.mxu0 0.0
    %5197 = vmatpush1.msra.mxu0 0.0
    %5198 = vmatprep.subr.mxu0 0.0
    %5199 = vmatpush1.msra.mxu0 0.0
    %5200 = vmatprep.subr.mxu0 0.0
    %5201 = vmatpush1.msra.mxu0 0.0
    %5202 = vmatprep.subr.mxu0 0.0
    %5203 = vmatpush1.msra.mxu0 0.0
    %5204 = vmatprep.subr.mxu0 0.0
    %5205 = vmatpush1.msra.mxu0 0.0
    %5206 = vmatprep.subr.mxu0 0.0
    %5207 = vmatpush1.msra.mxu0 0.0
    %5208 = vmatprep.subr.mxu0 0.0
    %5209 = vmatpush1.msra.mxu0 0.0
    %5210 = vmatprep.subr.mxu0 0.0
    %5211 = vmatpush1.msra.mxu0 0.0
    %5212 = vmatprep.subr.mxu0 0.0
    %5213 = vmatpush1.msra.mxu0 0.0
    %5214 = vmatprep.subr.mxu0 0.0
    %5215 = vmatpush1.msra.mxu0 0.0
    %5216 = vmatprep.subr.mxu0 0.0
    %5217 = vmatpush1.msra.mxu0 0.0
    %5218 = vmatprep.subr.mxu0 0.0
    %5219 = vmatpush1.msra.mxu0 0.0
    %5220 = vmatprep.subr.mxu0 0.0
    %5221 = vmatpush1.msra.mxu0 0.0
    %5222 = vmatprep.subr.mxu0 0.0
    %5223 = vmatpush1.msra.mxu0 0.0
    %5224 = vmatprep.subr.mxu0 0.0
    %5225 = vmatpush1.msra.mxu0 0.0
    %5226 = vmatprep.subr.mxu0 0.0
    %5227 = vmatpush1.msra.mxu0 0.0
    %5228 = vmatprep.mubr.f32.mxu0 0.0
    %5229 = vmatmul.mubr.f32.gmra.mrb[0].mxu0 %v5159
    %v5230 = vpop.f32.mrb[0].mxu0
    %v5231 = vadd.f32 0.0, %v5230
    %v5232 = vpop.f32.mrb[0].mxu0
    %5233 = vmatprep.mubr.f32.mxu0 0.0
    %5234 = vmatmul.mubr.f32.gmra.mrb[0].mxu0 %v5162
    %v5235 = vpop.f32.mrb[0].mxu0
    %v5236 = vadd.f32 0.0, %v5235
    %v5237 = vpop.f32.mrb[0].mxu0
    %5238 = vdwg.mxu0
    %5239 = vrot.lane.b32.xlu0 %v331, 64
    %v5240 = vpop.permute.xlu0 %5239
    %5241 = vrot.lane.b32.xlu0 %v336, 64
    %v5242 = vpop.permute.xlu0 %5241
    %v5246 = vsel %vm1086, %v4628, 0
    %v5249 = vsel %vm1086, %v4629, 0
    %5251 = vmatprep.subr.mxu0 0.0
    %5252 = vmatpush1.msra.mxu0 %v5240
    %5253 = vmatprep.subr.mxu0 0.0
    %5254 = vmatpush1.msra.mxu0 %v5242
    %5255 = vmatprep.subr.mxu0 0.0
    %5256 = vmatpush1.msra.mxu0 0.0
    %5257 = vmatprep.subr.mxu0 0.0
    %5258 = vmatpush1.msra.mxu0 0.0
    %5259 = vmatprep.subr.mxu0 0.0
    %5260 = vmatpush1.msra.mxu0 0.0
    %5261 = vmatprep.subr.mxu0 0.0
    %5262 = vmatpush1.msra.mxu0 0.0
    %5263 = vmatprep.subr.mxu0 0.0
    %5264 = vmatpush1.msra.mxu0 0.0
    %5265 = vmatprep.subr.mxu0 0.0
    %5266 = vmatpush1.msra.mxu0 0.0
    %5267 = vmatprep.subr.mxu0 0.0
    %5268 = vmatpush1.msra.mxu0 0.0
    %5269 = vmatprep.subr.mxu0 0.0
    %5270 = vmatpush1.msra.mxu0 0.0
    %5271 = vmatprep.subr.mxu0 0.0
    %5272 = vmatpush1.msra.mxu0 0.0
    %5273 = vmatprep.subr.mxu0 0.0
    %5274 = vmatpush1.msra.mxu0 0.0
    %5275 = vmatprep.subr.mxu0 0.0
    %5276 = vmatpush1.msra.mxu0 0.0
    %5277 = vmatprep.subr.mxu0 0.0
    %5278 = vmatpush1.msra.mxu0 0.0
    %5279 = vmatprep.subr.mxu0 0.0
    %5280 = vmatpush1.msra.mxu0 0.0
    %5281 = vmatprep.subr.mxu0 0.0
    %5282 = vmatpush1.msra.mxu0 0.0
    %5283 = vmatprep.subr.mxu0 0.0
    %5284 = vmatpush1.msra.mxu0 0.0
    %5285 = vmatprep.subr.mxu0 0.0
    %5286 = vmatpush1.msra.mxu0 0.0
    %5287 = vmatprep.subr.mxu0 0.0
    %5288 = vmatpush1.msra.mxu0 0.0
    %5289 = vmatprep.subr.mxu0 0.0
    %5290 = vmatpush1.msra.mxu0 0.0
    %5291 = vmatprep.subr.mxu0 0.0
    %5292 = vmatpush1.msra.mxu0 0.0
    %5293 = vmatprep.subr.mxu0 0.0
    %5294 = vmatpush1.msra.mxu0 0.0
    %5295 = vmatprep.subr.mxu0 0.0
    %5296 = vmatpush1.msra.mxu0 0.0
    %5297 = vmatprep.subr.mxu0 0.0
    %5298 = vmatpush1.msra.mxu0 0.0
    %5299 = vmatprep.subr.mxu0 0.0
    %5300 = vmatpush1.msra.mxu0 0.0
    %5301 = vmatprep.subr.mxu0 0.0
    %5302 = vmatpush1.msra.mxu0 0.0
    %5303 = vmatprep.subr.mxu0 0.0
    %5304 = vmatpush1.msra.mxu0 0.0
    %5305 = vmatprep.subr.mxu0 0.0
    %5306 = vmatpush1.msra.mxu0 0.0
    %5307 = vmatprep.subr.mxu0 0.0
    %5308 = vmatpush1.msra.mxu0 0.0
    %5309 = vmatprep.subr.mxu0 0.0
    %5310 = vmatpush1.msra.mxu0 0.0
    %5311 = vmatprep.subr.mxu0 0.0
    %5312 = vmatpush1.msra.mxu0 0.0
    %5313 = vmatprep.subr.mxu0 0.0
    %5314 = vmatpush1.msra.mxu0 0.0
    %5315 = vmatprep.mubr.f32.mxu0 0.0
    %5316 = vmatmul.mubr.f32.gmra.mrb[0].mxu0 %v5246
    %v5317 = vpop.f32.mrb[0].mxu0
    %v5318 = vadd.f32 0.0, %v5317
    %v5319 = vpop.f32.mrb[0].mxu0
    %5320 = vmatprep.mubr.f32.mxu0 0.0
    %5321 = vmatmul.mubr.f32.gmra.mrb[0].mxu0 %v5249
    %v5322 = vpop.f32.mrb[0].mxu0
    %v5323 = vadd.f32 0.0, %v5322
    %v5324 = vpop.f32.mrb[0].mxu0
    %5325 = vdwg.mxu0
    %5342 = vrot.lane.b32.xlu0 %v4709, 16
    %v5343 = vpop.permute.xlu0 %5342
    %5344 = vrot.lane.b32.xlu0 %v4714, 16
    %v5345 = vpop.permute.xlu0 %5344
    %5346 = vrot.lane.b32.xlu0 %v4796, 16
    %v5347 = vpop.permute.xlu0 %5346
    %5348 = vrot.lane.b32.xlu0 %v4801, 16
    %v5349 = vpop.permute.xlu0 %5348
    %5350 = vrot.lane.b32.xlu0 %v4883, 16
    %v5351 = vpop.permute.xlu0 %5350
    %5352 = vrot.lane.b32.xlu0 %v4888, 16
    %v5353 = vpop.permute.xlu0 %5352
    %5354 = vrot.lane.b32.xlu0 %v4970, 16
    %v5355 = vpop.permute.xlu0 %5354
    %5356 = vrot.lane.b32.xlu0 %v4975, 16
    %v5357 = vpop.permute.xlu0 %5356
    %5358 = vrot.lane.b32.xlu0 %v5057, 16
    %v5359 = vpop.permute.xlu0 %5358
    %5360 = vrot.lane.b32.xlu0 %v5062, 16
    %v5361 = vpop.permute.xlu0 %5360
    %5362 = vrot.lane.b32.xlu0 %v5144, 16
    %v5363 = vpop.permute.xlu0 %5362
    %5364 = vrot.lane.b32.xlu0 %v5149, 16
    %v5365 = vpop.permute.xlu0 %5364
    %5366 = vrot.lane.b32.xlu0 %v5231, 16
    %v5367 = vpop.permute.xlu0 %5366
    %5368 = vrot.lane.b32.xlu0 %v5236, 16
    %v5369 = vpop.permute.xlu0 %5368
    %5370 = vrot.lane.b32.xlu0 %v5318, 16
    %v5371 = vpop.permute.xlu0 %5370
    %5372 = vrot.lane.b32.xlu0 %v5323, 16
    %v5373 = vpop.permute.xlu0 %5372
    %vm5390 = vcmask 195712
    %5391 = vst.msk [vmem:[#allocation2] sm:$0xff] %vm5390, %v5343
    %5392 = vst.msk [vmem:[#allocation2 + $0x8] sm:$0xff] %vm5390, %v5345
    %5393 = vst.msk [vmem:[#allocation2 + $0x10] sm:$0xff] %vm5390, %v5347
    %5394 = vst.msk [vmem:[#allocation2 + $0x18] sm:$0xff] %vm5390, %v5349
    %5395 = vst.msk [vmem:[#allocation2 + $0x20] sm:$0xff] %vm5390, %v5351
    %5396 = vst.msk [vmem:[#allocation2 + $0x28] sm:$0xff] %vm5390, %v5353
    %5397 = vst.msk [vmem:[#allocation2 + $0x30] sm:$0xff] %vm5390, %v5355
    %5398 = vst.msk [vmem:[#allocation2 + $0x38] sm:$0xff] %vm5390, %v5357
    %5399 = vst.msk [vmem:[#allocation2 + $0x40] sm:$0xff] %vm5390, %v5359
    %5400 = vst.msk [vmem:[#allocation2 + $0x48] sm:$0xff] %vm5390, %v5361
    %5401 = vst.msk [vmem:[#allocation2 + $0x50] sm:$0xff] %vm5390, %v5363
    %5402 = vst.msk [vmem:[#allocation2 + $0x58] sm:$0xff] %vm5390, %v5365
    %5403 = vst.msk [vmem:[#allocation2 + $0x60] sm:$0xff] %vm5390, %v5367
    %5404 = vst.msk [vmem:[#allocation2 + $0x68] sm:$0xff] %vm5390, %v5369
    %5405 = vst.msk [vmem:[#allocation2 + $0x70] sm:$0xff] %vm5390, %v5371
    %5406 = vst.msk [vmem:[#allocation2 + $0x78] sm:$0xff] %vm5390, %v5373
    %s5407 = scalar_lea.vmem [#allocation9], 48
    %v5408 = vld [vmem:[%s5407] sm:$0xff]
    %v5409 = vld [vmem:[%s5407 + $0x8] sm:$0xff]
    %5410 = vrot.lane.b32.xlu0 %v261, 56
    %v5411 = vpop.permute.xlu0 %5410
    %5412 = vrot.lane.b32.xlu0 %v266, 56
    %v5413 = vpop.permute.xlu0 %5412
    %5414 = vrot.lane.b32.xlu0 %v261, 48
    %v5415 = vpop.permute.xlu0 %5414
    %5416 = vrot.lane.b32.xlu0 %v266, 48
    %v5417 = vpop.permute.xlu0 %5416
    %v5418 = vsel %vm347, %v5411, 0
    %v5420 = vsel %vm347, %v5413, 0
    %v5422 = vsel %vm347, %v5415, 0
    %v5424 = vsel %vm347, %v5417, 0
    %5426 = vmatprep.subr.mxu0 0.0
    %5427 = vmatpush1.xpose.msra.mxu0 %v5422
    %5428 = vmatprep.subr.mxu0 0.0
    %5429 = vmatpush1.xpose.msra.mxu0 %v5424
    %5430 = vmatprep.subr.mxu0 0.0
    %5431 = vmatpush1.xpose.msra.mxu0 0.0
    %5432 = vmatprep.subr.mxu0 0.0
    %5433 = vmatpush1.xpose.msra.mxu0 0.0
    %5434 = vmatprep.subr.mxu0 0.0
    %5435 = vmatpush1.xpose.msra.mxu0 0.0
    %5436 = vmatprep.subr.mxu0 0.0
    %5437 = vmatpush1.xpose.msra.mxu0 0.0
    %5438 = vmatprep.subr.mxu0 0.0
    %5439 = vmatpush1.xpose.msra.mxu0 0.0
    %5440 = vmatprep.subr.mxu0 0.0
    %5441 = vmatpush1.xpose.msra.mxu0 0.0
    %5442 = vmatprep.subr.mxu0 0.0
    %5443 = vmatpush1.xpose.msra.mxu0 0.0
    %5444 = vmatprep.subr.mxu0 0.0
    %5445 = vmatpush1.xpose.msra.mxu0 0.0
    %5446 = vmatprep.subr.mxu0 0.0
    %5447 = vmatpush1.xpose.msra.mxu0 0.0
    %5448 = vmatprep.subr.mxu0 0.0
    %5449 = vmatpush1.xpose.msra.mxu0 0.0
    %5450 = vmatprep.subr.mxu0 0.0
    %5451 = vmatpush1.xpose.msra.mxu0 0.0
    %5452 = vmatprep.subr.mxu0 0.0
    %5453 = vmatpush1.xpose.msra.mxu0 0.0
    %5454 = vmatprep.subr.mxu0 0.0
    %5455 = vmatpush1.xpose.msra.mxu0 0.0
    %5456 = vmatprep.subr.mxu0 0.0
    %5457 = vmatpush1.xpose.msra.mxu0 0.0
    %5458 = vmatprep.subr.mxu0 0.0
    %5459 = vmatpush1.xpose.msra.mxu0 0.0
    %5460 = vmatprep.subr.mxu0 0.0
    %5461 = vmatpush1.xpose.msra.mxu0 0.0
    %5462 = vmatprep.subr.mxu0 0.0
    %5463 = vmatpush1.xpose.msra.mxu0 0.0
    %5464 = vmatprep.subr.mxu0 0.0
    %5465 = vmatpush1.xpose.msra.mxu0 0.0
    %5466 = vmatprep.subr.mxu0 0.0
    %5467 = vmatpush1.xpose.msra.mxu0 0.0
    %5468 = vmatprep.subr.mxu0 0.0
    %5469 = vmatpush1.xpose.msra.mxu0 0.0
    %5470 = vmatprep.subr.mxu0 0.0
    %5471 = vmatpush1.xpose.msra.mxu0 0.0
    %5472 = vmatprep.subr.mxu0 0.0
    %5473 = vmatpush1.xpose.msra.mxu0 0.0
    %5474 = vmatprep.subr.mxu0 0.0
    %5475 = vmatpush1.xpose.msra.mxu0 0.0
    %5476 = vmatprep.subr.mxu0 0.0
    %5477 = vmatpush1.xpose.msra.mxu0 0.0
    %5478 = vmatprep.subr.mxu0 0.0
    %5479 = vmatpush1.xpose.msra.mxu0 0.0
    %5480 = vmatprep.subr.mxu0 0.0
    %5481 = vmatpush1.xpose.msra.mxu0 0.0
    %5482 = vmatprep.subr.mxu0 0.0
    %5483 = vmatpush1.xpose.msra.mxu0 0.0
    %5484 = vmatprep.subr.mxu0 0.0
    %5485 = vmatpush1.xpose.msra.mxu0 0.0
    %5486 = vmatprep.subr.mxu0 0.0
    %5487 = vmatpush1.xpose.msra.mxu0 0.0
    %5488 = vmatprep.subr.mxu0 0.0
    %5489 = vmatpush1.xpose.msra.mxu0 0.0
    %5490 = vmatprep.mubr.f32.mxu0 0.0
    %5491 = vmatmul.mubr.f32.gmra.mrb[0].mxu0 %v5418
    %v5492 = vpop.f32.mrb[0].mxu0
    %v5493 = vadd.f32 %v5408, %v5492
    %v5494 = vpop.f32.mrb[0].mxu0
    %5495 = vmatprep.mubr.f32.mxu0 0.0
    %5496 = vmatmul.mubr.f32.gmra.mrb[0].mxu0 %v5420
    %v5497 = vpop.f32.mrb[0].mxu0
    %v5498 = vadd.f32 %v5409, %v5497
    %v5499 = vpop.f32.mrb[0].mxu0
    %5500 = vdwg.mxu0
    %5501 = vrot.lane.b32.xlu0 %v271, 56
    %v5502 = vpop.permute.xlu0 %5501
    %5503 = vrot.lane.b32.xlu0 %v276, 56
    %v5504 = vpop.permute.xlu0 %5503
    %5505 = vrot.lane.b32.xlu0 %v271, 48
    %v5506 = vpop.permute.xlu0 %5505
    %5507 = vrot.lane.b32.xlu0 %v276, 48
    %v5508 = vpop.permute.xlu0 %5507
    %v5509 = vsel %vm347, %v5502, 0
    %v5511 = vsel %vm347, %v5504, 0
    %v5513 = vsel %vm347, %v5506, 0
    %v5515 = vsel %vm347, %v5508, 0
    %5517 = vmatprep.subr.mxu0 0.0
    %5518 = vmatpush1.xpose.msra.mxu0 %v5513
    %5519 = vmatprep.subr.mxu0 0.0
    %5520 = vmatpush1.xpose.msra.mxu0 %v5515
    %5521 = vmatprep.subr.mxu0 0.0
    %5522 = vmatpush1.xpose.msra.mxu0 0.0
    %5523 = vmatprep.subr.mxu0 0.0
    %5524 = vmatpush1.xpose.msra.mxu0 0.0
    %5525 = vmatprep.subr.mxu0 0.0
    %5526 = vmatpush1.xpose.msra.mxu0 0.0
    %5527 = vmatprep.subr.mxu0 0.0
    %5528 = vmatpush1.xpose.msra.mxu0 0.0
    %5529 = vmatprep.subr.mxu0 0.0
    %5530 = vmatpush1.xpose.msra.mxu0 0.0
    %5531 = vmatprep.subr.mxu0 0.0
    %5532 = vmatpush1.xpose.msra.mxu0 0.0
    %5533 = vmatprep.subr.mxu0 0.0
    %5534 = vmatpush1.xpose.msra.mxu0 0.0
    %5535 = vmatprep.subr.mxu0 0.0
    %5536 = vmatpush1.xpose.msra.mxu0 0.0
    %5537 = vmatprep.subr.mxu0 0.0
    %5538 = vmatpush1.xpose.msra.mxu0 0.0
    %5539 = vmatprep.subr.mxu0 0.0
    %5540 = vmatpush1.xpose.msra.mxu0 0.0
    %5541 = vmatprep.subr.mxu0 0.0
    %5542 = vmatpush1.xpose.msra.mxu0 0.0
    %5543 = vmatprep.subr.mxu0 0.0
    %5544 = vmatpush1.xpose.msra.mxu0 0.0
    %5545 = vmatprep.subr.mxu0 0.0
    %5546 = vmatpush1.xpose.msra.mxu0 0.0
    %5547 = vmatprep.subr.mxu0 0.0
    %5548 = vmatpush1.xpose.msra.mxu0 0.0
    %5549 = vmatprep.subr.mxu0 0.0
    %5550 = vmatpush1.xpose.msra.mxu0 0.0
    %5551 = vmatprep.subr.mxu0 0.0
    %5552 = vmatpush1.xpose.msra.mxu0 0.0
    %5553 = vmatprep.subr.mxu0 0.0
    %5554 = vmatpush1.xpose.msra.mxu0 0.0
    %5555 = vmatprep.subr.mxu0 0.0
    %5556 = vmatpush1.xpose.msra.mxu0 0.0
    %5557 = vmatprep.subr.mxu0 0.0
    %5558 = vmatpush1.xpose.msra.mxu0 0.0
    %5559 = vmatprep.subr.mxu0 0.0
    %5560 = vmatpush1.xpose.msra.mxu0 0.0
    %5561 = vmatprep.subr.mxu0 0.0
    %5562 = vmatpush1.xpose.msra.mxu0 0.0
    %5563 = vmatprep.subr.mxu0 0.0
    %5564 = vmatpush1.xpose.msra.mxu0 0.0
    %5565 = vmatprep.subr.mxu0 0.0
    %5566 = vmatpush1.xpose.msra.mxu0 0.0
    %5567 = vmatprep.subr.mxu0 0.0
    %5568 = vmatpush1.xpose.msra.mxu0 0.0
    %5569 = vmatprep.subr.mxu0 0.0
    %5570 = vmatpush1.xpose.msra.mxu0 0.0
    %5571 = vmatprep.subr.mxu0 0.0
    %5572 = vmatpush1.xpose.msra.mxu0 0.0
    %5573 = vmatprep.subr.mxu0 0.0
    %5574 = vmatpush1.xpose.msra.mxu0 0.0
    %5575 = vmatprep.subr.mxu0 0.0
    %5576 = vmatpush1.xpose.msra.mxu0 0.0
    %5577 = vmatprep.subr.mxu0 0.0
    %5578 = vmatpush1.xpose.msra.mxu0 0.0
    %5579 = vmatprep.subr.mxu0 0.0
    %5580 = vmatpush1.xpose.msra.mxu0 0.0
    %5581 = vmatprep.mubr.f32.mxu0 0.0
    %5582 = vmatmul.mubr.f32.gmra.mrb[0].mxu0 %v5509
    %v5583 = vpop.f32.mrb[0].mxu0
    %v5584 = vadd.f32 %v5408, %v5583
    %v5585 = vpop.f32.mrb[0].mxu0
    %5586 = vmatprep.mubr.f32.mxu0 0.0
    %5587 = vmatmul.mubr.f32.gmra.mrb[0].mxu0 %v5511
    %v5588 = vpop.f32.mrb[0].mxu0
    %v5589 = vadd.f32 %v5409, %v5588
    %v5590 = vpop.f32.mrb[0].mxu0
    %5591 = vdwg.mxu0
    %5592 = vrot.lane.b32.xlu0 %v281, 56
    %v5593 = vpop.permute.xlu0 %5592
    %5594 = vrot.lane.b32.xlu0 %v286, 56
    %v5595 = vpop.permute.xlu0 %5594
    %5596 = vrot.lane.b32.xlu0 %v281, 48
    %v5597 = vpop.permute.xlu0 %5596
    %5598 = vrot.lane.b32.xlu0 %v286, 48
    %v5599 = vpop.permute.xlu0 %5598
    %v5600 = vsel %vm347, %v5593, 0
    %v5602 = vsel %vm347, %v5595, 0
    %v5604 = vsel %vm347, %v5597, 0
    %v5606 = vsel %vm347, %v5599, 0
    %5608 = vmatprep.subr.mxu0 0.0
    %5609 = vmatpush1.xpose.msra.mxu0 %v5604
    %5610 = vmatprep.subr.mxu0 0.0
    %5611 = vmatpush1.xpose.msra.mxu0 %v5606
    %5612 = vmatprep.subr.mxu0 0.0
    %5613 = vmatpush1.xpose.msra.mxu0 0.0
    %5614 = vmatprep.subr.mxu0 0.0
    %5615 = vmatpush1.xpose.msra.mxu0 0.0
    %5616 = vmatprep.subr.mxu0 0.0
    %5617 = vmatpush1.xpose.msra.mxu0 0.0
    %5618 = vmatprep.subr.mxu0 0.0
    %5619 = vmatpush1.xpose.msra.mxu0 0.0
    %5620 = vmatprep.subr.mxu0 0.0
    %5621 = vmatpush1.xpose.msra.mxu0 0.0
    %5622 = vmatprep.subr.mxu0 0.0
    %5623 = vmatpush1.xpose.msra.mxu0 0.0
    %5624 = vmatprep.subr.mxu0 0.0
    %5625 = vmatpush1.xpose.msra.mxu0 0.0
    %5626 = vmatprep.subr.mxu0 0.0
    %5627 = vmatpush1.xpose.msra.mxu0 0.0
    %5628 = vmatprep.subr.mxu0 0.0
    %5629 = vmatpush1.xpose.msra.mxu0 0.0
    %5630 = vmatprep.subr.mxu0 0.0
    %5631 = vmatpush1.xpose.msra.mxu0 0.0
    %5632 = vmatprep.subr.mxu0 0.0
    %5633 = vmatpush1.xpose.msra.mxu0 0.0
    %5634 = vmatprep.subr.mxu0 0.0
    %5635 = vmatpush1.xpose.msra.mxu0 0.0
    %5636 = vmatprep.subr.mxu0 0.0
    %5637 = vmatpush1.xpose.msra.mxu0 0.0
    %5638 = vmatprep.subr.mxu0 0.0
    %5639 = vmatpush1.xpose.msra.mxu0 0.0
    %5640 = vmatprep.subr.mxu0 0.0
    %5641 = vmatpush1.xpose.msra.mxu0 0.0
    %5642 = vmatprep.subr.mxu0 0.0
    %5643 = vmatpush1.xpose.msra.mxu0 0.0
    %5644 = vmatprep.subr.mxu0 0.0
    %5645 = vmatpush1.xpose.msra.mxu0 0.0
    %5646 = vmatprep.subr.mxu0 0.0
    %5647 = vmatpush1.xpose.msra.mxu0 0.0
    %5648 = vmatprep.subr.mxu0 0.0
    %5649 = vmatpush1.xpose.msra.mxu0 0.0
    %5650 = vmatprep.subr.mxu0 0.0
    %5651 = vmatpush1.xpose.msra.mxu0 0.0
    %5652 = vmatprep.subr.mxu0 0.0
    %5653 = vmatpush1.xpose.msra.mxu0 0.0
    %5654 = vmatprep.subr.mxu0 0.0
    %5655 = vmatpush1.xpose.msra.mxu0 0.0
    %5656 = vmatprep.subr.mxu0 0.0
    %5657 = vmatpush1.xpose.msra.mxu0 0.0
    %5658 = vmatprep.subr.mxu0 0.0
    %5659 = vmatpush1.xpose.msra.mxu0 0.0
    %5660 = vmatprep.subr.mxu0 0.0
    %5661 = vmatpush1.xpose.msra.mxu0 0.0
    %5662 = vmatprep.subr.mxu0 0.0
    %5663 = vmatpush1.xpose.msra.mxu0 0.0
    %5664 = vmatprep.subr.mxu0 0.0
    %5665 = vmatpush1.xpose.msra.mxu0 0.0
    %5666 = vmatprep.subr.mxu0 0.0
    %5667 = vmatpush1.xpose.msra.mxu0 0.0
    %5668 = vmatprep.subr.mxu0 0.0
    %5669 = vmatpush1.xpose.msra.mxu0 0.0
    %5670 = vmatprep.subr.mxu0 0.0
    %5671 = vmatpush1.xpose.msra.mxu0 0.0
    %5672 = vmatprep.mubr.f32.mxu0 0.0
    %5673 = vmatmul.mubr.f32.gmra.mrb[0].mxu0 %v5600
    %v5674 = vpop.f32.mrb[0].mxu0
    %v5675 = vadd.f32 %v5408, %v5674
    %v5676 = vpop.f32.mrb[0].mxu0
    %5677 = vmatprep.mubr.f32.mxu0 0.0
    %5678 = vmatmul.mubr.f32.gmra.mrb[0].mxu0 %v5602
    %v5679 = vpop.f32.mrb[0].mxu0
    %v5680 = vadd.f32 %v5409, %v5679
    %v5681 = vpop.f32.mrb[0].mxu0
    %5682 = vdwg.mxu0
    %5683 = vrot.lane.b32.xlu0 %v291, 56
    %v5684 = vpop.permute.xlu0 %5683
    %5685 = vrot.lane.b32.xlu0 %v296, 56
    %v5686 = vpop.permute.xlu0 %5685
    %5687 = vrot.lane.b32.xlu0 %v291, 48
    %v5688 = vpop.permute.xlu0 %5687
    %5689 = vrot.lane.b32.xlu0 %v296, 48
    %v5690 = vpop.permute.xlu0 %5689
    %v5691 = vsel %vm347, %v5684, 0
    %v5693 = vsel %vm347, %v5686, 0
    %v5695 = vsel %vm347, %v5688, 0
    %v5697 = vsel %vm347, %v5690, 0
    %5699 = vmatprep.subr.mxu0 0.0
    %5700 = vmatpush1.xpose.msra.mxu0 %v5695
    %5701 = vmatprep.subr.mxu0 0.0
    %5702 = vmatpush1.xpose.msra.mxu0 %v5697
    %5703 = vmatprep.subr.mxu0 0.0
    %5704 = vmatpush1.xpose.msra.mxu0 0.0
    %5705 = vmatprep.subr.mxu0 0.0
    %5706 = vmatpush1.xpose.msra.mxu0 0.0
    %5707 = vmatprep.subr.mxu0 0.0
    %5708 = vmatpush1.xpose.msra.mxu0 0.0
    %5709 = vmatprep.subr.mxu0 0.0
    %5710 = vmatpush1.xpose.msra.mxu0 0.0
    %5711 = vmatprep.subr.mxu0 0.0
    %5712 = vmatpush1.xpose.msra.mxu0 0.0
    %5713 = vmatprep.subr.mxu0 0.0
    %5714 = vmatpush1.xpose.msra.mxu0 0.0
    %5715 = vmatprep.subr.mxu0 0.0
    %5716 = vmatpush1.xpose.msra.mxu0 0.0
    %5717 = vmatprep.subr.mxu0 0.0
    %5718 = vmatpush1.xpose.msra.mxu0 0.0
    %5719 = vmatprep.subr.mxu0 0.0
    %5720 = vmatpush1.xpose.msra.mxu0 0.0
    %5721 = vmatprep.subr.mxu0 0.0
    %5722 = vmatpush1.xpose.msra.mxu0 0.0
    %5723 = vmatprep.subr.mxu0 0.0
    %5724 = vmatpush1.xpose.msra.mxu0 0.0
    %5725 = vmatprep.subr.mxu0 0.0
    %5726 = vmatpush1.xpose.msra.mxu0 0.0
    %5727 = vmatprep.subr.mxu0 0.0
    %5728 = vmatpush1.xpose.msra.mxu0 0.0
    %5729 = vmatprep.subr.mxu0 0.0
    %5730 = vmatpush1.xpose.msra.mxu0 0.0
    %5731 = vmatprep.subr.mxu0 0.0
    %5732 = vmatpush1.xpose.msra.mxu0 0.0
    %5733 = vmatprep.subr.mxu0 0.0
    %5734 = vmatpush1.xpose.msra.mxu0 0.0
    %5735 = vmatprep.subr.mxu0 0.0
    %5736 = vmatpush1.xpose.msra.mxu0 0.0
    %5737 = vmatprep.subr.mxu0 0.0
    %5738 = vmatpush1.xpose.msra.mxu0 0.0
    %5739 = vmatprep.subr.mxu0 0.0
    %5740 = vmatpush1.xpose.msra.mxu0 0.0
    %5741 = vmatprep.subr.mxu0 0.0
    %5742 = vmatpush1.xpose.msra.mxu0 0.0
    %5743 = vmatprep.subr.mxu0 0.0
    %5744 = vmatpush1.xpose.msra.mxu0 0.0
    %5745 = vmatprep.subr.mxu0 0.0
    %5746 = vmatpush1.xpose.msra.mxu0 0.0
    %5747 = vmatprep.subr.mxu0 0.0
    %5748 = vmatpush1.xpose.msra.mxu0 0.0
    %5749 = vmatprep.subr.mxu0 0.0
    %5750 = vmatpush1.xpose.msra.mxu0 0.0
    %5751 = vmatprep.subr.mxu0 0.0
    %5752 = vmatpush1.xpose.msra.mxu0 0.0
    %5753 = vmatprep.subr.mxu0 0.0
    %5754 = vmatpush1.xpose.msra.mxu0 0.0
    %5755 = vmatprep.subr.mxu0 0.0
    %5756 = vmatpush1.xpose.msra.mxu0 0.0
    %5757 = vmatprep.subr.mxu0 0.0
    %5758 = vmatpush1.xpose.msra.mxu0 0.0
    %5759 = vmatprep.subr.mxu0 0.0
    %5760 = vmatpush1.xpose.msra.mxu0 0.0
    %5761 = vmatprep.subr.mxu0 0.0
    %5762 = vmatpush1.xpose.msra.mxu0 0.0
    %5763 = vmatprep.mubr.f32.mxu0 0.0
    %5764 = vmatmul.mubr.f32.gmra.mrb[0].mxu0 %v5691
    %v5765 = vpop.f32.mrb[0].mxu0
    %v5766 = vadd.f32 %v5408, %v5765
    %v5767 = vpop.f32.mrb[0].mxu0
    %5768 = vmatprep.mubr.f32.mxu0 0.0
    %5769 = vmatmul.mubr.f32.gmra.mrb[0].mxu0 %v5693
    %v5770 = vpop.f32.mrb[0].mxu0
    %v5771 = vadd.f32 %v5409, %v5770
    %v5772 = vpop.f32.mrb[0].mxu0
    %5773 = vdwg.mxu0
    %5774 = vrot.lane.b32.xlu0 %v301, 56
    %v5775 = vpop.permute.xlu0 %5774
    %5776 = vrot.lane.b32.xlu0 %v306, 56
    %v5777 = vpop.permute.xlu0 %5776
    %5778 = vrot.lane.b32.xlu0 %v301, 48
    %v5779 = vpop.permute.xlu0 %5778
    %5780 = vrot.lane.b32.xlu0 %v306, 48
    %v5781 = vpop.permute.xlu0 %5780
    %v5782 = vsel %vm347, %v5775, 0
    %v5784 = vsel %vm347, %v5777, 0
    %v5786 = vsel %vm347, %v5779, 0
    %v5788 = vsel %vm347, %v5781, 0
    %5790 = vmatprep.subr.mxu0 0.0
    %5791 = vmatpush1.xpose.msra.mxu0 %v5786
    %5792 = vmatprep.subr.mxu0 0.0
    %5793 = vmatpush1.xpose.msra.mxu0 %v5788
    %5794 = vmatprep.subr.mxu0 0.0
    %5795 = vmatpush1.xpose.msra.mxu0 0.0
    %5796 = vmatprep.subr.mxu0 0.0
    %5797 = vmatpush1.xpose.msra.mxu0 0.0
    %5798 = vmatprep.subr.mxu0 0.0
    %5799 = vmatpush1.xpose.msra.mxu0 0.0
    %5800 = vmatprep.subr.mxu0 0.0
    %5801 = vmatpush1.xpose.msra.mxu0 0.0
    %5802 = vmatprep.subr.mxu0 0.0
    %5803 = vmatpush1.xpose.msra.mxu0 0.0
    %5804 = vmatprep.subr.mxu0 0.0
    %5805 = vmatpush1.xpose.msra.mxu0 0.0
    %5806 = vmatprep.subr.mxu0 0.0
    %5807 = vmatpush1.xpose.msra.mxu0 0.0
    %5808 = vmatprep.subr.mxu0 0.0
    %5809 = vmatpush1.xpose.msra.mxu0 0.0
    %5810 = vmatprep.subr.mxu0 0.0
    %5811 = vmatpush1.xpose.msra.mxu0 0.0
    %5812 = vmatprep.subr.mxu0 0.0
    %5813 = vmatpush1.xpose.msra.mxu0 0.0
    %5814 = vmatprep.subr.mxu0 0.0
    %5815 = vmatpush1.xpose.msra.mxu0 0.0
    %5816 = vmatprep.subr.mxu0 0.0
    %5817 = vmatpush1.xpose.msra.mxu0 0.0
    %5818 = vmatprep.subr.mxu0 0.0
    %5819 = vmatpush1.xpose.msra.mxu0 0.0
    %5820 = vmatprep.subr.mxu0 0.0
    %5821 = vmatpush1.xpose.msra.mxu0 0.0
    %5822 = vmatprep.subr.mxu0 0.0
    %5823 = vmatpush1.xpose.msra.mxu0 0.0
    %5824 = vmatprep.subr.mxu0 0.0
    %5825 = vmatpush1.xpose.msra.mxu0 0.0
    %5826 = vmatprep.subr.mxu0 0.0
    %5827 = vmatpush1.xpose.msra.mxu0 0.0
    %5828 = vmatprep.subr.mxu0 0.0
    %5829 = vmatpush1.xpose.msra.mxu0 0.0
    %5830 = vmatprep.subr.mxu0 0.0
    %5831 = vmatpush1.xpose.msra.mxu0 0.0
    %5832 = vmatprep.subr.mxu0 0.0
    %5833 = vmatpush1.xpose.msra.mxu0 0.0
    %5834 = vmatprep.subr.mxu0 0.0
    %5835 = vmatpush1.xpose.msra.mxu0 0.0
    %5836 = vmatprep.subr.mxu0 0.0
    %5837 = vmatpush1.xpose.msra.mxu0 0.0
    %5838 = vmatprep.subr.mxu0 0.0
    %5839 = vmatpush1.xpose.msra.mxu0 0.0
    %5840 = vmatprep.subr.mxu0 0.0
    %5841 = vmatpush1.xpose.msra.mxu0 0.0
    %5842 = vmatprep.subr.mxu0 0.0
    %5843 = vmatpush1.xpose.msra.mxu0 0.0
    %5844 = vmatprep.subr.mxu0 0.0
    %5845 = vmatpush1.xpose.msra.mxu0 0.0
    %5846 = vmatprep.subr.mxu0 0.0
    %5847 = vmatpush1.xpose.msra.mxu0 0.0
    %5848 = vmatprep.subr.mxu0 0.0
    %5849 = vmatpush1.xpose.msra.mxu0 0.0
    %5850 = vmatprep.subr.mxu0 0.0
    %5851 = vmatpush1.xpose.msra.mxu0 0.0
    %5852 = vmatprep.subr.mxu0 0.0
    %5853 = vmatpush1.xpose.msra.mxu0 0.0
    %5854 = vmatprep.mubr.f32.mxu0 0.0
    %5855 = vmatmul.mubr.f32.gmra.mrb[0].mxu0 %v5782
    %v5856 = vpop.f32.mrb[0].mxu0
    %v5857 = vadd.f32 %v5408, %v5856
    %v5858 = vpop.f32.mrb[0].mxu0
    %5859 = vmatprep.mubr.f32.mxu0 0.0
    %5860 = vmatmul.mubr.f32.gmra.mrb[0].mxu0 %v5784
    %v5861 = vpop.f32.mrb[0].mxu0
    %v5862 = vadd.f32 %v5409, %v5861
    %v5863 = vpop.f32.mrb[0].mxu0
    %5864 = vdwg.mxu0
    %5865 = vrot.lane.b32.xlu0 %v311, 56
    %v5866 = vpop.permute.xlu0 %5865
    %5867 = vrot.lane.b32.xlu0 %v316, 56
    %v5868 = vpop.permute.xlu0 %5867
    %5869 = vrot.lane.b32.xlu0 %v311, 48
    %v5870 = vpop.permute.xlu0 %5869
    %5871 = vrot.lane.b32.xlu0 %v316, 48
    %v5872 = vpop.permute.xlu0 %5871
    %v5873 = vsel %vm347, %v5866, 0
    %v5875 = vsel %vm347, %v5868, 0
    %v5877 = vsel %vm347, %v5870, 0
    %v5879 = vsel %vm347, %v5872, 0
    %5881 = vmatprep.subr.mxu0 0.0
    %5882 = vmatpush1.xpose.msra.mxu0 %v5877
    %5883 = vmatprep.subr.mxu0 0.0
    %5884 = vmatpush1.xpose.msra.mxu0 %v5879
    %5885 = vmatprep.subr.mxu0 0.0
    %5886 = vmatpush1.xpose.msra.mxu0 0.0
    %5887 = vmatprep.subr.mxu0 0.0
    %5888 = vmatpush1.xpose.msra.mxu0 0.0
    %5889 = vmatprep.subr.mxu0 0.0
    %5890 = vmatpush1.xpose.msra.mxu0 0.0
    %5891 = vmatprep.subr.mxu0 0.0
    %5892 = vmatpush1.xpose.msra.mxu0 0.0
    %5893 = vmatprep.subr.mxu0 0.0
    %5894 = vmatpush1.xpose.msra.mxu0 0.0
    %5895 = vmatprep.subr.mxu0 0.0
    %5896 = vmatpush1.xpose.msra.mxu0 0.0
    %5897 = vmatprep.subr.mxu0 0.0
    %5898 = vmatpush1.xpose.msra.mxu0 0.0
    %5899 = vmatprep.subr.mxu0 0.0
    %5900 = vmatpush1.xpose.msra.mxu0 0.0
    %5901 = vmatprep.subr.mxu0 0.0
    %5902 = vmatpush1.xpose.msra.mxu0 0.0
    %5903 = vmatprep.subr.mxu0 0.0
    %5904 = vmatpush1.xpose.msra.mxu0 0.0
    %5905 = vmatprep.subr.mxu0 0.0
    %5906 = vmatpush1.xpose.msra.mxu0 0.0
    %5907 = vmatprep.subr.mxu0 0.0
    %5908 = vmatpush1.xpose.msra.mxu0 0.0
    %5909 = vmatprep.subr.mxu0 0.0
    %5910 = vmatpush1.xpose.msra.mxu0 0.0
    %5911 = vmatprep.subr.mxu0 0.0
    %5912 = vmatpush1.xpose.msra.mxu0 0.0
    %5913 = vmatprep.subr.mxu0 0.0
    %5914 = vmatpush1.xpose.msra.mxu0 0.0
    %5915 = vmatprep.subr.mxu0 0.0
    %5916 = vmatpush1.xpose.msra.mxu0 0.0
    %5917 = vmatprep.subr.mxu0 0.0
    %5918 = vmatpush1.xpose.msra.mxu0 0.0
    %5919 = vmatprep.subr.mxu0 0.0
    %5920 = vmatpush1.xpose.msra.mxu0 0.0
    %5921 = vmatprep.subr.mxu0 0.0
    %5922 = vmatpush1.xpose.msra.mxu0 0.0
    %5923 = vmatprep.subr.mxu0 0.0
    %5924 = vmatpush1.xpose.msra.mxu0 0.0
    %5925 = vmatprep.subr.mxu0 0.0
    %5926 = vmatpush1.xpose.msra.mxu0 0.0
    %5927 = vmatprep.subr.mxu0 0.0
    %5928 = vmatpush1.xpose.msra.mxu0 0.0
    %5929 = vmatprep.subr.mxu0 0.0
    %5930 = vmatpush1.xpose.msra.mxu0 0.0
    %5931 = vmatprep.subr.mxu0 0.0
    %5932 = vmatpush1.xpose.msra.mxu0 0.0
    %5933 = vmatprep.subr.mxu0 0.0
    %5934 = vmatpush1.xpose.msra.mxu0 0.0
    %5935 = vmatprep.subr.mxu0 0.0
    %5936 = vmatpush1.xpose.msra.mxu0 0.0
    %5937 = vmatprep.subr.mxu0 0.0
    %5938 = vmatpush1.xpose.msra.mxu0 0.0
    %5939 = vmatprep.subr.mxu0 0.0
    %5940 = vmatpush1.xpose.msra.mxu0 0.0
    %5941 = vmatprep.subr.mxu0 0.0
    %5942 = vmatpush1.xpose.msra.mxu0 0.0
    %5943 = vmatprep.subr.mxu0 0.0
    %5944 = vmatpush1.xpose.msra.mxu0 0.0
    %5945 = vmatprep.mubr.f32.mxu0 0.0
    %5946 = vmatmul.mubr.f32.gmra.mrb[0].mxu0 %v5873
    %v5947 = vpop.f32.mrb[0].mxu0
    %v5948 = vadd.f32 %v5408, %v5947
    %v5949 = vpop.f32.mrb[0].mxu0
    %5950 = vmatprep.mubr.f32.mxu0 0.0
    %5951 = vmatmul.mubr.f32.gmra.mrb[0].mxu0 %v5875
    %v5952 = vpop.f32.mrb[0].mxu0
    %v5953 = vadd.f32 %v5409, %v5952
    %v5954 = vpop.f32.mrb[0].mxu0
    %5955 = vdwg.mxu0
    %5956 = vrot.lane.b32.xlu0 %v321, 56
    %v5957 = vpop.permute.xlu0 %5956
    %5958 = vrot.lane.b32.xlu0 %v326, 56
    %v5959 = vpop.permute.xlu0 %5958
    %5960 = vrot.lane.b32.xlu0 %v321, 48
    %v5961 = vpop.permute.xlu0 %5960
    %5962 = vrot.lane.b32.xlu0 %v326, 48
    %v5963 = vpop.permute.xlu0 %5962
    %v5964 = vsel %vm347, %v5957, 0
    %v5966 = vsel %vm347, %v5959, 0
    %v5968 = vsel %vm347, %v5961, 0
    %v5970 = vsel %vm347, %v5963, 0
    %5972 = vmatprep.subr.mxu0 0.0
    %5973 = vmatpush1.xpose.msra.mxu0 %v5968
    %5974 = vmatprep.subr.mxu0 0.0
    %5975 = vmatpush1.xpose.msra.mxu0 %v5970
    %5976 = vmatprep.subr.mxu0 0.0
    %5977 = vmatpush1.xpose.msra.mxu0 0.0
    %5978 = vmatprep.subr.mxu0 0.0
    %5979 = vmatpush1.xpose.msra.mxu0 0.0
    %5980 = vmatprep.subr.mxu0 0.0
    %5981 = vmatpush1.xpose.msra.mxu0 0.0
    %5982 = vmatprep.subr.mxu0 0.0
    %5983 = vmatpush1.xpose.msra.mxu0 0.0
    %5984 = vmatprep.subr.mxu0 0.0
    %5985 = vmatpush1.xpose.msra.mxu0 0.0
    %5986 = vmatprep.subr.mxu0 0.0
    %5987 = vmatpush1.xpose.msra.mxu0 0.0
    %5988 = vmatprep.subr.mxu0 0.0
    %5989 = vmatpush1.xpose.msra.mxu0 0.0
    %5990 = vmatprep.subr.mxu0 0.0
    %5991 = vmatpush1.xpose.msra.mxu0 0.0
    %5992 = vmatprep.subr.mxu0 0.0
    %5993 = vmatpush1.xpose.msra.mxu0 0.0
    %5994 = vmatprep.subr.mxu0 0.0
    %5995 = vmatpush1.xpose.msra.mxu0 0.0
    %5996 = vmatprep.subr.mxu0 0.0
    %5997 = vmatpush1.xpose.msra.mxu0 0.0
    %5998 = vmatprep.subr.mxu0 0.0
    %5999 = vmatpush1.xpose.msra.mxu0 0.0
    %6000 = vmatprep.subr.mxu0 0.0
    %6001 = vmatpush1.xpose.msra.mxu0 0.0
    %6002 = vmatprep.subr.mxu0 0.0
    %6003 = vmatpush1.xpose.msra.mxu0 0.0
    %6004 = vmatprep.subr.mxu0 0.0
    %6005 = vmatpush1.xpose.msra.mxu0 0.0
    %6006 = vmatprep.subr.mxu0 0.0
    %6007 = vmatpush1.xpose.msra.mxu0 0.0
    %6008 = vmatprep.subr.mxu0 0.0
    %6009 = vmatpush1.xpose.msra.mxu0 0.0
    %6010 = vmatprep.subr.mxu0 0.0
    %6011 = vmatpush1.xpose.msra.mxu0 0.0
    %6012 = vmatprep.subr.mxu0 0.0
    %6013 = vmatpush1.xpose.msra.mxu0 0.0
    %6014 = vmatprep.subr.mxu0 0.0
    %6015 = vmatpush1.xpose.msra.mxu0 0.0
    %6016 = vmatprep.subr.mxu0 0.0
    %6017 = vmatpush1.xpose.msra.mxu0 0.0
    %6018 = vmatprep.subr.mxu0 0.0
    %6019 = vmatpush1.xpose.msra.mxu0 0.0
    %6020 = vmatprep.subr.mxu0 0.0
    %6021 = vmatpush1.xpose.msra.mxu0 0.0
    %6022 = vmatprep.subr.mxu0 0.0
    %6023 = vmatpush1.xpose.msra.mxu0 0.0
    %6024 = vmatprep.subr.mxu0 0.0
    %6025 = vmatpush1.xpose.msra.mxu0 0.0
    %6026 = vmatprep.subr.mxu0 0.0
    %6027 = vmatpush1.xpose.msra.mxu0 0.0
    %6028 = vmatprep.subr.mxu0 0.0
    %6029 = vmatpush1.xpose.msra.mxu0 0.0
    %6030 = vmatprep.subr.mxu0 0.0
    %6031 = vmatpush1.xpose.msra.mxu0 0.0
    %6032 = vmatprep.subr.mxu0 0.0
    %6033 = vmatpush1.xpose.msra.mxu0 0.0
    %6034 = vmatprep.subr.mxu0 0.0
    %6035 = vmatpush1.xpose.msra.mxu0 0.0
    %6036 = vmatprep.mubr.f32.mxu0 0.0
    %6037 = vmatmul.mubr.f32.gmra.mrb[0].mxu0 %v5964
    %v6038 = vpop.f32.mrb[0].mxu0
    %v6039 = vadd.f32 %v5408, %v6038
    %v6040 = vpop.f32.mrb[0].mxu0
    %6041 = vmatprep.mubr.f32.mxu0 0.0
    %6042 = vmatmul.mubr.f32.gmra.mrb[0].mxu0 %v5966
    %v6043 = vpop.f32.mrb[0].mxu0
    %v6044 = vadd.f32 %v5409, %v6043
    %v6045 = vpop.f32.mrb[0].mxu0
    %6046 = vdwg.mxu0
    %6047 = vrot.lane.b32.xlu0 %v331, 56
    %v6048 = vpop.permute.xlu0 %6047
    %6049 = vrot.lane.b32.xlu0 %v336, 56
    %v6050 = vpop.permute.xlu0 %6049
    %6051 = vrot.lane.b32.xlu0 %v331, 48
    %v6052 = vpop.permute.xlu0 %6051
    %6053 = vrot.lane.b32.xlu0 %v336, 48
    %v6054 = vpop.permute.xlu0 %6053
    %v6055 = vsel %vm347, %v6048, 0
    %v6057 = vsel %vm347, %v6050, 0
    %v6059 = vsel %vm347, %v6052, 0
    %v6061 = vsel %vm347, %v6054, 0
    %6063 = vmatprep.subr.mxu0 0.0
    %6064 = vmatpush1.xpose.msra.mxu0 %v6059
    %6065 = vmatprep.subr.mxu0 0.0
    %6066 = vmatpush1.xpose.msra.mxu0 %v6061
    %6067 = vmatprep.subr.mxu0 0.0
    %6068 = vmatpush1.xpose.msra.mxu0 0.0
    %6069 = vmatprep.subr.mxu0 0.0
    %6070 = vmatpush1.xpose.msra.mxu0 0.0
    %6071 = vmatprep.subr.mxu0 0.0
    %6072 = vmatpush1.xpose.msra.mxu0 0.0
    %6073 = vmatprep.subr.mxu0 0.0
    %6074 = vmatpush1.xpose.msra.mxu0 0.0
    %6075 = vmatprep.subr.mxu0 0.0
    %6076 = vmatpush1.xpose.msra.mxu0 0.0
    %6077 = vmatprep.subr.mxu0 0.0
    %6078 = vmatpush1.xpose.msra.mxu0 0.0
    %6079 = vmatprep.subr.mxu0 0.0
    %6080 = vmatpush1.xpose.msra.mxu0 0.0
    %6081 = vmatprep.subr.mxu0 0.0
    %6082 = vmatpush1.xpose.msra.mxu0 0.0
    %6083 = vmatprep.subr.mxu0 0.0
    %6084 = vmatpush1.xpose.msra.mxu0 0.0
    %6085 = vmatprep.subr.mxu0 0.0
    %6086 = vmatpush1.xpose.msra.mxu0 0.0
    %6087 = vmatprep.subr.mxu0 0.0
    %6088 = vmatpush1.xpose.msra.mxu0 0.0
    %6089 = vmatprep.subr.mxu0 0.0
    %6090 = vmatpush1.xpose.msra.mxu0 0.0
    %6091 = vmatprep.subr.mxu0 0.0
    %6092 = vmatpush1.xpose.msra.mxu0 0.0
    %6093 = vmatprep.subr.mxu0 0.0
    %6094 = vmatpush1.xpose.msra.mxu0 0.0
    %6095 = vmatprep.subr.mxu0 0.0
    %6096 = vmatpush1.xpose.msra.mxu0 0.0
    %6097 = vmatprep.subr.mxu0 0.0
    %6098 = vmatpush1.xpose.msra.mxu0 0.0
    %6099 = vmatprep.subr.mxu0 0.0
    %6100 = vmatpush1.xpose.msra.mxu0 0.0
    %6101 = vmatprep.subr.mxu0 0.0
    %6102 = vmatpush1.xpose.msra.mxu0 0.0
    %6103 = vmatprep.subr.mxu0 0.0
    %6104 = vmatpush1.xpose.msra.mxu0 0.0
    %6105 = vmatprep.subr.mxu0 0.0
    %6106 = vmatpush1.xpose.msra.mxu0 0.0
    %6107 = vmatprep.subr.mxu0 0.0
    %6108 = vmatpush1.xpose.msra.mxu0 0.0
    %6109 = vmatprep.subr.mxu0 0.0
    %6110 = vmatpush1.xpose.msra.mxu0 0.0
    %6111 = vmatprep.subr.mxu0 0.0
    %6112 = vmatpush1.xpose.msra.mxu0 0.0
    %6113 = vmatprep.subr.mxu0 0.0
    %6114 = vmatpush1.xpose.msra.mxu0 0.0
    %6115 = vmatprep.subr.mxu0 0.0
    %6116 = vmatpush1.xpose.msra.mxu0 0.0
    %6117 = vmatprep.subr.mxu0 0.0
    %6118 = vmatpush1.xpose.msra.mxu0 0.0
    %6119 = vmatprep.subr.mxu0 0.0
    %6120 = vmatpush1.xpose.msra.mxu0 0.0
    %6121 = vmatprep.subr.mxu0 0.0
    %6122 = vmatpush1.xpose.msra.mxu0 0.0
    %6123 = vmatprep.subr.mxu0 0.0
    %6124 = vmatpush1.xpose.msra.mxu0 0.0
    %6125 = vmatprep.subr.mxu0 0.0
    %6126 = vmatpush1.xpose.msra.mxu0 0.0
    %6127 = vmatprep.mubr.f32.mxu0 0.0
    %6128 = vmatmul.mubr.f32.gmra.mrb[0].mxu0 %v6055
    %v6129 = vpop.f32.mrb[0].mxu0
    %v6130 = vadd.f32 %v5408, %v6129
    %v6131 = vpop.f32.mrb[0].mxu0
    %6132 = vmatprep.mubr.f32.mxu0 0.0
    %6133 = vmatmul.mubr.f32.gmra.mrb[0].mxu0 %v6057
    %v6134 = vpop.f32.mrb[0].mxu0
    %v6135 = vadd.f32 %v5409, %v6134
    %v6136 = vpop.f32.mrb[0].mxu0
    %6137 = vdwg.mxu0
    %v6138 = vld [vmem:[#allocation11] sm:$0xff]
    %v6139 = vld [vmem:[#allocation11 + $0x8] sm:$0xff]
    %v6140 = vld [vmem:[#allocation11 + $0x10] sm:$0xff]
    %v6141 = vld [vmem:[#allocation11 + $0x18] sm:$0xff]
    %v6142 = vld [vmem:[#allocation11 + $0x20] sm:$0xff]
    %v6143 = vld [vmem:[#allocation11 + $0x28] sm:$0xff]
    %v6144 = vld [vmem:[#allocation11 + $0x30] sm:$0xff]
    %v6145 = vld [vmem:[#allocation11 + $0x38] sm:$0xff]
    %v6146 = vld [vmem:[#allocation11 + $0x40] sm:$0xff]
    %v6147 = vld [vmem:[#allocation11 + $0x48] sm:$0xff]
    %v6148 = vld [vmem:[#allocation11 + $0x50] sm:$0xff]
    %v6149 = vld [vmem:[#allocation11 + $0x58] sm:$0xff]
    %v6150 = vld [vmem:[#allocation11 + $0x60] sm:$0xff]
    %v6151 = vld [vmem:[#allocation11 + $0x68] sm:$0xff]
    %v6152 = vld [vmem:[#allocation11 + $0x70] sm:$0xff]
    %v6153 = vld [vmem:[#allocation11 + $0x78] sm:$0xff]
    %v6154 = vadd.f32 %v5493, %v6138
    %v6155 = vadd.f32 %v5498, %v6139
    %v6156 = vadd.f32 %v5584, %v6140
    %v6157 = vadd.f32 %v5589, %v6141
    %v6158 = vadd.f32 %v5675, %v6142
    %v6159 = vadd.f32 %v5680, %v6143
    %v6160 = vadd.f32 %v5766, %v6144
    %v6161 = vadd.f32 %v5771, %v6145
    %v6162 = vadd.f32 %v5857, %v6146
    %v6163 = vadd.f32 %v5862, %v6147
    %v6164 = vadd.f32 %v5948, %v6148
    %v6165 = vadd.f32 %v5953, %v6149
    %v6166 = vadd.f32 %v6039, %v6150
    %v6167 = vadd.f32 %v6044, %v6151
    %v6168 = vadd.f32 %v6130, %v6152
    %v6169 = vadd.f32 %v6135, %v6153
    %v6170 = vsel %vm1086, %v6154, -inf
    %6171 = vmax.xlane.f32.xlu0 %v6170
    %v6172 = vpop.xlane.xlu0 %6171
    %v6173 = vsel %vm1086, %v6155, -inf
    %6174 = vmax.xlane.f32.xlu0 %v6173
    %v6175 = vpop.xlane.xlu0 %6174
    %v6176 = vsel %vm1086, %v6156, -inf
    %6177 = vmax.xlane.f32.xlu0 %v6176
    %v6178 = vpop.xlane.xlu0 %6177
    %v6179 = vsel %vm1086, %v6157, -inf
    %6180 = vmax.xlane.f32.xlu0 %v6179
    %v6181 = vpop.xlane.xlu0 %6180
    %v6182 = vsel %vm1086, %v6158, -inf
    %6183 = vmax.xlane.f32.xlu0 %v6182
    %v6184 = vpop.xlane.xlu0 %6183
    %v6185 = vsel %vm1086, %v6159, -inf
    %6186 = vmax.xlane.f32.xlu0 %v6185
    %v6187 = vpop.xlane.xlu0 %6186
    %v6188 = vsel %vm1086, %v6160, -inf
    %6189 = vmax.xlane.f32.xlu0 %v6188
    %v6190 = vpop.xlane.xlu0 %6189
    %v6191 = vsel %vm1086, %v6161, -inf
    %6192 = vmax.xlane.f32.xlu0 %v6191
    %v6193 = vpop.xlane.xlu0 %6192
    %v6194 = vsel %vm1086, %v6162, -inf
    %6195 = vmax.xlane.f32.xlu0 %v6194
    %v6196 = vpop.xlane.xlu0 %6195
    %v6197 = vsel %vm1086, %v6163, -inf
    %6198 = vmax.xlane.f32.xlu0 %v6197
    %v6199 = vpop.xlane.xlu0 %6198
    %v6200 = vsel %vm1086, %v6164, -inf
    %6201 = vmax.xlane.f32.xlu0 %v6200
    %v6202 = vpop.xlane.xlu0 %6201
    %v6203 = vsel %vm1086, %v6165, -inf
    %6204 = vmax.xlane.f32.xlu0 %v6203
    %v6205 = vpop.xlane.xlu0 %6204
    %v6206 = vsel %vm1086, %v6166, -inf
    %6207 = vmax.xlane.f32.xlu0 %v6206
    %v6208 = vpop.xlane.xlu0 %6207
    %v6209 = vsel %vm1086, %v6167, -inf
    %6210 = vmax.xlane.f32.xlu0 %v6209
    %v6211 = vpop.xlane.xlu0 %6210
    %v6212 = vsel %vm1086, %v6168, -inf
    %6213 = vmax.xlane.f32.xlu0 %v6212
    %v6214 = vpop.xlane.xlu0 %6213
    %v6215 = vsel %vm1086, %v6169, -inf
    %6216 = vmax.xlane.f32.xlu0 %v6215
    %v6217 = vpop.xlane.xlu0 %6216
    %v6218 = vsub.f32 %v6154, %v6172
    %v6219 = vsub.f32 %v6155, %v6175
    %v6220 = vsub.f32 %v6156, %v6178
    %v6221 = vsub.f32 %v6157, %v6181
    %v6222 = vsub.f32 %v6158, %v6184
    %v6223 = vsub.f32 %v6159, %v6187
    %v6224 = vsub.f32 %v6160, %v6190
    %v6225 = vsub.f32 %v6161, %v6193
    %v6226 = vsub.f32 %v6162, %v6196
    %v6227 = vsub.f32 %v6163, %v6199
    %v6228 = vsub.f32 %v6164, %v6202
    %v6229 = vsub.f32 %v6165, %v6205
    %v6230 = vsub.f32 %v6166, %v6208
    %v6231 = vsub.f32 %v6167, %v6211
    %v6232 = vsub.f32 %v6168, %v6214
    %v6233 = vsub.f32 %v6169, %v6217
    %v6234 = vmul.f32 %v6218, 1.442695
    %v6235 = vpow.pop %v6234
    %v6236 = vmul.f32 %v6219, 1.442695
    %v6237 = vpow.pop %v6236
    %v6238 = vmul.f32 %v6220, 1.442695
    %v6239 = vpow.pop %v6238
    %v6240 = vmul.f32 %v6221, 1.442695
    %v6241 = vpow.pop %v6240
    %v6242 = vmul.f32 %v6222, 1.442695
    %v6243 = vpow.pop %v6242
    %v6244 = vmul.f32 %v6223, 1.442695
    %v6245 = vpow.pop %v6244
    %v6246 = vmul.f32 %v6224, 1.442695
    %v6247 = vpow.pop %v6246
    %v6248 = vmul.f32 %v6225, 1.442695
    %v6249 = vpow.pop %v6248
    %v6250 = vmul.f32 %v6226, 1.442695
    %v6251 = vpow.pop %v6250
    %v6252 = vmul.f32 %v6227, 1.442695
    %v6253 = vpow.pop %v6252
    %v6254 = vmul.f32 %v6228, 1.442695
    %v6255 = vpow.pop %v6254
    %v6256 = vmul.f32 %v6229, 1.442695
    %v6257 = vpow.pop %v6256
    %v6258 = vmul.f32 %v6230, 1.442695
    %v6259 = vpow.pop %v6258
    %v6260 = vmul.f32 %v6231, 1.442695
    %v6261 = vpow.pop %v6260
    %v6262 = vmul.f32 %v6232, 1.442695
    %v6263 = vpow.pop %v6262
    %v6264 = vmul.f32 %v6233, 1.442695
    %v6265 = vpow.pop %v6264
    %v6266 = vsel %vm1086, %v6235, 0.0
    %6267 = vadd.xlane.f32.xlu0 %v6266
    %v6268 = vpop.xlane.xlu0 %6267
    %v6269 = vsel %vm1086, %v6237, 0.0
    %6270 = vadd.xlane.f32.xlu0 %v6269
    %v6271 = vpop.xlane.xlu0 %6270
    %v6272 = vsel %vm1086, %v6239, 0.0
    %6273 = vadd.xlane.f32.xlu0 %v6272
    %v6274 = vpop.xlane.xlu0 %6273
    %v6275 = vsel %vm1086, %v6241, 0.0
    %6276 = vadd.xlane.f32.xlu0 %v6275
    %v6277 = vpop.xlane.xlu0 %6276
    %v6278 = vsel %vm1086, %v6243, 0.0
    %6279 = vadd.xlane.f32.xlu0 %v6278
    %v6280 = vpop.xlane.xlu0 %6279
    %v6281 = vsel %vm1086, %v6245, 0.0
    %6282 = vadd.xlane.f32.xlu0 %v6281
    %v6283 = vpop.xlane.xlu0 %6282
    %v6284 = vsel %vm1086, %v6247, 0.0
    %6285 = vadd.xlane.f32.xlu0 %v6284
    %v6286 = vpop.xlane.xlu0 %6285
    %v6287 = vsel %vm1086, %v6249, 0.0
    %6288 = vadd.xlane.f32.xlu0 %v6287
    %v6289 = vpop.xlane.xlu0 %6288
    %v6290 = vsel %vm1086, %v6251, 0.0
    %6291 = vadd.xlane.f32.xlu0 %v6290
    %v6292 = vpop.xlane.xlu0 %6291
    %v6293 = vsel %vm1086, %v6253, 0.0
    %6294 = vadd.xlane.f32.xlu0 %v6293
    %v6295 = vpop.xlane.xlu0 %6294
    %v6296 = vsel %vm1086, %v6255, 0.0
    %6297 = vadd.xlane.f32.xlu0 %v6296
    %v6298 = vpop.xlane.xlu0 %6297
    %v6299 = vsel %vm1086, %v6257, 0.0
    %6300 = vadd.xlane.f32.xlu0 %v6299
    %v6301 = vpop.xlane.xlu0 %6300
    %v6302 = vsel %vm1086, %v6259, 0.0
    %6303 = vadd.xlane.f32.xlu0 %v6302
    %v6304 = vpop.xlane.xlu0 %6303
    %v6305 = vsel %vm1086, %v6261, 0.0
    %6306 = vadd.xlane.f32.xlu0 %v6305
    %v6307 = vpop.xlane.xlu0 %6306
    %v6308 = vsel %vm1086, %v6263, 0.0
    %6309 = vadd.xlane.f32.xlu0 %v6308
    %v6310 = vpop.xlane.xlu0 %6309
    %v6311 = vsel %vm1086, %v6265, 0.0
    %6312 = vadd.xlane.f32.xlu0 %v6311
    %v6313 = vpop.xlane.xlu0 %6312
    %v6314 = vrcp.pop %v6268
    %v6315 = vrcp.pop %v6271
    %v6316 = vrcp.pop %v6274
    %v6317 = vrcp.pop %v6277
    %v6318 = vrcp.pop %v6280
    %v6319 = vrcp.pop %v6283
    %v6320 = vrcp.pop %v6286
    %v6321 = vrcp.pop %v6289
    %v6322 = vrcp.pop %v6292
    %v6323 = vrcp.pop %v6295
    %v6324 = vrcp.pop %v6298
    %v6325 = vrcp.pop %v6301
    %v6326 = vrcp.pop %v6304
    %v6327 = vrcp.pop %v6307
    %v6328 = vrcp.pop %v6310
    %v6329 = vrcp.pop %v6313
    %v6330 = vmul.f32 %v6235, %v6314
    %v6331 = vmul.f32 %v6237, %v6315
    %v6332 = vmul.f32 %v6239, %v6316
    %v6333 = vmul.f32 %v6241, %v6317
    %v6334 = vmul.f32 %v6243, %v6318
    %v6335 = vmul.f32 %v6245, %v6319
    %v6336 = vmul.f32 %v6247, %v6320
    %v6337 = vmul.f32 %v6249, %v6321
    %v6338 = vmul.f32 %v6251, %v6322
    %v6339 = vmul.f32 %v6253, %v6323
    %v6340 = vmul.f32 %v6255, %v6324
    %v6341 = vmul.f32 %v6257, %v6325
    %v6342 = vmul.f32 %v6259, %v6326
    %v6343 = vmul.f32 %v6261, %v6327
    %v6344 = vmul.f32 %v6263, %v6328
    %v6345 = vmul.f32 %v6265, %v6329
    %6346 = vrot.lane.b32.xlu0 %v261, 40
    %v6347 = vpop.permute.xlu0 %6346
    %6348 = vrot.lane.b32.xlu0 %v266, 40
    %v6349 = vpop.permute.xlu0 %6348
    %v6353 = vsel %vm1086, %v6330, 0
    %v6356 = vsel %vm1086, %v6331, 0
    %6358 = vmatprep.subr.mxu0 0.0
    %6359 = vmatpush1.msra.mxu0 %v6347
    %6360 = vmatprep.subr.mxu0 0.0
    %6361 = vmatpush1.msra.mxu0 %v6349
    %6362 = vmatprep.subr.mxu0 0.0
    %6363 = vmatpush1.msra.mxu0 0.0
    %6364 = vmatprep.subr.mxu0 0.0
    %6365 = vmatpush1.msra.mxu0 0.0
    %6366 = vmatprep.subr.mxu0 0.0
    %6367 = vmatpush1.msra.mxu0 0.0
    %6368 = vmatprep.subr.mxu0 0.0
    %6369 = vmatpush1.msra.mxu0 0.0
    %6370 = vmatprep.subr.mxu0 0.0
    %6371 = vmatpush1.msra.mxu0 0.0
    %6372 = vmatprep.subr.mxu0 0.0
    %6373 = vmatpush1.msra.mxu0 0.0
    %6374 = vmatprep.subr.mxu0 0.0
    %6375 = vmatpush1.msra.mxu0 0.0
    %6376 = vmatprep.subr.mxu0 0.0
    %6377 = vmatpush1.msra.mxu0 0.0
    %6378 = vmatprep.subr.mxu0 0.0
    %6379 = vmatpush1.msra.mxu0 0.0
    %6380 = vmatprep.subr.mxu0 0.0
    %6381 = vmatpush1.msra.mxu0 0.0
    %6382 = vmatprep.subr.mxu0 0.0
    %6383 = vmatpush1.msra.mxu0 0.0
    %6384 = vmatprep.subr.mxu0 0.0
    %6385 = vmatpush1.msra.mxu0 0.0
    %6386 = vmatprep.subr.mxu0 0.0
    %6387 = vmatpush1.msra.mxu0 0.0
    %6388 = vmatprep.subr.mxu0 0.0
    %6389 = vmatpush1.msra.mxu0 0.0
    %6390 = vmatprep.subr.mxu0 0.0
    %6391 = vmatpush1.msra.mxu0 0.0
    %6392 = vmatprep.subr.mxu0 0.0
    %6393 = vmatpush1.msra.mxu0 0.0
    %6394 = vmatprep.subr.mxu0 0.0
    %6395 = vmatpush1.msra.mxu0 0.0
    %6396 = vmatprep.subr.mxu0 0.0
    %6397 = vmatpush1.msra.mxu0 0.0
    %6398 = vmatprep.subr.mxu0 0.0
    %6399 = vmatpush1.msra.mxu0 0.0
    %6400 = vmatprep.subr.mxu0 0.0
    %6401 = vmatpush1.msra.mxu0 0.0
    %6402 = vmatprep.subr.mxu0 0.0
    %6403 = vmatpush1.msra.mxu0 0.0
    %6404 = vmatprep.subr.mxu0 0.0
    %6405 = vmatpush1.msra.mxu0 0.0
    %6406 = vmatprep.subr.mxu0 0.0
    %6407 = vmatpush1.msra.mxu0 0.0
    %6408 = vmatprep.subr.mxu0 0.0
    %6409 = vmatpush1.msra.mxu0 0.0
    %6410 = vmatprep.subr.mxu0 0.0
    %6411 = vmatpush1.msra.mxu0 0.0
    %6412 = vmatprep.subr.mxu0 0.0
    %6413 = vmatpush1.msra.mxu0 0.0
    %6414 = vmatprep.subr.mxu0 0.0
    %6415 = vmatpush1.msra.mxu0 0.0
    %6416 = vmatprep.subr.mxu0 0.0
    %6417 = vmatpush1.msra.mxu0 0.0
    %6418 = vmatprep.subr.mxu0 0.0
    %6419 = vmatpush1.msra.mxu0 0.0
    %6420 = vmatprep.subr.mxu0 0.0
    %6421 = vmatpush1.msra.mxu0 0.0
    %6422 = vmatprep.mubr.f32.mxu0 0.0
    %6423 = vmatmul.mubr.f32.gmra.mrb[0].mxu0 %v6353
    %v6424 = vpop.f32.mrb[0].mxu0
    %v6425 = vadd.f32 0.0, %v6424
    %v6426 = vpop.f32.mrb[0].mxu0
    %6427 = vmatprep.mubr.f32.mxu0 0.0
    %6428 = vmatmul.mubr.f32.gmra.mrb[0].mxu0 %v6356
    %v6429 = vpop.f32.mrb[0].mxu0
    %v6430 = vadd.f32 0.0, %v6429
    %v6431 = vpop.f32.mrb[0].mxu0
    %6432 = vdwg.mxu0
    %6433 = vrot.lane.b32.xlu0 %v271, 40
    %v6434 = vpop.permute.xlu0 %6433
    %6435 = vrot.lane.b32.xlu0 %v276, 40
    %v6436 = vpop.permute.xlu0 %6435
    %v6440 = vsel %vm1086, %v6332, 0
    %v6443 = vsel %vm1086, %v6333, 0
    %6445 = vmatprep.subr.mxu0 0.0
    %6446 = vmatpush1.msra.mxu0 %v6434
    %6447 = vmatprep.subr.mxu0 0.0
    %6448 = vmatpush1.msra.mxu0 %v6436
    %6449 = vmatprep.subr.mxu0 0.0
    %6450 = vmatpush1.msra.mxu0 0.0
    %6451 = vmatprep.subr.mxu0 0.0
    %6452 = vmatpush1.msra.mxu0 0.0
    %6453 = vmatprep.subr.mxu0 0.0
    %6454 = vmatpush1.msra.mxu0 0.0
    %6455 = vmatprep.subr.mxu0 0.0
    %6456 = vmatpush1.msra.mxu0 0.0
    %6457 = vmatprep.subr.mxu0 0.0
    %6458 = vmatpush1.msra.mxu0 0.0
    %6459 = vmatprep.subr.mxu0 0.0
    %6460 = vmatpush1.msra.mxu0 0.0
    %6461 = vmatprep.subr.mxu0 0.0
    %6462 = vmatpush1.msra.mxu0 0.0
    %6463 = vmatprep.subr.mxu0 0.0
    %6464 = vmatpush1.msra.mxu0 0.0
    %6465 = vmatprep.subr.mxu0 0.0
    %6466 = vmatpush1.msra.mxu0 0.0
    %6467 = vmatprep.subr.mxu0 0.0
    %6468 = vmatpush1.msra.mxu0 0.0
    %6469 = vmatprep.subr.mxu0 0.0
    %6470 = vmatpush1.msra.mxu0 0.0
    %6471 = vmatprep.subr.mxu0 0.0
    %6472 = vmatpush1.msra.mxu0 0.0
    %6473 = vmatprep.subr.mxu0 0.0
    %6474 = vmatpush1.msra.mxu0 0.0
    %6475 = vmatprep.subr.mxu0 0.0
    %6476 = vmatpush1.msra.mxu0 0.0
    %6477 = vmatprep.subr.mxu0 0.0
    %6478 = vmatpush1.msra.mxu0 0.0
    %6479 = vmatprep.subr.mxu0 0.0
    %6480 = vmatpush1.msra.mxu0 0.0
    %6481 = vmatprep.subr.mxu0 0.0
    %6482 = vmatpush1.msra.mxu0 0.0
    %6483 = vmatprep.subr.mxu0 0.0
    %6484 = vmatpush1.msra.mxu0 0.0
    %6485 = vmatprep.subr.mxu0 0.0
    %6486 = vmatpush1.msra.mxu0 0.0
    %6487 = vmatprep.subr.mxu0 0.0
    %6488 = vmatpush1.msra.mxu0 0.0
    %6489 = vmatprep.subr.mxu0 0.0
    %6490 = vmatpush1.msra.mxu0 0.0
    %6491 = vmatprep.subr.mxu0 0.0
    %6492 = vmatpush1.msra.mxu0 0.0
    %6493 = vmatprep.subr.mxu0 0.0
    %6494 = vmatpush1.msra.mxu0 0.0
    %6495 = vmatprep.subr.mxu0 0.0
    %6496 = vmatpush1.msra.mxu0 0.0
    %6497 = vmatprep.subr.mxu0 0.0
    %6498 = vmatpush1.msra.mxu0 0.0
    %6499 = vmatprep.subr.mxu0 0.0
    %6500 = vmatpush1.msra.mxu0 0.0
    %6501 = vmatprep.subr.mxu0 0.0
    %6502 = vmatpush1.msra.mxu0 0.0
    %6503 = vmatprep.subr.mxu0 0.0
    %6504 = vmatpush1.msra.mxu0 0.0
    %6505 = vmatprep.subr.mxu0 0.0
    %6506 = vmatpush1.msra.mxu0 0.0
    %6507 = vmatprep.subr.mxu0 0.0
    %6508 = vmatpush1.msra.mxu0 0.0
    %6509 = vmatprep.mubr.f32.mxu0 0.0
    %6510 = vmatmul.mubr.f32.gmra.mrb[0].mxu0 %v6440
    %v6511 = vpop.f32.mrb[0].mxu0
    %v6512 = vadd.f32 0.0, %v6511
    %v6513 = vpop.f32.mrb[0].mxu0
    %6514 = vmatprep.mubr.f32.mxu0 0.0
    %6515 = vmatmul.mubr.f32.gmra.mrb[0].mxu0 %v6443
    %v6516 = vpop.f32.mrb[0].mxu0
    %v6517 = vadd.f32 0.0, %v6516
    %v6518 = vpop.f32.mrb[0].mxu0
    %6519 = vdwg.mxu0
    %6520 = vrot.lane.b32.xlu0 %v281, 40
    %v6521 = vpop.permute.xlu0 %6520
    %6522 = vrot.lane.b32.xlu0 %v286, 40
    %v6523 = vpop.permute.xlu0 %6522
    %v6527 = vsel %vm1086, %v6334, 0
    %v6530 = vsel %vm1086, %v6335, 0
    %6532 = vmatprep.subr.mxu0 0.0
    %6533 = vmatpush1.msra.mxu0 %v6521
    %6534 = vmatprep.subr.mxu0 0.0
    %6535 = vmatpush1.msra.mxu0 %v6523
    %6536 = vmatprep.subr.mxu0 0.0
    %6537 = vmatpush1.msra.mxu0 0.0
    %6538 = vmatprep.subr.mxu0 0.0
    %6539 = vmatpush1.msra.mxu0 0.0
    %6540 = vmatprep.subr.mxu0 0.0
    %6541 = vmatpush1.msra.mxu0 0.0
    %6542 = vmatprep.subr.mxu0 0.0
    %6543 = vmatpush1.msra.mxu0 0.0
    %6544 = vmatprep.subr.mxu0 0.0
    %6545 = vmatpush1.msra.mxu0 0.0
    %6546 = vmatprep.subr.mxu0 0.0
    %6547 = vmatpush1.msra.mxu0 0.0
    %6548 = vmatprep.subr.mxu0 0.0
    %6549 = vmatpush1.msra.mxu0 0.0
    %6550 = vmatprep.subr.mxu0 0.0
    %6551 = vmatpush1.msra.mxu0 0.0
    %6552 = vmatprep.subr.mxu0 0.0
    %6553 = vmatpush1.msra.mxu0 0.0
    %6554 = vmatprep.subr.mxu0 0.0
    %6555 = vmatpush1.msra.mxu0 0.0
    %6556 = vmatprep.subr.mxu0 0.0
    %6557 = vmatpush1.msra.mxu0 0.0
    %6558 = vmatprep.subr.mxu0 0.0
    %6559 = vmatpush1.msra.mxu0 0.0
    %6560 = vmatprep.subr.mxu0 0.0
    %6561 = vmatpush1.msra.mxu0 0.0
    %6562 = vmatprep.subr.mxu0 0.0
    %6563 = vmatpush1.msra.mxu0 0.0
    %6564 = vmatprep.subr.mxu0 0.0
    %6565 = vmatpush1.msra.mxu0 0.0
    %6566 = vmatprep.subr.mxu0 0.0
    %6567 = vmatpush1.msra.mxu0 0.0
    %6568 = vmatprep.subr.mxu0 0.0
    %6569 = vmatpush1.msra.mxu0 0.0
    %6570 = vmatprep.subr.mxu0 0.0
    %6571 = vmatpush1.msra.mxu0 0.0
    %6572 = vmatprep.subr.mxu0 0.0
    %6573 = vmatpush1.msra.mxu0 0.0
    %6574 = vmatprep.subr.mxu0 0.0
    %6575 = vmatpush1.msra.mxu0 0.0
    %6576 = vmatprep.subr.mxu0 0.0
    %6577 = vmatpush1.msra.mxu0 0.0
    %6578 = vmatprep.subr.mxu0 0.0
    %6579 = vmatpush1.msra.mxu0 0.0
    %6580 = vmatprep.subr.mxu0 0.0
    %6581 = vmatpush1.msra.mxu0 0.0
    %6582 = vmatprep.subr.mxu0 0.0
    %6583 = vmatpush1.msra.mxu0 0.0
    %6584 = vmatprep.subr.mxu0 0.0
    %6585 = vmatpush1.msra.mxu0 0.0
    %6586 = vmatprep.subr.mxu0 0.0
    %6587 = vmatpush1.msra.mxu0 0.0
    %6588 = vmatprep.subr.mxu0 0.0
    %6589 = vmatpush1.msra.mxu0 0.0
    %6590 = vmatprep.subr.mxu0 0.0
    %6591 = vmatpush1.msra.mxu0 0.0
    %6592 = vmatprep.subr.mxu0 0.0
    %6593 = vmatpush1.msra.mxu0 0.0
    %6594 = vmatprep.subr.mxu0 0.0
    %6595 = vmatpush1.msra.mxu0 0.0
    %6596 = vmatprep.mubr.f32.mxu0 0.0
    %6597 = vmatmul.mubr.f32.gmra.mrb[0].mxu0 %v6527
    %v6598 = vpop.f32.mrb[0].mxu0
    %v6599 = vadd.f32 0.0, %v6598
    %v6600 = vpop.f32.mrb[0].mxu0
    %6601 = vmatprep.mubr.f32.mxu0 0.0
    %6602 = vmatmul.mubr.f32.gmra.mrb[0].mxu0 %v6530
    %v6603 = vpop.f32.mrb[0].mxu0
    %v6604 = vadd.f32 0.0, %v6603
    %v6605 = vpop.f32.mrb[0].mxu0
    %6606 = vdwg.mxu0
    %6607 = vrot.lane.b32.xlu0 %v291, 40
    %v6608 = vpop.permute.xlu0 %6607
    %6609 = vrot.lane.b32.xlu0 %v296, 40
    %v6610 = vpop.permute.xlu0 %6609
    %v6614 = vsel %vm1086, %v6336, 0
    %v6617 = vsel %vm1086, %v6337, 0
    %6619 = vmatprep.subr.mxu0 0.0
    %6620 = vmatpush1.msra.mxu0 %v6608
    %6621 = vmatprep.subr.mxu0 0.0
    %6622 = vmatpush1.msra.mxu0 %v6610
    %6623 = vmatprep.subr.mxu0 0.0
    %6624 = vmatpush1.msra.mxu0 0.0
    %6625 = vmatprep.subr.mxu0 0.0
    %6626 = vmatpush1.msra.mxu0 0.0
    %6627 = vmatprep.subr.mxu0 0.0
    %6628 = vmatpush1.msra.mxu0 0.0
    %6629 = vmatprep.subr.mxu0 0.0
    %6630 = vmatpush1.msra.mxu0 0.0
    %6631 = vmatprep.subr.mxu0 0.0
    %6632 = vmatpush1.msra.mxu0 0.0
    %6633 = vmatprep.subr.mxu0 0.0
    %6634 = vmatpush1.msra.mxu0 0.0
    %6635 = vmatprep.subr.mxu0 0.0
    %6636 = vmatpush1.msra.mxu0 0.0
    %6637 = vmatprep.subr.mxu0 0.0
    %6638 = vmatpush1.msra.mxu0 0.0
    %6639 = vmatprep.subr.mxu0 0.0
    %6640 = vmatpush1.msra.mxu0 0.0
    %6641 = vmatprep.subr.mxu0 0.0
    %6642 = vmatpush1.msra.mxu0 0.0
    %6643 = vmatprep.subr.mxu0 0.0
    %6644 = vmatpush1.msra.mxu0 0.0
    %6645 = vmatprep.subr.mxu0 0.0
    %6646 = vmatpush1.msra.mxu0 0.0
    %6647 = vmatprep.subr.mxu0 0.0
    %6648 = vmatpush1.msra.mxu0 0.0
    %6649 = vmatprep.subr.mxu0 0.0
    %6650 = vmatpush1.msra.mxu0 0.0
    %6651 = vmatprep.subr.mxu0 0.0
    %6652 = vmatpush1.msra.mxu0 0.0
    %6653 = vmatprep.subr.mxu0 0.0
    %6654 = vmatpush1.msra.mxu0 0.0
    %6655 = vmatprep.subr.mxu0 0.0
    %6656 = vmatpush1.msra.mxu0 0.0
    %6657 = vmatprep.subr.mxu0 0.0
    %6658 = vmatpush1.msra.mxu0 0.0
    %6659 = vmatprep.subr.mxu0 0.0
    %6660 = vmatpush1.msra.mxu0 0.0
    %6661 = vmatprep.subr.mxu0 0.0
    %6662 = vmatpush1.msra.mxu0 0.0
    %6663 = vmatprep.subr.mxu0 0.0
    %6664 = vmatpush1.msra.mxu0 0.0
    %6665 = vmatprep.subr.mxu0 0.0
    %6666 = vmatpush1.msra.mxu0 0.0
    %6667 = vmatprep.subr.mxu0 0.0
    %6668 = vmatpush1.msra.mxu0 0.0
    %6669 = vmatprep.subr.mxu0 0.0
    %6670 = vmatpush1.msra.mxu0 0.0
    %6671 = vmatprep.subr.mxu0 0.0
    %6672 = vmatpush1.msra.mxu0 0.0
    %6673 = vmatprep.subr.mxu0 0.0
    %6674 = vmatpush1.msra.mxu0 0.0
    %6675 = vmatprep.subr.mxu0 0.0
    %6676 = vmatpush1.msra.mxu0 0.0
    %6677 = vmatprep.subr.mxu0 0.0
    %6678 = vmatpush1.msra.mxu0 0.0
    %6679 = vmatprep.subr.mxu0 0.0
    %6680 = vmatpush1.msra.mxu0 0.0
    %6681 = vmatprep.subr.mxu0 0.0
    %6682 = vmatpush1.msra.mxu0 0.0
    %6683 = vmatprep.mubr.f32.mxu0 0.0
    %6684 = vmatmul.mubr.f32.gmra.mrb[0].mxu0 %v6614
    %v6685 = vpop.f32.mrb[0].mxu0
    %v6686 = vadd.f32 0.0, %v6685
    %v6687 = vpop.f32.mrb[0].mxu0
    %6688 = vmatprep.mubr.f32.mxu0 0.0
    %6689 = vmatmul.mubr.f32.gmra.mrb[0].mxu0 %v6617
    %v6690 = vpop.f32.mrb[0].mxu0
    %v6691 = vadd.f32 0.0, %v6690
    %v6692 = vpop.f32.mrb[0].mxu0
    %6693 = vdwg.mxu0
    %6694 = vrot.lane.b32.xlu0 %v301, 40
    %v6695 = vpop.permute.xlu0 %6694
    %6696 = vrot.lane.b32.xlu0 %v306, 40
    %v6697 = vpop.permute.xlu0 %6696
    %v6701 = vsel %vm1086, %v6338, 0
    %v6704 = vsel %vm1086, %v6339, 0
    %6706 = vmatprep.subr.mxu0 0.0
    %6707 = vmatpush1.msra.mxu0 %v6695
    %6708 = vmatprep.subr.mxu0 0.0
    %6709 = vmatpush1.msra.mxu0 %v6697
    %6710 = vmatprep.subr.mxu0 0.0
    %6711 = vmatpush1.msra.mxu0 0.0
    %6712 = vmatprep.subr.mxu0 0.0
    %6713 = vmatpush1.msra.mxu0 0.0
    %6714 = vmatprep.subr.mxu0 0.0
    %6715 = vmatpush1.msra.mxu0 0.0
    %6716 = vmatprep.subr.mxu0 0.0
    %6717 = vmatpush1.msra.mxu0 0.0
    %6718 = vmatprep.subr.mxu0 0.0
    %6719 = vmatpush1.msra.mxu0 0.0
    %6720 = vmatprep.subr.mxu0 0.0
    %6721 = vmatpush1.msra.mxu0 0.0
    %6722 = vmatprep.subr.mxu0 0.0
    %6723 = vmatpush1.msra.mxu0 0.0
    %6724 = vmatprep.subr.mxu0 0.0
    %6725 = vmatpush1.msra.mxu0 0.0
    %6726 = vmatprep.subr.mxu0 0.0
    %6727 = vmatpush1.msra.mxu0 0.0
    %6728 = vmatprep.subr.mxu0 0.0
    %6729 = vmatpush1.msra.mxu0 0.0
    %6730 = vmatprep.subr.mxu0 0.0
    %6731 = vmatpush1.msra.mxu0 0.0
    %6732 = vmatprep.subr.mxu0 0.0
    %6733 = vmatpush1.msra.mxu0 0.0
    %6734 = vmatprep.subr.mxu0 0.0
    %6735 = vmatpush1.msra.mxu0 0.0
    %6736 = vmatprep.subr.mxu0 0.0
    %6737 = vmatpush1.msra.mxu0 0.0
    %6738 = vmatprep.subr.mxu0 0.0
    %6739 = vmatpush1.msra.mxu0 0.0
    %6740 = vmatprep.subr.mxu0 0.0
    %6741 = vmatpush1.msra.mxu0 0.0
    %6742 = vmatprep.subr.mxu0 0.0
    %6743 = vmatpush1.msra.mxu0 0.0
    %6744 = vmatprep.subr.mxu0 0.0
    %6745 = vmatpush1.msra.mxu0 0.0
    %6746 = vmatprep.subr.mxu0 0.0
    %6747 = vmatpush1.msra.mxu0 0.0
    %6748 = vmatprep.subr.mxu0 0.0
    %6749 = vmatpush1.msra.mxu0 0.0
    %6750 = vmatprep.subr.mxu0 0.0
    %6751 = vmatpush1.msra.mxu0 0.0
    %6752 = vmatprep.subr.mxu0 0.0
    %6753 = vmatpush1.msra.mxu0 0.0
    %6754 = vmatprep.subr.mxu0 0.0
    %6755 = vmatpush1.msra.mxu0 0.0
    %6756 = vmatprep.subr.mxu0 0.0
    %6757 = vmatpush1.msra.mxu0 0.0
    %6758 = vmatprep.subr.mxu0 0.0
    %6759 = vmatpush1.msra.mxu0 0.0
    %6760 = vmatprep.subr.mxu0 0.0
    %6761 = vmatpush1.msra.mxu0 0.0
    %6762 = vmatprep.subr.mxu0 0.0
    %6763 = vmatpush1.msra.mxu0 0.0
    %6764 = vmatprep.subr.mxu0 0.0
    %6765 = vmatpush1.msra.mxu0 0.0
    %6766 = vmatprep.subr.mxu0 0.0
    %6767 = vmatpush1.msra.mxu0 0.0
    %6768 = vmatprep.subr.mxu0 0.0
    %6769 = vmatpush1.msra.mxu0 0.0
    %6770 = vmatprep.mubr.f32.mxu0 0.0
    %6771 = vmatmul.mubr.f32.gmra.mrb[0].mxu0 %v6701
    %v6772 = vpop.f32.mrb[0].mxu0
    %v6773 = vadd.f32 0.0, %v6772
    %v6774 = vpop.f32.mrb[0].mxu0
    %6775 = vmatprep.mubr.f32.mxu0 0.0
    %6776 = vmatmul.mubr.f32.gmra.mrb[0].mxu0 %v6704
    %v6777 = vpop.f32.mrb[0].mxu0
    %v6778 = vadd.f32 0.0, %v6777
    %v6779 = vpop.f32.mrb[0].mxu0
    %6780 = vdwg.mxu0
    %6781 = vrot.lane.b32.xlu0 %v311, 40
    %v6782 = vpop.permute.xlu0 %6781
    %6783 = vrot.lane.b32.xlu0 %v316, 40
    %v6784 = vpop.permute.xlu0 %6783
    %v6788 = vsel %vm1086, %v6340, 0
    %v6791 = vsel %vm1086, %v6341, 0
    %6793 = vmatprep.subr.mxu0 0.0
    %6794 = vmatpush1.msra.mxu0 %v6782
    %6795 = vmatprep.subr.mxu0 0.0
    %6796 = vmatpush1.msra.mxu0 %v6784
    %6797 = vmatprep.subr.mxu0 0.0
    %6798 = vmatpush1.msra.mxu0 0.0
    %6799 = vmatprep.subr.mxu0 0.0
    %6800 = vmatpush1.msra.mxu0 0.0
    %6801 = vmatprep.subr.mxu0 0.0
    %6802 = vmatpush1.msra.mxu0 0.0
    %6803 = vmatprep.subr.mxu0 0.0
    %6804 = vmatpush1.msra.mxu0 0.0
    %6805 = vmatprep.subr.mxu0 0.0
    %6806 = vmatpush1.msra.mxu0 0.0
    %6807 = vmatprep.subr.mxu0 0.0
    %6808 = vmatpush1.msra.mxu0 0.0
    %6809 = vmatprep.subr.mxu0 0.0
    %6810 = vmatpush1.msra.mxu0 0.0
    %6811 = vmatprep.subr.mxu0 0.0
    %6812 = vmatpush1.msra.mxu0 0.0
    %6813 = vmatprep.subr.mxu0 0.0
    %6814 = vmatpush1.msra.mxu0 0.0
    %6815 = vmatprep.subr.mxu0 0.0
    %6816 = vmatpush1.msra.mxu0 0.0
    %6817 = vmatprep.subr.mxu0 0.0
    %6818 = vmatpush1.msra.mxu0 0.0
    %6819 = vmatprep.subr.mxu0 0.0
    %6820 = vmatpush1.msra.mxu0 0.0
    %6821 = vmatprep.subr.mxu0 0.0
    %6822 = vmatpush1.msra.mxu0 0.0
    %6823 = vmatprep.subr.mxu0 0.0
    %6824 = vmatpush1.msra.mxu0 0.0
    %6825 = vmatprep.subr.mxu0 0.0
    %6826 = vmatpush1.msra.mxu0 0.0
    %6827 = vmatprep.subr.mxu0 0.0
    %6828 = vmatpush1.msra.mxu0 0.0
    %6829 = vmatprep.subr.mxu0 0.0
    %6830 = vmatpush1.msra.mxu0 0.0
    %6831 = vmatprep.subr.mxu0 0.0
    %6832 = vmatpush1.msra.mxu0 0.0
    %6833 = vmatprep.subr.mxu0 0.0
    %6834 = vmatpush1.msra.mxu0 0.0
    %6835 = vmatprep.subr.mxu0 0.0
    %6836 = vmatpush1.msra.mxu0 0.0
    %6837 = vmatprep.subr.mxu0 0.0
    %6838 = vmatpush1.msra.mxu0 0.0
    %6839 = vmatprep.subr.mxu0 0.0
    %6840 = vmatpush1.msra.mxu0 0.0
    %6841 = vmatprep.subr.mxu0 0.0
    %6842 = vmatpush1.msra.mxu0 0.0
    %6843 = vmatprep.subr.mxu0 0.0
    %6844 = vmatpush1.msra.mxu0 0.0
    %6845 = vmatprep.subr.mxu0 0.0
    %6846 = vmatpush1.msra.mxu0 0.0
    %6847 = vmatprep.subr.mxu0 0.0
    %6848 = vmatpush1.msra.mxu0 0.0
    %6849 = vmatprep.subr.mxu0 0.0
    %6850 = vmatpush1.msra.mxu0 0.0
    %6851 = vmatprep.subr.mxu0 0.0
    %6852 = vmatpush1.msra.mxu0 0.0
    %6853 = vmatprep.subr.mxu0 0.0
    %6854 = vmatpush1.msra.mxu0 0.0
    %6855 = vmatprep.subr.mxu0 0.0
    %6856 = vmatpush1.msra.mxu0 0.0
    %6857 = vmatprep.mubr.f32.mxu0 0.0
    %6858 = vmatmul.mubr.f32.gmra.mrb[0].mxu0 %v6788
    %v6859 = vpop.f32.mrb[0].mxu0
    %v6860 = vadd.f32 0.0, %v6859
    %v6861 = vpop.f32.mrb[0].mxu0
    %6862 = vmatprep.mubr.f32.mxu0 0.0
    %6863 = vmatmul.mubr.f32.gmra.mrb[0].mxu0 %v6791
    %v6864 = vpop.f32.mrb[0].mxu0
    %v6865 = vadd.f32 0.0, %v6864
    %v6866 = vpop.f32.mrb[0].mxu0
    %6867 = vdwg.mxu0
    %6868 = vrot.lane.b32.xlu0 %v321, 40
    %v6869 = vpop.permute.xlu0 %6868
    %6870 = vrot.lane.b32.xlu0 %v326, 40
    %v6871 = vpop.permute.xlu0 %6870
    %v6875 = vsel %vm1086, %v6342, 0
    %v6878 = vsel %vm1086, %v6343, 0
    %6880 = vmatprep.subr.mxu0 0.0
    %6881 = vmatpush1.msra.mxu0 %v6869
    %6882 = vmatprep.subr.mxu0 0.0
    %6883 = vmatpush1.msra.mxu0 %v6871
    %6884 = vmatprep.subr.mxu0 0.0
    %6885 = vmatpush1.msra.mxu0 0.0
    %6886 = vmatprep.subr.mxu0 0.0
    %6887 = vmatpush1.msra.mxu0 0.0
    %6888 = vmatprep.subr.mxu0 0.0
    %6889 = vmatpush1.msra.mxu0 0.0
    %6890 = vmatprep.subr.mxu0 0.0
    %6891 = vmatpush1.msra.mxu0 0.0
    %6892 = vmatprep.subr.mxu0 0.0
    %6893 = vmatpush1.msra.mxu0 0.0
    %6894 = vmatprep.subr.mxu0 0.0
    %6895 = vmatpush1.msra.mxu0 0.0
    %6896 = vmatprep.subr.mxu0 0.0
    %6897 = vmatpush1.msra.mxu0 0.0
    %6898 = vmatprep.subr.mxu0 0.0
    %6899 = vmatpush1.msra.mxu0 0.0
    %6900 = vmatprep.subr.mxu0 0.0
    %6901 = vmatpush1.msra.mxu0 0.0
    %6902 = vmatprep.subr.mxu0 0.0
    %6903 = vmatpush1.msra.mxu0 0.0
    %6904 = vmatprep.subr.mxu0 0.0
    %6905 = vmatpush1.msra.mxu0 0.0
    %6906 = vmatprep.subr.mxu0 0.0
    %6907 = vmatpush1.msra.mxu0 0.0
    %6908 = vmatprep.subr.mxu0 0.0
    %6909 = vmatpush1.msra.mxu0 0.0
    %6910 = vmatprep.subr.mxu0 0.0
    %6911 = vmatpush1.msra.mxu0 0.0
    %6912 = vmatprep.subr.mxu0 0.0
    %6913 = vmatpush1.msra.mxu0 0.0
    %6914 = vmatprep.subr.mxu0 0.0
    %6915 = vmatpush1.msra.mxu0 0.0
    %6916 = vmatprep.subr.mxu0 0.0
    %6917 = vmatpush1.msra.mxu0 0.0
    %6918 = vmatprep.subr.mxu0 0.0
    %6919 = vmatpush1.msra.mxu0 0.0
    %6920 = vmatprep.subr.mxu0 0.0
    %6921 = vmatpush1.msra.mxu0 0.0
    %6922 = vmatprep.subr.mxu0 0.0
    %6923 = vmatpush1.msra.mxu0 0.0
    %6924 = vmatprep.subr.mxu0 0.0
    %6925 = vmatpush1.msra.mxu0 0.0
    %6926 = vmatprep.subr.mxu0 0.0
    %6927 = vmatpush1.msra.mxu0 0.0
    %6928 = vmatprep.subr.mxu0 0.0
    %6929 = vmatpush1.msra.mxu0 0.0
    %6930 = vmatprep.subr.mxu0 0.0
    %6931 = vmatpush1.msra.mxu0 0.0
    %6932 = vmatprep.subr.mxu0 0.0
    %6933 = vmatpush1.msra.mxu0 0.0
    %6934 = vmatprep.subr.mxu0 0.0
    %6935 = vmatpush1.msra.mxu0 0.0
    %6936 = vmatprep.subr.mxu0 0.0
    %6937 = vmatpush1.msra.mxu0 0.0
    %6938 = vmatprep.subr.mxu0 0.0
    %6939 = vmatpush1.msra.mxu0 0.0
    %6940 = vmatprep.subr.mxu0 0.0
    %6941 = vmatpush1.msra.mxu0 0.0
    %6942 = vmatprep.subr.mxu0 0.0
    %6943 = vmatpush1.msra.mxu0 0.0
    %6944 = vmatprep.mubr.f32.mxu0 0.0
    %6945 = vmatmul.mubr.f32.gmra.mrb[0].mxu0 %v6875
    %v6946 = vpop.f32.mrb[0].mxu0
    %v6947 = vadd.f32 0.0, %v6946
    %v6948 = vpop.f32.mrb[0].mxu0
    %6949 = vmatprep.mubr.f32.mxu0 0.0
    %6950 = vmatmul.mubr.f32.gmra.mrb[0].mxu0 %v6878
    %v6951 = vpop.f32.mrb[0].mxu0
    %v6952 = vadd.f32 0.0, %v6951
    %v6953 = vpop.f32.mrb[0].mxu0
    %6954 = vdwg.mxu0
    %6955 = vrot.lane.b32.xlu0 %v331, 40
    %v6956 = vpop.permute.xlu0 %6955
    %6957 = vrot.lane.b32.xlu0 %v336, 40
    %v6958 = vpop.permute.xlu0 %6957
    %v6962 = vsel %vm1086, %v6344, 0
    %v6965 = vsel %vm1086, %v6345, 0
    %6967 = vmatprep.subr.mxu0 0.0
    %6968 = vmatpush1.msra.mxu0 %v6956
    %6969 = vmatprep.subr.mxu0 0.0
    %6970 = vmatpush1.msra.mxu0 %v6958
    %6971 = vmatprep.subr.mxu0 0.0
    %6972 = vmatpush1.msra.mxu0 0.0
    %6973 = vmatprep.subr.mxu0 0.0
    %6974 = vmatpush1.msra.mxu0 0.0
    %6975 = vmatprep.subr.mxu0 0.0
    %6976 = vmatpush1.msra.mxu0 0.0
    %6977 = vmatprep.subr.mxu0 0.0
    %6978 = vmatpush1.msra.mxu0 0.0
    %6979 = vmatprep.subr.mxu0 0.0
    %6980 = vmatpush1.msra.mxu0 0.0
    %6981 = vmatprep.subr.mxu0 0.0
    %6982 = vmatpush1.msra.mxu0 0.0
    %6983 = vmatprep.subr.mxu0 0.0
    %6984 = vmatpush1.msra.mxu0 0.0
    %6985 = vmatprep.subr.mxu0 0.0
    %6986 = vmatpush1.msra.mxu0 0.0
    %6987 = vmatprep.subr.mxu0 0.0
    %6988 = vmatpush1.msra.mxu0 0.0
    %6989 = vmatprep.subr.mxu0 0.0
    %6990 = vmatpush1.msra.mxu0 0.0
    %6991 = vmatprep.subr.mxu0 0.0
    %6992 = vmatpush1.msra.mxu0 0.0
    %6993 = vmatprep.subr.mxu0 0.0
    %6994 = vmatpush1.msra.mxu0 0.0
    %6995 = vmatprep.subr.mxu0 0.0
    %6996 = vmatpush1.msra.mxu0 0.0
    %6997 = vmatprep.subr.mxu0 0.0
    %6998 = vmatpush1.msra.mxu0 0.0
    %6999 = vmatprep.subr.mxu0 0.0
    %7000 = vmatpush1.msra.mxu0 0.0
    %7001 = vmatprep.subr.mxu0 0.0
    %7002 = vmatpush1.msra.mxu0 0.0
    %7003 = vmatprep.subr.mxu0 0.0
    %7004 = vmatpush1.msra.mxu0 0.0
    %7005 = vmatprep.subr.mxu0 0.0
    %7006 = vmatpush1.msra.mxu0 0.0
    %7007 = vmatprep.subr.mxu0 0.0
    %7008 = vmatpush1.msra.mxu0 0.0
    %7009 = vmatprep.subr.mxu0 0.0
    %7010 = vmatpush1.msra.mxu0 0.0
    %7011 = vmatprep.subr.mxu0 0.0
    %7012 = vmatpush1.msra.mxu0 0.0
    %7013 = vmatprep.subr.mxu0 0.0
    %7014 = vmatpush1.msra.mxu0 0.0
    %7015 = vmatprep.subr.mxu0 0.0
    %7016 = vmatpush1.msra.mxu0 0.0
    %7017 = vmatprep.subr.mxu0 0.0
    %7018 = vmatpush1.msra.mxu0 0.0
    %7019 = vmatprep.subr.mxu0 0.0
    %7020 = vmatpush1.msra.mxu0 0.0
    %7021 = vmatprep.subr.mxu0 0.0
    %7022 = vmatpush1.msra.mxu0 0.0
    %7023 = vmatprep.subr.mxu0 0.0
    %7024 = vmatpush1.msra.mxu0 0.0
    %7025 = vmatprep.subr.mxu0 0.0
    %7026 = vmatpush1.msra.mxu0 0.0
    %7027 = vmatprep.subr.mxu0 0.0
    %7028 = vmatpush1.msra.mxu0 0.0
    %7029 = vmatprep.subr.mxu0 0.0
    %7030 = vmatpush1.msra.mxu0 0.0
    %7031 = vmatprep.mubr.f32.mxu0 0.0
    %7032 = vmatmul.mubr.f32.gmra.mrb[0].mxu0 %v6962
    %v7033 = vpop.f32.mrb[0].mxu0
    %v7034 = vadd.f32 0.0, %v7033
    %v7035 = vpop.f32.mrb[0].mxu0
    %7036 = vmatprep.mubr.f32.mxu0 0.0
    %7037 = vmatmul.mubr.f32.gmra.mrb[0].mxu0 %v6965
    %v7038 = vpop.f32.mrb[0].mxu0
    %v7039 = vadd.f32 0.0, %v7038
    %v7040 = vpop.f32.mrb[0].mxu0
    %7041 = vdwg.mxu0
    %7058 = vrot.lane.b32.xlu0 %v6425, 24
    %v7059 = vpop.permute.xlu0 %7058
    %7060 = vrot.lane.b32.xlu0 %v6430, 24
    %v7061 = vpop.permute.xlu0 %7060
    %7062 = vrot.lane.b32.xlu0 %v6512, 24
    %v7063 = vpop.permute.xlu0 %7062
    %7064 = vrot.lane.b32.xlu0 %v6517, 24
    %v7065 = vpop.permute.xlu0 %7064
    %7066 = vrot.lane.b32.xlu0 %v6599, 24
    %v7067 = vpop.permute.xlu0 %7066
    %7068 = vrot.lane.b32.xlu0 %v6604, 24
    %v7069 = vpop.permute.xlu0 %7068
    %7070 = vrot.lane.b32.xlu0 %v6686, 24
    %v7071 = vpop.permute.xlu0 %7070
    %7072 = vrot.lane.b32.xlu0 %v6691, 24
    %v7073 = vpop.permute.xlu0 %7072
    %7074 = vrot.lane.b32.xlu0 %v6773, 24
    %v7075 = vpop.permute.xlu0 %7074
    %7076 = vrot.lane.b32.xlu0 %v6778, 24
    %v7077 = vpop.permute.xlu0 %7076
    %7078 = vrot.lane.b32.xlu0 %v6860, 24
    %v7079 = vpop.permute.xlu0 %7078
    %7080 = vrot.lane.b32.xlu0 %v6865, 24
    %v7081 = vpop.permute.xlu0 %7080
    %7082 = vrot.lane.b32.xlu0 %v6947, 24
    %v7083 = vpop.permute.xlu0 %7082
    %7084 = vrot.lane.b32.xlu0 %v6952, 24
    %v7085 = vpop.permute.xlu0 %7084
    %7086 = vrot.lane.b32.xlu0 %v7034, 24
    %v7087 = vpop.permute.xlu0 %7086
    %7088 = vrot.lane.b32.xlu0 %v7039, 24
    %v7089 = vpop.permute.xlu0 %7088
    %vm7106 = vcmask 261312
    %7107 = vst.msk [vmem:[#allocation2] sm:$0xff] %vm7106, %v7059
    %7108 = vst.msk [vmem:[#allocation2 + $0x8] sm:$0xff] %vm7106, %v7061
    %7109 = vst.msk [vmem:[#allocation2 + $0x10] sm:$0xff] %vm7106, %v7063
    %7110 = vst.msk [vmem:[#allocation2 + $0x18] sm:$0xff] %vm7106, %v7065
    %7111 = vst.msk [vmem:[#allocation2 + $0x20] sm:$0xff] %vm7106, %v7067
    %7112 = vst.msk [vmem:[#allocation2 + $0x28] sm:$0xff] %vm7106, %v7069
    %7113 = vst.msk [vmem:[#allocation2 + $0x30] sm:$0xff] %vm7106, %v7071
    %7114 = vst.msk [vmem:[#allocation2 + $0x38] sm:$0xff] %vm7106, %v7073
    %7115 = vst.msk [vmem:[#allocation2 + $0x40] sm:$0xff] %vm7106, %v7075
    %7116 = vst.msk [vmem:[#allocation2 + $0x48] sm:$0xff] %vm7106, %v7077
    %7117 = vst.msk [vmem:[#allocation2 + $0x50] sm:$0xff] %vm7106, %v7079
    %7118 = vst.msk [vmem:[#allocation2 + $0x58] sm:$0xff] %vm7106, %v7081
    %7119 = vst.msk [vmem:[#allocation2 + $0x60] sm:$0xff] %vm7106, %v7083
    %7120 = vst.msk [vmem:[#allocation2 + $0x68] sm:$0xff] %vm7106, %v7085
    %7121 = vst.msk [vmem:[#allocation2 + $0x70] sm:$0xff] %vm7106, %v7087
    %7122 = vst.msk [vmem:[#allocation2 + $0x78] sm:$0xff] %vm7106, %v7089
    %v7123 = vld [vmem:[#allocation2] sm:$0xff]
    %v7124 = vld [vmem:[#allocation2 + $0x8] sm:$0xff]
    %v7125 = vld [vmem:[#allocation2 + $0x10] sm:$0xff]
    %v7126 = vld [vmem:[#allocation2 + $0x18] sm:$0xff]
    %v7127 = vld [vmem:[#allocation2 + $0x20] sm:$0xff]
    %v7128 = vld [vmem:[#allocation2 + $0x28] sm:$0xff]
    %v7129 = vld [vmem:[#allocation2 + $0x30] sm:$0xff]
    %v7130 = vld [vmem:[#allocation2 + $0x38] sm:$0xff]
    %v7131 = vld [vmem:[#allocation2 + $0x40] sm:$0xff]
    %v7132 = vld [vmem:[#allocation2 + $0x48] sm:$0xff]
    %v7133 = vld [vmem:[#allocation2 + $0x50] sm:$0xff]
    %v7134 = vld [vmem:[#allocation2 + $0x58] sm:$0xff]
    %v7135 = vld [vmem:[#allocation2 + $0x60] sm:$0xff]
    %v7136 = vld [vmem:[#allocation2 + $0x68] sm:$0xff]
    %v7137 = vld [vmem:[#allocation2 + $0x70] sm:$0xff]
    %v7138 = vld [vmem:[#allocation2 + $0x78] sm:$0xff]
    %v7139 = vld [vmem:[#allocation12] sm:$0xff]
    %v7140 = vld [vmem:[#allocation12 + $0x8] sm:$0xff]
    %v7141 = vld [vmem:[#allocation12 + $0x10] sm:$0xff]
    %v7142 = vld [vmem:[#allocation12 + $0x18] sm:$0xff]
    %v7143 = vld [vmem:[#allocation14] sm:$0x1]
    %v7145 = vlaneseq
    %v7146 = vshrl.u32 %v7145, 7
    %v7147 = vsub.s32 0, %v7146
    %v7148 = vrot.slane %v7143, %v7147
    %v7151 = vsel %vm145, %v7123, 0
    %v7154 = vsel %vm145, %v7124, 0
    %v7157 = vsel %vm145, %v7125, 0
    %v7160 = vsel %vm145, %v7126, 0
    %v7163 = vsel %vm145, %v7127, 0
    %v7166 = vsel %vm145, %v7128, 0
    %v7169 = vsel %vm145, %v7129, 0
    %v7172 = vsel %vm145, %v7130, 0
    %v7175 = vsel %vm145, %v7131, 0
    %v7178 = vsel %vm145, %v7132, 0
    %v7181 = vsel %vm145, %v7133, 0
    %v7184 = vsel %vm145, %v7134, 0
    %v7187 = vsel %vm145, %v7135, 0
    %v7190 = vsel %vm145, %v7136, 0
    %v7193 = vsel %vm145, %v7137, 0
    %v7196 = vsel %vm145, %v7138, 0
    %7198 = vmatprep.subr.mxu0 0.0
    %7199 = vmatpush1.msra.mxu0 %v7139
    %7200 = vmatprep.subr.mxu0 0.0
    %7201 = vmatpush1.msra.mxu0 %v7140
    %7202 = vmatprep.subr.mxu0 0.0
    %7203 = vmatpush1.msra.mxu0 %v7141
    %7204 = vmatprep.subr.mxu0 0.0
    %7205 = vmatpush1.msra.mxu0 %v7142
    %7206 = vmatprep.subr.mxu0 0.0
    %7207 = vmatpush1.msra.mxu0 0.0
    %7208 = vmatprep.subr.mxu0 0.0
    %7209 = vmatpush1.msra.mxu0 0.0
    %7210 = vmatprep.subr.mxu0 0.0
    %7211 = vmatpush1.msra.mxu0 0.0
    %7212 = vmatprep.subr.mxu0 0.0
    %7213 = vmatpush1.msra.mxu0 0.0
    %7214 = vmatprep.subr.mxu0 0.0
    %7215 = vmatpush1.msra.mxu0 0.0
    %7216 = vmatprep.subr.mxu0 0.0
    %7217 = vmatpush1.msra.mxu0 0.0
    %7218 = vmatprep.subr.mxu0 0.0
    %7219 = vmatpush1.msra.mxu0 0.0
    %7220 = vmatprep.subr.mxu0 0.0
    %7221 = vmatpush1.msra.mxu0 0.0
    %7222 = vmatprep.subr.mxu0 0.0
    %7223 = vmatpush1.msra.mxu0 0.0
    %7224 = vmatprep.subr.mxu0 0.0
    %7225 = vmatpush1.msra.mxu0 0.0
    %7226 = vmatprep.subr.mxu0 0.0
    %7227 = vmatpush1.msra.mxu0 0.0
    %7228 = vmatprep.subr.mxu0 0.0
    %7229 = vmatpush1.msra.mxu0 0.0
    %7230 = vmatprep.subr.mxu0 0.0
    %7231 = vmatpush1.msra.mxu0 0.0
    %7232 = vmatprep.subr.mxu0 0.0
    %7233 = vmatpush1.msra.mxu0 0.0
    %7234 = vmatprep.subr.mxu0 0.0
    %7235 = vmatpush1.msra.mxu0 0.0
    %7236 = vmatprep.subr.mxu0 0.0
    %7237 = vmatpush1.msra.mxu0 0.0
    %7238 = vmatprep.subr.mxu0 0.0
    %7239 = vmatpush1.msra.mxu0 0.0
    %7240 = vmatprep.subr.mxu0 0.0
    %7241 = vmatpush1.msra.mxu0 0.0
    %7242 = vmatprep.subr.mxu0 0.0
    %7243 = vmatpush1.msra.mxu0 0.0
    %7244 = vmatprep.subr.mxu0 0.0
    %7245 = vmatpush1.msra.mxu0 0.0
    %7246 = vmatprep.subr.mxu0 0.0
    %7247 = vmatpush1.msra.mxu0 0.0
    %7248 = vmatprep.subr.mxu0 0.0
    %7249 = vmatpush1.msra.mxu0 0.0
    %7250 = vmatprep.subr.mxu0 0.0
    %7251 = vmatpush1.msra.mxu0 0.0
    %7252 = vmatprep.subr.mxu0 0.0
    %7253 = vmatpush1.msra.mxu0 0.0
    %7254 = vmatprep.subr.mxu0 0.0
    %7255 = vmatpush1.msra.mxu0 0.0
    %7256 = vmatprep.subr.mxu0 0.0
    %7257 = vmatpush1.msra.mxu0 0.0
    %7258 = vmatprep.subr.mxu0 0.0
    %7259 = vmatpush1.msra.mxu0 0.0
    %7260 = vmatprep.subr.mxu0 0.0
    %7261 = vmatpush1.msra.mxu0 0.0
    %7262 = vmatprep.mubr.f32.mxu0 0.0
    %7263 = vmatmul.mubr.f32.gmra.mrb[0].mxu0 %v7151
    %v7264 = vpop.f32.mrb[0].mxu0
    %v7265 = vadd.f32 %v7148, %v7264
    %v7266 = vpop.f32.mrb[0].mxu0
    %7267 = vmatprep.mubr.f32.mxu0 0.0
    %7268 = vmatmul.mubr.f32.gmra.mrb[0].mxu0 %v7154
    %v7269 = vpop.f32.mrb[0].mxu0
    %v7270 = vadd.f32 %v7148, %v7269
    %v7271 = vpop.f32.mrb[0].mxu0
    %7272 = vmatprep.mubr.f32.mxu0 0.0
    %7273 = vmatmul.mubr.f32.gmra.mrb[0].mxu0 %v7157
    %v7274 = vpop.f32.mrb[0].mxu0
    %v7275 = vadd.f32 %v7148, %v7274
    %v7276 = vpop.f32.mrb[0].mxu0
    %7277 = vmatprep.mubr.f32.mxu0 0.0
    %7278 = vmatmul.mubr.f32.gmra.mrb[0].mxu0 %v7160
    %v7279 = vpop.f32.mrb[0].mxu0
    %v7280 = vadd.f32 %v7148, %v7279
    %v7281 = vpop.f32.mrb[0].mxu0
    %7282 = vmatprep.mubr.f32.mxu0 0.0
    %7283 = vmatmul.mubr.f32.gmra.mrb[0].mxu0 %v7163
    %v7284 = vpop.f32.mrb[0].mxu0
    %v7285 = vadd.f32 %v7148, %v7284
    %v7286 = vpop.f32.mrb[0].mxu0
    %7287 = vmatprep.mubr.f32.mxu0 0.0
    %7288 = vmatmul.mubr.f32.gmra.mrb[0].mxu0 %v7166
    %v7289 = vpop.f32.mrb[0].mxu0
    %v7290 = vadd.f32 %v7148, %v7289
    %v7291 = vpop.f32.mrb[0].mxu0
    %7292 = vmatprep.mubr.f32.mxu0 0.0
    %7293 = vmatmul.mubr.f32.gmra.mrb[0].mxu0 %v7169
    %v7294 = vpop.f32.mrb[0].mxu0
    %v7295 = vadd.f32 %v7148, %v7294
    %v7296 = vpop.f32.mrb[0].mxu0
    %7297 = vmatprep.mubr.f32.mxu0 0.0
    %7298 = vmatmul.mubr.f32.gmra.mrb[0].mxu0 %v7172
    %v7299 = vpop.f32.mrb[0].mxu0
    %v7300 = vadd.f32 %v7148, %v7299
    %v7301 = vpop.f32.mrb[0].mxu0
    %7302 = vmatprep.mubr.f32.mxu0 0.0
    %7303 = vmatmul.mubr.f32.gmra.mrb[0].mxu0 %v7175
    %v7304 = vpop.f32.mrb[0].mxu0
    %v7305 = vadd.f32 %v7148, %v7304
    %v7306 = vpop.f32.mrb[0].mxu0
    %7307 = vmatprep.mubr.f32.mxu0 0.0
    %7308 = vmatmul.mubr.f32.gmra.mrb[0].mxu0 %v7178
    %v7309 = vpop.f32.mrb[0].mxu0
    %v7310 = vadd.f32 %v7148, %v7309
    %v7311 = vpop.f32.mrb[0].mxu0
    %7312 = vmatprep.mubr.f32.mxu0 0.0
    %7313 = vmatmul.mubr.f32.gmra.mrb[0].mxu0 %v7181
    %v7314 = vpop.f32.mrb[0].mxu0
    %v7315 = vadd.f32 %v7148, %v7314
    %v7316 = vpop.f32.mrb[0].mxu0
    %7317 = vmatprep.mubr.f32.mxu0 0.0
    %7318 = vmatmul.mubr.f32.gmra.mrb[0].mxu0 %v7184
    %v7319 = vpop.f32.mrb[0].mxu0
    %v7320 = vadd.f32 %v7148, %v7319
    %v7321 = vpop.f32.mrb[0].mxu0
    %7322 = vmatprep.mubr.f32.mxu0 0.0
    %7323 = vmatmul.mubr.f32.gmra.mrb[0].mxu0 %v7187
    %v7324 = vpop.f32.mrb[0].mxu0
    %v7325 = vadd.f32 %v7148, %v7324
    %v7326 = vpop.f32.mrb[0].mxu0
    %7327 = vmatprep.mubr.f32.mxu0 0.0
    %7328 = vmatmul.mubr.f32.gmra.mrb[0].mxu0 %v7190
    %v7329 = vpop.f32.mrb[0].mxu0
    %v7330 = vadd.f32 %v7148, %v7329
    %v7331 = vpop.f32.mrb[0].mxu0
    %7332 = vmatprep.mubr.f32.mxu0 0.0
    %7333 = vmatmul.mubr.f32.gmra.mrb[0].mxu0 %v7193
    %v7334 = vpop.f32.mrb[0].mxu0
    %v7335 = vadd.f32 %v7148, %v7334
    %v7336 = vpop.f32.mrb[0].mxu0
    %7337 = vmatprep.mubr.f32.mxu0 0.0
    %7338 = vmatmul.mubr.f32.gmra.mrb[0].mxu0 %v7196
    %v7339 = vpop.f32.mrb[0].mxu0
    %v7340 = vadd.f32 %v7148, %v7339
    %v7341 = vpop.f32.mrb[0].mxu0
    %7342 = vdwg.mxu0
    %7343 = vst.msk [vmem:[#allocation15] sm:$0xff] %vm145, %v7265
    %7344 = vst.msk [vmem:[#allocation15 + $0x8] sm:$0xff] %vm145, %v7270
    %7345 = vst.msk [vmem:[#allocation15 + $0x10] sm:$0xff] %vm145, %v7275
    %7346 = vst.msk [vmem:[#allocation15 + $0x18] sm:$0xff] %vm145, %v7280
    %7347 = vst.msk [vmem:[#allocation15 + $0x20] sm:$0xff] %vm145, %v7285
    %7348 = vst.msk [vmem:[#allocation15 + $0x28] sm:$0xff] %vm145, %v7290
    %7349 = vst.msk [vmem:[#allocation15 + $0x30] sm:$0xff] %vm145, %v7295
    %7350 = vst.msk [vmem:[#allocation15 + $0x38] sm:$0xff] %vm145, %v7300
    %7351 = vst.msk [vmem:[#allocation15 + $0x40] sm:$0xff] %vm145, %v7305
    %7352 = vst.msk [vmem:[#allocation15 + $0x48] sm:$0xff] %vm145, %v7310
    %7353 = vst.msk [vmem:[#allocation15 + $0x50] sm:$0xff] %vm145, %v7315
    %7354 = vst.msk [vmem:[#allocation15 + $0x58] sm:$0xff] %vm145, %v7320
    %7355 = vst.msk [vmem:[#allocation15 + $0x60] sm:$0xff] %vm145, %v7325
    %7356 = vst.msk [vmem:[#allocation15 + $0x68] sm:$0xff] %vm145, %v7330
    %7357 = vst.msk [vmem:[#allocation15 + $0x70] sm:$0xff] %vm145, %v7335
    %7358 = vst.msk [vmem:[#allocation15 + $0x78] sm:$0xff] %vm145, %v7340
    // Predicated region
    $region58: #{tpu_custom_call.1} parent=1 // pred_check
      _
    $region59: #{tpu_custom_call.1} parent=1 // pred_check_branch
      %7360 = sbr.rel (0) target = $region61
    $region60: #{tpu_custom_call.1} parent=1 // pred_region
      %s7362 = ssub.s32 2048, 2048
      %7363 = vsyncadd [#allocation5], %s7362
      %s7364 = sshll.u32 [#allocation15], 4
      %s7365 = int_to_ptr.vmem [resolvable:$true] %s7364
      %7370 = dma.vmem_to_hbm [thread:$0]  %s7365, 2048, %s7, [#allocation5], 128, 128, 8
    $region61: #{tpu_custom_call.1} parent=1 // pred_fallthru
      _
    // Predicated region
    $region62: #{tpu_custom_call.1} parent=1 // pred_check
      _
    $region63: #{tpu_custom_call.1} parent=1 // pred_check_branch
      %7372 = sbr.rel (0) target = $region65
    $region64: #{tpu_custom_call.1} parent=1 // pred_region
      %7373 = dma.done [#allocation5], 2048
    $region65: #{tpu_custom_call.1} parent=1 // pred_fallthru
      _
    %7374 = vsyncpa [#allocation4], 1
    %7375 = vsyncpa [#allocation7], 1
    %7376 = vsyncpa [#allocation10], 1
    %7377 = vsyncpa [#allocation13], 1
    %7378 = vsyncpa [#allocation5], 1

</llo_original>
